<compile_context>
chip_gen: v6e
topology: v6e:2x2x1
jax: 0.10.0
libtpu: 0.0.40
codegen_flags: <defaults>
</compile_context>

<pallas_src>
import numpy as np
import jax
import jax.numpy as jnp
from jax import lax
from jax.experimental import pallas as pl
from jax.experimental.pallas import tpu as pltpu

MAX_TN = 1024  # max row-tile size (rows = bs*npts); multiple of 128


def _round_up(a, m):
    return (a + m - 1) // m * m


# ------------------------------- fused kernel --------------------------------

def _make_fused_kernel(TN, H, O):
    H2 = 2 * H

    def kernel(x_ref, wfan_ref, phase_ref, wmix_ref, wout_ref, bout_ref,
               fx_ref, xx_ref, out_ref, acc_ref,
               comb_c, acc_c, xb_c):
        """Grid = (row_tile i, band b).  Carry [sin|cos]/acc in VMEM scratch."""
        b = pl.program_id(1)

        # Band-invariant lane-broadcast of x, computed once per row tile.
        @pl.when(b == 0)
        def _():
            xv = x_ref[...]                                       # (TN, 2)
            xb_c[:, :H] = jnp.broadcast_to(xv[:, 0:1], (TN, H))
            xb_c[:, H:] = jnp.broadcast_to(xv[:, 1:2], (TN, H))

        # ---- fan projection for this band (VPU math, no K=2 matmul) ----
        wf = wfan_ref[0]                                          # (2, H)
        o = (xb_c[:, :H] * wf[0:1, :]
             + xb_c[:, H:] * wf[1:2, :]
             + phase_ref[0])                                      # (TN, H)
        sin_y = jnp.sin(o)
        cos_y = jnp.cos(o)
        # [sin_fx | cos_fx] lane-dense slab, stored in bf16 (math stays f32).
        fx_ref[0] = jnp.concatenate([sin_y, cos_y], axis=-1).astype(fx_ref.dtype)

        # ---- band 0: initialize the carried state ----
        @pl.when(b == 0)
        def _():
            comb_c[:, :H] = sin_y
            comb_c[:, H:] = cos_y
            acc_c[...] = jnp.zeros_like(acc_c)
            # Insurance for output-revisit semantics: the stage-0 output blocks
            # share the b==0 block index (max(b-1,0)); define them here so a
            # flush can never expose uninitialized data (overwritten at b==1).
            xx_ref[0] = jnp.zeros((TN, H2), dtype=xx_ref.dtype)
            out_ref[0] = jnp.zeros((O, TN), dtype=out_ref.dtype)
            acc_ref[0] = jnp.zeros((O, TN), dtype=acc_ref.dtype)

        # ---- bands >= 1: mix -> subband_combine -> out Linear -> accumulate ----
        @pl.when(b > 0)
        def _():
            # One full-width (TN,2H)@(2H,2H) matmul vs blockdiag(Wmix^T, Wmix^T):
            # result is [m_sin | m_cos] in aligned 128-lane halves.
            m = jnp.dot(comb_c[...], wmix_ref[0],
                        preferred_element_type=jnp.float32)       # (TN, 2H)
            m_sin = m[:, :H]
            m_cos = m[:, H:]
            sin_new = m_sin * cos_y + m_cos * sin_y
            cos_new = m_cos * cos_y - m_sin * sin_y
            comb_new = jnp.concatenate([sin_new, cos_new], axis=-1)
            comb_c[...] = comb_new
            xx_ref[0] = comb_new.astype(xx_ref.dtype)

            # Fused out projection, produced directly in lane-dense transposed
            # (O, TN) layout: cur[o, n] = sum_k Wout[o, k] * comb[n, k] + b[o].
            cur = lax.dot_general(wout_ref[0], comb_new,
                                  dimension_numbers=(((1,), (1,)), ((), ())),
                                  preferred_element_type=jnp.float32)
            cur = cur + bout_ref[0]                               # (O, TN)
            acc_new = acc_c[...] + cur                            # acc_method == 'sum'
            acc_c[...] = acc_new
            out_ref[0] = cur
            acc_ref[0] = acc_new

    return kernel


# ------------------------------ parameter prep --------------------------------

def _fan_weights(fp, quantize=False):
    """Returns (w_fan.T of shape (2, H), phase of shape (1, H))."""
    direction = jnp.stack([jnp.cos(fp['angles']), jnp.sin(fp['angles'])], axis=-1)
    w = fp['radius'][:, None] * direction                       # (H, 2)
    if quantize:
        w = jnp.round(w / (2.0 * np.pi)) * (2.0 * np.pi)
    return w.T, fp['phase'].reshape(1, -1)


def make_params(key, bws, hiddim, outdim, la, ua):
    """Deterministic synthetic parameter init mirroring the module shapes."""
    params = {'fans': [], 'mixs': [], 'outs': []}
    for (lr, ur) in bws:
        key, k1, k2, k3 = jax.random.split(key, 4)
        R1, R2 = np.pi * lr, np.pi * ur
        radius = jax.random.uniform(k1, (hiddim,), jnp.float32) * (R2 - R1) + R1
        angles = jax.random.uniform(k2, (hiddim,), jnp.float32) * (ua - la) + la
        phase = (jax.random.uniform(k3, (hiddim,), jnp.float32) - 0.5) * 2.0 * np.pi
        params['fans'].append({'radius': radius, 'angles': angles, 'phase': phase})
    for _ in bws[1:]:
        key, k1, k2, k3 = jax.random.split(key, 4)
        c_mix = float(np.sqrt(1.0 / hiddim))
        wmix = jax.random.uniform(k1, (hiddim, hiddim), jnp.float32,
                                  minval=-c_mix, maxval=c_mix)      # torch (out,in)
        c_out = float(np.sqrt(1.0 / (2 * hiddim)))
        wout = jax.random.uniform(k2, (outdim, 2 * hiddim), jnp.float32,
                                  minval=-c_out, maxval=c_out)      # torch (out,in)
        bout = jax.random.uniform(k3, (outdim,), jnp.float32,
                                  minval=-c_out, maxval=c_out)
        params['mixs'].append(wmix)
        params['outs'].append({'w': wout, 'b': bout})
    return params


# ------------------------------ Pallas forward --------------------------------

def subband_series_forward(x, params, hiddim, outdim, quantize=False,
                           max_tn=MAX_TN):
    bs, npts, _ = x.shape
    N = bs * npts
    H, O = hiddim, outdim
    H2 = 2 * H
    NB = len(params['fans'])        # total number of fans/bands
    NBm = len(params['mixs'])       # number of mix/out stages (= NB - 1)
    assert NBm == NB - 1 and NBm >= 1, "need at least 2 bandwidth configs"

    # Row tile: single full tile if it fits under max_tn, else the largest
    # 128-aligned tile (128-alignment keeps the transposed sb_out / sb_acc
    # blocks lane-dense when more than one tile is used).
    n8 = _round_up(N, 8)
    if n8 <= max_tn:
        tn = n8
    else:
        tn = max(128, (max_tn // 128) * 128)
    # TODO(synk): on v7x force >= 2 row tiles so the "parallel" axis spans both
    # TensorCores (v5e/v6e are single-TC, no change needed).
    n_pad = _round_up(N, tn)
    n_tiles = n_pad // tn

    x_flat = x.reshape(N, 2).astype(jnp.float32)
    if n_pad != N:
        x_flat = jnp.pad(x_flat, ((0, n_pad - N), (0, 0)))

    # Stacked per-band fan weights.
    wfans, phases = [], []
    for fp in params['fans']:
        w, ph = _fan_weights(fp, quantize=quantize)
        wfans.append(w)
        phases.append(ph)
    wfan_all = jnp.stack(wfans)                                   # (NB, 2, H)
    phase_all = jnp.stack(phases)                                 # (NB, 1, H)

    # blockdiag(Wmix^T, Wmix^T) stacked per mix stage: (NBm, 2H, 2H)
    zeros_h = jnp.zeros((H, H), jnp.float32)

    def _bd(wt):
        top = jnp.concatenate([wt, zeros_h], axis=1)
        bot = jnp.concatenate([zeros_h, wt], axis=1)
        return jnp.concatenate([top, bot], axis=0)

    wmix_bd = jnp.stack([_bd(w.T) for w in params['mixs']])       # (NBm, 2H, 2H)
    wout_all = jnp.stack([o['w'] for o in params['outs']])        # (NBm, O, 2H) (torch layout)
    bout_all = jnp.stack([o['b'].reshape(-1, 1)
                          for o in params['outs']])               # (NBm, O, 1)

    band_w = lambda i, b: (jnp.maximum(b - 1, 0), 0, 0)   # mix/out weights
    band_x = lambda i, b: (jnp.maximum(b - 1, 0), i, 0)   # per-stage slab outputs
    band_t = lambda i, b: (jnp.maximum(b - 1, 0), 0, i)   # per-stage O-major outputs

    kernel = _make_fused_kernel(tn, H, O)

    fx, xx, sbo_t, sba_t = pl.pallas_call(
        kernel,
        out_shape=(
            jax.ShapeDtypeStruct((NB, n_pad, H2), jnp.bfloat16),   # [sin_fx|cos_fx]
            jax.ShapeDtypeStruct((NBm, n_pad, H2), jnp.bfloat16),  # [sin_x|cos_x]
            jax.ShapeDtypeStruct((NBm, O, n_pad), jnp.float32),    # sb_out (O-major)
            jax.ShapeDtypeStruct((NBm, O, n_pad), jnp.float32),    # sb_acc (O-major)
        ),
        grid_spec=pltpu.PrefetchScalarGridSpec(
            num_scalar_prefetch=0,
            grid=(n_tiles, NB),
            in_specs=[
                pl.BlockSpec((tn, 2), lambda i, b: (i, 0)),        # x (resident/band)
                pl.BlockSpec((1, 2, H), lambda i, b: (b, 0, 0)),   # fan weights
                pl.BlockSpec((1, 1, H), lambda i, b: (b, 0, 0)),   # fan phase
                pl.BlockSpec((1, H2, H2), band_w),                 # blockdiag(Wmix^T)
                pl.BlockSpec((1, O, H2), band_w),                  # Wout (out, 2H)
                pl.BlockSpec((1, O, 1), band_w),                   # bout (column)
            ],
            out_specs=[
                pl.BlockSpec((1, tn, H2), lambda i, b: (b, i, 0)),
                pl.BlockSpec((1, tn, H2), band_x),
                pl.BlockSpec((1, O, tn), band_t),
                pl.BlockSpec((1, O, tn), band_t),
            ],
            scratch_shapes=[
                pltpu.VMEM((tn, H2), jnp.float32),   # carried [sin_x | cos_x]
                pltpu.VMEM((O, tn), jnp.float32),    # carried acc (O-major)
                pltpu.VMEM((tn, H2), jnp.float32),   # cached x lane-broadcasts
            ]),
        compiler_params=pltpu.CompilerParams(
            dimension_semantics=("parallel", "arbitrary")),
    )(x_flat, wfan_all, phase_all, wmix_bd, wout_all, bout_all)

    def _split_slab(a, j):
        s = a[j, :N, :H].reshape(bs, npts, H)
        c = a[j, :N, H:].reshape(bs, npts, H)
        return s, c

    sin_fx, cos_fx, sin_x, cos_x = [], [], [], []
    for j in range(NB):
        s, c = _split_slab(fx, j)
        sin_fx.append(s)
        cos_fx.append(c)
    for j in range(NBm):
        s, c = _split_slab(xx, j)
        sin_x.append(s)
        cos_x.append(c)

    def _split_t(a, j):
        return a[j, :, :N].T.reshape(bs, npts, O)

    sb_out = [_split_t(sbo_t, j) for j in range(NBm)]
    sb_acc = [_split_t(sba_t, j) for j in range(NBm)]

    return {'sin_fx': sin_fx, 'cos_fx': cos_fx, 'sin_x': sin_x, 'cos_x': cos_x,
            'sb_out': sb_out, 'sb_acc': sb_acc}


# ----------------------------- pure-JAX reference ------------------------------

def reference_forward(x, params, hiddim, outdim):
    def fan(x3, fp):
        direction = jnp.stack([jnp.cos(fp['angles']), jnp.sin(fp['angles'])], -1)
        w = fp['radius'][:, None] * direction            # (H, 2)
        o = jnp.einsum('bnd,hd->bnh', x3, w) + fp['phase']
        return jnp.sin(o), jnp.cos(o)

    sin_x, cos_x = fan(x, params['fans'][0])
    sin_fx, cos_fx = [sin_x], [cos_x]
    sin_x_lst, cos_x_lst, out_lst, acc_lst = [], [], [], []
    acc = 0.0
    for i in range(len(params['mixs'])):
        sin_y, cos_y = fan(x, params['fans'][i + 1])
        sin_fx.append(sin_y)
        cos_fx.append(cos_y)
        m_sin = sin_x @ params['mixs'][i].T
        m_cos = cos_x @ params['mixs'][i].T
        sin_x = m_sin * cos_y + m_cos * sin_y
        cos_x = m_cos * cos_y - m_sin * sin_y
        sin_x_lst.append(sin_x)
        cos_x_lst.append(cos_x)
        cur = jnp.concatenate([sin_x, cos_x], -1) @ params['outs'][i]['w'].T \
              + params['outs'][i]['b']
        out_lst.append(cur)
        acc = acc + cur
        acc_lst.append(acc)
    return {'sin_fx': sin_fx, 'cos_fx': cos_fx,
            'sin_x': sin_x_lst, 'cos_x': cos_x_lst,
            'sb_out': out_lst, 'sb_acc': acc_lst}


# ------------------------------------ main -------------------------------------

if __name__ == "__main__":
    bs, npts = 2, 128
    hiddim, outdim = 128, 8
    bws = [(1, 2), (2, 4), (4, 8)]            # 3 fans -> 2 mix/out stages
    la, ua = 0.0, float(np.pi)

    key = jax.random.PRNGKey(0)
    key, kx, kp = jax.random.split(key, 3)
    x = jax.random.uniform(kx, (bs, npts, 2), jnp.float32, minval=-1.0, maxval=1.0)
    params = make_params(kp, bws, hiddim, outdim, la, ua)

    out = subband_series_forward(x, params, hiddim, outdim)
    jax.block_until_ready(out)

    ref = reference_forward(x, params, hiddim, outdim)
    # Saved activations are emitted in bf16 -> looser tolerance for them;
    # sb_out / sb_acc are computed from the f32 carry -> tight tolerance.
    tol = {'sin_fx': (2e-2, 2e-2), 'cos_fx': (2e-2, 2e-2),
           'sin_x': (2e-2, 2e-2), 'cos_x': (2e-2, 2e-2),
           'sb_out': (2e-4, 2e-4), 'sb_acc': (2e-4, 2e-4)}
    for k in ('sin_fx', 'cos_fx', 'sin_x', 'cos_x', 'sb_out', 'sb_acc'):
        rtol, atol = tol[k]
        for a, b in zip(out[k], ref[k]):
            np.testing.assert_allclose(np.asarray(a).astype(np.float32),
                                       np.asarray(b).astype(np.float32),
                                       rtol=rtol, atol=atol)

    print("KERNEL_OK")
</pallas_src>

<mosaic_0001>
module attributes {stable_mosaic.version = 11 : i64} {
  func.func @kernel(%arg0: i32, %arg1: i32, %arg2: memref<256x2xf32, #tpu.memory_space<vmem>>, %arg3: memref<1x2x128xf32, #tpu.memory_space<vmem>>, %arg4: memref<1x1x128xf32, #tpu.memory_space<vmem>>, %arg5: memref<1x256x256xf32, #tpu.memory_space<vmem>>, %arg6: memref<1x8x256xf32, #tpu.memory_space<vmem>>, %arg7: memref<1x8x1xf32, #tpu.memory_space<vmem>>, %arg8: memref<1x256x256xbf16, #tpu.memory_space<vmem>>, %arg9: memref<1x256x256xbf16, #tpu.memory_space<vmem>>, %arg10: memref<1x8x256xf32, #tpu.memory_space<vmem>>, %arg11: memref<1x8x256xf32, #tpu.memory_space<vmem>>, %arg12: memref<256x256xf32, #tpu.memory_space<vmem>>, %arg13: memref<8x256xf32, #tpu.memory_space<vmem>>, %arg14: memref<256x256xf32, #tpu.memory_space<vmem>>) attributes {dimension_semantics = [#tpu.dimension_semantics<parallel>, #tpu.dimension_semantics<arbitrary>], iteration_bounds = array<i64: 1, 3>, scalar_prefetch = 0 : i64, scratch_operands = 3 : i64, tpu.core_type = #tpu.core_type<tc>, window_params = [{transform_indices = @transform_0, window_bounds = array<i64: 256, 2>}, {transform_indices = @transform_1, window_bounds = array<i64: 1, 2, 128>}, {transform_indices = @transform_2, window_bounds = array<i64: 1, 1, 128>}, {transform_indices = @transform_3, window_bounds = array<i64: 1, 256, 256>}, {transform_indices = @transform_4, window_bounds = array<i64: 1, 8, 256>}, {transform_indices = @transform_5, window_bounds = array<i64: 1, 8, 1>}, {transform_indices = @transform_6, window_bounds = array<i64: 1, 256, 256>}, {transform_indices = @transform_7, window_bounds = array<i64: 1, 256, 256>}, {transform_indices = @transform_8, window_bounds = array<i64: 1, 8, 256>}, {transform_indices = @transform_9, window_bounds = array<i64: 1, 8, 256>}]} {
    %c0_i32 = arith.constant 0 : i32
    %0 = arith.cmpi eq, %arg1, %c0_i32 : i32
    %1 = arith.extui %0 : i1 to i32
    %c0_i32_0 = arith.constant 0 : i32
    %2 = arith.cmpi ne, %1, %c0_i32_0 : i32
    scf.if %2 {
      %c0_16 = arith.constant 0 : index
      %c0_17 = arith.constant 0 : index
      %31 = vector.load %arg2[%c0_16, %c0_17] : memref<256x2xf32, #tpu.memory_space<vmem>>, vector<256x2xf32>
      %32 = vector.extract_strided_slice %31 {offsets = [0, 0], sizes = [256, 1], strides = [1, 1]} : vector<256x2xf32> to vector<256x1xf32>
      %33 = vector.shape_cast %32 : vector<256x1xf32> to vector<256x1xf32>
      %34 = vector.broadcast %33 : vector<256x1xf32> to vector<256x128xf32>
      %c0_18 = arith.constant 0 : index
      %c0_19 = arith.constant 0 : index
      %35 = vector.load %arg14[%c0_18, %c0_19] : memref<256x256xf32, #tpu.memory_space<vmem>>, vector<256x128xf32>
      tpu.vector_store %arg14[%c0_18, %c0_19], %34 {strides = array<i32>} : memref<256x256xf32, #tpu.memory_space<vmem>>, vector<256x128xf32>,
      %36 = vector.extract_strided_slice %31 {offsets = [0, 1], sizes = [256, 1], strides = [1, 1]} : vector<256x2xf32> to vector<256x1xf32>
      %37 = vector.shape_cast %36 : vector<256x1xf32> to vector<256x1xf32>
      %38 = vector.broadcast %37 : vector<256x1xf32> to vector<256x128xf32>
      %c0_20 = arith.constant 0 : index
      %c128_21 = arith.constant 128 : index
      %39 = vector.load %arg14[%c0_20, %c128_21] : memref<256x256xf32, #tpu.memory_space<vmem>>, vector<256x128xf32>
      tpu.vector_store %arg14[%c0_20, %c128_21], %38 {strides = array<i32>} : memref<256x256xf32, #tpu.memory_space<vmem>>, vector<256x128xf32>,
    } else {
    }
    %c0 = arith.constant 0 : index
    %c0_1 = arith.constant 0 : index
    %c0_2 = arith.constant 0 : index
    %3 = vector.load %arg3[%c0, %c0_1, %c0_2] : memref<1x2x128xf32, #tpu.memory_space<vmem>>, vector<1x2x128xf32>
    %4 = vector.shape_cast %3 : vector<1x2x128xf32> to vector<2x128xf32>
    %c0_3 = arith.constant 0 : index
    %c0_4 = arith.constant 0 : index
    %5 = vector.load %arg14[%c0_3, %c0_4] : memref<256x256xf32, #tpu.memory_space<vmem>>, vector<256x128xf32>
    %6 = vector.extract_strided_slice %4 {offsets = [0, 0], sizes = [1, 128], strides = [1, 1]} : vector<2x128xf32> to vector<1x128xf32>
    %7 = vector.broadcast %6 : vector<1x128xf32> to vector<256x128xf32>
    %8 = arith.mulf %5, %7 : vector<256x128xf32>
    %c0_5 = arith.constant 0 : index
    %c128 = arith.constant 128 : index
    %9 = vector.load %arg14[%c0_5, %c128] : memref<256x256xf32, #tpu.memory_space<vmem>>, vector<256x128xf32>
    %10 = vector.extract_strided_slice %4 {offsets = [1, 0], sizes = [1, 128], strides = [1, 1]} : vector<2x128xf32> to vector<1x128xf32>
    %11 = vector.broadcast %10 : vector<1x128xf32> to vector<256x128xf32>
    %12 = arith.mulf %9, %11 : vector<256x128xf32>
    %13 = arith.addf %8, %12 : vector<256x128xf32>
    %c0_6 = arith.constant 0 : index
    %c0_7 = arith.constant 0 : index
    %c0_8 = arith.constant 0 : index
    %14 = vector.load %arg4[%c0_6, %c0_7, %c0_8] : memref<1x1x128xf32, #tpu.memory_space<vmem>>, vector<1x1x128xf32>
    %15 = vector.shape_cast %14 : vector<1x1x128xf32> to vector<1x128xf32>
    %16 = vector.broadcast %15 : vector<1x128xf32> to vector<256x128xf32>
    %17 = arith.addf %13, %16 : vector<256x128xf32>
    %18 = math.sin %17 : vector<256x128xf32>
    %19 = math.cos %17 : vector<256x128xf32>
    %20 = tpu.concatenate %18, %19 in 1 : vector<256x128xf32>, vector<256x128xf32> -> vector<256x256xf32>
    %21 = arith.truncf %20 : vector<256x256xf32> to vector<256x256xbf16>
    %c0_9 = arith.constant 0 : index
    %c0_10 = arith.constant 0 : index
    %c0_11 = arith.constant 0 : index
    %22 = vector.load %arg8[%c0_9, %c0_10, %c0_11] : memref<1x256x256xbf16, #tpu.memory_space<vmem>>, vector<1x256x256xbf16>
    %23 = vector.shape_cast %22 : vector<1x256x256xbf16> to vector<256x256xbf16>
    %24 = vector.shape_cast %21 : vector<256x256xbf16> to vector<1x256x256xbf16>
    tpu.vector_store %arg8[%c0_9, %c0_10, %c0_11], %24 {strides = array<i32>} : memref<1x256x256xbf16, #tpu.memory_space<vmem>>, vector<1x256x256xbf16>,
    %c0_i32_12 = arith.constant 0 : i32
    %25 = arith.cmpi eq, %arg1, %c0_i32_12 : i32
    %26 = arith.extui %25 : i1 to i32
    %c0_i32_13 = arith.constant 0 : i32
    %27 = arith.cmpi ne, %26, %c0_i32_13 : i32
    scf.if %27 {
      %c0_16 = arith.constant 0 : index
      %c0_17 = arith.constant 0 : index
      %31 = vector.load %arg12[%c0_16, %c0_17] : memref<256x256xf32, #tpu.memory_space<vmem>>, vector<256x128xf32>
      tpu.vector_store %arg12[%c0_16, %c0_17], %18 {strides = array<i32>} : memref<256x256xf32, #tpu.memory_space<vmem>>, vector<256x128xf32>,
      %c0_18 = arith.constant 0 : index
      %c128_19 = arith.constant 128 : index
      %32 = vector.load %arg12[%c0_18, %c128_19] : memref<256x256xf32, #tpu.memory_space<vmem>>, vector<256x128xf32>
      tpu.vector_store %arg12[%c0_18, %c128_19], %19 {strides = array<i32>} : memref<256x256xf32, #tpu.memory_space<vmem>>, vector<256x128xf32>,
      %cst = arith.constant 0.000000e+00 : f32
      %33 = vector.broadcast %cst : f32 to vector<8x256xf32>
      %c0_20 = arith.constant 0 : index
      %c0_21 = arith.constant 0 : index
      %34 = vector.load %arg13[%c0_20, %c0_21] : memref<8x256xf32, #tpu.memory_space<vmem>>, vector<8x256xf32>
      tpu.vector_store %arg13[%c0_20, %c0_21], %33 {strides = array<i32>} : memref<8x256xf32, #tpu.memory_space<vmem>>, vector<8x256xf32>,
      %cst_22 = arith.constant 0.000000e+00 : bf16
      %35 = vector.broadcast %cst_22 : bf16 to vector<256x256xbf16>
      %c0_23 = arith.constant 0 : index
      %c0_24 = arith.constant 0 : index
      %c0_25 = arith.constant 0 : index
      %36 = vector.load %arg9[%c0_23, %c0_24, %c0_25] : memref<1x256x256xbf16, #tpu.memory_space<vmem>>, vector<1x256x256xbf16>
      %37 = vector.shape_cast %36 : vector<1x256x256xbf16> to vector<256x256xbf16>
      %38 = vector.shape_cast %35 : vector<256x256xbf16> to vector<1x256x256xbf16>
      tpu.vector_store %arg9[%c0_23, %c0_24, %c0_25], %38 {strides = array<i32>} : memref<1x256x256xbf16, #tpu.memory_space<vmem>>, vector<1x256x256xbf16>,
      %cst_26 = arith.constant 0.000000e+00 : f32
      %39 = vector.broadcast %cst_26 : f32 to vector<8x256xf32>
      %c0_27 = arith.constant 0 : index
      %c0_28 = arith.constant 0 : index
      %c0_29 = arith.constant 0 : index
      %40 = vector.load %arg10[%c0_27, %c0_28, %c0_29] : memref<1x8x256xf32, #tpu.memory_space<vmem>>, vector<1x8x256xf32>
      %41 = vector.shape_cast %40 : vector<1x8x256xf32> to vector<8x256xf32>
      %42 = vector.shape_cast %39 : vector<8x256xf32> to vector<1x8x256xf32>
      tpu.vector_store %arg10[%c0_27, %c0_28, %c0_29], %42 {strides = array<i32>} : memref<1x8x256xf32, #tpu.memory_space<vmem>>, vector<1x8x256xf32>,
      %cst_30 = arith.constant 0.000000e+00 : f32
      %43 = vector.broadcast %cst_30 : f32 to vector<8x256xf32>
      %c0_31 = arith.constant 0 : index
      %c0_32 = arith.constant 0 : index
      %c0_33 = arith.constant 0 : index
      %44 = vector.load %arg11[%c0_31, %c0_32, %c0_33] : memref<1x8x256xf32, #tpu.memory_space<vmem>>, vector<1x8x256xf32>
      %45 = vector.shape_cast %44 : vector<1x8x256xf32> to vector<8x256xf32>
      %46 = vector.shape_cast %43 : vector<8x256xf32> to vector<1x8x256xf32>
      tpu.vector_store %arg11[%c0_31, %c0_32, %c0_33], %46 {strides = array<i32>} : memref<1x8x256xf32, #tpu.memory_space<vmem>>, vector<1x8x256xf32>,
    } else {
    }
    %c0_i32_14 = arith.constant 0 : i32
    %28 = arith.cmpi sgt, %arg1, %c0_i32_14 : i32
    %29 = arith.extui %28 : i1 to i32
    %c0_i32_15 = arith.constant 0 : i32
    %30 = arith.cmpi ne, %29, %c0_i32_15 : i32
    scf.if %30 {
      %c0_16 = arith.constant 0 : index
      %c0_17 = arith.constant 0 : index
      %31 = vector.load %arg12[%c0_16, %c0_17] : memref<256x256xf32, #tpu.memory_space<vmem>>, vector<256x256xf32>
      %c0_18 = arith.constant 0 : index
      %c0_19 = arith.constant 0 : index
      %c0_20 = arith.constant 0 : index
      %32 = vector.load %arg5[%c0_18, %c0_19, %c0_20] : memref<1x256x256xf32, #tpu.memory_space<vmem>>, vector<1x256x256xf32>
      %33 = vector.shape_cast %32 : vector<1x256x256xf32> to vector<256x256xf32>
      %cst = arith.constant dense<0.000000e+00> : vector<256x256xf32>
      %34 = tpu.matmul %31, %33, %cst {dimension_numbers = #tpu.dot_dimension_numbers<[1], [0], [0], [1], [0, 0, 1, 1], [], []>} : vector<256x256xf32>, vector<256x256xf32>, vector<256x256xf32> -> vector<256x256xf32>
      %35 = vector.extract_strided_slice %34 {offsets = [0, 0], sizes = [256, 128], strides = [1, 1]} : vector<256x256xf32> to vector<256x128xf32>
      %36 = vector.extract_strided_slice %34 {offsets = [0, 128], sizes = [256, 128], strides = [1, 1]} : vector<256x256xf32> to vector<256x128xf32>
      %37 = arith.mulf %35, %19 : vector<256x128xf32>
      %38 = arith.mulf %36, %18 : vector<256x128xf32>
      %39 = arith.addf %37, %38 : vector<256x128xf32>
      %40 = arith.mulf %36, %19 : vector<256x128xf32>
      %41 = arith.mulf %35, %18 : vector<256x128xf32>
      %42 = arith.subf %40, %41 : vector<256x128xf32>
      %43 = tpu.concatenate %39, %42 in 1 : vector<256x128xf32>, vector<256x128xf32> -> vector<256x256xf32>
      %c0_21 = arith.constant 0 : index
      %c0_22 = arith.constant 0 : index
      %44 = vector.load %arg12[%c0_21, %c0_22] : memref<256x256xf32, #tpu.memory_space<vmem>>, vector<256x256xf32>
      tpu.vector_store %arg12[%c0_21, %c0_22], %43 {strides = array<i32>} : memref<256x256xf32, #tpu.memory_space<vmem>>, vector<256x256xf32>,
      %45 = arith.truncf %43 : vector<256x256xf32> to vector<256x256xbf16>
      %c0_23 = arith.constant 0 : index
      %c0_24 = arith.constant 0 : index
      %c0_25 = arith.constant 0 : index
      %46 = vector.load %arg9[%c0_23, %c0_24, %c0_25] : memref<1x256x256xbf16, #tpu.memory_space<vmem>>, vector<1x256x256xbf16>
      %47 = vector.shape_cast %46 : vector<1x256x256xbf16> to vector<256x256xbf16>
      %48 = vector.shape_cast %45 : vector<256x256xbf16> to vector<1x256x256xbf16>
      tpu.vector_store %arg9[%c0_23, %c0_24, %c0_25], %48 {strides = array<i32>} : memref<1x256x256xbf16, #tpu.memory_space<vmem>>, vector<1x256x256xbf16>,
      %c0_26 = arith.constant 0 : index
      %c0_27 = arith.constant 0 : index
      %c0_28 = arith.constant 0 : index
      %49 = vector.load %arg6[%c0_26, %c0_27, %c0_28] : memref<1x8x256xf32, #tpu.memory_space<vmem>>, vector<1x8x256xf32>
      %50 = vector.shape_cast %49 : vector<1x8x256xf32> to vector<8x256xf32>
      %cst_29 = arith.constant dense<0.000000e+00> : vector<8x256xf32>
      %51 = tpu.matmul %50, %43, %cst_29 {dimension_numbers = #tpu.dot_dimension_numbers<[1], [1], [0], [0], [0, 0, 1, 0], [], []>} : vector<8x256xf32>, vector<256x256xf32>, vector<8x256xf32> -> vector<8x256xf32>
      %c0_30 = arith.constant 0 : index
      %c0_31 = arith.constant 0 : index
      %c0_32 = arith.constant 0 : index
      %52 = vector.load %arg7[%c0_30, %c0_31, %c0_32] : memref<1x8x1xf32, #tpu.memory_space<vmem>>, vector<1x8x1xf32>
      %53 = vector.shape_cast %52 : vector<1x8x1xf32> to vector<8x1xf32>
      %54 = vector.broadcast %53 : vector<8x1xf32> to vector<8x256xf32>
      %55 = arith.addf %51, %54 : vector<8x256xf32>
      %c0_33 = arith.constant 0 : index
      %c0_34 = arith.constant 0 : index
      %56 = vector.load %arg13[%c0_33, %c0_34] : memref<8x256xf32, #tpu.memory_space<vmem>>, vector<8x256xf32>
      %57 = arith.addf %56, %55 : vector<8x256xf32>
      %c0_35 = arith.constant 0 : index
      %c0_36 = arith.constant 0 : index
      %58 = vector.load %arg13[%c0_35, %c0_36] : memref<8x256xf32, #tpu.memory_space<vmem>>, vector<8x256xf32>
      tpu.vector_store %arg13[%c0_35, %c0_36], %57 {strides = array<i32>} : memref<8x256xf32, #tpu.memory_space<vmem>>, vector<8x256xf32>,
      %c0_37 = arith.constant 0 : index
      %c0_38 = arith.constant 0 : index
      %c0_39 = arith.constant 0 : index
      %59 = vector.load %arg10[%c0_37, %c0_38, %c0_39] : memref<1x8x256xf32, #tpu.memory_space<vmem>>, vector<1x8x256xf32>
      %60 = vector.shape_cast %59 : vector<1x8x256xf32> to vector<8x256xf32>
      %61 = vector.shape_cast %55 : vector<8x256xf32> to vector<1x8x256xf32>
      tpu.vector_store %arg10[%c0_37, %c0_38, %c0_39], %61 {strides = array<i32>} : memref<1x8x256xf32, #tpu.memory_space<vmem>>, vector<1x8x256xf32>,
      %c0_40 = arith.constant 0 : index
      %c0_41 = arith.constant 0 : index
      %c0_42 = arith.constant 0 : index
      %62 = vector.load %arg11[%c0_40, %c0_41, %c0_42] : memref<1x8x256xf32, #tpu.memory_space<vmem>>, vector<1x8x256xf32>
      %63 = vector.shape_cast %62 : vector<1x8x256xf32> to vector<8x256xf32>
      %64 = vector.shape_cast %57 : vector<8x256xf32> to vector<1x8x256xf32>
      tpu.vector_store %arg11[%c0_40, %c0_41, %c0_42], %64 {strides = array<i32>} : memref<1x8x256xf32, #tpu.memory_space<vmem>>, vector<1x8x256xf32>,
    } else {
    }
    return
  }
  func.func @transform_0(%arg0: i32, %arg1: i32) -> (i32, i32) {
    %c0_i32 = arith.constant 0 : i32
    %c0_i32_0 = arith.constant 0 : i32
    return %arg0, %c0_i32 : i32, i32
  }
  func.func @transform_1(%arg0: i32, %arg1: i32) -> (i32, i32, i32) {
    %c0_i32 = arith.constant 0 : i32
    %c0_i32_0 = arith.constant 0 : i32
    %c0_i32_1 = arith.constant 0 : i32
    return %arg1, %c0_i32, %c0_i32_0 : i32, i32, i32
  }
  func.func @transform_2(%arg0: i32, %arg1: i32) -> (i32, i32, i32) {
    %c0_i32 = arith.constant 0 : i32
    %c0_i32_0 = arith.constant 0 : i32
    %c0_i32_1 = arith.constant 0 : i32
    return %arg1, %c0_i32, %c0_i32_0 : i32, i32, i32
  }
  func.func @transform_3(%arg0: i32, %arg1: i32) -> (i32, i32, i32) {
    %c1_i32 = arith.constant 1 : i32
    %0 = arith.subi %arg1, %c1_i32 : i32
    %c0_i32 = arith.constant 0 : i32
    %1 = arith.maxsi %0, %c0_i32 : i32
    %c0_i32_0 = arith.constant 0 : i32
    %c0_i32_1 = arith.constant 0 : i32
    %c0_i32_2 = arith.constant 0 : i32
    return %1, %c0_i32_0, %c0_i32_1 : i32, i32, i32
  }
  func.func @transform_4(%arg0: i32, %arg1: i32) -> (i32, i32, i32) {
    %c1_i32 = arith.constant 1 : i32
    %0 = arith.subi %arg1, %c1_i32 : i32
    %c0_i32 = arith.constant 0 : i32
    %1 = arith.maxsi %0, %c0_i32 : i32
    %c0_i32_0 = arith.constant 0 : i32
    %c0_i32_1 = arith.constant 0 : i32
    %c0_i32_2 = arith.constant 0 : i32
    return %1, %c0_i32_0, %c0_i32_1 : i32, i32, i32
  }
  func.func @transform_5(%arg0: i32, %arg1: i32) -> (i32, i32, i32) {
    %c1_i32 = arith.constant 1 : i32
    %0 = arith.subi %arg1, %c1_i32 : i32
    %c0_i32 = arith.constant 0 : i32
    %1 = arith.maxsi %0, %c0_i32 : i32
    %c0_i32_0 = arith.constant 0 : i32
    %c0_i32_1 = arith.constant 0 : i32
    %c0_i32_2 = arith.constant 0 : i32
    return %1, %c0_i32_0, %c0_i32_1 : i32, i32, i32
  }
  func.func @transform_6(%arg0: i32, %arg1: i32) -> (i32, i32, i32) {
    %c0_i32 = arith.constant 0 : i32
    %c0_i32_0 = arith.constant 0 : i32
    return %arg1, %arg0, %c0_i32 : i32, i32, i32
  }
  func.func @transform_7(%arg0: i32, %arg1: i32) -> (i32, i32, i32) {
    %c1_i32 = arith.constant 1 : i32
    %0 = arith.subi %arg1, %c1_i32 : i32
    %c0_i32 = arith.constant 0 : i32
    %1 = arith.maxsi %0, %c0_i32 : i32
    %c0_i32_0 = arith.constant 0 : i32
    %c0_i32_1 = arith.constant 0 : i32
    return %1, %arg0, %c0_i32_0 : i32, i32, i32
  }
  func.func @transform_8(%arg0: i32, %arg1: i32) -> (i32, i32, i32) {
    %c1_i32 = arith.constant 1 : i32
    %0 = arith.subi %arg1, %c1_i32 : i32
    %c0_i32 = arith.constant 0 : i32
    %1 = arith.maxsi %0, %c0_i32 : i32
    %c0_i32_0 = arith.constant 0 : i32
    %c0_i32_1 = arith.constant 0 : i32
    return %1, %c0_i32_0, %arg0 : i32, i32, i32
  }
  func.func @transform_9(%arg0: i32, %arg1: i32) -> (i32, i32, i32) {
    %c1_i32 = arith.constant 1 : i32
    %0 = arith.subi %arg1, %c1_i32 : i32
    %c0_i32 = arith.constant 0 : i32
    %1 = arith.maxsi %0, %c0_i32 : i32
    %c0_i32_0 = arith.constant 0 : i32
    %c0_i32_1 = arith.constant 0 : i32
    return %1, %c0_i32_0, %arg0 : i32, i32, i32
  }
}

</mosaic_0001>

<llo_original>
// kernel: tpu_custom_call.1
$region0: #{tpu_custom_call.1}
  #allocation0 [shape = 'u32[]', space=smem, size = 0x4, offset = 0x4, fixed_abs, tag = 'smem constant byte address 0x4 - core index']
  #allocation1 [shape = 'u32[144,128]{1,0:T(1,128)}', space=vmem, size = 0x12000, scoped, tag = 'internal scratch']
  #allocation2 [shape = 'f32[256,256]{1,0:T(8,128)}', space=vmem, size = 0x40000, scoped, tag = 'scratch operand']
  #allocation3 [shape = 'f32[8,256]{1,0:T(8,128)}', space=vmem, size = 0x2000, scoped, tag = 'scratch operand']
  #allocation4 [shape = 'f32[256,256]{1,0:T(8,128)}', space=vmem, size = 0x40000, scoped, tag = 'scratch operand']
  %s0 = inlined_call_operand.vmem [shape: f32[256,2], index: 0, kind: input, shape index: {}]
  %s1 = inlined_call_operand.vmem [shape: f32[3,2,128], index: 1, kind: input, shape index: {}]
  %s2 = inlined_call_operand.vmem [shape: f32[3,1,128], index: 2, kind: input, shape index: {}]
  %s3 = inlined_call_operand.hbm [shape: f32[2,256,256], index: 3, kind: input, shape index: {}]
  %s4 = inlined_call_operand.vmem [shape: f32[2,8,256], index: 4, kind: input, shape index: {}]
  %s5 = inlined_call_operand.vmem [shape: f32[2,8,1], index: 5, kind: input, shape index: {}]
  %s6 = inlined_call_operand.hbm [shape: bf16[3,256,256], index: 6, kind: output, shape index: {0}]
  %s7 = inlined_call_operand.hbm [shape: bf16[2,256,256], index: 7, kind: output, shape index: {1}]
  %s8 = inlined_call_operand.hbm [shape: f32[2,8,256], index: 8, kind: output, shape index: {2}]
  %s9 = inlined_call_operand.hbm [shape: f32[2,8,256], index: 9, kind: output, shape index: {3}]
  %10 = xla_tuple %s6, %s7, %s8, %s9
  %s11 = sld [smem:[#allocation0]]
  $region97: #{tpu_custom_call.1} parent=0
    _
  %s13 = ssub.s32 1, %s11
  %s14 = scalar_select 0, %s13, %s11
  $region1: #{tpu_custom_call.1} parent=0
    #allocation5 [shape = 'u8[524288]{0}', space=vmem, size = 0x80000, scoped, tag = 'input window, operand 3']
    #allocation6 [shape = 's32[2]{0}', space=sflag, size = 0x8, scoped, tag = 'scoped memory for tpu_custom_call.1']
    #allocation7 [shape = 's32[2]{0}', space=sflag, size = 0x8, scoped, tag = 'scoped memory for tpu_custom_call.1']
    #allocation8 [shape = 'u8[262144]{0}', space=vmem, size = 0x40000, scoped, tag = 'output window, operand 0']
    #allocation9 [shape = 'u8[262144]{0}', space=vmem, size = 0x40000, scoped, tag = 'output window, operand 1']
    #allocation10 [shape = 's32[2]{0}', space=sflag, size = 0x8, scoped, tag = 'scoped memory for tpu_custom_call.1']
    #allocation11 [shape = 'u8[16384]{0}', space=vmem, size = 0x4000, scoped, tag = 'output window, operand 2']
    #allocation12 [shape = 'u8[16384]{0}', space=vmem, size = 0x4000, scoped, tag = 'output window, operand 3']
    #allocation13 [shape = 's32[2]{0}', space=sflag, size = 0x8, scoped, tag = 'scoped memory for tpu_custom_call.1']
    %15 = vsyncpa [#allocation6], 0
    %s16 = scalar_lea.sflag [#allocation6], 1
    %17 = vsyncpa %s16, 0
    %18 = vsyncpa [#allocation7], 0
    %s19 = scalar_lea.sflag [#allocation7], 1
    %20 = vsyncpa %s19, 0
    %21 = vsyncpa [#allocation10], 0
    %s22 = scalar_lea.sflag [#allocation10], 1
    %23 = vsyncpa %s22, 0
    %24 = vsyncpa [#allocation13], 0
    %s25 = scalar_lea.sflag [#allocation13], 1
    %26 = vsyncpa %s25, 0
    loop: start=0, step=1, limit=5
    $region2: #{tpu_custom_call.1} parent=1 // loop_pre_header
      _
    $region3: #{tpu_custom_call.1} parent=1 // loop_header
      %s28 = sphi 0, %s32
      %p29 = scmp.ge.s32.totalorder %s28, 5
      %s35 = sphi 0, %s47
      %s36 = sphi 0, %s43
      %s37 = sphi 0, %s35
      %s38 = sphi 0, %s36
      %s39 = sphi 0, %s37
      %s40 = sphi 0, %s38
      %s50 = sphi 0, %s52
      %s53 = sphi 0, %s50
      %s54 = sphi 0, %s53
      %s70 = sphi 0, %s54
      %s76 = sphi 0, %s78
      %s79 = sphi 0, %s76
      %s80 = sphi 0, %s79
      %s96 = sphi 0, %s80
      %s102 = sphi 0, %s104
      %s105 = sphi 0, %s102
      %s106 = sphi 0, %s105
      %s122 = sphi 0, %s106
      %s134 = sphi 0, %s136
      %s137 = sphi 0, %s134
      %s138 = sphi 0, %s137
      %s154 = sphi 0, %s138
      %s166 = sphi 0, %s168
      %s169 = sphi 0, %s166
      %s170 = sphi 0, %s169
      %s186 = sphi 0, %s170
      %s198 = sphi 0, %s200
      %s201 = sphi 0, %s198
      %s202 = sphi 0, %s201
      %s218 = sphi 0, %s202
      %s226 = sphi 0, %s228
      %s229 = sphi 0, %s226
      %s230 = sphi 0, %s229
      %s246 = sphi 0, %s230
      %s260 = sphi 0, %s262
      %s263 = sphi 0, %s260
      %s264 = sphi 0, %s263
      %s280 = sphi 0, %s264
      %s294 = sphi 0, %s296
      %s297 = sphi 0, %s294
      %s298 = sphi 0, %s297
      %s314 = sphi 0, %s298
      %s328 = sphi 0, %s330
      %s331 = sphi 0, %s328
      %s332 = sphi 0, %s331
      %s348 = sphi 0, %s332
    $region4: #{tpu_custom_call.1} parent=1 // loop_header_branch
      %31 = sbr.rel (%p29) target = $region8
    $region5: #{tpu_custom_call.1} parent=1 // loop_body
      %s33 = ssub.s32 %s28, 1
      %s34 = ssub.s32 %s28, 2
      %s41 = sadd.s32 1, %s36
      %p42 = scmp.ge.s32.totalorder %s41, 3
      %s43 = scalar_select %p42, 0, %s41
      %s44 = sadd.s32 1, %s35
      %s45 = scalar_select %p42, %s44, %s35
      %p46 = scmp.ge.s32.totalorder %s45, 1
      %s47 = scalar_select %p46, 0, %s45
      %s48 = ssub.s32 %s35, %s47
      %p49 = scmp.eq.s32.totalorder %s48, 0
      %s51 = sadd.s32 %s50, 1
      %s52 = scalar_select %p49, %s50, %s51
      %p55 = pneg %p49
      %p56 = scmp.eq.s32.totalorder %s28, 2
      %p57 = por %p55, %p56
      %p58 = scmp.ne.s32.totalorder %s50, %s53
      %p59 = scmp.eq.s32.totalorder %s28, 0
      %p60 = por %p58, %p59
      %p61 = scmp.ne.s32.totalorder %s50, %s53
      %p62 = scmp.eq.s32.totalorder %s33, 2
      %p63 = por %p61, %p62
      %p64 = scmp.ne.s32.totalorder %s53, %s54
      %p65 = scmp.eq.s32.totalorder %s33, 0
      %p66 = por %p64, %p65
      %p67 = scmp.ne.s32.totalorder %s53, %s54
      %p68 = scmp.eq.s32.totalorder %s34, 2
      %p69 = por %p67, %p68
      %p71 = scmp.ne.s32.totalorder %s54, %s70
      %p72 = scmp.eq.s32.totalorder %s34, 0
      %p73 = por %p71, %p72
      %s74 = ssub.s32 %s36, %s43
      %p75 = scmp.eq.s32.totalorder %s74, 0
      %s77 = sadd.s32 %s76, 1
      %s78 = scalar_select %p75, %s76, %s77
      %p81 = pneg %p75
      %p82 = scmp.eq.s32.totalorder %s28, 2
      %p83 = por %p81, %p82
      %p84 = scmp.ne.s32.totalorder %s76, %s79
      %p85 = scmp.eq.s32.totalorder %s28, 0
      %p86 = por %p84, %p85
      %p87 = scmp.ne.s32.totalorder %s76, %s79
      %p88 = scmp.eq.s32.totalorder %s33, 2
      %p89 = por %p87, %p88
      %p90 = scmp.ne.s32.totalorder %s79, %s80
      %p91 = scmp.eq.s32.totalorder %s33, 0
      %p92 = por %p90, %p91
      %p93 = scmp.ne.s32.totalorder %s79, %s80
      %p94 = scmp.eq.s32.totalorder %s34, 2
      %p95 = por %p93, %p94
      %p97 = scmp.ne.s32.totalorder %s80, %s96
      %p98 = scmp.eq.s32.totalorder %s34, 0
      %p99 = por %p97, %p98
      %s100 = ssub.s32 %s36, %s43
      %p101 = scmp.eq.s32.totalorder %s100, 0
      %s103 = sadd.s32 %s102, 1
      %s104 = scalar_select %p101, %s102, %s103
      %p107 = pneg %p101
      %p108 = scmp.eq.s32.totalorder %s28, 2
      %p109 = por %p107, %p108
      %p110 = scmp.ne.s32.totalorder %s102, %s105
      %p111 = scmp.eq.s32.totalorder %s28, 0
      %p112 = por %p110, %p111
      %p113 = scmp.ne.s32.totalorder %s102, %s105
      %p114 = scmp.eq.s32.totalorder %s33, 2
      %p115 = por %p113, %p114
      %p116 = scmp.ne.s32.totalorder %s105, %s106
      %p117 = scmp.eq.s32.totalorder %s33, 0
      %p118 = por %p116, %p117
      %p119 = scmp.ne.s32.totalorder %s105, %s106
      %p120 = scmp.eq.s32.totalorder %s34, 2
      %p121 = por %p119, %p120
      %p123 = scmp.ne.s32.totalorder %s106, %s122
      %p124 = scmp.eq.s32.totalorder %s34, 0
      %p125 = por %p123, %p124
      %s126 = ssub.s32 %s36, 1
      %p127 = scmp.gt.s32.totalorder %s126, 0
      %s128 = scalar_select %p127, %s126, 0
      %s129 = ssub.s32 %s43, 1
      %p130 = scmp.gt.s32.totalorder %s129, 0
      %s131 = scalar_select %p130, %s129, 0
      %s132 = ssub.s32 %s128, %s131
      %p133 = scmp.eq.s32.totalorder %s132, 0
      %s135 = sadd.s32 %s134, 1
      %s136 = scalar_select %p133, %s134, %s135
      %p139 = pneg %p133
      %p140 = scmp.eq.s32.totalorder %s28, 2
      %p141 = por %p139, %p140
      %p142 = scmp.ne.s32.totalorder %s134, %s137
      %p143 = scmp.eq.s32.totalorder %s28, 0
      %p144 = por %p142, %p143
      %p145 = scmp.ne.s32.totalorder %s134, %s137
      %p146 = scmp.eq.s32.totalorder %s33, 2
      %p147 = por %p145, %p146
      %p148 = scmp.ne.s32.totalorder %s137, %s138
      %p149 = scmp.eq.s32.totalorder %s33, 0
      %p150 = por %p148, %p149
      %p151 = scmp.ne.s32.totalorder %s137, %s138
      %p152 = scmp.eq.s32.totalorder %s34, 2
      %p153 = por %p151, %p152
      %p155 = scmp.ne.s32.totalorder %s138, %s154
      %p156 = scmp.eq.s32.totalorder %s34, 0
      %p157 = por %p155, %p156
      %s158 = ssub.s32 %s36, 1
      %p159 = scmp.gt.s32.totalorder %s158, 0
      %s160 = scalar_select %p159, %s158, 0
      %s161 = ssub.s32 %s43, 1
      %p162 = scmp.gt.s32.totalorder %s161, 0
      %s163 = scalar_select %p162, %s161, 0
      %s164 = ssub.s32 %s160, %s163
      %p165 = scmp.eq.s32.totalorder %s164, 0
      %s167 = sadd.s32 %s166, 1
      %s168 = scalar_select %p165, %s166, %s167
      %p171 = pneg %p165
      %p172 = scmp.eq.s32.totalorder %s28, 2
      %p173 = por %p171, %p172
      %p174 = scmp.ne.s32.totalorder %s166, %s169
      %p175 = scmp.eq.s32.totalorder %s28, 0
      %p176 = por %p174, %p175
      %p177 = scmp.ne.s32.totalorder %s166, %s169
      %p178 = scmp.eq.s32.totalorder %s33, 2
      %p179 = por %p177, %p178
      %p180 = scmp.ne.s32.totalorder %s169, %s170
      %p181 = scmp.eq.s32.totalorder %s33, 0
      %p182 = por %p180, %p181
      %p183 = scmp.ne.s32.totalorder %s169, %s170
      %p184 = scmp.eq.s32.totalorder %s34, 2
      %p185 = por %p183, %p184
      %p187 = scmp.ne.s32.totalorder %s170, %s186
      %p188 = scmp.eq.s32.totalorder %s34, 0
      %p189 = por %p187, %p188
      %s190 = ssub.s32 %s36, 1
      %p191 = scmp.gt.s32.totalorder %s190, 0
      %s192 = scalar_select %p191, %s190, 0
      %s193 = ssub.s32 %s43, 1
      %p194 = scmp.gt.s32.totalorder %s193, 0
      %s195 = scalar_select %p194, %s193, 0
      %s196 = ssub.s32 %s192, %s195
      %p197 = scmp.eq.s32.totalorder %s196, 0
      %s199 = sadd.s32 %s198, 1
      %s200 = scalar_select %p197, %s198, %s199
      %p203 = pneg %p197
      %p204 = scmp.eq.s32.totalorder %s28, 2
      %p205 = por %p203, %p204
      %p206 = scmp.ne.s32.totalorder %s198, %s201
      %p207 = scmp.eq.s32.totalorder %s28, 0
      %p208 = por %p206, %p207
      %p209 = scmp.ne.s32.totalorder %s198, %s201
      %p210 = scmp.eq.s32.totalorder %s33, 2
      %p211 = por %p209, %p210
      %p212 = scmp.ne.s32.totalorder %s201, %s202
      %p213 = scmp.eq.s32.totalorder %s33, 0
      %p214 = por %p212, %p213
      %p215 = scmp.ne.s32.totalorder %s201, %s202
      %p216 = scmp.eq.s32.totalorder %s34, 2
      %p217 = por %p215, %p216
      %p219 = scmp.ne.s32.totalorder %s202, %s218
      %p220 = scmp.eq.s32.totalorder %s34, 0
      %p221 = por %p219, %p220
      %s222 = ssub.s32 %s36, %s43
      %s223 = ssub.s32 %s35, %s47
      %s224 = sor.u32 %s222, %s223
      %p225 = scmp.eq.s32.totalorder %s224, 0
      %s227 = sadd.s32 %s226, 1
      %s228 = scalar_select %p225, %s226, %s227
      %p231 = pneg %p225
      %p232 = scmp.eq.s32.totalorder %s28, 2
      %p233 = por %p231, %p232
      %p234 = scmp.ne.s32.totalorder %s226, %s229
      %p235 = scmp.eq.s32.totalorder %s28, 0
      %p236 = por %p234, %p235
      %p237 = scmp.ne.s32.totalorder %s226, %s229
      %p238 = scmp.eq.s32.totalorder %s33, 2
      %p239 = por %p237, %p238
      %p240 = scmp.ne.s32.totalorder %s229, %s230
      %p241 = scmp.eq.s32.totalorder %s33, 0
      %p242 = por %p240, %p241
      %p243 = scmp.ne.s32.totalorder %s229, %s230
      %p244 = scmp.eq.s32.totalorder %s34, 2
      %p245 = por %p243, %p244
      %p247 = scmp.ne.s32.totalorder %s230, %s246
      %p248 = scmp.eq.s32.totalorder %s34, 0
      %p249 = por %p247, %p248
      %s250 = ssub.s32 %s36, 1
      %p251 = scmp.gt.s32.totalorder %s250, 0
      %s252 = scalar_select %p251, %s250, 0
      %s253 = ssub.s32 %s43, 1
      %p254 = scmp.gt.s32.totalorder %s253, 0
      %s255 = scalar_select %p254, %s253, 0
      %s256 = ssub.s32 %s252, %s255
      %s257 = ssub.s32 %s35, %s47
      %s258 = sor.u32 %s256, %s257
      %p259 = scmp.eq.s32.totalorder %s258, 0
      %s261 = sadd.s32 %s260, 1
      %s262 = scalar_select %p259, %s260, %s261
      %p265 = pneg %p259
      %p266 = scmp.eq.s32.totalorder %s28, 2
      %p267 = por %p265, %p266
      %p268 = scmp.ne.s32.totalorder %s260, %s263
      %p269 = scmp.eq.s32.totalorder %s28, 0
      %p270 = por %p268, %p269
      %p271 = scmp.ne.s32.totalorder %s260, %s263
      %p272 = scmp.eq.s32.totalorder %s33, 2
      %p273 = por %p271, %p272
      %p274 = scmp.ne.s32.totalorder %s263, %s264
      %p275 = scmp.eq.s32.totalorder %s33, 0
      %p276 = por %p274, %p275
      %p277 = scmp.ne.s32.totalorder %s263, %s264
      %p278 = scmp.eq.s32.totalorder %s34, 2
      %p279 = por %p277, %p278
      %p281 = scmp.ne.s32.totalorder %s264, %s280
      %p282 = scmp.eq.s32.totalorder %s34, 0
      %p283 = por %p281, %p282
      %s284 = ssub.s32 %s36, 1
      %p285 = scmp.gt.s32.totalorder %s284, 0
      %s286 = scalar_select %p285, %s284, 0
      %s287 = ssub.s32 %s43, 1
      %p288 = scmp.gt.s32.totalorder %s287, 0
      %s289 = scalar_select %p288, %s287, 0
      %s290 = ssub.s32 %s286, %s289
      %s291 = ssub.s32 %s35, %s47
      %s292 = sor.u32 %s290, %s291
      %p293 = scmp.eq.s32.totalorder %s292, 0
      %s295 = sadd.s32 %s294, 1
      %s296 = scalar_select %p293, %s294, %s295
      %p299 = pneg %p293
      %p300 = scmp.eq.s32.totalorder %s28, 2
      %p301 = por %p299, %p300
      %p302 = scmp.ne.s32.totalorder %s294, %s297
      %p303 = scmp.eq.s32.totalorder %s28, 0
      %p304 = por %p302, %p303
      %p305 = scmp.ne.s32.totalorder %s294, %s297
      %p306 = scmp.eq.s32.totalorder %s33, 2
      %p307 = por %p305, %p306
      %p308 = scmp.ne.s32.totalorder %s297, %s298
      %p309 = scmp.eq.s32.totalorder %s33, 0
      %p310 = por %p308, %p309
      %p311 = scmp.ne.s32.totalorder %s297, %s298
      %p312 = scmp.eq.s32.totalorder %s34, 2
      %p313 = por %p311, %p312
      %p315 = scmp.ne.s32.totalorder %s298, %s314
      %p316 = scmp.eq.s32.totalorder %s34, 0
      %p317 = por %p315, %p316
      %s318 = ssub.s32 %s36, 1
      %p319 = scmp.gt.s32.totalorder %s318, 0
      %s320 = scalar_select %p319, %s318, 0
      %s321 = ssub.s32 %s43, 1
      %p322 = scmp.gt.s32.totalorder %s321, 0
      %s323 = scalar_select %p322, %s321, 0
      %s324 = ssub.s32 %s320, %s323
      %s325 = ssub.s32 %s35, %s47
      %s326 = sor.u32 %s324, %s325
      %p327 = scmp.eq.s32.totalorder %s326, 0
      %s329 = sadd.s32 %s328, 1
      %s330 = scalar_select %p327, %s328, %s329
      %p333 = pneg %p327
      %p334 = scmp.eq.s32.totalorder %s28, 2
      %p335 = por %p333, %p334
      %p336 = scmp.ne.s32.totalorder %s328, %s331
      %p337 = scmp.eq.s32.totalorder %s28, 0
      %p338 = por %p336, %p337
      %p339 = scmp.ne.s32.totalorder %s328, %s331
      %p340 = scmp.eq.s32.totalorder %s33, 2
      %p341 = por %p339, %p340
      %p342 = scmp.ne.s32.totalorder %s331, %s332
      %p343 = scmp.eq.s32.totalorder %s33, 0
      %p344 = por %p342, %p343
      %p345 = scmp.ne.s32.totalorder %s331, %s332
      %p346 = scmp.eq.s32.totalorder %s34, 2
      %p347 = por %p345, %p346
      %p349 = scmp.ne.s32.totalorder %s332, %s348
      %p350 = scmp.eq.s32.totalorder %s34, 0
      %p351 = por %p349, %p350
      %p352 = scmp.le.s32.totalorder 1, %s28
      %p353 = scmp.lt.s32.totalorder %s28, 4
      %p354 = pnand %p352, %p353
      %p355 = pneg %p354
      // Predicated region
      $region9: #{tpu_custom_call.1} parent=5 // pred_check
        _
      $region10: #{tpu_custom_call.1} parent=5 // pred_check_branch
        %357 = sbr.rel (%p354) target = $region12
      $region11: #{tpu_custom_call.1} parent=5 // pred_region
        %s358 = ssub.s32 %s28, 1
        // Predicated region
        $region13: #{tpu_custom_call.1} parent=11 // pred_check
          %p359 = pneg %p66
        $region14: #{tpu_custom_call.1} parent=11 // pred_check_branch
          %361 = sbr.rel (%p359) target = $region16
        $region15: #{tpu_custom_call.1} parent=11 // pred_region
          %s362 = smul.u32 32, %s37
          %p363 = scmp.lt.s32.totalorder %s362, 31
          %s364 = scalar_select %p363, %s362, 31
          %s365 = smul.addr %s364, 8
          %s366 = scalar_lea.vmem %s0, %s365
          %s367 = smul.u32 32, %s37
        $region16: #{tpu_custom_call.1} parent=11 // pred_fallthru
          _
      $region12: #{tpu_custom_call.1} parent=5 // pred_fallthru
        _
      %p368 = scmp.lt.s32.totalorder %s28, 3
      // Predicated region
      $region17: #{tpu_custom_call.1} parent=5 // pred_check
        %p369 = pneg %p368
      $region18: #{tpu_custom_call.1} parent=5 // pred_check_branch
        %371 = sbr.rel (%p369) target = $region20
      $region19: #{tpu_custom_call.1} parent=5 // pred_region
        // Predicated region
        $region21: #{tpu_custom_call.1} parent=19 // pred_check
          %p372 = pneg %p86
        $region22: #{tpu_custom_call.1} parent=19 // pred_check_branch
          %374 = sbr.rel (%p372) target = $region24
        $region23: #{tpu_custom_call.1} parent=19 // pred_region
          %p375 = scmp.lt.s32.totalorder %s36, 2
          %s376 = scalar_select %p375, %s36, 2
          %s377 = smul.addr %s376, 2
          %s378 = scalar_lea.vmem %s1, %s377
        $region24: #{tpu_custom_call.1} parent=19 // pred_fallthru
          _
        // Predicated region
        $region25: #{tpu_custom_call.1} parent=19 // pred_check
          %p379 = pneg %p112
        $region26: #{tpu_custom_call.1} parent=19 // pred_check_branch
          %381 = sbr.rel (%p379) target = $region28
        $region27: #{tpu_custom_call.1} parent=19 // pred_region
          %p382 = scmp.lt.s32.totalorder %s36, 2
          %s383 = scalar_select %p382, %s36, 2
          %s384 = scalar_lea.vmem %s2, %s383
        $region28: #{tpu_custom_call.1} parent=19 // pred_fallthru
          _
        // Predicated region
        $region29: #{tpu_custom_call.1} parent=19 // pred_check
          %p385 = pneg %p144
        $region30: #{tpu_custom_call.1} parent=19 // pred_check_branch
          %387 = sbr.rel (%p385) target = $region32
        $region31: #{tpu_custom_call.1} parent=19 // pred_region
          %s388 = sand.u32 %s134, 1
          %s389 = scalar_lea.sflag [#allocation6], %s388
          %s390 = sand.u32 %s134, 1
          %s391 = smul.addr %s390, 512
          %s392 = scalar_lea.vmem [#allocation5], %s391
          %s393 = ssub.s32 %s36, 1
          %p394 = scmp.gt.s32.totalorder %s393, 0
          %s395 = scalar_select %p394, %s393, 0
          %s397 = ssub.s32 8192, 8192
          %398 = vsyncadd %s389, %s397
          %s399 = smul.addr %s395, 64
          %s400 = smul.addr %s399, 128
          %s401 = scalar_lea.hbm %s3, %s400
          %s402 = sshll.u32 %s392, 4
          %s403 = int_to_ptr.vmem [resolvable:$true] %s402
          %408 = dma.hbm_to_vmem [thread:$0]  %s401, 8192, %s403, %s389, 256, 256, 16
        $region32: #{tpu_custom_call.1} parent=19 // pred_fallthru
          _
        // Predicated region
        $region33: #{tpu_custom_call.1} parent=19 // pred_check
          %p409 = pneg %p176
        $region34: #{tpu_custom_call.1} parent=19 // pred_check_branch
          %411 = sbr.rel (%p409) target = $region36
        $region35: #{tpu_custom_call.1} parent=19 // pred_region
          %s412 = ssub.s32 %s36, 1
          %p413 = scmp.gt.s32.totalorder %s412, 0
          %s414 = scalar_select %p413, %s412, 0
          %p415 = scmp.lt.s32.totalorder %s414, 1
          %s416 = scalar_select %p415, %s414, 1
          %s417 = smul.addr %s416, 2
          %s418 = smul.addr %s417, 8
          %s419 = scalar_lea.vmem %s4, %s418
          %s420 = ssub.s32 %s36, 1
          %p421 = scmp.gt.s32.totalorder %s420, 0
          %s422 = scalar_select %p421, %s420, 0
        $region36: #{tpu_custom_call.1} parent=19 // pred_fallthru
          _
        // Predicated region
        $region37: #{tpu_custom_call.1} parent=19 // pred_check
          %p423 = pneg %p208
        $region38: #{tpu_custom_call.1} parent=19 // pred_check_branch
          %425 = sbr.rel (%p423) target = $region40
        $region39: #{tpu_custom_call.1} parent=19 // pred_region
          %s426 = ssub.s32 %s36, 1
          %p427 = scmp.gt.s32.totalorder %s426, 0
          %s428 = scalar_select %p427, %s426, 0
          %p429 = scmp.lt.s32.totalorder %s428, 1
          %s430 = scalar_select %p429, %s428, 1
          %s431 = smul.addr %s430, 8
          %s432 = scalar_lea.vmem %s5, %s431
          %s433 = ssub.s32 %s36, 1
          %p434 = scmp.gt.s32.totalorder %s433, 0
          %s435 = scalar_select %p434, %s433, 0
        $region40: #{tpu_custom_call.1} parent=19 // pred_fallthru
          _
      $region20: #{tpu_custom_call.1} parent=5 // pred_fallthru
        _
      %p436 = scmp.le.s32.totalorder 1, %s28
      %p437 = scmp.lt.s32.totalorder %s28, 4
      %p438 = pnand %p436, %p437
      %p439 = pneg %p438
      // Predicated region
      $region41: #{tpu_custom_call.1} parent=5 // pred_check
        _
      $region42: #{tpu_custom_call.1} parent=5 // pred_check_branch
        %441 = sbr.rel (%p438) target = $region44
      $region43: #{tpu_custom_call.1} parent=5 // pred_region
        %s442 = ssub.s32 %s28, 1
        %s443 = sand.u32 %s137, 1
        %s444 = scalar_lea.sflag [#allocation6], %s443
        %s445 = sand.u32 %s137, 1
        %s446 = smul.addr %s445, 512
        %s447 = scalar_lea.vmem [#allocation5], %s446
        // Predicated region
        $region45: #{tpu_custom_call.1} parent=43 // pred_check
          %p448 = pneg %p150
        $region46: #{tpu_custom_call.1} parent=43 // pred_check_branch
          %450 = sbr.rel (%p448) target = $region48
        $region47: #{tpu_custom_call.1} parent=43 // pred_region
          %451 = dma.done %s444, 8192
        $region48: #{tpu_custom_call.1} parent=43 // pred_fallthru
          _
        %s452 = smul.u32 32, %s37
        %p453 = scmp.lt.s32.totalorder %s452, 31
        %s454 = scalar_select %p453, %s452, 31
        %s455 = smul.addr %s454, 8
        %s456 = scalar_lea.vmem %s0, %s455
        %p457 = pneg %p66
        %p458 = pneg %p63
        %p459 = scmp.lt.s32.totalorder %s38, 2
        %s460 = scalar_select %p459, %s38, 2
        %s461 = smul.addr %s460, 2
        %s462 = scalar_lea.vmem %s1, %s461
        %p463 = pneg %p92
        %p464 = pneg %p89
        %p465 = scmp.lt.s32.totalorder %s38, 2
        %s466 = scalar_select %p465, %s38, 2
        %s467 = scalar_lea.vmem %s2, %s466
        %p468 = pneg %p118
        %p469 = pneg %p115
        %s470 = sand.u32 %s137, 1
        %s471 = scalar_lea.sflag [#allocation6], %s470
        %s472 = sand.u32 %s137, 1
        %s473 = smul.addr %s472, 512
        %s474 = scalar_lea.vmem [#allocation5], %s473
        %p475 = pneg %p150
        %p476 = pneg %p147
        %s477 = ssub.s32 %s38, 1
        %p478 = scmp.gt.s32.totalorder %s477, 0
        %s479 = scalar_select %p478, %s477, 0
        %p480 = scmp.lt.s32.totalorder %s479, 1
        %s481 = scalar_select %p480, %s479, 1
        %s482 = smul.addr %s481, 2
        %s483 = smul.addr %s482, 8
        %s484 = scalar_lea.vmem %s4, %s483
        %p485 = pneg %p182
        %p486 = pneg %p179
        %s487 = ssub.s32 %s38, 1
        %p488 = scmp.gt.s32.totalorder %s487, 0
        %s489 = scalar_select %p488, %s487, 0
        %p490 = scmp.lt.s32.totalorder %s489, 1
        %s491 = scalar_select %p490, %s489, 1
        %s492 = smul.addr %s491, 8
        %s493 = scalar_lea.vmem %s5, %s492
        %p494 = pneg %p214
        %p495 = pneg %p211
        %p496 = pneg %p242
        %p497 = pneg %p239
        %s498 = sand.u32 %s229, 1
        %s499 = scalar_lea.sflag [#allocation7], %s498
        %s500 = sand.u32 %s229, 1
        %s501 = smul.addr %s500, 256
        %s502 = scalar_lea.vmem [#allocation8], %s501
        %p503 = pneg %p276
        %p504 = pneg %p273
        %s505 = sand.u32 %s33, 1
        %s506 = scalar_lea.sflag [#allocation10], %s505
        %s507 = sand.u32 %s263, 1
        %s508 = smul.addr %s507, 256
        %s509 = scalar_lea.vmem [#allocation9], %s508
        %p510 = pneg %p310
        %p511 = pneg %p307
        %s512 = sand.u32 %s33, 1
        %s513 = scalar_lea.sflag [#allocation10], %s512
        %s514 = sand.u32 %s297, 1
        %s515 = smul.addr %s514, 16
        %s516 = scalar_lea.vmem [#allocation11], %s515
        %p517 = pneg %p344
        %p518 = pneg %p341
        %s519 = sand.u32 %s331, 1
        %s520 = scalar_lea.sflag [#allocation13], %s519
        %s521 = sand.u32 %s331, 1
        %s522 = smul.addr %s521, 16
        %s523 = scalar_lea.vmem [#allocation12], %s522
        %s524 = smul.u32 32, %s37
        %p525 = scmp.lt.s32.totalorder %s524, 31
        %s526 = scalar_select %p525, %s524, 31
        %s527 = smul.addr %s526, 8
        %s528 = scalar_lea.vmem %s0, %s527
        %s529 = smul.u32 32, %s37
        %p530 = scmp.lt.s32.totalorder %s38, 2
        %s531 = scalar_select %p530, %s38, 2
        %s532 = smul.addr %s531, 2
        %s533 = scalar_lea.vmem %s1, %s532
        %p534 = scmp.lt.s32.totalorder %s38, 2
        %s535 = scalar_select %p534, %s38, 2
        %s536 = scalar_lea.vmem %s2, %s535
        %s537 = ssub.s32 %s38, 1
        %p538 = scmp.gt.s32.totalorder %s537, 0
        %s539 = scalar_select %p538, %s537, 0
        %s540 = ssub.s32 %s38, 1
        %p541 = scmp.gt.s32.totalorder %s540, 0
        %s542 = scalar_select %p541, %s540, 0
        %p543 = scmp.lt.s32.totalorder %s542, 1
        %s544 = scalar_select %p543, %s542, 1
        %s545 = smul.addr %s544, 2
        %s546 = smul.addr %s545, 8
        %s547 = scalar_lea.vmem %s4, %s546
        %s548 = ssub.s32 %s38, 1
        %p549 = scmp.gt.s32.totalorder %s548, 0
        %s550 = scalar_select %p549, %s548, 0
        %s551 = ssub.s32 %s38, 1
        %p552 = scmp.gt.s32.totalorder %s551, 0
        %s553 = scalar_select %p552, %s551, 0
        %p554 = scmp.lt.s32.totalorder %s553, 1
        %s555 = scalar_select %p554, %s553, 1
        %s556 = smul.addr %s555, 8
        %s557 = scalar_lea.vmem %s5, %s556
        %s558 = ssub.s32 %s38, 1
        %p559 = scmp.gt.s32.totalorder %s558, 0
        %s560 = scalar_select %p559, %s558, 0
        %s561 = smul.u32 32, %s37
        %s562 = ssub.s32 %s38, 1
        %p563 = scmp.gt.s32.totalorder %s562, 0
        %s564 = scalar_select %p563, %s562, 0
        %s565 = smul.u32 32, %s37
        %s566 = ssub.s32 %s38, 1
        %p567 = scmp.gt.s32.totalorder %s566, 0
        %s568 = scalar_select %p567, %s566, 0
        %s569 = smul.u32 2, %s37
        %s570 = ssub.s32 %s38, 1
        %p571 = scmp.gt.s32.totalorder %s570, 0
        %s572 = scalar_select %p571, %s570, 0
        %s573 = smul.u32 2, %s37
        %p575 = scmp.eq.s32.totalorder %s38, 0
        // Predicated region
        $region49: #{tpu_custom_call.1} parent=43 // pred_check
          %p576 = pneg %p575
        $region50: #{tpu_custom_call.1} parent=43 // pred_check_branch
          %578 = sbr.rel (%p576) target = $region52
        $region51: #{tpu_custom_call.1} parent=43 // pred_region
          %v579 = vld [vmem:[%s528] sm:$0xff]
          %v580 = vld [vmem:[%s528 + $0x8] sm:$0xff]
          %v581 = vld [vmem:[%s528 + $0x10] sm:$0xff]
          %v582 = vld [vmem:[%s528 + $0x18] sm:$0xff]
          %v583 = vld [vmem:[%s528 + $0x20] sm:$0xff]
          %v584 = vld [vmem:[%s528 + $0x28] sm:$0xff]
          %v585 = vld [vmem:[%s528 + $0x30] sm:$0xff]
          %v586 = vld [vmem:[%s528 + $0x38] sm:$0xff]
          %v587 = vld [vmem:[%s528 + $0x40] sm:$0xff]
          %v588 = vld [vmem:[%s528 + $0x48] sm:$0xff]
          %v589 = vld [vmem:[%s528 + $0x50] sm:$0xff]
          %v590 = vld [vmem:[%s528 + $0x58] sm:$0xff]
          %v591 = vld [vmem:[%s528 + $0x60] sm:$0xff]
          %v592 = vld [vmem:[%s528 + $0x68] sm:$0xff]
          %v593 = vld [vmem:[%s528 + $0x70] sm:$0xff]
          %v594 = vld [vmem:[%s528 + $0x78] sm:$0xff]
          %v595 = vld [vmem:[%s528 + $0x80] sm:$0xff]
          %v596 = vld [vmem:[%s528 + $0x88] sm:$0xff]
          %v597 = vld [vmem:[%s528 + $0x90] sm:$0xff]
          %v598 = vld [vmem:[%s528 + $0x98] sm:$0xff]
          %v599 = vld [vmem:[%s528 + $0xa0] sm:$0xff]
          %v600 = vld [vmem:[%s528 + $0xa8] sm:$0xff]
          %v601 = vld [vmem:[%s528 + $0xb0] sm:$0xff]
          %v602 = vld [vmem:[%s528 + $0xb8] sm:$0xff]
          %v603 = vld [vmem:[%s528 + $0xc0] sm:$0xff]
          %v604 = vld [vmem:[%s528 + $0xc8] sm:$0xff]
          %v605 = vld [vmem:[%s528 + $0xd0] sm:$0xff]
          %v606 = vld [vmem:[%s528 + $0xd8] sm:$0xff]
          %v607 = vld [vmem:[%s528 + $0xe0] sm:$0xff]
          %v608 = vld [vmem:[%s528 + $0xe8] sm:$0xff]
          %v609 = vld [vmem:[%s528 + $0xf0] sm:$0xff]
          %v610 = vld [vmem:[%s528 + $0xf8] sm:$0xff]
          %612 = vset.pattern.permute.xlu0 0
          %613 = vperm.xlu0 %612, %v579
          %v614 = vpop.permute.xlu0 %613
          %617 = vset.pattern.permute.xlu0 0
          %618 = vperm.xlu0 %617, %v580
          %v619 = vpop.permute.xlu0 %618
          %622 = vset.pattern.permute.xlu0 0
          %623 = vperm.xlu0 %622, %v581
          %v624 = vpop.permute.xlu0 %623
          %627 = vset.pattern.permute.xlu0 0
          %628 = vperm.xlu0 %627, %v582
          %v629 = vpop.permute.xlu0 %628
          %632 = vset.pattern.permute.xlu0 0
          %633 = vperm.xlu0 %632, %v583
          %v634 = vpop.permute.xlu0 %633
          %637 = vset.pattern.permute.xlu0 0
          %638 = vperm.xlu0 %637, %v584
          %v639 = vpop.permute.xlu0 %638
          %642 = vset.pattern.permute.xlu0 0
          %643 = vperm.xlu0 %642, %v585
          %v644 = vpop.permute.xlu0 %643
          %647 = vset.pattern.permute.xlu0 0
          %648 = vperm.xlu0 %647, %v586
          %v649 = vpop.permute.xlu0 %648
          %652 = vset.pattern.permute.xlu0 0
          %653 = vperm.xlu0 %652, %v587
          %v654 = vpop.permute.xlu0 %653
          %657 = vset.pattern.permute.xlu0 0
          %658 = vperm.xlu0 %657, %v588
          %v659 = vpop.permute.xlu0 %658
          %662 = vset.pattern.permute.xlu0 0
          %663 = vperm.xlu0 %662, %v589
          %v664 = vpop.permute.xlu0 %663
          %667 = vset.pattern.permute.xlu0 0
          %668 = vperm.xlu0 %667, %v590
          %v669 = vpop.permute.xlu0 %668
          %672 = vset.pattern.permute.xlu0 0
          %673 = vperm.xlu0 %672, %v591
          %v674 = vpop.permute.xlu0 %673
          %677 = vset.pattern.permute.xlu0 0
          %678 = vperm.xlu0 %677, %v592
          %v679 = vpop.permute.xlu0 %678
          %682 = vset.pattern.permute.xlu0 0
          %683 = vperm.xlu0 %682, %v593
          %v684 = vpop.permute.xlu0 %683
          %687 = vset.pattern.permute.xlu0 0
          %688 = vperm.xlu0 %687, %v594
          %v689 = vpop.permute.xlu0 %688
          %692 = vset.pattern.permute.xlu0 0
          %693 = vperm.xlu0 %692, %v595
          %v694 = vpop.permute.xlu0 %693
          %697 = vset.pattern.permute.xlu0 0
          %698 = vperm.xlu0 %697, %v596
          %v699 = vpop.permute.xlu0 %698
          %702 = vset.pattern.permute.xlu0 0
          %703 = vperm.xlu0 %702, %v597
          %v704 = vpop.permute.xlu0 %703
          %707 = vset.pattern.permute.xlu0 0
          %708 = vperm.xlu0 %707, %v598
          %v709 = vpop.permute.xlu0 %708
          %712 = vset.pattern.permute.xlu0 0
          %713 = vperm.xlu0 %712, %v599
          %v714 = vpop.permute.xlu0 %713
          %717 = vset.pattern.permute.xlu0 0
          %718 = vperm.xlu0 %717, %v600
          %v719 = vpop.permute.xlu0 %718
          %722 = vset.pattern.permute.xlu0 0
          %723 = vperm.xlu0 %722, %v601
          %v724 = vpop.permute.xlu0 %723
          %727 = vset.pattern.permute.xlu0 0
          %728 = vperm.xlu0 %727, %v602
          %v729 = vpop.permute.xlu0 %728
          %732 = vset.pattern.permute.xlu0 0
          %733 = vperm.xlu0 %732, %v603
          %v734 = vpop.permute.xlu0 %733
          %737 = vset.pattern.permute.xlu0 0
          %738 = vperm.xlu0 %737, %v604
          %v739 = vpop.permute.xlu0 %738
          %742 = vset.pattern.permute.xlu0 0
          %743 = vperm.xlu0 %742, %v605
          %v744 = vpop.permute.xlu0 %743
          %747 = vset.pattern.permute.xlu0 0
          %748 = vperm.xlu0 %747, %v606
          %v749 = vpop.permute.xlu0 %748
          %752 = vset.pattern.permute.xlu0 0
          %753 = vperm.xlu0 %752, %v607
          %v754 = vpop.permute.xlu0 %753
          %757 = vset.pattern.permute.xlu0 0
          %758 = vperm.xlu0 %757, %v608
          %v759 = vpop.permute.xlu0 %758
          %762 = vset.pattern.permute.xlu0 0
          %763 = vperm.xlu0 %762, %v609
          %v764 = vpop.permute.xlu0 %763
          %767 = vset.pattern.permute.xlu0 0
          %768 = vperm.xlu0 %767, %v610
          %v769 = vpop.permute.xlu0 %768
          %771 = vst [vmem:[#allocation4] sm:$0xff] %v614
          %772 = vst [vmem:[#allocation4 + $0x10] sm:$0xff] %v619
          %773 = vst [vmem:[#allocation4 + $0x20] sm:$0xff] %v624
          %774 = vst [vmem:[#allocation4 + $0x30] sm:$0xff] %v629
          %775 = vst [vmem:[#allocation4 + $0x40] sm:$0xff] %v634
          %776 = vst [vmem:[#allocation4 + $0x50] sm:$0xff] %v639
          %777 = vst [vmem:[#allocation4 + $0x60] sm:$0xff] %v644
          %778 = vst [vmem:[#allocation4 + $0x70] sm:$0xff] %v649
          %779 = vst [vmem:[#allocation4 + $0x80] sm:$0xff] %v654
          %780 = vst [vmem:[#allocation4 + $0x90] sm:$0xff] %v659
          %781 = vst [vmem:[#allocation4 + $0xa0] sm:$0xff] %v664
          %782 = vst [vmem:[#allocation4 + $0xb0] sm:$0xff] %v669
          %783 = vst [vmem:[#allocation4 + $0xc0] sm:$0xff] %v674
          %784 = vst [vmem:[#allocation4 + $0xd0] sm:$0xff] %v679
          %785 = vst [vmem:[#allocation4 + $0xe0] sm:$0xff] %v684
          %786 = vst [vmem:[#allocation4 + $0xf0] sm:$0xff] %v689
          %787 = vst [vmem:[#allocation4 + $0x100] sm:$0xff] %v694
          %788 = vst [vmem:[#allocation4 + $0x110] sm:$0xff] %v699
          %789 = vst [vmem:[#allocation4 + $0x120] sm:$0xff] %v704
          %790 = vst [vmem:[#allocation4 + $0x130] sm:$0xff] %v709
          %791 = vst [vmem:[#allocation4 + $0x140] sm:$0xff] %v714
          %792 = vst [vmem:[#allocation4 + $0x150] sm:$0xff] %v719
          %793 = vst [vmem:[#allocation4 + $0x160] sm:$0xff] %v724
          %794 = vst [vmem:[#allocation4 + $0x170] sm:$0xff] %v729
          %795 = vst [vmem:[#allocation4 + $0x180] sm:$0xff] %v734
          %796 = vst [vmem:[#allocation4 + $0x190] sm:$0xff] %v739
          %797 = vst [vmem:[#allocation4 + $0x1a0] sm:$0xff] %v744
          %798 = vst [vmem:[#allocation4 + $0x1b0] sm:$0xff] %v749
          %799 = vst [vmem:[#allocation4 + $0x1c0] sm:$0xff] %v754
          %800 = vst [vmem:[#allocation4 + $0x1d0] sm:$0xff] %v759
          %801 = vst [vmem:[#allocation4 + $0x1e0] sm:$0xff] %v764
          %802 = vst [vmem:[#allocation4 + $0x1f0] sm:$0xff] %v769
          %803 = vset.pattern.permute.xlu0 1
          %804 = vperm.xlu0 %803, %v579
          %v805 = vpop.permute.xlu0 %804
          %807 = vset.pattern.permute.xlu0 1
          %808 = vperm.xlu0 %807, %v580
          %v809 = vpop.permute.xlu0 %808
          %811 = vset.pattern.permute.xlu0 1
          %812 = vperm.xlu0 %811, %v581
          %v813 = vpop.permute.xlu0 %812
          %815 = vset.pattern.permute.xlu0 1
          %816 = vperm.xlu0 %815, %v582
          %v817 = vpop.permute.xlu0 %816
          %819 = vset.pattern.permute.xlu0 1
          %820 = vperm.xlu0 %819, %v583
          %v821 = vpop.permute.xlu0 %820
          %823 = vset.pattern.permute.xlu0 1
          %824 = vperm.xlu0 %823, %v584
          %v825 = vpop.permute.xlu0 %824
          %827 = vset.pattern.permute.xlu0 1
          %828 = vperm.xlu0 %827, %v585
          %v829 = vpop.permute.xlu0 %828
          %831 = vset.pattern.permute.xlu0 1
          %832 = vperm.xlu0 %831, %v586
          %v833 = vpop.permute.xlu0 %832
          %835 = vset.pattern.permute.xlu0 1
          %836 = vperm.xlu0 %835, %v587
          %v837 = vpop.permute.xlu0 %836
          %839 = vset.pattern.permute.xlu0 1
          %840 = vperm.xlu0 %839, %v588
          %v841 = vpop.permute.xlu0 %840
          %843 = vset.pattern.permute.xlu0 1
          %844 = vperm.xlu0 %843, %v589
          %v845 = vpop.permute.xlu0 %844
          %847 = vset.pattern.permute.xlu0 1
          %848 = vperm.xlu0 %847, %v590
          %v849 = vpop.permute.xlu0 %848
          %851 = vset.pattern.permute.xlu0 1
          %852 = vperm.xlu0 %851, %v591
          %v853 = vpop.permute.xlu0 %852
          %855 = vset.pattern.permute.xlu0 1
          %856 = vperm.xlu0 %855, %v592
          %v857 = vpop.permute.xlu0 %856
          %859 = vset.pattern.permute.xlu0 1
          %860 = vperm.xlu0 %859, %v593
          %v861 = vpop.permute.xlu0 %860
          %863 = vset.pattern.permute.xlu0 1
          %864 = vperm.xlu0 %863, %v594
          %v865 = vpop.permute.xlu0 %864
          %867 = vset.pattern.permute.xlu0 1
          %868 = vperm.xlu0 %867, %v595
          %v869 = vpop.permute.xlu0 %868
          %871 = vset.pattern.permute.xlu0 1
          %872 = vperm.xlu0 %871, %v596
          %v873 = vpop.permute.xlu0 %872
          %875 = vset.pattern.permute.xlu0 1
          %876 = vperm.xlu0 %875, %v597
          %v877 = vpop.permute.xlu0 %876
          %879 = vset.pattern.permute.xlu0 1
          %880 = vperm.xlu0 %879, %v598
          %v881 = vpop.permute.xlu0 %880
          %883 = vset.pattern.permute.xlu0 1
          %884 = vperm.xlu0 %883, %v599
          %v885 = vpop.permute.xlu0 %884
          %887 = vset.pattern.permute.xlu0 1
          %888 = vperm.xlu0 %887, %v600
          %v889 = vpop.permute.xlu0 %888
          %891 = vset.pattern.permute.xlu0 1
          %892 = vperm.xlu0 %891, %v601
          %v893 = vpop.permute.xlu0 %892
          %895 = vset.pattern.permute.xlu0 1
          %896 = vperm.xlu0 %895, %v602
          %v897 = vpop.permute.xlu0 %896
          %899 = vset.pattern.permute.xlu0 1
          %900 = vperm.xlu0 %899, %v603
          %v901 = vpop.permute.xlu0 %900
          %903 = vset.pattern.permute.xlu0 1
          %904 = vperm.xlu0 %903, %v604
          %v905 = vpop.permute.xlu0 %904
          %907 = vset.pattern.permute.xlu0 1
          %908 = vperm.xlu0 %907, %v605
          %v909 = vpop.permute.xlu0 %908
          %911 = vset.pattern.permute.xlu0 1
          %912 = vperm.xlu0 %911, %v606
          %v913 = vpop.permute.xlu0 %912
          %915 = vset.pattern.permute.xlu0 1
          %916 = vperm.xlu0 %915, %v607
          %v917 = vpop.permute.xlu0 %916
          %919 = vset.pattern.permute.xlu0 1
          %920 = vperm.xlu0 %919, %v608
          %v921 = vpop.permute.xlu0 %920
          %923 = vset.pattern.permute.xlu0 1
          %924 = vperm.xlu0 %923, %v609
          %v925 = vpop.permute.xlu0 %924
          %927 = vset.pattern.permute.xlu0 1
          %928 = vperm.xlu0 %927, %v610
          %v929 = vpop.permute.xlu0 %928
          %931 = vst [vmem:[#allocation4 + $0x8] sm:$0xff] %v805
          %932 = vst [vmem:[#allocation4 + $0x18] sm:$0xff] %v809
          %933 = vst [vmem:[#allocation4 + $0x28] sm:$0xff] %v813
          %934 = vst [vmem:[#allocation4 + $0x38] sm:$0xff] %v817
          %935 = vst [vmem:[#allocation4 + $0x48] sm:$0xff] %v821
          %936 = vst [vmem:[#allocation4 + $0x58] sm:$0xff] %v825
          %937 = vst [vmem:[#allocation4 + $0x68] sm:$0xff] %v829
          %938 = vst [vmem:[#allocation4 + $0x78] sm:$0xff] %v833
          %939 = vst [vmem:[#allocation4 + $0x88] sm:$0xff] %v837
          %940 = vst [vmem:[#allocation4 + $0x98] sm:$0xff] %v841
          %941 = vst [vmem:[#allocation4 + $0xa8] sm:$0xff] %v845
          %942 = vst [vmem:[#allocation4 + $0xb8] sm:$0xff] %v849
          %943 = vst [vmem:[#allocation4 + $0xc8] sm:$0xff] %v853
          %944 = vst [vmem:[#allocation4 + $0xd8] sm:$0xff] %v857
          %945 = vst [vmem:[#allocation4 + $0xe8] sm:$0xff] %v861
          %946 = vst [vmem:[#allocation4 + $0xf8] sm:$0xff] %v865
          %947 = vst [vmem:[#allocation4 + $0x108] sm:$0xff] %v869
          %948 = vst [vmem:[#allocation4 + $0x118] sm:$0xff] %v873
          %949 = vst [vmem:[#allocation4 + $0x128] sm:$0xff] %v877
          %950 = vst [vmem:[#allocation4 + $0x138] sm:$0xff] %v881
          %951 = vst [vmem:[#allocation4 + $0x148] sm:$0xff] %v885
          %952 = vst [vmem:[#allocation4 + $0x158] sm:$0xff] %v889
          %953 = vst [vmem:[#allocation4 + $0x168] sm:$0xff] %v893
          %954 = vst [vmem:[#allocation4 + $0x178] sm:$0xff] %v897
          %955 = vst [vmem:[#allocation4 + $0x188] sm:$0xff] %v901
          %956 = vst [vmem:[#allocation4 + $0x198] sm:$0xff] %v905
          %957 = vst [vmem:[#allocation4 + $0x1a8] sm:$0xff] %v909
          %958 = vst [vmem:[#allocation4 + $0x1b8] sm:$0xff] %v913
          %959 = vst [vmem:[#allocation4 + $0x1c8] sm:$0xff] %v917
          %960 = vst [vmem:[#allocation4 + $0x1d8] sm:$0xff] %v921
          %961 = vst [vmem:[#allocation4 + $0x1e8] sm:$0xff] %v925
          %962 = vst [vmem:[#allocation4 + $0x1f8] sm:$0xff] %v929
        $region52: #{tpu_custom_call.1} parent=43 // pred_fallthru
          _
        %v963 = vld [vmem:[%s533] sm:$0x3]
        %v964 = vld [vmem:[#allocation4] sm:$0xff]
        %v965 = vld [vmem:[#allocation4 + $0x10] sm:$0xff]
        %v966 = vld [vmem:[#allocation4 + $0x20] sm:$0xff]
        %v967 = vld [vmem:[#allocation4 + $0x30] sm:$0xff]
        %v968 = vld [vmem:[#allocation4 + $0x40] sm:$0xff]
        %v969 = vld [vmem:[#allocation4 + $0x50] sm:$0xff]
        %v970 = vld [vmem:[#allocation4 + $0x60] sm:$0xff]
        %v971 = vld [vmem:[#allocation4 + $0x70] sm:$0xff]
        %v972 = vld [vmem:[#allocation4 + $0x80] sm:$0xff]
        %v973 = vld [vmem:[#allocation4 + $0x90] sm:$0xff]
        %v974 = vld [vmem:[#allocation4 + $0xa0] sm:$0xff]
        %v975 = vld [vmem:[#allocation4 + $0xb0] sm:$0xff]
        %v976 = vld [vmem:[#allocation4 + $0xc0] sm:$0xff]
        %v977 = vld [vmem:[#allocation4 + $0xd0] sm:$0xff]
        %v978 = vld [vmem:[#allocation4 + $0xe0] sm:$0xff]
        %v979 = vld [vmem:[#allocation4 + $0xf0] sm:$0xff]
        %v980 = vld [vmem:[#allocation4 + $0x100] sm:$0xff]
        %v981 = vld [vmem:[#allocation4 + $0x110] sm:$0xff]
        %v982 = vld [vmem:[#allocation4 + $0x120] sm:$0xff]
        %v983 = vld [vmem:[#allocation4 + $0x130] sm:$0xff]
        %v984 = vld [vmem:[#allocation4 + $0x140] sm:$0xff]
        %v985 = vld [vmem:[#allocation4 + $0x150] sm:$0xff]
        %v986 = vld [vmem:[#allocation4 + $0x160] sm:$0xff]
        %v987 = vld [vmem:[#allocation4 + $0x170] sm:$0xff]
        %v988 = vld [vmem:[#allocation4 + $0x180] sm:$0xff]
        %v989 = vld [vmem:[#allocation4 + $0x190] sm:$0xff]
        %v990 = vld [vmem:[#allocation4 + $0x1a0] sm:$0xff]
        %v991 = vld [vmem:[#allocation4 + $0x1b0] sm:$0xff]
        %v992 = vld [vmem:[#allocation4 + $0x1c0] sm:$0xff]
        %v993 = vld [vmem:[#allocation4 + $0x1d0] sm:$0xff]
        %v994 = vld [vmem:[#allocation4 + $0x1e0] sm:$0xff]
        %v995 = vld [vmem:[#allocation4 + $0x1f0] sm:$0xff]
        %v996 = vlaneseq
        %v997 = vshrl.u32 %v996, 7
        %v998 = vsub.s32 0, %v997
        %v999 = vrot.slane %v963, %v998
        %v1000 = vmul.f32 %v964, %v999
        %v1001 = vmul.f32 %v965, %v999
        %v1002 = vmul.f32 %v966, %v999
        %v1003 = vmul.f32 %v967, %v999
        %v1004 = vmul.f32 %v968, %v999
        %v1005 = vmul.f32 %v969, %v999
        %v1006 = vmul.f32 %v970, %v999
        %v1007 = vmul.f32 %v971, %v999
        %v1008 = vmul.f32 %v972, %v999
        %v1009 = vmul.f32 %v973, %v999
        %v1010 = vmul.f32 %v974, %v999
        %v1011 = vmul.f32 %v975, %v999
        %v1012 = vmul.f32 %v976, %v999
        %v1013 = vmul.f32 %v977, %v999
        %v1014 = vmul.f32 %v978, %v999
        %v1015 = vmul.f32 %v979, %v999
        %v1016 = vmul.f32 %v980, %v999
        %v1017 = vmul.f32 %v981, %v999
        %v1018 = vmul.f32 %v982, %v999
        %v1019 = vmul.f32 %v983, %v999
        %v1020 = vmul.f32 %v984, %v999
        %v1021 = vmul.f32 %v985, %v999
        %v1022 = vmul.f32 %v986, %v999
        %v1023 = vmul.f32 %v987, %v999
        %v1024 = vmul.f32 %v988, %v999
        %v1025 = vmul.f32 %v989, %v999
        %v1026 = vmul.f32 %v990, %v999
        %v1027 = vmul.f32 %v991, %v999
        %v1028 = vmul.f32 %v992, %v999
        %v1029 = vmul.f32 %v993, %v999
        %v1030 = vmul.f32 %v994, %v999
        %v1031 = vmul.f32 %v995, %v999
        %v1032 = vld [vmem:[#allocation4 + $0x8] sm:$0xff]
        %v1033 = vld [vmem:[#allocation4 + $0x18] sm:$0xff]
        %v1034 = vld [vmem:[#allocation4 + $0x28] sm:$0xff]
        %v1035 = vld [vmem:[#allocation4 + $0x38] sm:$0xff]
        %v1036 = vld [vmem:[#allocation4 + $0x48] sm:$0xff]
        %v1037 = vld [vmem:[#allocation4 + $0x58] sm:$0xff]
        %v1038 = vld [vmem:[#allocation4 + $0x68] sm:$0xff]
        %v1039 = vld [vmem:[#allocation4 + $0x78] sm:$0xff]
        %v1040 = vld [vmem:[#allocation4 + $0x88] sm:$0xff]
        %v1041 = vld [vmem:[#allocation4 + $0x98] sm:$0xff]
        %v1042 = vld [vmem:[#allocation4 + $0xa8] sm:$0xff]
        %v1043 = vld [vmem:[#allocation4 + $0xb8] sm:$0xff]
        %v1044 = vld [vmem:[#allocation4 + $0xc8] sm:$0xff]
        %v1045 = vld [vmem:[#allocation4 + $0xd8] sm:$0xff]
        %v1046 = vld [vmem:[#allocation4 + $0xe8] sm:$0xff]
        %v1047 = vld [vmem:[#allocation4 + $0xf8] sm:$0xff]
        %v1048 = vld [vmem:[#allocation4 + $0x108] sm:$0xff]
        %v1049 = vld [vmem:[#allocation4 + $0x118] sm:$0xff]
        %v1050 = vld [vmem:[#allocation4 + $0x128] sm:$0xff]
        %v1051 = vld [vmem:[#allocation4 + $0x138] sm:$0xff]
        %v1052 = vld [vmem:[#allocation4 + $0x148] sm:$0xff]
        %v1053 = vld [vmem:[#allocation4 + $0x158] sm:$0xff]
        %v1054 = vld [vmem:[#allocation4 + $0x168] sm:$0xff]
        %v1055 = vld [vmem:[#allocation4 + $0x178] sm:$0xff]
        %v1056 = vld [vmem:[#allocation4 + $0x188] sm:$0xff]
        %v1057 = vld [vmem:[#allocation4 + $0x198] sm:$0xff]
        %v1058 = vld [vmem:[#allocation4 + $0x1a8] sm:$0xff]
        %v1059 = vld [vmem:[#allocation4 + $0x1b8] sm:$0xff]
        %v1060 = vld [vmem:[#allocation4 + $0x1c8] sm:$0xff]
        %v1061 = vld [vmem:[#allocation4 + $0x1d8] sm:$0xff]
        %v1062 = vld [vmem:[#allocation4 + $0x1e8] sm:$0xff]
        %v1063 = vld [vmem:[#allocation4 + $0x1f8] sm:$0xff]
        %v1064 = vlaneseq
        %v1065 = vshrl.u32 %v1064, 7
        %v1066 = vsub.s32 1, %v1065
        %v1067 = vrot.slane %v963, %v1066
        %v1068 = vmul.f32 %v1032, %v1067
        %v1069 = vmul.f32 %v1033, %v1067
        %v1070 = vmul.f32 %v1034, %v1067
        %v1071 = vmul.f32 %v1035, %v1067
        %v1072 = vmul.f32 %v1036, %v1067
        %v1073 = vmul.f32 %v1037, %v1067
        %v1074 = vmul.f32 %v1038, %v1067
        %v1075 = vmul.f32 %v1039, %v1067
        %v1076 = vmul.f32 %v1040, %v1067
        %v1077 = vmul.f32 %v1041, %v1067
        %v1078 = vmul.f32 %v1042, %v1067
        %v1079 = vmul.f32 %v1043, %v1067
        %v1080 = vmul.f32 %v1044, %v1067
        %v1081 = vmul.f32 %v1045, %v1067
        %v1082 = vmul.f32 %v1046, %v1067
        %v1083 = vmul.f32 %v1047, %v1067
        %v1084 = vmul.f32 %v1048, %v1067
        %v1085 = vmul.f32 %v1049, %v1067
        %v1086 = vmul.f32 %v1050, %v1067
        %v1087 = vmul.f32 %v1051, %v1067
        %v1088 = vmul.f32 %v1052, %v1067
        %v1089 = vmul.f32 %v1053, %v1067
        %v1090 = vmul.f32 %v1054, %v1067
        %v1091 = vmul.f32 %v1055, %v1067
        %v1092 = vmul.f32 %v1056, %v1067
        %v1093 = vmul.f32 %v1057, %v1067
        %v1094 = vmul.f32 %v1058, %v1067
        %v1095 = vmul.f32 %v1059, %v1067
        %v1096 = vmul.f32 %v1060, %v1067
        %v1097 = vmul.f32 %v1061, %v1067
        %v1098 = vmul.f32 %v1062, %v1067
        %v1099 = vmul.f32 %v1063, %v1067
        %v1100 = vadd.f32 %v1000, %v1068
        %v1101 = vadd.f32 %v1001, %v1069
        %v1102 = vadd.f32 %v1002, %v1070
        %v1103 = vadd.f32 %v1003, %v1071
        %v1104 = vadd.f32 %v1004, %v1072
        %v1105 = vadd.f32 %v1005, %v1073
        %v1106 = vadd.f32 %v1006, %v1074
        %v1107 = vadd.f32 %v1007, %v1075
        %v1108 = vadd.f32 %v1008, %v1076
        %v1109 = vadd.f32 %v1009, %v1077
        %v1110 = vadd.f32 %v1010, %v1078
        %v1111 = vadd.f32 %v1011, %v1079
        %v1112 = vadd.f32 %v1012, %v1080
        %v1113 = vadd.f32 %v1013, %v1081
        %v1114 = vadd.f32 %v1014, %v1082
        %v1115 = vadd.f32 %v1015, %v1083
        %v1116 = vadd.f32 %v1016, %v1084
        %v1117 = vadd.f32 %v1017, %v1085
        %v1118 = vadd.f32 %v1018, %v1086
        %v1119 = vadd.f32 %v1019, %v1087
        %v1120 = vadd.f32 %v1020, %v1088
        %v1121 = vadd.f32 %v1021, %v1089
        %v1122 = vadd.f32 %v1022, %v1090
        %v1123 = vadd.f32 %v1023, %v1091
        %v1124 = vadd.f32 %v1024, %v1092
        %v1125 = vadd.f32 %v1025, %v1093
        %v1126 = vadd.f32 %v1026, %v1094
        %v1127 = vadd.f32 %v1027, %v1095
        %v1128 = vadd.f32 %v1028, %v1096
        %v1129 = vadd.f32 %v1029, %v1097
        %v1130 = vadd.f32 %v1030, %v1098
        %v1131 = vadd.f32 %v1031, %v1099
        %v1132 = vld [vmem:[%s536] sm:$0x1]
        %v1134 = vlaneseq
        %v1135 = vshrl.u32 %v1134, 7
        %v1136 = vsub.s32 0, %v1135
        %v1137 = vrot.slane %v1132, %v1136
        %v1139 = vadd.f32 %v1100, %v1137
        %v1140 = vadd.f32 %v1101, %v1137
        %v1141 = vadd.f32 %v1102, %v1137
        %v1142 = vadd.f32 %v1103, %v1137
        %v1143 = vadd.f32 %v1104, %v1137
        %v1144 = vadd.f32 %v1105, %v1137
        %v1145 = vadd.f32 %v1106, %v1137
        %v1146 = vadd.f32 %v1107, %v1137
        %v1147 = vadd.f32 %v1108, %v1137
        %v1148 = vadd.f32 %v1109, %v1137
        %v1149 = vadd.f32 %v1110, %v1137
        %v1150 = vadd.f32 %v1111, %v1137
        %v1151 = vadd.f32 %v1112, %v1137
        %v1152 = vadd.f32 %v1113, %v1137
        %v1153 = vadd.f32 %v1114, %v1137
        %v1154 = vadd.f32 %v1115, %v1137
        %v1155 = vadd.f32 %v1116, %v1137
        %v1156 = vadd.f32 %v1117, %v1137
        %v1157 = vadd.f32 %v1118, %v1137
        %v1158 = vadd.f32 %v1119, %v1137
        %v1159 = vadd.f32 %v1120, %v1137
        %v1160 = vadd.f32 %v1121, %v1137
        %v1161 = vadd.f32 %v1122, %v1137
        %v1162 = vadd.f32 %v1123, %v1137
        %v1163 = vadd.f32 %v1124, %v1137
        %v1164 = vadd.f32 %v1125, %v1137
        %v1165 = vadd.f32 %v1126, %v1137
        %v1166 = vadd.f32 %v1127, %v1137
        %v1167 = vadd.f32 %v1128, %v1137
        %v1168 = vadd.f32 %v1129, %v1137
        %v1169 = vadd.f32 %v1130, %v1137
        %v1170 = vadd.f32 %v1131, %v1137
        %v1171 = vand.u32 2147483647, %v1139
        %vm1172 = vcmp.le.f32.partialorder %v1171, 0.7853982
        %vm1173 = vcmp.lt.s32.totalorder %v1139, 0
        %v1174 = vand.u32 %v1139, 2139095040
        %v1175 = vshrl.u32 %v1174, 23
        %v1176 = vsub.s32 %v1175, 127
        %v1177 = vand.u32 2147483647, %v1139
        %v1178 = vand.u32 %v1177, 8388607
        %v1179 = vor.u32 %v1178, 8388608
        %v1180 = vsub.s32 0, %v1179
        %v1181 = vadd.s32 %v1176, 1
        %vm1182 = vcmp.gt.s32.totalorder %v1181, 0
        %v1183 = vsel %vm1182, %v1181, 0
        %v1184 = vshrl.u32 %v1183, 5
        %v1185 = vand.u32 %v1183, 31
        %v1186 = vsub.s32 32, %v1185
        %v1187 = vshrl.u32 683565275, %v1186
        %v1188 = vshll.u32 683565275, %v1185
        %v1189 = vshrl.u32 2475754826, %v1186
        %v1190 = vor.u32 %v1188, %v1189
        %v1191 = vshll.u32 2475754826, %v1185
        %v1192 = vshrl.u32 2131351028, %v1186
        %v1193 = vor.u32 %v1191, %v1192
        %v1194 = vshll.u32 2131351028, %v1185
        %v1195 = vshrl.u32 2102212464, %v1186
        %v1196 = vor.u32 %v1194, %v1195
        %v1197 = vshll.u32 2102212464, %v1185
        %v1198 = vshrl.u32 920167782, %v1186
        %v1199 = vor.u32 %v1197, %v1198
        %v1200 = vshll.u32 920167782, %v1185
        %v1201 = vshrl.u32 1326507024, %v1186
        %v1202 = vor.u32 %v1200, %v1201
        %vm1203 = vcmp.lt.s32.totalorder %v1184, 1
        %vm1204 = vcmp.lt.s32.totalorder %v1184, 2
        %vm1205 = vcmp.lt.s32.totalorder %v1184, 3
        %vm1206 = vcmp.lt.s32.totalorder %v1184, 4
        %v1207 = vsel %vm1203, %v1187, %v1190
        %v1208 = vsel %vm1206, %v1196, 2102212464
        %v1209 = vsel %vm1205, %v1193, %v1208
        %v1210 = vsel %vm1204, %v1207, %v1209
        %v1211 = vsel %vm1203, %v1190, %v1193
        %v1212 = vsel %vm1206, %v1199, 920167782
        %v1213 = vsel %vm1205, %v1196, %v1212
        %v1214 = vsel %vm1204, %v1211, %v1213
        %v1215 = vsel %vm1203, %v1193, %v1196
        %v1216 = vsel %vm1206, %v1202, 1326507024
        %v1217 = vsel %vm1205, %v1199, %v1216
        %v1218 = vsel %vm1204, %v1215, %v1217
        %v1219 = vshll.u32 %v1179, 8
        %v1220 = vmul.u32.u64.compose %v1219, %v1218
        %v1221 = vextract.low.u32 %v1220
        %v1222 = vextract.high.u32 %v1220
        %v1223 = vmul.u32.u64.compose %v1219, %v1214
        %v1224 = vextract.low.u32 %v1223
        %v1225 = vextract.high.u32 %v1223
        %v1226 = vmul.u32 %v1219, %v1210
        %v1227 = vadd.s32 %v1222, %v1224
        %vm1228 = vc.u32 %v1222, %v1224
        %v1229 = vadd.s32 %v1225, 1
        %v1230 = vsel %vm1228, %v1229, %v1225
        %v1231 = vadd.s32 %v1226, %v1230
        %v1232 = vadd.s32 %v1231, 536870912
        %v1233 = vshrl.u32 %v1232, 30
        %v1234 = vshll.u32 %v1233, 30
        %v1235 = vsub.s32 %v1231, %v1234
        %vm1236 = vcmp.lt.s32.totalorder %v1235, 0
        %v1237 = vsub.s32 0, %v1235
        %v1238 = vsel %vm1236, %v1237, %v1235
        %v1239 = vclz %v1238
        %v1240 = vsub.s32 %v1239, 2
        %vm1241 = vcmp.gt.s32.totalorder 0, %v1240
        %v1242 = vsel %vm1241, 0, %v1240
        %v1243 = vsub.s32 32, %v1242
        %v1244 = vshll.u32 %v1235, %v1242
        %v1245 = vshrl.u32 %v1227, %v1243
        %v1246 = vor.u32 %v1244, %v1245
        %v1247 = vsub.s32 4294967266, %v1242
        %v1248 = vadd.s32 %v1247, 127
        %v1249 = vshll.u32 %v1248, 23
        %v1250 = vor.u32 4788187, %v1249
        %v1251 = vand.u32 2147483647, %v1250
        %v1253 = vcvt.s32.f32 %v1246
        %v1254 = vmul.f32 %v1253, %v1251
        %v1255 = vxor.u32 %v1254, 2147483648
        %v1256 = vsel %vm1173, %v1255, %v1254
        %v1257 = vsub.s32 4, %v1233
        %v1258 = vsel %vm1173, %v1257, %v1233
        %v1259 = vsel %vm1172, %v1139, %v1256
        %v1260 = vsel %vm1172, 0, %v1258
        %v1261 = vcosq.f32.pop %v1259
        %v1262 = vsinq.f32.pop %v1259
        %vm1263 = vweird.f32 %v1139
        %v1264 = vadd.s32 %v1260, 3
        %v1265 = vand.u32 %v1264, 3
        %vm1266 = vcmp.lt.s32.totalorder %v1265, 2
        %vm1267 = vcmp.eq.s32.totalorder %v1265, 0
        %v1268 = vxor.u32 %v1262, 2147483648
        %v1269 = vsel %vm1267, %v1261, %v1268
        %vm1270 = vcmp.eq.s32.totalorder %v1265, 2
        %v1271 = vxor.u32 %v1261, 2147483648
        %v1272 = vsel %vm1270, %v1271, %v1262
        %v1273 = vsel %vm1266, %v1269, %v1272
        %v1274 = vsel %vm1263, nan, %v1273
        %v1275 = vand.u32 2147483647, %v1140
        %vm1276 = vcmp.le.f32.partialorder %v1275, 0.7853982
        %vm1277 = vcmp.lt.s32.totalorder %v1140, 0
        %v1278 = vand.u32 %v1140, 2139095040
        %v1279 = vshrl.u32 %v1278, 23
        %v1280 = vsub.s32 %v1279, 127
        %v1281 = vand.u32 2147483647, %v1140
        %v1282 = vand.u32 %v1281, 8388607
        %v1283 = vor.u32 %v1282, 8388608
        %v1284 = vsub.s32 0, %v1283
        %v1285 = vadd.s32 %v1280, 1
        %vm1286 = vcmp.gt.s32.totalorder %v1285, 0
        %v1287 = vsel %vm1286, %v1285, 0
        %v1288 = vshrl.u32 %v1287, 5
        %v1289 = vand.u32 %v1287, 31
        %v1290 = vsub.s32 32, %v1289
        %v1291 = vshrl.u32 683565275, %v1290
        %v1292 = vshll.u32 683565275, %v1289
        %v1293 = vshrl.u32 2475754826, %v1290
        %v1294 = vor.u32 %v1292, %v1293
        %v1295 = vshll.u32 2475754826, %v1289
        %v1296 = vshrl.u32 2131351028, %v1290
        %v1297 = vor.u32 %v1295, %v1296
        %v1298 = vshll.u32 2131351028, %v1289
        %v1299 = vshrl.u32 2102212464, %v1290
        %v1300 = vor.u32 %v1298, %v1299
        %v1301 = vshll.u32 2102212464, %v1289
        %v1302 = vshrl.u32 920167782, %v1290
        %v1303 = vor.u32 %v1301, %v1302
        %v1304 = vshll.u32 920167782, %v1289
        %v1305 = vshrl.u32 1326507024, %v1290
        %v1306 = vor.u32 %v1304, %v1305
        %vm1307 = vcmp.lt.s32.totalorder %v1288, 1
        %vm1308 = vcmp.lt.s32.totalorder %v1288, 2
        %vm1309 = vcmp.lt.s32.totalorder %v1288, 3
        %vm1310 = vcmp.lt.s32.totalorder %v1288, 4
        %v1311 = vsel %vm1307, %v1291, %v1294
        %v1312 = vsel %vm1310, %v1300, 2102212464
        %v1313 = vsel %vm1309, %v1297, %v1312
        %v1314 = vsel %vm1308, %v1311, %v1313
        %v1315 = vsel %vm1307, %v1294, %v1297
        %v1316 = vsel %vm1310, %v1303, 920167782
        %v1317 = vsel %vm1309, %v1300, %v1316
        %v1318 = vsel %vm1308, %v1315, %v1317
        %v1319 = vsel %vm1307, %v1297, %v1300
        %v1320 = vsel %vm1310, %v1306, 1326507024
        %v1321 = vsel %vm1309, %v1303, %v1320
        %v1322 = vsel %vm1308, %v1319, %v1321
        %v1323 = vshll.u32 %v1283, 8
        %v1324 = vmul.u32.u64.compose %v1323, %v1322
        %v1325 = vextract.low.u32 %v1324
        %v1326 = vextract.high.u32 %v1324
        %v1327 = vmul.u32.u64.compose %v1323, %v1318
        %v1328 = vextract.low.u32 %v1327
        %v1329 = vextract.high.u32 %v1327
        %v1330 = vmul.u32 %v1323, %v1314
        %v1331 = vadd.s32 %v1326, %v1328
        %vm1332 = vc.u32 %v1326, %v1328
        %v1333 = vadd.s32 %v1329, 1
        %v1334 = vsel %vm1332, %v1333, %v1329
        %v1335 = vadd.s32 %v1330, %v1334
        %v1336 = vadd.s32 %v1335, 536870912
        %v1337 = vshrl.u32 %v1336, 30
        %v1338 = vshll.u32 %v1337, 30
        %v1339 = vsub.s32 %v1335, %v1338
        %vm1340 = vcmp.lt.s32.totalorder %v1339, 0
        %v1341 = vsub.s32 0, %v1339
        %v1342 = vsel %vm1340, %v1341, %v1339
        %v1343 = vclz %v1342
        %v1344 = vsub.s32 %v1343, 2
        %vm1345 = vcmp.gt.s32.totalorder 0, %v1344
        %v1346 = vsel %vm1345, 0, %v1344
        %v1347 = vsub.s32 32, %v1346
        %v1348 = vshll.u32 %v1339, %v1346
        %v1349 = vshrl.u32 %v1331, %v1347
        %v1350 = vor.u32 %v1348, %v1349
        %v1351 = vsub.s32 4294967266, %v1346
        %v1352 = vadd.s32 %v1351, 127
        %v1353 = vshll.u32 %v1352, 23
        %v1354 = vor.u32 4788187, %v1353
        %v1355 = vand.u32 2147483647, %v1354
        %v1357 = vcvt.s32.f32 %v1350
        %v1358 = vmul.f32 %v1357, %v1355
        %v1359 = vxor.u32 %v1358, 2147483648
        %v1360 = vsel %vm1277, %v1359, %v1358
        %v1361 = vsub.s32 4, %v1337
        %v1362 = vsel %vm1277, %v1361, %v1337
        %v1363 = vsel %vm1276, %v1140, %v1360
        %v1364 = vsel %vm1276, 0, %v1362
        %v1365 = vcosq.f32.pop %v1363
        %v1366 = vsinq.f32.pop %v1363
        %vm1367 = vweird.f32 %v1140
        %v1368 = vadd.s32 %v1364, 3
        %v1369 = vand.u32 %v1368, 3
        %vm1370 = vcmp.lt.s32.totalorder %v1369, 2
        %vm1371 = vcmp.eq.s32.totalorder %v1369, 0
        %v1372 = vxor.u32 %v1366, 2147483648
        %v1373 = vsel %vm1371, %v1365, %v1372
        %vm1374 = vcmp.eq.s32.totalorder %v1369, 2
        %v1375 = vxor.u32 %v1365, 2147483648
        %v1376 = vsel %vm1374, %v1375, %v1366
        %v1377 = vsel %vm1370, %v1373, %v1376
        %v1378 = vsel %vm1367, nan, %v1377
        %v1379 = vand.u32 2147483647, %v1141
        %vm1380 = vcmp.le.f32.partialorder %v1379, 0.7853982
        %vm1381 = vcmp.lt.s32.totalorder %v1141, 0
        %v1382 = vand.u32 %v1141, 2139095040
        %v1383 = vshrl.u32 %v1382, 23
        %v1384 = vsub.s32 %v1383, 127
        %v1385 = vand.u32 2147483647, %v1141
        %v1386 = vand.u32 %v1385, 8388607
        %v1387 = vor.u32 %v1386, 8388608
        %v1388 = vsub.s32 0, %v1387
        %v1389 = vadd.s32 %v1384, 1
        %vm1390 = vcmp.gt.s32.totalorder %v1389, 0
        %v1391 = vsel %vm1390, %v1389, 0
        %v1392 = vshrl.u32 %v1391, 5
        %v1393 = vand.u32 %v1391, 31
        %v1394 = vsub.s32 32, %v1393
        %v1395 = vshrl.u32 683565275, %v1394
        %v1396 = vshll.u32 683565275, %v1393
        %v1397 = vshrl.u32 2475754826, %v1394
        %v1398 = vor.u32 %v1396, %v1397
        %v1399 = vshll.u32 2475754826, %v1393
        %v1400 = vshrl.u32 2131351028, %v1394
        %v1401 = vor.u32 %v1399, %v1400
        %v1402 = vshll.u32 2131351028, %v1393
        %v1403 = vshrl.u32 2102212464, %v1394
        %v1404 = vor.u32 %v1402, %v1403
        %v1405 = vshll.u32 2102212464, %v1393
        %v1406 = vshrl.u32 920167782, %v1394
        %v1407 = vor.u32 %v1405, %v1406
        %v1408 = vshll.u32 920167782, %v1393
        %v1409 = vshrl.u32 1326507024, %v1394
        %v1410 = vor.u32 %v1408, %v1409
        %vm1411 = vcmp.lt.s32.totalorder %v1392, 1
        %vm1412 = vcmp.lt.s32.totalorder %v1392, 2
        %vm1413 = vcmp.lt.s32.totalorder %v1392, 3
        %vm1414 = vcmp.lt.s32.totalorder %v1392, 4
        %v1415 = vsel %vm1411, %v1395, %v1398
        %v1416 = vsel %vm1414, %v1404, 2102212464
        %v1417 = vsel %vm1413, %v1401, %v1416
        %v1418 = vsel %vm1412, %v1415, %v1417
        %v1419 = vsel %vm1411, %v1398, %v1401
        %v1420 = vsel %vm1414, %v1407, 920167782
        %v1421 = vsel %vm1413, %v1404, %v1420
        %v1422 = vsel %vm1412, %v1419, %v1421
        %v1423 = vsel %vm1411, %v1401, %v1404
        %v1424 = vsel %vm1414, %v1410, 1326507024
        %v1425 = vsel %vm1413, %v1407, %v1424
        %v1426 = vsel %vm1412, %v1423, %v1425
        %v1427 = vshll.u32 %v1387, 8
        %v1428 = vmul.u32.u64.compose %v1427, %v1426
        %v1429 = vextract.low.u32 %v1428
        %v1430 = vextract.high.u32 %v1428
        %v1431 = vmul.u32.u64.compose %v1427, %v1422
        %v1432 = vextract.low.u32 %v1431
        %v1433 = vextract.high.u32 %v1431
        %v1434 = vmul.u32 %v1427, %v1418
        %v1435 = vadd.s32 %v1430, %v1432
        %vm1436 = vc.u32 %v1430, %v1432
        %v1437 = vadd.s32 %v1433, 1
        %v1438 = vsel %vm1436, %v1437, %v1433
        %v1439 = vadd.s32 %v1434, %v1438
        %v1440 = vadd.s32 %v1439, 536870912
        %v1441 = vshrl.u32 %v1440, 30
        %v1442 = vshll.u32 %v1441, 30
        %v1443 = vsub.s32 %v1439, %v1442
        %vm1444 = vcmp.lt.s32.totalorder %v1443, 0
        %v1445 = vsub.s32 0, %v1443
        %v1446 = vsel %vm1444, %v1445, %v1443
        %v1447 = vclz %v1446
        %v1448 = vsub.s32 %v1447, 2
        %vm1449 = vcmp.gt.s32.totalorder 0, %v1448
        %v1450 = vsel %vm1449, 0, %v1448
        %v1451 = vsub.s32 32, %v1450
        %v1452 = vshll.u32 %v1443, %v1450
        %v1453 = vshrl.u32 %v1435, %v1451
        %v1454 = vor.u32 %v1452, %v1453
        %v1455 = vsub.s32 4294967266, %v1450
        %v1456 = vadd.s32 %v1455, 127
        %v1457 = vshll.u32 %v1456, 23
        %v1458 = vor.u32 4788187, %v1457
        %v1459 = vand.u32 2147483647, %v1458
        %v1461 = vcvt.s32.f32 %v1454
        %v1462 = vmul.f32 %v1461, %v1459
        %v1463 = vxor.u32 %v1462, 2147483648
        %v1464 = vsel %vm1381, %v1463, %v1462
        %v1465 = vsub.s32 4, %v1441
        %v1466 = vsel %vm1381, %v1465, %v1441
        %v1467 = vsel %vm1380, %v1141, %v1464
        %v1468 = vsel %vm1380, 0, %v1466
        %v1469 = vcosq.f32.pop %v1467
        %v1470 = vsinq.f32.pop %v1467
        %vm1471 = vweird.f32 %v1141
        %v1472 = vadd.s32 %v1468, 3
        %v1473 = vand.u32 %v1472, 3
        %vm1474 = vcmp.lt.s32.totalorder %v1473, 2
        %vm1475 = vcmp.eq.s32.totalorder %v1473, 0
        %v1476 = vxor.u32 %v1470, 2147483648
        %v1477 = vsel %vm1475, %v1469, %v1476
        %vm1478 = vcmp.eq.s32.totalorder %v1473, 2
        %v1479 = vxor.u32 %v1469, 2147483648
        %v1480 = vsel %vm1478, %v1479, %v1470
        %v1481 = vsel %vm1474, %v1477, %v1480
        %v1482 = vsel %vm1471, nan, %v1481
        %v1483 = vand.u32 2147483647, %v1142
        %vm1484 = vcmp.le.f32.partialorder %v1483, 0.7853982
        %vm1485 = vcmp.lt.s32.totalorder %v1142, 0
        %v1486 = vand.u32 %v1142, 2139095040
        %v1487 = vshrl.u32 %v1486, 23
        %v1488 = vsub.s32 %v1487, 127
        %v1489 = vand.u32 2147483647, %v1142
        %v1490 = vand.u32 %v1489, 8388607
        %v1491 = vor.u32 %v1490, 8388608
        %v1492 = vsub.s32 0, %v1491
        %v1493 = vadd.s32 %v1488, 1
        %vm1494 = vcmp.gt.s32.totalorder %v1493, 0
        %v1495 = vsel %vm1494, %v1493, 0
        %v1496 = vshrl.u32 %v1495, 5
        %v1497 = vand.u32 %v1495, 31
        %v1498 = vsub.s32 32, %v1497
        %v1499 = vshrl.u32 683565275, %v1498
        %v1500 = vshll.u32 683565275, %v1497
        %v1501 = vshrl.u32 2475754826, %v1498
        %v1502 = vor.u32 %v1500, %v1501
        %v1503 = vshll.u32 2475754826, %v1497
        %v1504 = vshrl.u32 2131351028, %v1498
        %v1505 = vor.u32 %v1503, %v1504
        %v1506 = vshll.u32 2131351028, %v1497
        %v1507 = vshrl.u32 2102212464, %v1498
        %v1508 = vor.u32 %v1506, %v1507
        %v1509 = vshll.u32 2102212464, %v1497
        %v1510 = vshrl.u32 920167782, %v1498
        %v1511 = vor.u32 %v1509, %v1510
        %v1512 = vshll.u32 920167782, %v1497
        %v1513 = vshrl.u32 1326507024, %v1498
        %v1514 = vor.u32 %v1512, %v1513
        %vm1515 = vcmp.lt.s32.totalorder %v1496, 1
        %vm1516 = vcmp.lt.s32.totalorder %v1496, 2
        %vm1517 = vcmp.lt.s32.totalorder %v1496, 3
        %vm1518 = vcmp.lt.s32.totalorder %v1496, 4
        %v1519 = vsel %vm1515, %v1499, %v1502
        %v1520 = vsel %vm1518, %v1508, 2102212464
        %v1521 = vsel %vm1517, %v1505, %v1520
        %v1522 = vsel %vm1516, %v1519, %v1521
        %v1523 = vsel %vm1515, %v1502, %v1505
        %v1524 = vsel %vm1518, %v1511, 920167782
        %v1525 = vsel %vm1517, %v1508, %v1524
        %v1526 = vsel %vm1516, %v1523, %v1525
        %v1527 = vsel %vm1515, %v1505, %v1508
        %v1528 = vsel %vm1518, %v1514, 1326507024
        %v1529 = vsel %vm1517, %v1511, %v1528
        %v1530 = vsel %vm1516, %v1527, %v1529
        %v1531 = vshll.u32 %v1491, 8
        %v1532 = vmul.u32.u64.compose %v1531, %v1530
        %v1533 = vextract.low.u32 %v1532
        %v1534 = vextract.high.u32 %v1532
        %v1535 = vmul.u32.u64.compose %v1531, %v1526
        %v1536 = vextract.low.u32 %v1535
        %v1537 = vextract.high.u32 %v1535
        %v1538 = vmul.u32 %v1531, %v1522
        %v1539 = vadd.s32 %v1534, %v1536
        %vm1540 = vc.u32 %v1534, %v1536
        %v1541 = vadd.s32 %v1537, 1
        %v1542 = vsel %vm1540, %v1541, %v1537
        %v1543 = vadd.s32 %v1538, %v1542
        %v1544 = vadd.s32 %v1543, 536870912
        %v1545 = vshrl.u32 %v1544, 30
        %v1546 = vshll.u32 %v1545, 30
        %v1547 = vsub.s32 %v1543, %v1546
        %vm1548 = vcmp.lt.s32.totalorder %v1547, 0
        %v1549 = vsub.s32 0, %v1547
        %v1550 = vsel %vm1548, %v1549, %v1547
        %v1551 = vclz %v1550
        %v1552 = vsub.s32 %v1551, 2
        %vm1553 = vcmp.gt.s32.totalorder 0, %v1552
        %v1554 = vsel %vm1553, 0, %v1552
        %v1555 = vsub.s32 32, %v1554
        %v1556 = vshll.u32 %v1547, %v1554
        %v1557 = vshrl.u32 %v1539, %v1555
        %v1558 = vor.u32 %v1556, %v1557
        %v1559 = vsub.s32 4294967266, %v1554
        %v1560 = vadd.s32 %v1559, 127
        %v1561 = vshll.u32 %v1560, 23
        %v1562 = vor.u32 4788187, %v1561
        %v1563 = vand.u32 2147483647, %v1562
        %v1565 = vcvt.s32.f32 %v1558
        %v1566 = vmul.f32 %v1565, %v1563
        %v1567 = vxor.u32 %v1566, 2147483648
        %v1568 = vsel %vm1485, %v1567, %v1566
        %v1569 = vsub.s32 4, %v1545
        %v1570 = vsel %vm1485, %v1569, %v1545
        %v1571 = vsel %vm1484, %v1142, %v1568
        %v1572 = vsel %vm1484, 0, %v1570
        %v1573 = vcosq.f32.pop %v1571
        %v1574 = vsinq.f32.pop %v1571
        %vm1575 = vweird.f32 %v1142
        %v1576 = vadd.s32 %v1572, 3
        %v1577 = vand.u32 %v1576, 3
        %vm1578 = vcmp.lt.s32.totalorder %v1577, 2
        %vm1579 = vcmp.eq.s32.totalorder %v1577, 0
        %v1580 = vxor.u32 %v1574, 2147483648
        %v1581 = vsel %vm1579, %v1573, %v1580
        %vm1582 = vcmp.eq.s32.totalorder %v1577, 2
        %v1583 = vxor.u32 %v1573, 2147483648
        %v1584 = vsel %vm1582, %v1583, %v1574
        %v1585 = vsel %vm1578, %v1581, %v1584
        %v1586 = vsel %vm1575, nan, %v1585
        %v1587 = vand.u32 2147483647, %v1143
        %vm1588 = vcmp.le.f32.partialorder %v1587, 0.7853982
        %vm1589 = vcmp.lt.s32.totalorder %v1143, 0
        %v1590 = vand.u32 %v1143, 2139095040
        %v1591 = vshrl.u32 %v1590, 23
        %v1592 = vsub.s32 %v1591, 127
        %v1593 = vand.u32 2147483647, %v1143
        %v1594 = vand.u32 %v1593, 8388607
        %v1595 = vor.u32 %v1594, 8388608
        %v1596 = vsub.s32 0, %v1595
        %v1597 = vadd.s32 %v1592, 1
        %vm1598 = vcmp.gt.s32.totalorder %v1597, 0
        %v1599 = vsel %vm1598, %v1597, 0
        %v1600 = vshrl.u32 %v1599, 5
        %v1601 = vand.u32 %v1599, 31
        %v1602 = vsub.s32 32, %v1601
        %v1603 = vshrl.u32 683565275, %v1602
        %v1604 = vshll.u32 683565275, %v1601
        %v1605 = vshrl.u32 2475754826, %v1602
        %v1606 = vor.u32 %v1604, %v1605
        %v1607 = vshll.u32 2475754826, %v1601
        %v1608 = vshrl.u32 2131351028, %v1602
        %v1609 = vor.u32 %v1607, %v1608
        %v1610 = vshll.u32 2131351028, %v1601
        %v1611 = vshrl.u32 2102212464, %v1602
        %v1612 = vor.u32 %v1610, %v1611
        %v1613 = vshll.u32 2102212464, %v1601
        %v1614 = vshrl.u32 920167782, %v1602
        %v1615 = vor.u32 %v1613, %v1614
        %v1616 = vshll.u32 920167782, %v1601
        %v1617 = vshrl.u32 1326507024, %v1602
        %v1618 = vor.u32 %v1616, %v1617
        %vm1619 = vcmp.lt.s32.totalorder %v1600, 1
        %vm1620 = vcmp.lt.s32.totalorder %v1600, 2
        %vm1621 = vcmp.lt.s32.totalorder %v1600, 3
        %vm1622 = vcmp.lt.s32.totalorder %v1600, 4
        %v1623 = vsel %vm1619, %v1603, %v1606
        %v1624 = vsel %vm1622, %v1612, 2102212464
        %v1625 = vsel %vm1621, %v1609, %v1624
        %v1626 = vsel %vm1620, %v1623, %v1625
        %v1627 = vsel %vm1619, %v1606, %v1609
        %v1628 = vsel %vm1622, %v1615, 920167782
        %v1629 = vsel %vm1621, %v1612, %v1628
        %v1630 = vsel %vm1620, %v1627, %v1629
        %v1631 = vsel %vm1619, %v1609, %v1612
        %v1632 = vsel %vm1622, %v1618, 1326507024
        %v1633 = vsel %vm1621, %v1615, %v1632
        %v1634 = vsel %vm1620, %v1631, %v1633
        %v1635 = vshll.u32 %v1595, 8
        %v1636 = vmul.u32.u64.compose %v1635, %v1634
        %v1637 = vextract.low.u32 %v1636
        %v1638 = vextract.high.u32 %v1636
        %v1639 = vmul.u32.u64.compose %v1635, %v1630
        %v1640 = vextract.low.u32 %v1639
        %v1641 = vextract.high.u32 %v1639
        %v1642 = vmul.u32 %v1635, %v1626
        %v1643 = vadd.s32 %v1638, %v1640
        %vm1644 = vc.u32 %v1638, %v1640
        %v1645 = vadd.s32 %v1641, 1
        %v1646 = vsel %vm1644, %v1645, %v1641
        %v1647 = vadd.s32 %v1642, %v1646
        %v1648 = vadd.s32 %v1647, 536870912
        %v1649 = vshrl.u32 %v1648, 30
        %v1650 = vshll.u32 %v1649, 30
        %v1651 = vsub.s32 %v1647, %v1650
        %vm1652 = vcmp.lt.s32.totalorder %v1651, 0
        %v1653 = vsub.s32 0, %v1651
        %v1654 = vsel %vm1652, %v1653, %v1651
        %v1655 = vclz %v1654
        %v1656 = vsub.s32 %v1655, 2
        %vm1657 = vcmp.gt.s32.totalorder 0, %v1656
        %v1658 = vsel %vm1657, 0, %v1656
        %v1659 = vsub.s32 32, %v1658
        %v1660 = vshll.u32 %v1651, %v1658
        %v1661 = vshrl.u32 %v1643, %v1659
        %v1662 = vor.u32 %v1660, %v1661
        %v1663 = vsub.s32 4294967266, %v1658
        %v1664 = vadd.s32 %v1663, 127
        %v1665 = vshll.u32 %v1664, 23
        %v1666 = vor.u32 4788187, %v1665
        %v1667 = vand.u32 2147483647, %v1666
        %v1669 = vcvt.s32.f32 %v1662
        %v1670 = vmul.f32 %v1669, %v1667
        %v1671 = vxor.u32 %v1670, 2147483648
        %v1672 = vsel %vm1589, %v1671, %v1670
        %v1673 = vsub.s32 4, %v1649
        %v1674 = vsel %vm1589, %v1673, %v1649
        %v1675 = vsel %vm1588, %v1143, %v1672
        %v1676 = vsel %vm1588, 0, %v1674
        %v1677 = vcosq.f32.pop %v1675
        %v1678 = vsinq.f32.pop %v1675
        %vm1679 = vweird.f32 %v1143
        %v1680 = vadd.s32 %v1676, 3
        %v1681 = vand.u32 %v1680, 3
        %vm1682 = vcmp.lt.s32.totalorder %v1681, 2
        %vm1683 = vcmp.eq.s32.totalorder %v1681, 0
        %v1684 = vxor.u32 %v1678, 2147483648
        %v1685 = vsel %vm1683, %v1677, %v1684
        %vm1686 = vcmp.eq.s32.totalorder %v1681, 2
        %v1687 = vxor.u32 %v1677, 2147483648
        %v1688 = vsel %vm1686, %v1687, %v1678
        %v1689 = vsel %vm1682, %v1685, %v1688
        %v1690 = vsel %vm1679, nan, %v1689
        %v1691 = vand.u32 2147483647, %v1144
        %vm1692 = vcmp.le.f32.partialorder %v1691, 0.7853982
        %vm1693 = vcmp.lt.s32.totalorder %v1144, 0
        %v1694 = vand.u32 %v1144, 2139095040
        %v1695 = vshrl.u32 %v1694, 23
        %v1696 = vsub.s32 %v1695, 127
        %v1697 = vand.u32 2147483647, %v1144
        %v1698 = vand.u32 %v1697, 8388607
        %v1699 = vor.u32 %v1698, 8388608
        %v1700 = vsub.s32 0, %v1699
        %v1701 = vadd.s32 %v1696, 1
        %vm1702 = vcmp.gt.s32.totalorder %v1701, 0
        %v1703 = vsel %vm1702, %v1701, 0
        %v1704 = vshrl.u32 %v1703, 5
        %v1705 = vand.u32 %v1703, 31
        %v1706 = vsub.s32 32, %v1705
        %v1707 = vshrl.u32 683565275, %v1706
        %v1708 = vshll.u32 683565275, %v1705
        %v1709 = vshrl.u32 2475754826, %v1706
        %v1710 = vor.u32 %v1708, %v1709
        %v1711 = vshll.u32 2475754826, %v1705
        %v1712 = vshrl.u32 2131351028, %v1706
        %v1713 = vor.u32 %v1711, %v1712
        %v1714 = vshll.u32 2131351028, %v1705
        %v1715 = vshrl.u32 2102212464, %v1706
        %v1716 = vor.u32 %v1714, %v1715
        %v1717 = vshll.u32 2102212464, %v1705
        %v1718 = vshrl.u32 920167782, %v1706
        %v1719 = vor.u32 %v1717, %v1718
        %v1720 = vshll.u32 920167782, %v1705
        %v1721 = vshrl.u32 1326507024, %v1706
        %v1722 = vor.u32 %v1720, %v1721
        %vm1723 = vcmp.lt.s32.totalorder %v1704, 1
        %vm1724 = vcmp.lt.s32.totalorder %v1704, 2
        %vm1725 = vcmp.lt.s32.totalorder %v1704, 3
        %vm1726 = vcmp.lt.s32.totalorder %v1704, 4
        %v1727 = vsel %vm1723, %v1707, %v1710
        %v1728 = vsel %vm1726, %v1716, 2102212464
        %v1729 = vsel %vm1725, %v1713, %v1728
        %v1730 = vsel %vm1724, %v1727, %v1729
        %v1731 = vsel %vm1723, %v1710, %v1713
        %v1732 = vsel %vm1726, %v1719, 920167782
        %v1733 = vsel %vm1725, %v1716, %v1732
        %v1734 = vsel %vm1724, %v1731, %v1733
        %v1735 = vsel %vm1723, %v1713, %v1716
        %v1736 = vsel %vm1726, %v1722, 1326507024
        %v1737 = vsel %vm1725, %v1719, %v1736
        %v1738 = vsel %vm1724, %v1735, %v1737
        %v1739 = vshll.u32 %v1699, 8
        %v1740 = vmul.u32.u64.compose %v1739, %v1738
        %v1741 = vextract.low.u32 %v1740
        %v1742 = vextract.high.u32 %v1740
        %v1743 = vmul.u32.u64.compose %v1739, %v1734
        %v1744 = vextract.low.u32 %v1743
        %v1745 = vextract.high.u32 %v1743
        %v1746 = vmul.u32 %v1739, %v1730
        %v1747 = vadd.s32 %v1742, %v1744
        %vm1748 = vc.u32 %v1742, %v1744
        %v1749 = vadd.s32 %v1745, 1
        %v1750 = vsel %vm1748, %v1749, %v1745
        %v1751 = vadd.s32 %v1746, %v1750
        %v1752 = vadd.s32 %v1751, 536870912
        %v1753 = vshrl.u32 %v1752, 30
        %v1754 = vshll.u32 %v1753, 30
        %v1755 = vsub.s32 %v1751, %v1754
        %vm1756 = vcmp.lt.s32.totalorder %v1755, 0
        %v1757 = vsub.s32 0, %v1755
        %v1758 = vsel %vm1756, %v1757, %v1755
        %v1759 = vclz %v1758
        %v1760 = vsub.s32 %v1759, 2
        %vm1761 = vcmp.gt.s32.totalorder 0, %v1760
        %v1762 = vsel %vm1761, 0, %v1760
        %v1763 = vsub.s32 32, %v1762
        %v1764 = vshll.u32 %v1755, %v1762
        %v1765 = vshrl.u32 %v1747, %v1763
        %v1766 = vor.u32 %v1764, %v1765
        %v1767 = vsub.s32 4294967266, %v1762
        %v1768 = vadd.s32 %v1767, 127
        %v1769 = vshll.u32 %v1768, 23
        %v1770 = vor.u32 4788187, %v1769
        %v1771 = vand.u32 2147483647, %v1770
        %v1773 = vcvt.s32.f32 %v1766
        %v1774 = vmul.f32 %v1773, %v1771
        %v1775 = vxor.u32 %v1774, 2147483648
        %v1776 = vsel %vm1693, %v1775, %v1774
        %v1777 = vsub.s32 4, %v1753
        %v1778 = vsel %vm1693, %v1777, %v1753
        %v1779 = vsel %vm1692, %v1144, %v1776
        %v1780 = vsel %vm1692, 0, %v1778
        %v1781 = vcosq.f32.pop %v1779
        %v1782 = vsinq.f32.pop %v1779
        %vm1783 = vweird.f32 %v1144
        %v1784 = vadd.s32 %v1780, 3
        %v1785 = vand.u32 %v1784, 3
        %vm1786 = vcmp.lt.s32.totalorder %v1785, 2
        %vm1787 = vcmp.eq.s32.totalorder %v1785, 0
        %v1788 = vxor.u32 %v1782, 2147483648
        %v1789 = vsel %vm1787, %v1781, %v1788
        %vm1790 = vcmp.eq.s32.totalorder %v1785, 2
        %v1791 = vxor.u32 %v1781, 2147483648
        %v1792 = vsel %vm1790, %v1791, %v1782
        %v1793 = vsel %vm1786, %v1789, %v1792
        %v1794 = vsel %vm1783, nan, %v1793
        %v1795 = vand.u32 2147483647, %v1145
        %vm1796 = vcmp.le.f32.partialorder %v1795, 0.7853982
        %vm1797 = vcmp.lt.s32.totalorder %v1145, 0
        %v1798 = vand.u32 %v1145, 2139095040
        %v1799 = vshrl.u32 %v1798, 23
        %v1800 = vsub.s32 %v1799, 127
        %v1801 = vand.u32 2147483647, %v1145
        %v1802 = vand.u32 %v1801, 8388607
        %v1803 = vor.u32 %v1802, 8388608
        %v1804 = vsub.s32 0, %v1803
        %v1805 = vadd.s32 %v1800, 1
        %vm1806 = vcmp.gt.s32.totalorder %v1805, 0
        %v1807 = vsel %vm1806, %v1805, 0
        %v1808 = vshrl.u32 %v1807, 5
        %v1809 = vand.u32 %v1807, 31
        %v1810 = vsub.s32 32, %v1809
        %v1811 = vshrl.u32 683565275, %v1810
        %v1812 = vshll.u32 683565275, %v1809
        %v1813 = vshrl.u32 2475754826, %v1810
        %v1814 = vor.u32 %v1812, %v1813
        %v1815 = vshll.u32 2475754826, %v1809
        %v1816 = vshrl.u32 2131351028, %v1810
        %v1817 = vor.u32 %v1815, %v1816
        %v1818 = vshll.u32 2131351028, %v1809
        %v1819 = vshrl.u32 2102212464, %v1810
        %v1820 = vor.u32 %v1818, %v1819
        %v1821 = vshll.u32 2102212464, %v1809
        %v1822 = vshrl.u32 920167782, %v1810
        %v1823 = vor.u32 %v1821, %v1822
        %v1824 = vshll.u32 920167782, %v1809
        %v1825 = vshrl.u32 1326507024, %v1810
        %v1826 = vor.u32 %v1824, %v1825
        %vm1827 = vcmp.lt.s32.totalorder %v1808, 1
        %vm1828 = vcmp.lt.s32.totalorder %v1808, 2
        %vm1829 = vcmp.lt.s32.totalorder %v1808, 3
        %vm1830 = vcmp.lt.s32.totalorder %v1808, 4
        %v1831 = vsel %vm1827, %v1811, %v1814
        %v1832 = vsel %vm1830, %v1820, 2102212464
        %v1833 = vsel %vm1829, %v1817, %v1832
        %v1834 = vsel %vm1828, %v1831, %v1833
        %v1835 = vsel %vm1827, %v1814, %v1817
        %v1836 = vsel %vm1830, %v1823, 920167782
        %v1837 = vsel %vm1829, %v1820, %v1836
        %v1838 = vsel %vm1828, %v1835, %v1837
        %v1839 = vsel %vm1827, %v1817, %v1820
        %v1840 = vsel %vm1830, %v1826, 1326507024
        %v1841 = vsel %vm1829, %v1823, %v1840
        %v1842 = vsel %vm1828, %v1839, %v1841
        %v1843 = vshll.u32 %v1803, 8
        %v1844 = vmul.u32.u64.compose %v1843, %v1842
        %v1845 = vextract.low.u32 %v1844
        %v1846 = vextract.high.u32 %v1844
        %v1847 = vmul.u32.u64.compose %v1843, %v1838
        %v1848 = vextract.low.u32 %v1847
        %v1849 = vextract.high.u32 %v1847
        %v1850 = vmul.u32 %v1843, %v1834
        %v1851 = vadd.s32 %v1846, %v1848
        %vm1852 = vc.u32 %v1846, %v1848
        %v1853 = vadd.s32 %v1849, 1
        %v1854 = vsel %vm1852, %v1853, %v1849
        %v1855 = vadd.s32 %v1850, %v1854
        %v1856 = vadd.s32 %v1855, 536870912
        %v1857 = vshrl.u32 %v1856, 30
        %v1858 = vshll.u32 %v1857, 30
        %v1859 = vsub.s32 %v1855, %v1858
        %vm1860 = vcmp.lt.s32.totalorder %v1859, 0
        %v1861 = vsub.s32 0, %v1859
        %v1862 = vsel %vm1860, %v1861, %v1859
        %v1863 = vclz %v1862
        %v1864 = vsub.s32 %v1863, 2
        %vm1865 = vcmp.gt.s32.totalorder 0, %v1864
        %v1866 = vsel %vm1865, 0, %v1864
        %v1867 = vsub.s32 32, %v1866
        %v1868 = vshll.u32 %v1859, %v1866
        %v1869 = vshrl.u32 %v1851, %v1867
        %v1870 = vor.u32 %v1868, %v1869
        %v1871 = vsub.s32 4294967266, %v1866
        %v1872 = vadd.s32 %v1871, 127
        %v1873 = vshll.u32 %v1872, 23
        %v1874 = vor.u32 4788187, %v1873
        %v1875 = vand.u32 2147483647, %v1874
        %v1877 = vcvt.s32.f32 %v1870
        %v1878 = vmul.f32 %v1877, %v1875
        %v1879 = vxor.u32 %v1878, 2147483648
        %v1880 = vsel %vm1797, %v1879, %v1878
        %v1881 = vsub.s32 4, %v1857
        %v1882 = vsel %vm1797, %v1881, %v1857
        %v1883 = vsel %vm1796, %v1145, %v1880
        %v1884 = vsel %vm1796, 0, %v1882
        %v1885 = vcosq.f32.pop %v1883
        %v1886 = vsinq.f32.pop %v1883
        %vm1887 = vweird.f32 %v1145
        %v1888 = vadd.s32 %v1884, 3
        %v1889 = vand.u32 %v1888, 3
        %vm1890 = vcmp.lt.s32.totalorder %v1889, 2
        %vm1891 = vcmp.eq.s32.totalorder %v1889, 0
        %v1892 = vxor.u32 %v1886, 2147483648
        %v1893 = vsel %vm1891, %v1885, %v1892
        %vm1894 = vcmp.eq.s32.totalorder %v1889, 2
        %v1895 = vxor.u32 %v1885, 2147483648
        %v1896 = vsel %vm1894, %v1895, %v1886
        %v1897 = vsel %vm1890, %v1893, %v1896
        %v1898 = vsel %vm1887, nan, %v1897
        %v1899 = vand.u32 2147483647, %v1146
        %vm1900 = vcmp.le.f32.partialorder %v1899, 0.7853982
        %vm1901 = vcmp.lt.s32.totalorder %v1146, 0
        %v1902 = vand.u32 %v1146, 2139095040
        %v1903 = vshrl.u32 %v1902, 23
        %v1904 = vsub.s32 %v1903, 127
        %v1905 = vand.u32 2147483647, %v1146
        %v1906 = vand.u32 %v1905, 8388607
        %v1907 = vor.u32 %v1906, 8388608
        %v1908 = vsub.s32 0, %v1907
        %v1909 = vadd.s32 %v1904, 1
        %vm1910 = vcmp.gt.s32.totalorder %v1909, 0
        %v1911 = vsel %vm1910, %v1909, 0
        %v1912 = vshrl.u32 %v1911, 5
        %v1913 = vand.u32 %v1911, 31
        %v1914 = vsub.s32 32, %v1913
        %v1915 = vshrl.u32 683565275, %v1914
        %v1916 = vshll.u32 683565275, %v1913
        %v1917 = vshrl.u32 2475754826, %v1914
        %v1918 = vor.u32 %v1916, %v1917
        %v1919 = vshll.u32 2475754826, %v1913
        %v1920 = vshrl.u32 2131351028, %v1914
        %v1921 = vor.u32 %v1919, %v1920
        %v1922 = vshll.u32 2131351028, %v1913
        %v1923 = vshrl.u32 2102212464, %v1914
        %v1924 = vor.u32 %v1922, %v1923
        %v1925 = vshll.u32 2102212464, %v1913
        %v1926 = vshrl.u32 920167782, %v1914
        %v1927 = vor.u32 %v1925, %v1926
        %v1928 = vshll.u32 920167782, %v1913
        %v1929 = vshrl.u32 1326507024, %v1914
        %v1930 = vor.u32 %v1928, %v1929
        %vm1931 = vcmp.lt.s32.totalorder %v1912, 1
        %vm1932 = vcmp.lt.s32.totalorder %v1912, 2
        %vm1933 = vcmp.lt.s32.totalorder %v1912, 3
        %vm1934 = vcmp.lt.s32.totalorder %v1912, 4
        %v1935 = vsel %vm1931, %v1915, %v1918
        %v1936 = vsel %vm1934, %v1924, 2102212464
        %v1937 = vsel %vm1933, %v1921, %v1936
        %v1938 = vsel %vm1932, %v1935, %v1937
        %v1939 = vsel %vm1931, %v1918, %v1921
        %v1940 = vsel %vm1934, %v1927, 920167782
        %v1941 = vsel %vm1933, %v1924, %v1940
        %v1942 = vsel %vm1932, %v1939, %v1941
        %v1943 = vsel %vm1931, %v1921, %v1924
        %v1944 = vsel %vm1934, %v1930, 1326507024
        %v1945 = vsel %vm1933, %v1927, %v1944
        %v1946 = vsel %vm1932, %v1943, %v1945
        %v1947 = vshll.u32 %v1907, 8
        %v1948 = vmul.u32.u64.compose %v1947, %v1946
        %v1949 = vextract.low.u32 %v1948
        %v1950 = vextract.high.u32 %v1948
        %v1951 = vmul.u32.u64.compose %v1947, %v1942
        %v1952 = vextract.low.u32 %v1951
        %v1953 = vextract.high.u32 %v1951
        %v1954 = vmul.u32 %v1947, %v1938
        %v1955 = vadd.s32 %v1950, %v1952
        %vm1956 = vc.u32 %v1950, %v1952
        %v1957 = vadd.s32 %v1953, 1
        %v1958 = vsel %vm1956, %v1957, %v1953
        %v1959 = vadd.s32 %v1954, %v1958
        %v1960 = vadd.s32 %v1959, 536870912
        %v1961 = vshrl.u32 %v1960, 30
        %v1962 = vshll.u32 %v1961, 30
        %v1963 = vsub.s32 %v1959, %v1962
        %vm1964 = vcmp.lt.s32.totalorder %v1963, 0
        %v1965 = vsub.s32 0, %v1963
        %v1966 = vsel %vm1964, %v1965, %v1963
        %v1967 = vclz %v1966
        %v1968 = vsub.s32 %v1967, 2
        %vm1969 = vcmp.gt.s32.totalorder 0, %v1968
        %v1970 = vsel %vm1969, 0, %v1968
        %v1971 = vsub.s32 32, %v1970
        %v1972 = vshll.u32 %v1963, %v1970
        %v1973 = vshrl.u32 %v1955, %v1971
        %v1974 = vor.u32 %v1972, %v1973
        %v1975 = vsub.s32 4294967266, %v1970
        %v1976 = vadd.s32 %v1975, 127
        %v1977 = vshll.u32 %v1976, 23
        %v1978 = vor.u32 4788187, %v1977
        %v1979 = vand.u32 2147483647, %v1978
        %v1981 = vcvt.s32.f32 %v1974
        %v1982 = vmul.f32 %v1981, %v1979
        %v1983 = vxor.u32 %v1982, 2147483648
        %v1984 = vsel %vm1901, %v1983, %v1982
        %v1985 = vsub.s32 4, %v1961
        %v1986 = vsel %vm1901, %v1985, %v1961
        %v1987 = vsel %vm1900, %v1146, %v1984
        %v1988 = vsel %vm1900, 0, %v1986
        %v1989 = vcosq.f32.pop %v1987
        %v1990 = vsinq.f32.pop %v1987
        %vm1991 = vweird.f32 %v1146
        %v1992 = vadd.s32 %v1988, 3
        %v1993 = vand.u32 %v1992, 3
        %vm1994 = vcmp.lt.s32.totalorder %v1993, 2
        %vm1995 = vcmp.eq.s32.totalorder %v1993, 0
        %v1996 = vxor.u32 %v1990, 2147483648
        %v1997 = vsel %vm1995, %v1989, %v1996
        %vm1998 = vcmp.eq.s32.totalorder %v1993, 2
        %v1999 = vxor.u32 %v1989, 2147483648
        %v2000 = vsel %vm1998, %v1999, %v1990
        %v2001 = vsel %vm1994, %v1997, %v2000
        %v2002 = vsel %vm1991, nan, %v2001
        %v2003 = vand.u32 2147483647, %v1147
        %vm2004 = vcmp.le.f32.partialorder %v2003, 0.7853982
        %vm2005 = vcmp.lt.s32.totalorder %v1147, 0
        %v2006 = vand.u32 %v1147, 2139095040
        %v2007 = vshrl.u32 %v2006, 23
        %v2008 = vsub.s32 %v2007, 127
        %v2009 = vand.u32 2147483647, %v1147
        %v2010 = vand.u32 %v2009, 8388607
        %v2011 = vor.u32 %v2010, 8388608
        %v2012 = vsub.s32 0, %v2011
        %v2013 = vadd.s32 %v2008, 1
        %vm2014 = vcmp.gt.s32.totalorder %v2013, 0
        %v2015 = vsel %vm2014, %v2013, 0
        %v2016 = vshrl.u32 %v2015, 5
        %v2017 = vand.u32 %v2015, 31
        %v2018 = vsub.s32 32, %v2017
        %v2019 = vshrl.u32 683565275, %v2018
        %v2020 = vshll.u32 683565275, %v2017
        %v2021 = vshrl.u32 2475754826, %v2018
        %v2022 = vor.u32 %v2020, %v2021
        %v2023 = vshll.u32 2475754826, %v2017
        %v2024 = vshrl.u32 2131351028, %v2018
        %v2025 = vor.u32 %v2023, %v2024
        %v2026 = vshll.u32 2131351028, %v2017
        %v2027 = vshrl.u32 2102212464, %v2018
        %v2028 = vor.u32 %v2026, %v2027
        %v2029 = vshll.u32 2102212464, %v2017
        %v2030 = vshrl.u32 920167782, %v2018
        %v2031 = vor.u32 %v2029, %v2030
        %v2032 = vshll.u32 920167782, %v2017
        %v2033 = vshrl.u32 1326507024, %v2018
        %v2034 = vor.u32 %v2032, %v2033
        %vm2035 = vcmp.lt.s32.totalorder %v2016, 1
        %vm2036 = vcmp.lt.s32.totalorder %v2016, 2
        %vm2037 = vcmp.lt.s32.totalorder %v2016, 3
        %vm2038 = vcmp.lt.s32.totalorder %v2016, 4
        %v2039 = vsel %vm2035, %v2019, %v2022
        %v2040 = vsel %vm2038, %v2028, 2102212464
        %v2041 = vsel %vm2037, %v2025, %v2040
        %v2042 = vsel %vm2036, %v2039, %v2041
        %v2043 = vsel %vm2035, %v2022, %v2025
        %v2044 = vsel %vm2038, %v2031, 920167782
        %v2045 = vsel %vm2037, %v2028, %v2044
        %v2046 = vsel %vm2036, %v2043, %v2045
        %v2047 = vsel %vm2035, %v2025, %v2028
        %v2048 = vsel %vm2038, %v2034, 1326507024
        %v2049 = vsel %vm2037, %v2031, %v2048
        %v2050 = vsel %vm2036, %v2047, %v2049
        %v2051 = vshll.u32 %v2011, 8
        %v2052 = vmul.u32.u64.compose %v2051, %v2050
        %v2053 = vextract.low.u32 %v2052
        %v2054 = vextract.high.u32 %v2052
        %v2055 = vmul.u32.u64.compose %v2051, %v2046
        %v2056 = vextract.low.u32 %v2055
        %v2057 = vextract.high.u32 %v2055
        %v2058 = vmul.u32 %v2051, %v2042
        %v2059 = vadd.s32 %v2054, %v2056
        %vm2060 = vc.u32 %v2054, %v2056
        %v2061 = vadd.s32 %v2057, 1
        %v2062 = vsel %vm2060, %v2061, %v2057
        %v2063 = vadd.s32 %v2058, %v2062
        %v2064 = vadd.s32 %v2063, 536870912
        %v2065 = vshrl.u32 %v2064, 30
        %v2066 = vshll.u32 %v2065, 30
        %v2067 = vsub.s32 %v2063, %v2066
        %vm2068 = vcmp.lt.s32.totalorder %v2067, 0
        %v2069 = vsub.s32 0, %v2067
        %v2070 = vsel %vm2068, %v2069, %v2067
        %v2071 = vclz %v2070
        %v2072 = vsub.s32 %v2071, 2
        %vm2073 = vcmp.gt.s32.totalorder 0, %v2072
        %v2074 = vsel %vm2073, 0, %v2072
        %v2075 = vsub.s32 32, %v2074
        %v2076 = vshll.u32 %v2067, %v2074
        %v2077 = vshrl.u32 %v2059, %v2075
        %v2078 = vor.u32 %v2076, %v2077
        %v2079 = vsub.s32 4294967266, %v2074
        %v2080 = vadd.s32 %v2079, 127
        %v2081 = vshll.u32 %v2080, 23
        %v2082 = vor.u32 4788187, %v2081
        %v2083 = vand.u32 2147483647, %v2082
        %v2085 = vcvt.s32.f32 %v2078
        %v2086 = vmul.f32 %v2085, %v2083
        %v2087 = vxor.u32 %v2086, 2147483648
        %v2088 = vsel %vm2005, %v2087, %v2086
        %v2089 = vsub.s32 4, %v2065
        %v2090 = vsel %vm2005, %v2089, %v2065
        %v2091 = vsel %vm2004, %v1147, %v2088
        %v2092 = vsel %vm2004, 0, %v2090
        %v2093 = vcosq.f32.pop %v2091
        %v2094 = vsinq.f32.pop %v2091
        %vm2095 = vweird.f32 %v1147
        %v2096 = vadd.s32 %v2092, 3
        %v2097 = vand.u32 %v2096, 3
        %vm2098 = vcmp.lt.s32.totalorder %v2097, 2
        %vm2099 = vcmp.eq.s32.totalorder %v2097, 0
        %v2100 = vxor.u32 %v2094, 2147483648
        %v2101 = vsel %vm2099, %v2093, %v2100
        %vm2102 = vcmp.eq.s32.totalorder %v2097, 2
        %v2103 = vxor.u32 %v2093, 2147483648
        %v2104 = vsel %vm2102, %v2103, %v2094
        %v2105 = vsel %vm2098, %v2101, %v2104
        %v2106 = vsel %vm2095, nan, %v2105
        %v2107 = vand.u32 2147483647, %v1148
        %vm2108 = vcmp.le.f32.partialorder %v2107, 0.7853982
        %vm2109 = vcmp.lt.s32.totalorder %v1148, 0
        %v2110 = vand.u32 %v1148, 2139095040
        %v2111 = vshrl.u32 %v2110, 23
        %v2112 = vsub.s32 %v2111, 127
        %v2113 = vand.u32 2147483647, %v1148
        %v2114 = vand.u32 %v2113, 8388607
        %v2115 = vor.u32 %v2114, 8388608
        %v2116 = vsub.s32 0, %v2115
        %v2117 = vadd.s32 %v2112, 1
        %vm2118 = vcmp.gt.s32.totalorder %v2117, 0
        %v2119 = vsel %vm2118, %v2117, 0
        %v2120 = vshrl.u32 %v2119, 5
        %v2121 = vand.u32 %v2119, 31
        %v2122 = vsub.s32 32, %v2121
        %v2123 = vshrl.u32 683565275, %v2122
        %v2124 = vshll.u32 683565275, %v2121
        %v2125 = vshrl.u32 2475754826, %v2122
        %v2126 = vor.u32 %v2124, %v2125
        %v2127 = vshll.u32 2475754826, %v2121
        %v2128 = vshrl.u32 2131351028, %v2122
        %v2129 = vor.u32 %v2127, %v2128
        %v2130 = vshll.u32 2131351028, %v2121
        %v2131 = vshrl.u32 2102212464, %v2122
        %v2132 = vor.u32 %v2130, %v2131
        %v2133 = vshll.u32 2102212464, %v2121
        %v2134 = vshrl.u32 920167782, %v2122
        %v2135 = vor.u32 %v2133, %v2134
        %v2136 = vshll.u32 920167782, %v2121
        %v2137 = vshrl.u32 1326507024, %v2122
        %v2138 = vor.u32 %v2136, %v2137
        %vm2139 = vcmp.lt.s32.totalorder %v2120, 1
        %vm2140 = vcmp.lt.s32.totalorder %v2120, 2
        %vm2141 = vcmp.lt.s32.totalorder %v2120, 3
        %vm2142 = vcmp.lt.s32.totalorder %v2120, 4
        %v2143 = vsel %vm2139, %v2123, %v2126
        %v2144 = vsel %vm2142, %v2132, 2102212464
        %v2145 = vsel %vm2141, %v2129, %v2144
        %v2146 = vsel %vm2140, %v2143, %v2145
        %v2147 = vsel %vm2139, %v2126, %v2129
        %v2148 = vsel %vm2142, %v2135, 920167782
        %v2149 = vsel %vm2141, %v2132, %v2148
        %v2150 = vsel %vm2140, %v2147, %v2149
        %v2151 = vsel %vm2139, %v2129, %v2132
        %v2152 = vsel %vm2142, %v2138, 1326507024
        %v2153 = vsel %vm2141, %v2135, %v2152
        %v2154 = vsel %vm2140, %v2151, %v2153
        %v2155 = vshll.u32 %v2115, 8
        %v2156 = vmul.u32.u64.compose %v2155, %v2154
        %v2157 = vextract.low.u32 %v2156
        %v2158 = vextract.high.u32 %v2156
        %v2159 = vmul.u32.u64.compose %v2155, %v2150
        %v2160 = vextract.low.u32 %v2159
        %v2161 = vextract.high.u32 %v2159
        %v2162 = vmul.u32 %v2155, %v2146
        %v2163 = vadd.s32 %v2158, %v2160
        %vm2164 = vc.u32 %v2158, %v2160
        %v2165 = vadd.s32 %v2161, 1
        %v2166 = vsel %vm2164, %v2165, %v2161
        %v2167 = vadd.s32 %v2162, %v2166
        %v2168 = vadd.s32 %v2167, 536870912
        %v2169 = vshrl.u32 %v2168, 30
        %v2170 = vshll.u32 %v2169, 30
        %v2171 = vsub.s32 %v2167, %v2170
        %vm2172 = vcmp.lt.s32.totalorder %v2171, 0
        %v2173 = vsub.s32 0, %v2171
        %v2174 = vsel %vm2172, %v2173, %v2171
        %v2175 = vclz %v2174
        %v2176 = vsub.s32 %v2175, 2
        %vm2177 = vcmp.gt.s32.totalorder 0, %v2176
        %v2178 = vsel %vm2177, 0, %v2176
        %v2179 = vsub.s32 32, %v2178
        %v2180 = vshll.u32 %v2171, %v2178
        %v2181 = vshrl.u32 %v2163, %v2179
        %v2182 = vor.u32 %v2180, %v2181
        %v2183 = vsub.s32 4294967266, %v2178
        %v2184 = vadd.s32 %v2183, 127
        %v2185 = vshll.u32 %v2184, 23
        %v2186 = vor.u32 4788187, %v2185
        %v2187 = vand.u32 2147483647, %v2186
        %v2189 = vcvt.s32.f32 %v2182
        %v2190 = vmul.f32 %v2189, %v2187
        %v2191 = vxor.u32 %v2190, 2147483648
        %v2192 = vsel %vm2109, %v2191, %v2190
        %v2193 = vsub.s32 4, %v2169
        %v2194 = vsel %vm2109, %v2193, %v2169
        %v2195 = vsel %vm2108, %v1148, %v2192
        %v2196 = vsel %vm2108, 0, %v2194
        %v2197 = vcosq.f32.pop %v2195
        %v2198 = vsinq.f32.pop %v2195
        %vm2199 = vweird.f32 %v1148
        %v2200 = vadd.s32 %v2196, 3
        %v2201 = vand.u32 %v2200, 3
        %vm2202 = vcmp.lt.s32.totalorder %v2201, 2
        %vm2203 = vcmp.eq.s32.totalorder %v2201, 0
        %v2204 = vxor.u32 %v2198, 2147483648
        %v2205 = vsel %vm2203, %v2197, %v2204
        %vm2206 = vcmp.eq.s32.totalorder %v2201, 2
        %v2207 = vxor.u32 %v2197, 2147483648
        %v2208 = vsel %vm2206, %v2207, %v2198
        %v2209 = vsel %vm2202, %v2205, %v2208
        %v2210 = vsel %vm2199, nan, %v2209
        %v2211 = vand.u32 2147483647, %v1149
        %vm2212 = vcmp.le.f32.partialorder %v2211, 0.7853982
        %vm2213 = vcmp.lt.s32.totalorder %v1149, 0
        %v2214 = vand.u32 %v1149, 2139095040
        %v2215 = vshrl.u32 %v2214, 23
        %v2216 = vsub.s32 %v2215, 127
        %v2217 = vand.u32 2147483647, %v1149
        %v2218 = vand.u32 %v2217, 8388607
        %v2219 = vor.u32 %v2218, 8388608
        %v2220 = vsub.s32 0, %v2219
        %v2221 = vadd.s32 %v2216, 1
        %vm2222 = vcmp.gt.s32.totalorder %v2221, 0
        %v2223 = vsel %vm2222, %v2221, 0
        %v2224 = vshrl.u32 %v2223, 5
        %v2225 = vand.u32 %v2223, 31
        %v2226 = vsub.s32 32, %v2225
        %v2227 = vshrl.u32 683565275, %v2226
        %v2228 = vshll.u32 683565275, %v2225
        %v2229 = vshrl.u32 2475754826, %v2226
        %v2230 = vor.u32 %v2228, %v2229
        %v2231 = vshll.u32 2475754826, %v2225
        %v2232 = vshrl.u32 2131351028, %v2226
        %v2233 = vor.u32 %v2231, %v2232
        %v2234 = vshll.u32 2131351028, %v2225
        %v2235 = vshrl.u32 2102212464, %v2226
        %v2236 = vor.u32 %v2234, %v2235
        %v2237 = vshll.u32 2102212464, %v2225
        %v2238 = vshrl.u32 920167782, %v2226
        %v2239 = vor.u32 %v2237, %v2238
        %v2240 = vshll.u32 920167782, %v2225
        %v2241 = vshrl.u32 1326507024, %v2226
        %v2242 = vor.u32 %v2240, %v2241
        %vm2243 = vcmp.lt.s32.totalorder %v2224, 1
        %vm2244 = vcmp.lt.s32.totalorder %v2224, 2
        %vm2245 = vcmp.lt.s32.totalorder %v2224, 3
        %vm2246 = vcmp.lt.s32.totalorder %v2224, 4
        %v2247 = vsel %vm2243, %v2227, %v2230
        %v2248 = vsel %vm2246, %v2236, 2102212464
        %v2249 = vsel %vm2245, %v2233, %v2248
        %v2250 = vsel %vm2244, %v2247, %v2249
        %v2251 = vsel %vm2243, %v2230, %v2233
        %v2252 = vsel %vm2246, %v2239, 920167782
        %v2253 = vsel %vm2245, %v2236, %v2252
        %v2254 = vsel %vm2244, %v2251, %v2253
        %v2255 = vsel %vm2243, %v2233, %v2236
        %v2256 = vsel %vm2246, %v2242, 1326507024
        %v2257 = vsel %vm2245, %v2239, %v2256
        %v2258 = vsel %vm2244, %v2255, %v2257
        %v2259 = vshll.u32 %v2219, 8
        %v2260 = vmul.u32.u64.compose %v2259, %v2258
        %v2261 = vextract.low.u32 %v2260
        %v2262 = vextract.high.u32 %v2260
        %v2263 = vmul.u32.u64.compose %v2259, %v2254
        %v2264 = vextract.low.u32 %v2263
        %v2265 = vextract.high.u32 %v2263
        %v2266 = vmul.u32 %v2259, %v2250
        %v2267 = vadd.s32 %v2262, %v2264
        %vm2268 = vc.u32 %v2262, %v2264
        %v2269 = vadd.s32 %v2265, 1
        %v2270 = vsel %vm2268, %v2269, %v2265
        %v2271 = vadd.s32 %v2266, %v2270
        %v2272 = vadd.s32 %v2271, 536870912
        %v2273 = vshrl.u32 %v2272, 30
        %v2274 = vshll.u32 %v2273, 30
        %v2275 = vsub.s32 %v2271, %v2274
        %vm2276 = vcmp.lt.s32.totalorder %v2275, 0
        %v2277 = vsub.s32 0, %v2275
        %v2278 = vsel %vm2276, %v2277, %v2275
        %v2279 = vclz %v2278
        %v2280 = vsub.s32 %v2279, 2
        %vm2281 = vcmp.gt.s32.totalorder 0, %v2280
        %v2282 = vsel %vm2281, 0, %v2280
        %v2283 = vsub.s32 32, %v2282
        %v2284 = vshll.u32 %v2275, %v2282
        %v2285 = vshrl.u32 %v2267, %v2283
        %v2286 = vor.u32 %v2284, %v2285
        %v2287 = vsub.s32 4294967266, %v2282
        %v2288 = vadd.s32 %v2287, 127
        %v2289 = vshll.u32 %v2288, 23
        %v2290 = vor.u32 4788187, %v2289
        %v2291 = vand.u32 2147483647, %v2290
        %v2293 = vcvt.s32.f32 %v2286
        %v2294 = vmul.f32 %v2293, %v2291
        %v2295 = vxor.u32 %v2294, 2147483648
        %v2296 = vsel %vm2213, %v2295, %v2294
        %v2297 = vsub.s32 4, %v2273
        %v2298 = vsel %vm2213, %v2297, %v2273
        %v2299 = vsel %vm2212, %v1149, %v2296
        %v2300 = vsel %vm2212, 0, %v2298
        %v2301 = vcosq.f32.pop %v2299
        %v2302 = vsinq.f32.pop %v2299
        %vm2303 = vweird.f32 %v1149
        %v2304 = vadd.s32 %v2300, 3
        %v2305 = vand.u32 %v2304, 3
        %vm2306 = vcmp.lt.s32.totalorder %v2305, 2
        %vm2307 = vcmp.eq.s32.totalorder %v2305, 0
        %v2308 = vxor.u32 %v2302, 2147483648
        %v2309 = vsel %vm2307, %v2301, %v2308
        %vm2310 = vcmp.eq.s32.totalorder %v2305, 2
        %v2311 = vxor.u32 %v2301, 2147483648
        %v2312 = vsel %vm2310, %v2311, %v2302
        %v2313 = vsel %vm2306, %v2309, %v2312
        %v2314 = vsel %vm2303, nan, %v2313
        %v2315 = vand.u32 2147483647, %v1150
        %vm2316 = vcmp.le.f32.partialorder %v2315, 0.7853982
        %vm2317 = vcmp.lt.s32.totalorder %v1150, 0
        %v2318 = vand.u32 %v1150, 2139095040
        %v2319 = vshrl.u32 %v2318, 23
        %v2320 = vsub.s32 %v2319, 127
        %v2321 = vand.u32 2147483647, %v1150
        %v2322 = vand.u32 %v2321, 8388607
        %v2323 = vor.u32 %v2322, 8388608
        %v2324 = vsub.s32 0, %v2323
        %v2325 = vadd.s32 %v2320, 1
        %vm2326 = vcmp.gt.s32.totalorder %v2325, 0
        %v2327 = vsel %vm2326, %v2325, 0
        %v2328 = vshrl.u32 %v2327, 5
        %v2329 = vand.u32 %v2327, 31
        %v2330 = vsub.s32 32, %v2329
        %v2331 = vshrl.u32 683565275, %v2330
        %v2332 = vshll.u32 683565275, %v2329
        %v2333 = vshrl.u32 2475754826, %v2330
        %v2334 = vor.u32 %v2332, %v2333
        %v2335 = vshll.u32 2475754826, %v2329
        %v2336 = vshrl.u32 2131351028, %v2330
        %v2337 = vor.u32 %v2335, %v2336
        %v2338 = vshll.u32 2131351028, %v2329
        %v2339 = vshrl.u32 2102212464, %v2330
        %v2340 = vor.u32 %v2338, %v2339
        %v2341 = vshll.u32 2102212464, %v2329
        %v2342 = vshrl.u32 920167782, %v2330
        %v2343 = vor.u32 %v2341, %v2342
        %v2344 = vshll.u32 920167782, %v2329
        %v2345 = vshrl.u32 1326507024, %v2330
        %v2346 = vor.u32 %v2344, %v2345
        %vm2347 = vcmp.lt.s32.totalorder %v2328, 1
        %vm2348 = vcmp.lt.s32.totalorder %v2328, 2
        %vm2349 = vcmp.lt.s32.totalorder %v2328, 3
        %vm2350 = vcmp.lt.s32.totalorder %v2328, 4
        %v2351 = vsel %vm2347, %v2331, %v2334
        %v2352 = vsel %vm2350, %v2340, 2102212464
        %v2353 = vsel %vm2349, %v2337, %v2352
        %v2354 = vsel %vm2348, %v2351, %v2353
        %v2355 = vsel %vm2347, %v2334, %v2337
        %v2356 = vsel %vm2350, %v2343, 920167782
        %v2357 = vsel %vm2349, %v2340, %v2356
        %v2358 = vsel %vm2348, %v2355, %v2357
        %v2359 = vsel %vm2347, %v2337, %v2340
        %v2360 = vsel %vm2350, %v2346, 1326507024
        %v2361 = vsel %vm2349, %v2343, %v2360
        %v2362 = vsel %vm2348, %v2359, %v2361
        %v2363 = vshll.u32 %v2323, 8
        %v2364 = vmul.u32.u64.compose %v2363, %v2362
        %v2365 = vextract.low.u32 %v2364
        %v2366 = vextract.high.u32 %v2364
        %v2367 = vmul.u32.u64.compose %v2363, %v2358
        %v2368 = vextract.low.u32 %v2367
        %v2369 = vextract.high.u32 %v2367
        %v2370 = vmul.u32 %v2363, %v2354
        %v2371 = vadd.s32 %v2366, %v2368
        %vm2372 = vc.u32 %v2366, %v2368
        %v2373 = vadd.s32 %v2369, 1
        %v2374 = vsel %vm2372, %v2373, %v2369
        %v2375 = vadd.s32 %v2370, %v2374
        %v2376 = vadd.s32 %v2375, 536870912
        %v2377 = vshrl.u32 %v2376, 30
        %v2378 = vshll.u32 %v2377, 30
        %v2379 = vsub.s32 %v2375, %v2378
        %vm2380 = vcmp.lt.s32.totalorder %v2379, 0
        %v2381 = vsub.s32 0, %v2379
        %v2382 = vsel %vm2380, %v2381, %v2379
        %v2383 = vclz %v2382
        %v2384 = vsub.s32 %v2383, 2
        %vm2385 = vcmp.gt.s32.totalorder 0, %v2384
        %v2386 = vsel %vm2385, 0, %v2384
        %v2387 = vsub.s32 32, %v2386
        %v2388 = vshll.u32 %v2379, %v2386
        %v2389 = vshrl.u32 %v2371, %v2387
        %v2390 = vor.u32 %v2388, %v2389
        %v2391 = vsub.s32 4294967266, %v2386
        %v2392 = vadd.s32 %v2391, 127
        %v2393 = vshll.u32 %v2392, 23
        %v2394 = vor.u32 4788187, %v2393
        %v2395 = vand.u32 2147483647, %v2394
        %v2397 = vcvt.s32.f32 %v2390
        %v2398 = vmul.f32 %v2397, %v2395
        %v2399 = vxor.u32 %v2398, 2147483648
        %v2400 = vsel %vm2317, %v2399, %v2398
        %v2401 = vsub.s32 4, %v2377
        %v2402 = vsel %vm2317, %v2401, %v2377
        %v2403 = vsel %vm2316, %v1150, %v2400
        %v2404 = vsel %vm2316, 0, %v2402
        %v2405 = vcosq.f32.pop %v2403
        %v2406 = vsinq.f32.pop %v2403
        %vm2407 = vweird.f32 %v1150
        %v2408 = vadd.s32 %v2404, 3
        %v2409 = vand.u32 %v2408, 3
        %vm2410 = vcmp.lt.s32.totalorder %v2409, 2
        %vm2411 = vcmp.eq.s32.totalorder %v2409, 0
        %v2412 = vxor.u32 %v2406, 2147483648
        %v2413 = vsel %vm2411, %v2405, %v2412
        %vm2414 = vcmp.eq.s32.totalorder %v2409, 2
        %v2415 = vxor.u32 %v2405, 2147483648
        %v2416 = vsel %vm2414, %v2415, %v2406
        %v2417 = vsel %vm2410, %v2413, %v2416
        %v2418 = vsel %vm2407, nan, %v2417
        %v2419 = vand.u32 2147483647, %v1151
        %vm2420 = vcmp.le.f32.partialorder %v2419, 0.7853982
        %vm2421 = vcmp.lt.s32.totalorder %v1151, 0
        %v2422 = vand.u32 %v1151, 2139095040
        %v2423 = vshrl.u32 %v2422, 23
        %v2424 = vsub.s32 %v2423, 127
        %v2425 = vand.u32 2147483647, %v1151
        %v2426 = vand.u32 %v2425, 8388607
        %v2427 = vor.u32 %v2426, 8388608
        %v2428 = vsub.s32 0, %v2427
        %v2429 = vadd.s32 %v2424, 1
        %vm2430 = vcmp.gt.s32.totalorder %v2429, 0
        %v2431 = vsel %vm2430, %v2429, 0
        %v2432 = vshrl.u32 %v2431, 5
        %v2433 = vand.u32 %v2431, 31
        %v2434 = vsub.s32 32, %v2433
        %v2435 = vshrl.u32 683565275, %v2434
        %v2436 = vshll.u32 683565275, %v2433
        %v2437 = vshrl.u32 2475754826, %v2434
        %v2438 = vor.u32 %v2436, %v2437
        %v2439 = vshll.u32 2475754826, %v2433
        %v2440 = vshrl.u32 2131351028, %v2434
        %v2441 = vor.u32 %v2439, %v2440
        %v2442 = vshll.u32 2131351028, %v2433
        %v2443 = vshrl.u32 2102212464, %v2434
        %v2444 = vor.u32 %v2442, %v2443
        %v2445 = vshll.u32 2102212464, %v2433
        %v2446 = vshrl.u32 920167782, %v2434
        %v2447 = vor.u32 %v2445, %v2446
        %v2448 = vshll.u32 920167782, %v2433
        %v2449 = vshrl.u32 1326507024, %v2434
        %v2450 = vor.u32 %v2448, %v2449
        %vm2451 = vcmp.lt.s32.totalorder %v2432, 1
        %vm2452 = vcmp.lt.s32.totalorder %v2432, 2
        %vm2453 = vcmp.lt.s32.totalorder %v2432, 3
        %vm2454 = vcmp.lt.s32.totalorder %v2432, 4
        %v2455 = vsel %vm2451, %v2435, %v2438
        %v2456 = vsel %vm2454, %v2444, 2102212464
        %v2457 = vsel %vm2453, %v2441, %v2456
        %v2458 = vsel %vm2452, %v2455, %v2457
        %v2459 = vsel %vm2451, %v2438, %v2441
        %v2460 = vsel %vm2454, %v2447, 920167782
        %v2461 = vsel %vm2453, %v2444, %v2460
        %v2462 = vsel %vm2452, %v2459, %v2461
        %v2463 = vsel %vm2451, %v2441, %v2444
        %v2464 = vsel %vm2454, %v2450, 1326507024
        %v2465 = vsel %vm2453, %v2447, %v2464
        %v2466 = vsel %vm2452, %v2463, %v2465
        %v2467 = vshll.u32 %v2427, 8
        %v2468 = vmul.u32.u64.compose %v2467, %v2466
        %v2469 = vextract.low.u32 %v2468
        %v2470 = vextract.high.u32 %v2468
        %v2471 = vmul.u32.u64.compose %v2467, %v2462
        %v2472 = vextract.low.u32 %v2471
        %v2473 = vextract.high.u32 %v2471
        %v2474 = vmul.u32 %v2467, %v2458
        %v2475 = vadd.s32 %v2470, %v2472
        %vm2476 = vc.u32 %v2470, %v2472
        %v2477 = vadd.s32 %v2473, 1
        %v2478 = vsel %vm2476, %v2477, %v2473
        %v2479 = vadd.s32 %v2474, %v2478
        %v2480 = vadd.s32 %v2479, 536870912
        %v2481 = vshrl.u32 %v2480, 30
        %v2482 = vshll.u32 %v2481, 30
        %v2483 = vsub.s32 %v2479, %v2482
        %vm2484 = vcmp.lt.s32.totalorder %v2483, 0
        %v2485 = vsub.s32 0, %v2483
        %v2486 = vsel %vm2484, %v2485, %v2483
        %v2487 = vclz %v2486
        %v2488 = vsub.s32 %v2487, 2
        %vm2489 = vcmp.gt.s32.totalorder 0, %v2488
        %v2490 = vsel %vm2489, 0, %v2488
        %v2491 = vsub.s32 32, %v2490
        %v2492 = vshll.u32 %v2483, %v2490
        %v2493 = vshrl.u32 %v2475, %v2491
        %v2494 = vor.u32 %v2492, %v2493
        %v2495 = vsub.s32 4294967266, %v2490
        %v2496 = vadd.s32 %v2495, 127
        %v2497 = vshll.u32 %v2496, 23
        %v2498 = vor.u32 4788187, %v2497
        %v2499 = vand.u32 2147483647, %v2498
        %v2501 = vcvt.s32.f32 %v2494
        %v2502 = vmul.f32 %v2501, %v2499
        %v2503 = vxor.u32 %v2502, 2147483648
        %v2504 = vsel %vm2421, %v2503, %v2502
        %v2505 = vsub.s32 4, %v2481
        %v2506 = vsel %vm2421, %v2505, %v2481
        %v2507 = vsel %vm2420, %v1151, %v2504
        %v2508 = vsel %vm2420, 0, %v2506
        %v2509 = vcosq.f32.pop %v2507
        %v2510 = vsinq.f32.pop %v2507
        %vm2511 = vweird.f32 %v1151
        %v2512 = vadd.s32 %v2508, 3
        %v2513 = vand.u32 %v2512, 3
        %vm2514 = vcmp.lt.s32.totalorder %v2513, 2
        %vm2515 = vcmp.eq.s32.totalorder %v2513, 0
        %v2516 = vxor.u32 %v2510, 2147483648
        %v2517 = vsel %vm2515, %v2509, %v2516
        %vm2518 = vcmp.eq.s32.totalorder %v2513, 2
        %v2519 = vxor.u32 %v2509, 2147483648
        %v2520 = vsel %vm2518, %v2519, %v2510
        %v2521 = vsel %vm2514, %v2517, %v2520
        %v2522 = vsel %vm2511, nan, %v2521
        %v2523 = vand.u32 2147483647, %v1152
        %vm2524 = vcmp.le.f32.partialorder %v2523, 0.7853982
        %vm2525 = vcmp.lt.s32.totalorder %v1152, 0
        %v2526 = vand.u32 %v1152, 2139095040
        %v2527 = vshrl.u32 %v2526, 23
        %v2528 = vsub.s32 %v2527, 127
        %v2529 = vand.u32 2147483647, %v1152
        %v2530 = vand.u32 %v2529, 8388607
        %v2531 = vor.u32 %v2530, 8388608
        %v2532 = vsub.s32 0, %v2531
        %v2533 = vadd.s32 %v2528, 1
        %vm2534 = vcmp.gt.s32.totalorder %v2533, 0
        %v2535 = vsel %vm2534, %v2533, 0
        %v2536 = vshrl.u32 %v2535, 5
        %v2537 = vand.u32 %v2535, 31
        %v2538 = vsub.s32 32, %v2537
        %v2539 = vshrl.u32 683565275, %v2538
        %v2540 = vshll.u32 683565275, %v2537
        %v2541 = vshrl.u32 2475754826, %v2538
        %v2542 = vor.u32 %v2540, %v2541
        %v2543 = vshll.u32 2475754826, %v2537
        %v2544 = vshrl.u32 2131351028, %v2538
        %v2545 = vor.u32 %v2543, %v2544
        %v2546 = vshll.u32 2131351028, %v2537
        %v2547 = vshrl.u32 2102212464, %v2538
        %v2548 = vor.u32 %v2546, %v2547
        %v2549 = vshll.u32 2102212464, %v2537
        %v2550 = vshrl.u32 920167782, %v2538
        %v2551 = vor.u32 %v2549, %v2550
        %v2552 = vshll.u32 920167782, %v2537
        %v2553 = vshrl.u32 1326507024, %v2538
        %v2554 = vor.u32 %v2552, %v2553
        %vm2555 = vcmp.lt.s32.totalorder %v2536, 1
        %vm2556 = vcmp.lt.s32.totalorder %v2536, 2
        %vm2557 = vcmp.lt.s32.totalorder %v2536, 3
        %vm2558 = vcmp.lt.s32.totalorder %v2536, 4
        %v2559 = vsel %vm2555, %v2539, %v2542
        %v2560 = vsel %vm2558, %v2548, 2102212464
        %v2561 = vsel %vm2557, %v2545, %v2560
        %v2562 = vsel %vm2556, %v2559, %v2561
        %v2563 = vsel %vm2555, %v2542, %v2545
        %v2564 = vsel %vm2558, %v2551, 920167782
        %v2565 = vsel %vm2557, %v2548, %v2564
        %v2566 = vsel %vm2556, %v2563, %v2565
        %v2567 = vsel %vm2555, %v2545, %v2548
        %v2568 = vsel %vm2558, %v2554, 1326507024
        %v2569 = vsel %vm2557, %v2551, %v2568
        %v2570 = vsel %vm2556, %v2567, %v2569
        %v2571 = vshll.u32 %v2531, 8
        %v2572 = vmul.u32.u64.compose %v2571, %v2570
        %v2573 = vextract.low.u32 %v2572
        %v2574 = vextract.high.u32 %v2572
        %v2575 = vmul.u32.u64.compose %v2571, %v2566
        %v2576 = vextract.low.u32 %v2575
        %v2577 = vextract.high.u32 %v2575
        %v2578 = vmul.u32 %v2571, %v2562
        %v2579 = vadd.s32 %v2574, %v2576
        %vm2580 = vc.u32 %v2574, %v2576
        %v2581 = vadd.s32 %v2577, 1
        %v2582 = vsel %vm2580, %v2581, %v2577
        %v2583 = vadd.s32 %v2578, %v2582
        %v2584 = vadd.s32 %v2583, 536870912
        %v2585 = vshrl.u32 %v2584, 30
        %v2586 = vshll.u32 %v2585, 30
        %v2587 = vsub.s32 %v2583, %v2586
        %vm2588 = vcmp.lt.s32.totalorder %v2587, 0
        %v2589 = vsub.s32 0, %v2587
        %v2590 = vsel %vm2588, %v2589, %v2587
        %v2591 = vclz %v2590
        %v2592 = vsub.s32 %v2591, 2
        %vm2593 = vcmp.gt.s32.totalorder 0, %v2592
        %v2594 = vsel %vm2593, 0, %v2592
        %v2595 = vsub.s32 32, %v2594
        %v2596 = vshll.u32 %v2587, %v2594
        %v2597 = vshrl.u32 %v2579, %v2595
        %v2598 = vor.u32 %v2596, %v2597
        %v2599 = vsub.s32 4294967266, %v2594
        %v2600 = vadd.s32 %v2599, 127
        %v2601 = vshll.u32 %v2600, 23
        %v2602 = vor.u32 4788187, %v2601
        %v2603 = vand.u32 2147483647, %v2602
        %v2605 = vcvt.s32.f32 %v2598
        %v2606 = vmul.f32 %v2605, %v2603
        %v2607 = vxor.u32 %v2606, 2147483648
        %v2608 = vsel %vm2525, %v2607, %v2606
        %v2609 = vsub.s32 4, %v2585
        %v2610 = vsel %vm2525, %v2609, %v2585
        %v2611 = vsel %vm2524, %v1152, %v2608
        %v2612 = vsel %vm2524, 0, %v2610
        %v2613 = vcosq.f32.pop %v2611
        %v2614 = vsinq.f32.pop %v2611
        %vm2615 = vweird.f32 %v1152
        %v2616 = vadd.s32 %v2612, 3
        %v2617 = vand.u32 %v2616, 3
        %vm2618 = vcmp.lt.s32.totalorder %v2617, 2
        %vm2619 = vcmp.eq.s32.totalorder %v2617, 0
        %v2620 = vxor.u32 %v2614, 2147483648
        %v2621 = vsel %vm2619, %v2613, %v2620
        %vm2622 = vcmp.eq.s32.totalorder %v2617, 2
        %v2623 = vxor.u32 %v2613, 2147483648
        %v2624 = vsel %vm2622, %v2623, %v2614
        %v2625 = vsel %vm2618, %v2621, %v2624
        %v2626 = vsel %vm2615, nan, %v2625
        %v2627 = vand.u32 2147483647, %v1153
        %vm2628 = vcmp.le.f32.partialorder %v2627, 0.7853982
        %vm2629 = vcmp.lt.s32.totalorder %v1153, 0
        %v2630 = vand.u32 %v1153, 2139095040
        %v2631 = vshrl.u32 %v2630, 23
        %v2632 = vsub.s32 %v2631, 127
        %v2633 = vand.u32 2147483647, %v1153
        %v2634 = vand.u32 %v2633, 8388607
        %v2635 = vor.u32 %v2634, 8388608
        %v2636 = vsub.s32 0, %v2635
        %v2637 = vadd.s32 %v2632, 1
        %vm2638 = vcmp.gt.s32.totalorder %v2637, 0
        %v2639 = vsel %vm2638, %v2637, 0
        %v2640 = vshrl.u32 %v2639, 5
        %v2641 = vand.u32 %v2639, 31
        %v2642 = vsub.s32 32, %v2641
        %v2643 = vshrl.u32 683565275, %v2642
        %v2644 = vshll.u32 683565275, %v2641
        %v2645 = vshrl.u32 2475754826, %v2642
        %v2646 = vor.u32 %v2644, %v2645
        %v2647 = vshll.u32 2475754826, %v2641
        %v2648 = vshrl.u32 2131351028, %v2642
        %v2649 = vor.u32 %v2647, %v2648
        %v2650 = vshll.u32 2131351028, %v2641
        %v2651 = vshrl.u32 2102212464, %v2642
        %v2652 = vor.u32 %v2650, %v2651
        %v2653 = vshll.u32 2102212464, %v2641
        %v2654 = vshrl.u32 920167782, %v2642
        %v2655 = vor.u32 %v2653, %v2654
        %v2656 = vshll.u32 920167782, %v2641
        %v2657 = vshrl.u32 1326507024, %v2642
        %v2658 = vor.u32 %v2656, %v2657
        %vm2659 = vcmp.lt.s32.totalorder %v2640, 1
        %vm2660 = vcmp.lt.s32.totalorder %v2640, 2
        %vm2661 = vcmp.lt.s32.totalorder %v2640, 3
        %vm2662 = vcmp.lt.s32.totalorder %v2640, 4
        %v2663 = vsel %vm2659, %v2643, %v2646
        %v2664 = vsel %vm2662, %v2652, 2102212464
        %v2665 = vsel %vm2661, %v2649, %v2664
        %v2666 = vsel %vm2660, %v2663, %v2665
        %v2667 = vsel %vm2659, %v2646, %v2649
        %v2668 = vsel %vm2662, %v2655, 920167782
        %v2669 = vsel %vm2661, %v2652, %v2668
        %v2670 = vsel %vm2660, %v2667, %v2669
        %v2671 = vsel %vm2659, %v2649, %v2652
        %v2672 = vsel %vm2662, %v2658, 1326507024
        %v2673 = vsel %vm2661, %v2655, %v2672
        %v2674 = vsel %vm2660, %v2671, %v2673
        %v2675 = vshll.u32 %v2635, 8
        %v2676 = vmul.u32.u64.compose %v2675, %v2674
        %v2677 = vextract.low.u32 %v2676
        %v2678 = vextract.high.u32 %v2676
        %v2679 = vmul.u32.u64.compose %v2675, %v2670
        %v2680 = vextract.low.u32 %v2679
        %v2681 = vextract.high.u32 %v2679
        %v2682 = vmul.u32 %v2675, %v2666
        %v2683 = vadd.s32 %v2678, %v2680
        %vm2684 = vc.u32 %v2678, %v2680
        %v2685 = vadd.s32 %v2681, 1
        %v2686 = vsel %vm2684, %v2685, %v2681
        %v2687 = vadd.s32 %v2682, %v2686
        %v2688 = vadd.s32 %v2687, 536870912
        %v2689 = vshrl.u32 %v2688, 30
        %v2690 = vshll.u32 %v2689, 30
        %v2691 = vsub.s32 %v2687, %v2690
        %vm2692 = vcmp.lt.s32.totalorder %v2691, 0
        %v2693 = vsub.s32 0, %v2691
        %v2694 = vsel %vm2692, %v2693, %v2691
        %v2695 = vclz %v2694
        %v2696 = vsub.s32 %v2695, 2
        %vm2697 = vcmp.gt.s32.totalorder 0, %v2696
        %v2698 = vsel %vm2697, 0, %v2696
        %v2699 = vsub.s32 32, %v2698
        %v2700 = vshll.u32 %v2691, %v2698
        %v2701 = vshrl.u32 %v2683, %v2699
        %v2702 = vor.u32 %v2700, %v2701
        %v2703 = vsub.s32 4294967266, %v2698
        %v2704 = vadd.s32 %v2703, 127
        %v2705 = vshll.u32 %v2704, 23
        %v2706 = vor.u32 4788187, %v2705
        %v2707 = vand.u32 2147483647, %v2706
        %v2709 = vcvt.s32.f32 %v2702
        %v2710 = vmul.f32 %v2709, %v2707
        %v2711 = vxor.u32 %v2710, 2147483648
        %v2712 = vsel %vm2629, %v2711, %v2710
        %v2713 = vsub.s32 4, %v2689
        %v2714 = vsel %vm2629, %v2713, %v2689
        %v2715 = vsel %vm2628, %v1153, %v2712
        %v2716 = vsel %vm2628, 0, %v2714
        %v2717 = vcosq.f32.pop %v2715
        %v2718 = vsinq.f32.pop %v2715
        %vm2719 = vweird.f32 %v1153
        %v2720 = vadd.s32 %v2716, 3
        %v2721 = vand.u32 %v2720, 3
        %vm2722 = vcmp.lt.s32.totalorder %v2721, 2
        %vm2723 = vcmp.eq.s32.totalorder %v2721, 0
        %v2724 = vxor.u32 %v2718, 2147483648
        %v2725 = vsel %vm2723, %v2717, %v2724
        %vm2726 = vcmp.eq.s32.totalorder %v2721, 2
        %v2727 = vxor.u32 %v2717, 2147483648
        %v2728 = vsel %vm2726, %v2727, %v2718
        %v2729 = vsel %vm2722, %v2725, %v2728
        %v2730 = vsel %vm2719, nan, %v2729
        %v2731 = vand.u32 2147483647, %v1154
        %vm2732 = vcmp.le.f32.partialorder %v2731, 0.7853982
        %vm2733 = vcmp.lt.s32.totalorder %v1154, 0
        %v2734 = vand.u32 %v1154, 2139095040
        %v2735 = vshrl.u32 %v2734, 23
        %v2736 = vsub.s32 %v2735, 127
        %v2737 = vand.u32 2147483647, %v1154
        %v2738 = vand.u32 %v2737, 8388607
        %v2739 = vor.u32 %v2738, 8388608
        %v2740 = vsub.s32 0, %v2739
        %v2741 = vadd.s32 %v2736, 1
        %vm2742 = vcmp.gt.s32.totalorder %v2741, 0
        %v2743 = vsel %vm2742, %v2741, 0
        %v2744 = vshrl.u32 %v2743, 5
        %v2745 = vand.u32 %v2743, 31
        %v2746 = vsub.s32 32, %v2745
        %v2747 = vshrl.u32 683565275, %v2746
        %v2748 = vshll.u32 683565275, %v2745
        %v2749 = vshrl.u32 2475754826, %v2746
        %v2750 = vor.u32 %v2748, %v2749
        %v2751 = vshll.u32 2475754826, %v2745
        %v2752 = vshrl.u32 2131351028, %v2746
        %v2753 = vor.u32 %v2751, %v2752
        %v2754 = vshll.u32 2131351028, %v2745
        %v2755 = vshrl.u32 2102212464, %v2746
        %v2756 = vor.u32 %v2754, %v2755
        %v2757 = vshll.u32 2102212464, %v2745
        %v2758 = vshrl.u32 920167782, %v2746
        %v2759 = vor.u32 %v2757, %v2758
        %v2760 = vshll.u32 920167782, %v2745
        %v2761 = vshrl.u32 1326507024, %v2746
        %v2762 = vor.u32 %v2760, %v2761
        %vm2763 = vcmp.lt.s32.totalorder %v2744, 1
        %vm2764 = vcmp.lt.s32.totalorder %v2744, 2
        %vm2765 = vcmp.lt.s32.totalorder %v2744, 3
        %vm2766 = vcmp.lt.s32.totalorder %v2744, 4
        %v2767 = vsel %vm2763, %v2747, %v2750
        %v2768 = vsel %vm2766, %v2756, 2102212464
        %v2769 = vsel %vm2765, %v2753, %v2768
        %v2770 = vsel %vm2764, %v2767, %v2769
        %v2771 = vsel %vm2763, %v2750, %v2753
        %v2772 = vsel %vm2766, %v2759, 920167782
        %v2773 = vsel %vm2765, %v2756, %v2772
        %v2774 = vsel %vm2764, %v2771, %v2773
        %v2775 = vsel %vm2763, %v2753, %v2756
        %v2776 = vsel %vm2766, %v2762, 1326507024
        %v2777 = vsel %vm2765, %v2759, %v2776
        %v2778 = vsel %vm2764, %v2775, %v2777
        %v2779 = vshll.u32 %v2739, 8
        %v2780 = vmul.u32.u64.compose %v2779, %v2778
        %v2781 = vextract.low.u32 %v2780
        %v2782 = vextract.high.u32 %v2780
        %v2783 = vmul.u32.u64.compose %v2779, %v2774
        %v2784 = vextract.low.u32 %v2783
        %v2785 = vextract.high.u32 %v2783
        %v2786 = vmul.u32 %v2779, %v2770
        %v2787 = vadd.s32 %v2782, %v2784
        %vm2788 = vc.u32 %v2782, %v2784
        %v2789 = vadd.s32 %v2785, 1
        %v2790 = vsel %vm2788, %v2789, %v2785
        %v2791 = vadd.s32 %v2786, %v2790
        %v2792 = vadd.s32 %v2791, 536870912
        %v2793 = vshrl.u32 %v2792, 30
        %v2794 = vshll.u32 %v2793, 30
        %v2795 = vsub.s32 %v2791, %v2794
        %vm2796 = vcmp.lt.s32.totalorder %v2795, 0
        %v2797 = vsub.s32 0, %v2795
        %v2798 = vsel %vm2796, %v2797, %v2795
        %v2799 = vclz %v2798
        %v2800 = vsub.s32 %v2799, 2
        %vm2801 = vcmp.gt.s32.totalorder 0, %v2800
        %v2802 = vsel %vm2801, 0, %v2800
        %v2803 = vsub.s32 32, %v2802
        %v2804 = vshll.u32 %v2795, %v2802
        %v2805 = vshrl.u32 %v2787, %v2803
        %v2806 = vor.u32 %v2804, %v2805
        %v2807 = vsub.s32 4294967266, %v2802
        %v2808 = vadd.s32 %v2807, 127
        %v2809 = vshll.u32 %v2808, 23
        %v2810 = vor.u32 4788187, %v2809
        %v2811 = vand.u32 2147483647, %v2810
        %v2813 = vcvt.s32.f32 %v2806
        %v2814 = vmul.f32 %v2813, %v2811
        %v2815 = vxor.u32 %v2814, 2147483648
        %v2816 = vsel %vm2733, %v2815, %v2814
        %v2817 = vsub.s32 4, %v2793
        %v2818 = vsel %vm2733, %v2817, %v2793
        %v2819 = vsel %vm2732, %v1154, %v2816
        %v2820 = vsel %vm2732, 0, %v2818
        %v2821 = vcosq.f32.pop %v2819
        %v2822 = vsinq.f32.pop %v2819
        %vm2823 = vweird.f32 %v1154
        %v2824 = vadd.s32 %v2820, 3
        %v2825 = vand.u32 %v2824, 3
        %vm2826 = vcmp.lt.s32.totalorder %v2825, 2
        %vm2827 = vcmp.eq.s32.totalorder %v2825, 0
        %v2828 = vxor.u32 %v2822, 2147483648
        %v2829 = vsel %vm2827, %v2821, %v2828
        %vm2830 = vcmp.eq.s32.totalorder %v2825, 2
        %v2831 = vxor.u32 %v2821, 2147483648
        %v2832 = vsel %vm2830, %v2831, %v2822
        %v2833 = vsel %vm2826, %v2829, %v2832
        %v2834 = vsel %vm2823, nan, %v2833
        %v2835 = vand.u32 2147483647, %v1155
        %vm2836 = vcmp.le.f32.partialorder %v2835, 0.7853982
        %vm2837 = vcmp.lt.s32.totalorder %v1155, 0
        %v2838 = vand.u32 %v1155, 2139095040
        %v2839 = vshrl.u32 %v2838, 23
        %v2840 = vsub.s32 %v2839, 127
        %v2841 = vand.u32 2147483647, %v1155
        %v2842 = vand.u32 %v2841, 8388607
        %v2843 = vor.u32 %v2842, 8388608
        %v2844 = vsub.s32 0, %v2843
        %v2845 = vadd.s32 %v2840, 1
        %vm2846 = vcmp.gt.s32.totalorder %v2845, 0
        %v2847 = vsel %vm2846, %v2845, 0
        %v2848 = vshrl.u32 %v2847, 5
        %v2849 = vand.u32 %v2847, 31
        %v2850 = vsub.s32 32, %v2849
        %v2851 = vshrl.u32 683565275, %v2850
        %v2852 = vshll.u32 683565275, %v2849
        %v2853 = vshrl.u32 2475754826, %v2850
        %v2854 = vor.u32 %v2852, %v2853
        %v2855 = vshll.u32 2475754826, %v2849
        %v2856 = vshrl.u32 2131351028, %v2850
        %v2857 = vor.u32 %v2855, %v2856
        %v2858 = vshll.u32 2131351028, %v2849
        %v2859 = vshrl.u32 2102212464, %v2850
        %v2860 = vor.u32 %v2858, %v2859
        %v2861 = vshll.u32 2102212464, %v2849
        %v2862 = vshrl.u32 920167782, %v2850
        %v2863 = vor.u32 %v2861, %v2862
        %v2864 = vshll.u32 920167782, %v2849
        %v2865 = vshrl.u32 1326507024, %v2850
        %v2866 = vor.u32 %v2864, %v2865
        %vm2867 = vcmp.lt.s32.totalorder %v2848, 1
        %vm2868 = vcmp.lt.s32.totalorder %v2848, 2
        %vm2869 = vcmp.lt.s32.totalorder %v2848, 3
        %vm2870 = vcmp.lt.s32.totalorder %v2848, 4
        %v2871 = vsel %vm2867, %v2851, %v2854
        %v2872 = vsel %vm2870, %v2860, 2102212464
        %v2873 = vsel %vm2869, %v2857, %v2872
        %v2874 = vsel %vm2868, %v2871, %v2873
        %v2875 = vsel %vm2867, %v2854, %v2857
        %v2876 = vsel %vm2870, %v2863, 920167782
        %v2877 = vsel %vm2869, %v2860, %v2876
        %v2878 = vsel %vm2868, %v2875, %v2877
        %v2879 = vsel %vm2867, %v2857, %v2860
        %v2880 = vsel %vm2870, %v2866, 1326507024
        %v2881 = vsel %vm2869, %v2863, %v2880
        %v2882 = vsel %vm2868, %v2879, %v2881
        %v2883 = vshll.u32 %v2843, 8
        %v2884 = vmul.u32.u64.compose %v2883, %v2882
        %v2885 = vextract.low.u32 %v2884
        %v2886 = vextract.high.u32 %v2884
        %v2887 = vmul.u32.u64.compose %v2883, %v2878
        %v2888 = vextract.low.u32 %v2887
        %v2889 = vextract.high.u32 %v2887
        %v2890 = vmul.u32 %v2883, %v2874
        %v2891 = vadd.s32 %v2886, %v2888
        %vm2892 = vc.u32 %v2886, %v2888
        %v2893 = vadd.s32 %v2889, 1
        %v2894 = vsel %vm2892, %v2893, %v2889
        %v2895 = vadd.s32 %v2890, %v2894
        %v2896 = vadd.s32 %v2895, 536870912
        %v2897 = vshrl.u32 %v2896, 30
        %v2898 = vshll.u32 %v2897, 30
        %v2899 = vsub.s32 %v2895, %v2898
        %vm2900 = vcmp.lt.s32.totalorder %v2899, 0
        %v2901 = vsub.s32 0, %v2899
        %v2902 = vsel %vm2900, %v2901, %v2899
        %v2903 = vclz %v2902
        %v2904 = vsub.s32 %v2903, 2
        %vm2905 = vcmp.gt.s32.totalorder 0, %v2904
        %v2906 = vsel %vm2905, 0, %v2904
        %v2907 = vsub.s32 32, %v2906
        %v2908 = vshll.u32 %v2899, %v2906
        %v2909 = vshrl.u32 %v2891, %v2907
        %v2910 = vor.u32 %v2908, %v2909
        %v2911 = vsub.s32 4294967266, %v2906
        %v2912 = vadd.s32 %v2911, 127
        %v2913 = vshll.u32 %v2912, 23
        %v2914 = vor.u32 4788187, %v2913
        %v2915 = vand.u32 2147483647, %v2914
        %v2917 = vcvt.s32.f32 %v2910
        %v2918 = vmul.f32 %v2917, %v2915
        %v2919 = vxor.u32 %v2918, 2147483648
        %v2920 = vsel %vm2837, %v2919, %v2918
        %v2921 = vsub.s32 4, %v2897
        %v2922 = vsel %vm2837, %v2921, %v2897
        %v2923 = vsel %vm2836, %v1155, %v2920
        %v2924 = vsel %vm2836, 0, %v2922
        %v2925 = vcosq.f32.pop %v2923
        %v2926 = vsinq.f32.pop %v2923
        %vm2927 = vweird.f32 %v1155
        %v2928 = vadd.s32 %v2924, 3
        %v2929 = vand.u32 %v2928, 3
        %vm2930 = vcmp.lt.s32.totalorder %v2929, 2
        %vm2931 = vcmp.eq.s32.totalorder %v2929, 0
        %v2932 = vxor.u32 %v2926, 2147483648
        %v2933 = vsel %vm2931, %v2925, %v2932
        %vm2934 = vcmp.eq.s32.totalorder %v2929, 2
        %v2935 = vxor.u32 %v2925, 2147483648
        %v2936 = vsel %vm2934, %v2935, %v2926
        %v2937 = vsel %vm2930, %v2933, %v2936
        %v2938 = vsel %vm2927, nan, %v2937
        %v2939 = vand.u32 2147483647, %v1156
        %vm2940 = vcmp.le.f32.partialorder %v2939, 0.7853982
        %vm2941 = vcmp.lt.s32.totalorder %v1156, 0
        %v2942 = vand.u32 %v1156, 2139095040
        %v2943 = vshrl.u32 %v2942, 23
        %v2944 = vsub.s32 %v2943, 127
        %v2945 = vand.u32 2147483647, %v1156
        %v2946 = vand.u32 %v2945, 8388607
        %v2947 = vor.u32 %v2946, 8388608
        %v2948 = vsub.s32 0, %v2947
        %v2949 = vadd.s32 %v2944, 1
        %vm2950 = vcmp.gt.s32.totalorder %v2949, 0
        %v2951 = vsel %vm2950, %v2949, 0
        %v2952 = vshrl.u32 %v2951, 5
        %v2953 = vand.u32 %v2951, 31
        %v2954 = vsub.s32 32, %v2953
        %v2955 = vshrl.u32 683565275, %v2954
        %v2956 = vshll.u32 683565275, %v2953
        %v2957 = vshrl.u32 2475754826, %v2954
        %v2958 = vor.u32 %v2956, %v2957
        %v2959 = vshll.u32 2475754826, %v2953
        %v2960 = vshrl.u32 2131351028, %v2954
        %v2961 = vor.u32 %v2959, %v2960
        %v2962 = vshll.u32 2131351028, %v2953
        %v2963 = vshrl.u32 2102212464, %v2954
        %v2964 = vor.u32 %v2962, %v2963
        %v2965 = vshll.u32 2102212464, %v2953
        %v2966 = vshrl.u32 920167782, %v2954
        %v2967 = vor.u32 %v2965, %v2966
        %v2968 = vshll.u32 920167782, %v2953
        %v2969 = vshrl.u32 1326507024, %v2954
        %v2970 = vor.u32 %v2968, %v2969
        %vm2971 = vcmp.lt.s32.totalorder %v2952, 1
        %vm2972 = vcmp.lt.s32.totalorder %v2952, 2
        %vm2973 = vcmp.lt.s32.totalorder %v2952, 3
        %vm2974 = vcmp.lt.s32.totalorder %v2952, 4
        %v2975 = vsel %vm2971, %v2955, %v2958
        %v2976 = vsel %vm2974, %v2964, 2102212464
        %v2977 = vsel %vm2973, %v2961, %v2976
        %v2978 = vsel %vm2972, %v2975, %v2977
        %v2979 = vsel %vm2971, %v2958, %v2961
        %v2980 = vsel %vm2974, %v2967, 920167782
        %v2981 = vsel %vm2973, %v2964, %v2980
        %v2982 = vsel %vm2972, %v2979, %v2981
        %v2983 = vsel %vm2971, %v2961, %v2964
        %v2984 = vsel %vm2974, %v2970, 1326507024
        %v2985 = vsel %vm2973, %v2967, %v2984
        %v2986 = vsel %vm2972, %v2983, %v2985
        %v2987 = vshll.u32 %v2947, 8
        %v2988 = vmul.u32.u64.compose %v2987, %v2986
        %v2989 = vextract.low.u32 %v2988
        %v2990 = vextract.high.u32 %v2988
        %v2991 = vmul.u32.u64.compose %v2987, %v2982
        %v2992 = vextract.low.u32 %v2991
        %v2993 = vextract.high.u32 %v2991
        %v2994 = vmul.u32 %v2987, %v2978
        %v2995 = vadd.s32 %v2990, %v2992
        %vm2996 = vc.u32 %v2990, %v2992
        %v2997 = vadd.s32 %v2993, 1
        %v2998 = vsel %vm2996, %v2997, %v2993
        %v2999 = vadd.s32 %v2994, %v2998
        %v3000 = vadd.s32 %v2999, 536870912
        %v3001 = vshrl.u32 %v3000, 30
        %v3002 = vshll.u32 %v3001, 30
        %v3003 = vsub.s32 %v2999, %v3002
        %vm3004 = vcmp.lt.s32.totalorder %v3003, 0
        %v3005 = vsub.s32 0, %v3003
        %v3006 = vsel %vm3004, %v3005, %v3003
        %v3007 = vclz %v3006
        %v3008 = vsub.s32 %v3007, 2
        %vm3009 = vcmp.gt.s32.totalorder 0, %v3008
        %v3010 = vsel %vm3009, 0, %v3008
        %v3011 = vsub.s32 32, %v3010
        %v3012 = vshll.u32 %v3003, %v3010
        %v3013 = vshrl.u32 %v2995, %v3011
        %v3014 = vor.u32 %v3012, %v3013
        %v3015 = vsub.s32 4294967266, %v3010
        %v3016 = vadd.s32 %v3015, 127
        %v3017 = vshll.u32 %v3016, 23
        %v3018 = vor.u32 4788187, %v3017
        %v3019 = vand.u32 2147483647, %v3018
        %v3021 = vcvt.s32.f32 %v3014
        %v3022 = vmul.f32 %v3021, %v3019
        %v3023 = vxor.u32 %v3022, 2147483648
        %v3024 = vsel %vm2941, %v3023, %v3022
        %v3025 = vsub.s32 4, %v3001
        %v3026 = vsel %vm2941, %v3025, %v3001
        %v3027 = vsel %vm2940, %v1156, %v3024
        %v3028 = vsel %vm2940, 0, %v3026
        %v3029 = vcosq.f32.pop %v3027
        %v3030 = vsinq.f32.pop %v3027
        %vm3031 = vweird.f32 %v1156
        %v3032 = vadd.s32 %v3028, 3
        %v3033 = vand.u32 %v3032, 3
        %vm3034 = vcmp.lt.s32.totalorder %v3033, 2
        %vm3035 = vcmp.eq.s32.totalorder %v3033, 0
        %v3036 = vxor.u32 %v3030, 2147483648
        %v3037 = vsel %vm3035, %v3029, %v3036
        %vm3038 = vcmp.eq.s32.totalorder %v3033, 2
        %v3039 = vxor.u32 %v3029, 2147483648
        %v3040 = vsel %vm3038, %v3039, %v3030
        %v3041 = vsel %vm3034, %v3037, %v3040
        %v3042 = vsel %vm3031, nan, %v3041
        %v3043 = vand.u32 2147483647, %v1157
        %vm3044 = vcmp.le.f32.partialorder %v3043, 0.7853982
        %vm3045 = vcmp.lt.s32.totalorder %v1157, 0
        %v3046 = vand.u32 %v1157, 2139095040
        %v3047 = vshrl.u32 %v3046, 23
        %v3048 = vsub.s32 %v3047, 127
        %v3049 = vand.u32 2147483647, %v1157
        %v3050 = vand.u32 %v3049, 8388607
        %v3051 = vor.u32 %v3050, 8388608
        %v3052 = vsub.s32 0, %v3051
        %v3053 = vadd.s32 %v3048, 1
        %vm3054 = vcmp.gt.s32.totalorder %v3053, 0
        %v3055 = vsel %vm3054, %v3053, 0
        %v3056 = vshrl.u32 %v3055, 5
        %v3057 = vand.u32 %v3055, 31
        %v3058 = vsub.s32 32, %v3057
        %v3059 = vshrl.u32 683565275, %v3058
        %v3060 = vshll.u32 683565275, %v3057
        %v3061 = vshrl.u32 2475754826, %v3058
        %v3062 = vor.u32 %v3060, %v3061
        %v3063 = vshll.u32 2475754826, %v3057
        %v3064 = vshrl.u32 2131351028, %v3058
        %v3065 = vor.u32 %v3063, %v3064
        %v3066 = vshll.u32 2131351028, %v3057
        %v3067 = vshrl.u32 2102212464, %v3058
        %v3068 = vor.u32 %v3066, %v3067
        %v3069 = vshll.u32 2102212464, %v3057
        %v3070 = vshrl.u32 920167782, %v3058
        %v3071 = vor.u32 %v3069, %v3070
        %v3072 = vshll.u32 920167782, %v3057
        %v3073 = vshrl.u32 1326507024, %v3058
        %v3074 = vor.u32 %v3072, %v3073
        %vm3075 = vcmp.lt.s32.totalorder %v3056, 1
        %vm3076 = vcmp.lt.s32.totalorder %v3056, 2
        %vm3077 = vcmp.lt.s32.totalorder %v3056, 3
        %vm3078 = vcmp.lt.s32.totalorder %v3056, 4
        %v3079 = vsel %vm3075, %v3059, %v3062
        %v3080 = vsel %vm3078, %v3068, 2102212464
        %v3081 = vsel %vm3077, %v3065, %v3080
        %v3082 = vsel %vm3076, %v3079, %v3081
        %v3083 = vsel %vm3075, %v3062, %v3065
        %v3084 = vsel %vm3078, %v3071, 920167782
        %v3085 = vsel %vm3077, %v3068, %v3084
        %v3086 = vsel %vm3076, %v3083, %v3085
        %v3087 = vsel %vm3075, %v3065, %v3068
        %v3088 = vsel %vm3078, %v3074, 1326507024
        %v3089 = vsel %vm3077, %v3071, %v3088
        %v3090 = vsel %vm3076, %v3087, %v3089
        %v3091 = vshll.u32 %v3051, 8
        %v3092 = vmul.u32.u64.compose %v3091, %v3090
        %v3093 = vextract.low.u32 %v3092
        %v3094 = vextract.high.u32 %v3092
        %v3095 = vmul.u32.u64.compose %v3091, %v3086
        %v3096 = vextract.low.u32 %v3095
        %v3097 = vextract.high.u32 %v3095
        %v3098 = vmul.u32 %v3091, %v3082
        %v3099 = vadd.s32 %v3094, %v3096
        %vm3100 = vc.u32 %v3094, %v3096
        %v3101 = vadd.s32 %v3097, 1
        %v3102 = vsel %vm3100, %v3101, %v3097
        %v3103 = vadd.s32 %v3098, %v3102
        %v3104 = vadd.s32 %v3103, 536870912
        %v3105 = vshrl.u32 %v3104, 30
        %v3106 = vshll.u32 %v3105, 30
        %v3107 = vsub.s32 %v3103, %v3106
        %vm3108 = vcmp.lt.s32.totalorder %v3107, 0
        %v3109 = vsub.s32 0, %v3107
        %v3110 = vsel %vm3108, %v3109, %v3107
        %v3111 = vclz %v3110
        %v3112 = vsub.s32 %v3111, 2
        %vm3113 = vcmp.gt.s32.totalorder 0, %v3112
        %v3114 = vsel %vm3113, 0, %v3112
        %v3115 = vsub.s32 32, %v3114
        %v3116 = vshll.u32 %v3107, %v3114
        %v3117 = vshrl.u32 %v3099, %v3115
        %v3118 = vor.u32 %v3116, %v3117
        %v3119 = vsub.s32 4294967266, %v3114
        %v3120 = vadd.s32 %v3119, 127
        %v3121 = vshll.u32 %v3120, 23
        %v3122 = vor.u32 4788187, %v3121
        %v3123 = vand.u32 2147483647, %v3122
        %v3125 = vcvt.s32.f32 %v3118
        %v3126 = vmul.f32 %v3125, %v3123
        %v3127 = vxor.u32 %v3126, 2147483648
        %v3128 = vsel %vm3045, %v3127, %v3126
        %v3129 = vsub.s32 4, %v3105
        %v3130 = vsel %vm3045, %v3129, %v3105
        %v3131 = vsel %vm3044, %v1157, %v3128
        %v3132 = vsel %vm3044, 0, %v3130
        %v3133 = vcosq.f32.pop %v3131
        %v3134 = vsinq.f32.pop %v3131
        %vm3135 = vweird.f32 %v1157
        %v3136 = vadd.s32 %v3132, 3
        %v3137 = vand.u32 %v3136, 3
        %vm3138 = vcmp.lt.s32.totalorder %v3137, 2
        %vm3139 = vcmp.eq.s32.totalorder %v3137, 0
        %v3140 = vxor.u32 %v3134, 2147483648
        %v3141 = vsel %vm3139, %v3133, %v3140
        %vm3142 = vcmp.eq.s32.totalorder %v3137, 2
        %v3143 = vxor.u32 %v3133, 2147483648
        %v3144 = vsel %vm3142, %v3143, %v3134
        %v3145 = vsel %vm3138, %v3141, %v3144
        %v3146 = vsel %vm3135, nan, %v3145
        %v3147 = vand.u32 2147483647, %v1158
        %vm3148 = vcmp.le.f32.partialorder %v3147, 0.7853982
        %vm3149 = vcmp.lt.s32.totalorder %v1158, 0
        %v3150 = vand.u32 %v1158, 2139095040
        %v3151 = vshrl.u32 %v3150, 23
        %v3152 = vsub.s32 %v3151, 127
        %v3153 = vand.u32 2147483647, %v1158
        %v3154 = vand.u32 %v3153, 8388607
        %v3155 = vor.u32 %v3154, 8388608
        %v3156 = vsub.s32 0, %v3155
        %v3157 = vadd.s32 %v3152, 1
        %vm3158 = vcmp.gt.s32.totalorder %v3157, 0
        %v3159 = vsel %vm3158, %v3157, 0
        %v3160 = vshrl.u32 %v3159, 5
        %v3161 = vand.u32 %v3159, 31
        %v3162 = vsub.s32 32, %v3161
        %v3163 = vshrl.u32 683565275, %v3162
        %v3164 = vshll.u32 683565275, %v3161
        %v3165 = vshrl.u32 2475754826, %v3162
        %v3166 = vor.u32 %v3164, %v3165
        %v3167 = vshll.u32 2475754826, %v3161
        %v3168 = vshrl.u32 2131351028, %v3162
        %v3169 = vor.u32 %v3167, %v3168
        %v3170 = vshll.u32 2131351028, %v3161
        %v3171 = vshrl.u32 2102212464, %v3162
        %v3172 = vor.u32 %v3170, %v3171
        %v3173 = vshll.u32 2102212464, %v3161
        %v3174 = vshrl.u32 920167782, %v3162
        %v3175 = vor.u32 %v3173, %v3174
        %v3176 = vshll.u32 920167782, %v3161
        %v3177 = vshrl.u32 1326507024, %v3162
        %v3178 = vor.u32 %v3176, %v3177
        %vm3179 = vcmp.lt.s32.totalorder %v3160, 1
        %vm3180 = vcmp.lt.s32.totalorder %v3160, 2
        %vm3181 = vcmp.lt.s32.totalorder %v3160, 3
        %vm3182 = vcmp.lt.s32.totalorder %v3160, 4
        %v3183 = vsel %vm3179, %v3163, %v3166
        %v3184 = vsel %vm3182, %v3172, 2102212464
        %v3185 = vsel %vm3181, %v3169, %v3184
        %v3186 = vsel %vm3180, %v3183, %v3185
        %v3187 = vsel %vm3179, %v3166, %v3169
        %v3188 = vsel %vm3182, %v3175, 920167782
        %v3189 = vsel %vm3181, %v3172, %v3188
        %v3190 = vsel %vm3180, %v3187, %v3189
        %v3191 = vsel %vm3179, %v3169, %v3172
        %v3192 = vsel %vm3182, %v3178, 1326507024
        %v3193 = vsel %vm3181, %v3175, %v3192
        %v3194 = vsel %vm3180, %v3191, %v3193
        %v3195 = vshll.u32 %v3155, 8
        %v3196 = vmul.u32.u64.compose %v3195, %v3194
        %v3197 = vextract.low.u32 %v3196
        %v3198 = vextract.high.u32 %v3196
        %v3199 = vmul.u32.u64.compose %v3195, %v3190
        %v3200 = vextract.low.u32 %v3199
        %v3201 = vextract.high.u32 %v3199
        %v3202 = vmul.u32 %v3195, %v3186
        %v3203 = vadd.s32 %v3198, %v3200
        %vm3204 = vc.u32 %v3198, %v3200
        %v3205 = vadd.s32 %v3201, 1
        %v3206 = vsel %vm3204, %v3205, %v3201
        %v3207 = vadd.s32 %v3202, %v3206
        %v3208 = vadd.s32 %v3207, 536870912
        %v3209 = vshrl.u32 %v3208, 30
        %v3210 = vshll.u32 %v3209, 30
        %v3211 = vsub.s32 %v3207, %v3210
        %vm3212 = vcmp.lt.s32.totalorder %v3211, 0
        %v3213 = vsub.s32 0, %v3211
        %v3214 = vsel %vm3212, %v3213, %v3211
        %v3215 = vclz %v3214
        %v3216 = vsub.s32 %v3215, 2
        %vm3217 = vcmp.gt.s32.totalorder 0, %v3216
        %v3218 = vsel %vm3217, 0, %v3216
        %v3219 = vsub.s32 32, %v3218
        %v3220 = vshll.u32 %v3211, %v3218
        %v3221 = vshrl.u32 %v3203, %v3219
        %v3222 = vor.u32 %v3220, %v3221
        %v3223 = vsub.s32 4294967266, %v3218
        %v3224 = vadd.s32 %v3223, 127
        %v3225 = vshll.u32 %v3224, 23
        %v3226 = vor.u32 4788187, %v3225
        %v3227 = vand.u32 2147483647, %v3226
        %v3229 = vcvt.s32.f32 %v3222
        %v3230 = vmul.f32 %v3229, %v3227
        %v3231 = vxor.u32 %v3230, 2147483648
        %v3232 = vsel %vm3149, %v3231, %v3230
        %v3233 = vsub.s32 4, %v3209
        %v3234 = vsel %vm3149, %v3233, %v3209
        %v3235 = vsel %vm3148, %v1158, %v3232
        %v3236 = vsel %vm3148, 0, %v3234
        %v3237 = vcosq.f32.pop %v3235
        %v3238 = vsinq.f32.pop %v3235
        %vm3239 = vweird.f32 %v1158
        %v3240 = vadd.s32 %v3236, 3
        %v3241 = vand.u32 %v3240, 3
        %vm3242 = vcmp.lt.s32.totalorder %v3241, 2
        %vm3243 = vcmp.eq.s32.totalorder %v3241, 0
        %v3244 = vxor.u32 %v3238, 2147483648
        %v3245 = vsel %vm3243, %v3237, %v3244
        %vm3246 = vcmp.eq.s32.totalorder %v3241, 2
        %v3247 = vxor.u32 %v3237, 2147483648
        %v3248 = vsel %vm3246, %v3247, %v3238
        %v3249 = vsel %vm3242, %v3245, %v3248
        %v3250 = vsel %vm3239, nan, %v3249
        %v3251 = vand.u32 2147483647, %v1159
        %vm3252 = vcmp.le.f32.partialorder %v3251, 0.7853982
        %vm3253 = vcmp.lt.s32.totalorder %v1159, 0
        %v3254 = vand.u32 %v1159, 2139095040
        %v3255 = vshrl.u32 %v3254, 23
        %v3256 = vsub.s32 %v3255, 127
        %v3257 = vand.u32 2147483647, %v1159
        %v3258 = vand.u32 %v3257, 8388607
        %v3259 = vor.u32 %v3258, 8388608
        %v3260 = vsub.s32 0, %v3259
        %v3261 = vadd.s32 %v3256, 1
        %vm3262 = vcmp.gt.s32.totalorder %v3261, 0
        %v3263 = vsel %vm3262, %v3261, 0
        %v3264 = vshrl.u32 %v3263, 5
        %v3265 = vand.u32 %v3263, 31
        %v3266 = vsub.s32 32, %v3265
        %v3267 = vshrl.u32 683565275, %v3266
        %v3268 = vshll.u32 683565275, %v3265
        %v3269 = vshrl.u32 2475754826, %v3266
        %v3270 = vor.u32 %v3268, %v3269
        %v3271 = vshll.u32 2475754826, %v3265
        %v3272 = vshrl.u32 2131351028, %v3266
        %v3273 = vor.u32 %v3271, %v3272
        %v3274 = vshll.u32 2131351028, %v3265
        %v3275 = vshrl.u32 2102212464, %v3266
        %v3276 = vor.u32 %v3274, %v3275
        %v3277 = vshll.u32 2102212464, %v3265
        %v3278 = vshrl.u32 920167782, %v3266
        %v3279 = vor.u32 %v3277, %v3278
        %v3280 = vshll.u32 920167782, %v3265
        %v3281 = vshrl.u32 1326507024, %v3266
        %v3282 = vor.u32 %v3280, %v3281
        %vm3283 = vcmp.lt.s32.totalorder %v3264, 1
        %vm3284 = vcmp.lt.s32.totalorder %v3264, 2
        %vm3285 = vcmp.lt.s32.totalorder %v3264, 3
        %vm3286 = vcmp.lt.s32.totalorder %v3264, 4
        %v3287 = vsel %vm3283, %v3267, %v3270
        %v3288 = vsel %vm3286, %v3276, 2102212464
        %v3289 = vsel %vm3285, %v3273, %v3288
        %v3290 = vsel %vm3284, %v3287, %v3289
        %v3291 = vsel %vm3283, %v3270, %v3273
        %v3292 = vsel %vm3286, %v3279, 920167782
        %v3293 = vsel %vm3285, %v3276, %v3292
        %v3294 = vsel %vm3284, %v3291, %v3293
        %v3295 = vsel %vm3283, %v3273, %v3276
        %v3296 = vsel %vm3286, %v3282, 1326507024
        %v3297 = vsel %vm3285, %v3279, %v3296
        %v3298 = vsel %vm3284, %v3295, %v3297
        %v3299 = vshll.u32 %v3259, 8
        %v3300 = vmul.u32.u64.compose %v3299, %v3298
        %v3301 = vextract.low.u32 %v3300
        %v3302 = vextract.high.u32 %v3300
        %v3303 = vmul.u32.u64.compose %v3299, %v3294
        %v3304 = vextract.low.u32 %v3303
        %v3305 = vextract.high.u32 %v3303
        %v3306 = vmul.u32 %v3299, %v3290
        %v3307 = vadd.s32 %v3302, %v3304
        %vm3308 = vc.u32 %v3302, %v3304
        %v3309 = vadd.s32 %v3305, 1
        %v3310 = vsel %vm3308, %v3309, %v3305
        %v3311 = vadd.s32 %v3306, %v3310
        %v3312 = vadd.s32 %v3311, 536870912
        %v3313 = vshrl.u32 %v3312, 30
        %v3314 = vshll.u32 %v3313, 30
        %v3315 = vsub.s32 %v3311, %v3314
        %vm3316 = vcmp.lt.s32.totalorder %v3315, 0
        %v3317 = vsub.s32 0, %v3315
        %v3318 = vsel %vm3316, %v3317, %v3315
        %v3319 = vclz %v3318
        %v3320 = vsub.s32 %v3319, 2
        %vm3321 = vcmp.gt.s32.totalorder 0, %v3320
        %v3322 = vsel %vm3321, 0, %v3320
        %v3323 = vsub.s32 32, %v3322
        %v3324 = vshll.u32 %v3315, %v3322
        %v3325 = vshrl.u32 %v3307, %v3323
        %v3326 = vor.u32 %v3324, %v3325
        %v3327 = vsub.s32 4294967266, %v3322
        %v3328 = vadd.s32 %v3327, 127
        %v3329 = vshll.u32 %v3328, 23
        %v3330 = vor.u32 4788187, %v3329
        %v3331 = vand.u32 2147483647, %v3330
        %v3333 = vcvt.s32.f32 %v3326
        %v3334 = vmul.f32 %v3333, %v3331
        %v3335 = vxor.u32 %v3334, 2147483648
        %v3336 = vsel %vm3253, %v3335, %v3334
        %v3337 = vsub.s32 4, %v3313
        %v3338 = vsel %vm3253, %v3337, %v3313
        %v3339 = vsel %vm3252, %v1159, %v3336
        %v3340 = vsel %vm3252, 0, %v3338
        %v3341 = vcosq.f32.pop %v3339
        %v3342 = vsinq.f32.pop %v3339
        %vm3343 = vweird.f32 %v1159
        %v3344 = vadd.s32 %v3340, 3
        %v3345 = vand.u32 %v3344, 3
        %vm3346 = vcmp.lt.s32.totalorder %v3345, 2
        %vm3347 = vcmp.eq.s32.totalorder %v3345, 0
        %v3348 = vxor.u32 %v3342, 2147483648
        %v3349 = vsel %vm3347, %v3341, %v3348
        %vm3350 = vcmp.eq.s32.totalorder %v3345, 2
        %v3351 = vxor.u32 %v3341, 2147483648
        %v3352 = vsel %vm3350, %v3351, %v3342
        %v3353 = vsel %vm3346, %v3349, %v3352
        %v3354 = vsel %vm3343, nan, %v3353
        %v3355 = vand.u32 2147483647, %v1160
        %vm3356 = vcmp.le.f32.partialorder %v3355, 0.7853982
        %vm3357 = vcmp.lt.s32.totalorder %v1160, 0
        %v3358 = vand.u32 %v1160, 2139095040
        %v3359 = vshrl.u32 %v3358, 23
        %v3360 = vsub.s32 %v3359, 127
        %v3361 = vand.u32 2147483647, %v1160
        %v3362 = vand.u32 %v3361, 8388607
        %v3363 = vor.u32 %v3362, 8388608
        %v3364 = vsub.s32 0, %v3363
        %v3365 = vadd.s32 %v3360, 1
        %vm3366 = vcmp.gt.s32.totalorder %v3365, 0
        %v3367 = vsel %vm3366, %v3365, 0
        %v3368 = vshrl.u32 %v3367, 5
        %v3369 = vand.u32 %v3367, 31
        %v3370 = vsub.s32 32, %v3369
        %v3371 = vshrl.u32 683565275, %v3370
        %v3372 = vshll.u32 683565275, %v3369
        %v3373 = vshrl.u32 2475754826, %v3370
        %v3374 = vor.u32 %v3372, %v3373
        %v3375 = vshll.u32 2475754826, %v3369
        %v3376 = vshrl.u32 2131351028, %v3370
        %v3377 = vor.u32 %v3375, %v3376
        %v3378 = vshll.u32 2131351028, %v3369
        %v3379 = vshrl.u32 2102212464, %v3370
        %v3380 = vor.u32 %v3378, %v3379
        %v3381 = vshll.u32 2102212464, %v3369
        %v3382 = vshrl.u32 920167782, %v3370
        %v3383 = vor.u32 %v3381, %v3382
        %v3384 = vshll.u32 920167782, %v3369
        %v3385 = vshrl.u32 1326507024, %v3370
        %v3386 = vor.u32 %v3384, %v3385
        %vm3387 = vcmp.lt.s32.totalorder %v3368, 1
        %vm3388 = vcmp.lt.s32.totalorder %v3368, 2
        %vm3389 = vcmp.lt.s32.totalorder %v3368, 3
        %vm3390 = vcmp.lt.s32.totalorder %v3368, 4
        %v3391 = vsel %vm3387, %v3371, %v3374
        %v3392 = vsel %vm3390, %v3380, 2102212464
        %v3393 = vsel %vm3389, %v3377, %v3392
        %v3394 = vsel %vm3388, %v3391, %v3393
        %v3395 = vsel %vm3387, %v3374, %v3377
        %v3396 = vsel %vm3390, %v3383, 920167782
        %v3397 = vsel %vm3389, %v3380, %v3396
        %v3398 = vsel %vm3388, %v3395, %v3397
        %v3399 = vsel %vm3387, %v3377, %v3380
        %v3400 = vsel %vm3390, %v3386, 1326507024
        %v3401 = vsel %vm3389, %v3383, %v3400
        %v3402 = vsel %vm3388, %v3399, %v3401
        %v3403 = vshll.u32 %v3363, 8
        %v3404 = vmul.u32.u64.compose %v3403, %v3402
        %v3405 = vextract.low.u32 %v3404
        %v3406 = vextract.high.u32 %v3404
        %v3407 = vmul.u32.u64.compose %v3403, %v3398
        %v3408 = vextract.low.u32 %v3407
        %v3409 = vextract.high.u32 %v3407
        %v3410 = vmul.u32 %v3403, %v3394
        %v3411 = vadd.s32 %v3406, %v3408
        %vm3412 = vc.u32 %v3406, %v3408
        %v3413 = vadd.s32 %v3409, 1
        %v3414 = vsel %vm3412, %v3413, %v3409
        %v3415 = vadd.s32 %v3410, %v3414
        %v3416 = vadd.s32 %v3415, 536870912
        %v3417 = vshrl.u32 %v3416, 30
        %v3418 = vshll.u32 %v3417, 30
        %v3419 = vsub.s32 %v3415, %v3418
        %vm3420 = vcmp.lt.s32.totalorder %v3419, 0
        %v3421 = vsub.s32 0, %v3419
        %v3422 = vsel %vm3420, %v3421, %v3419
        %v3423 = vclz %v3422
        %v3424 = vsub.s32 %v3423, 2
        %vm3425 = vcmp.gt.s32.totalorder 0, %v3424
        %v3426 = vsel %vm3425, 0, %v3424
        %v3427 = vsub.s32 32, %v3426
        %v3428 = vshll.u32 %v3419, %v3426
        %v3429 = vshrl.u32 %v3411, %v3427
        %v3430 = vor.u32 %v3428, %v3429
        %v3431 = vsub.s32 4294967266, %v3426
        %v3432 = vadd.s32 %v3431, 127
        %v3433 = vshll.u32 %v3432, 23
        %v3434 = vor.u32 4788187, %v3433
        %v3435 = vand.u32 2147483647, %v3434
        %v3437 = vcvt.s32.f32 %v3430
        %v3438 = vmul.f32 %v3437, %v3435
        %v3439 = vxor.u32 %v3438, 2147483648
        %v3440 = vsel %vm3357, %v3439, %v3438
        %v3441 = vsub.s32 4, %v3417
        %v3442 = vsel %vm3357, %v3441, %v3417
        %v3443 = vsel %vm3356, %v1160, %v3440
        %v3444 = vsel %vm3356, 0, %v3442
        %v3445 = vcosq.f32.pop %v3443
        %v3446 = vsinq.f32.pop %v3443
        %vm3447 = vweird.f32 %v1160
        %v3448 = vadd.s32 %v3444, 3
        %v3449 = vand.u32 %v3448, 3
        %vm3450 = vcmp.lt.s32.totalorder %v3449, 2
        %vm3451 = vcmp.eq.s32.totalorder %v3449, 0
        %v3452 = vxor.u32 %v3446, 2147483648
        %v3453 = vsel %vm3451, %v3445, %v3452
        %vm3454 = vcmp.eq.s32.totalorder %v3449, 2
        %v3455 = vxor.u32 %v3445, 2147483648
        %v3456 = vsel %vm3454, %v3455, %v3446
        %v3457 = vsel %vm3450, %v3453, %v3456
        %v3458 = vsel %vm3447, nan, %v3457
        %v3459 = vand.u32 2147483647, %v1161
        %vm3460 = vcmp.le.f32.partialorder %v3459, 0.7853982
        %vm3461 = vcmp.lt.s32.totalorder %v1161, 0
        %v3462 = vand.u32 %v1161, 2139095040
        %v3463 = vshrl.u32 %v3462, 23
        %v3464 = vsub.s32 %v3463, 127
        %v3465 = vand.u32 2147483647, %v1161
        %v3466 = vand.u32 %v3465, 8388607
        %v3467 = vor.u32 %v3466, 8388608
        %v3468 = vsub.s32 0, %v3467
        %v3469 = vadd.s32 %v3464, 1
        %vm3470 = vcmp.gt.s32.totalorder %v3469, 0
        %v3471 = vsel %vm3470, %v3469, 0
        %v3472 = vshrl.u32 %v3471, 5
        %v3473 = vand.u32 %v3471, 31
        %v3474 = vsub.s32 32, %v3473
        %v3475 = vshrl.u32 683565275, %v3474
        %v3476 = vshll.u32 683565275, %v3473
        %v3477 = vshrl.u32 2475754826, %v3474
        %v3478 = vor.u32 %v3476, %v3477
        %v3479 = vshll.u32 2475754826, %v3473
        %v3480 = vshrl.u32 2131351028, %v3474
        %v3481 = vor.u32 %v3479, %v3480
        %v3482 = vshll.u32 2131351028, %v3473
        %v3483 = vshrl.u32 2102212464, %v3474
        %v3484 = vor.u32 %v3482, %v3483
        %v3485 = vshll.u32 2102212464, %v3473
        %v3486 = vshrl.u32 920167782, %v3474
        %v3487 = vor.u32 %v3485, %v3486
        %v3488 = vshll.u32 920167782, %v3473
        %v3489 = vshrl.u32 1326507024, %v3474
        %v3490 = vor.u32 %v3488, %v3489
        %vm3491 = vcmp.lt.s32.totalorder %v3472, 1
        %vm3492 = vcmp.lt.s32.totalorder %v3472, 2
        %vm3493 = vcmp.lt.s32.totalorder %v3472, 3
        %vm3494 = vcmp.lt.s32.totalorder %v3472, 4
        %v3495 = vsel %vm3491, %v3475, %v3478
        %v3496 = vsel %vm3494, %v3484, 2102212464
        %v3497 = vsel %vm3493, %v3481, %v3496
        %v3498 = vsel %vm3492, %v3495, %v3497
        %v3499 = vsel %vm3491, %v3478, %v3481
        %v3500 = vsel %vm3494, %v3487, 920167782
        %v3501 = vsel %vm3493, %v3484, %v3500
        %v3502 = vsel %vm3492, %v3499, %v3501
        %v3503 = vsel %vm3491, %v3481, %v3484
        %v3504 = vsel %vm3494, %v3490, 1326507024
        %v3505 = vsel %vm3493, %v3487, %v3504
        %v3506 = vsel %vm3492, %v3503, %v3505
        %v3507 = vshll.u32 %v3467, 8
        %v3508 = vmul.u32.u64.compose %v3507, %v3506
        %v3509 = vextract.low.u32 %v3508
        %v3510 = vextract.high.u32 %v3508
        %v3511 = vmul.u32.u64.compose %v3507, %v3502
        %v3512 = vextract.low.u32 %v3511
        %v3513 = vextract.high.u32 %v3511
        %v3514 = vmul.u32 %v3507, %v3498
        %v3515 = vadd.s32 %v3510, %v3512
        %vm3516 = vc.u32 %v3510, %v3512
        %v3517 = vadd.s32 %v3513, 1
        %v3518 = vsel %vm3516, %v3517, %v3513
        %v3519 = vadd.s32 %v3514, %v3518
        %v3520 = vadd.s32 %v3519, 536870912
        %v3521 = vshrl.u32 %v3520, 30
        %v3522 = vshll.u32 %v3521, 30
        %v3523 = vsub.s32 %v3519, %v3522
        %vm3524 = vcmp.lt.s32.totalorder %v3523, 0
        %v3525 = vsub.s32 0, %v3523
        %v3526 = vsel %vm3524, %v3525, %v3523
        %v3527 = vclz %v3526
        %v3528 = vsub.s32 %v3527, 2
        %vm3529 = vcmp.gt.s32.totalorder 0, %v3528
        %v3530 = vsel %vm3529, 0, %v3528
        %v3531 = vsub.s32 32, %v3530
        %v3532 = vshll.u32 %v3523, %v3530
        %v3533 = vshrl.u32 %v3515, %v3531
        %v3534 = vor.u32 %v3532, %v3533
        %v3535 = vsub.s32 4294967266, %v3530
        %v3536 = vadd.s32 %v3535, 127
        %v3537 = vshll.u32 %v3536, 23
        %v3538 = vor.u32 4788187, %v3537
        %v3539 = vand.u32 2147483647, %v3538
        %v3541 = vcvt.s32.f32 %v3534
        %v3542 = vmul.f32 %v3541, %v3539
        %v3543 = vxor.u32 %v3542, 2147483648
        %v3544 = vsel %vm3461, %v3543, %v3542
        %v3545 = vsub.s32 4, %v3521
        %v3546 = vsel %vm3461, %v3545, %v3521
        %v3547 = vsel %vm3460, %v1161, %v3544
        %v3548 = vsel %vm3460, 0, %v3546
        %v3549 = vcosq.f32.pop %v3547
        %v3550 = vsinq.f32.pop %v3547
        %vm3551 = vweird.f32 %v1161
        %v3552 = vadd.s32 %v3548, 3
        %v3553 = vand.u32 %v3552, 3
        %vm3554 = vcmp.lt.s32.totalorder %v3553, 2
        %vm3555 = vcmp.eq.s32.totalorder %v3553, 0
        %v3556 = vxor.u32 %v3550, 2147483648
        %v3557 = vsel %vm3555, %v3549, %v3556
        %vm3558 = vcmp.eq.s32.totalorder %v3553, 2
        %v3559 = vxor.u32 %v3549, 2147483648
        %v3560 = vsel %vm3558, %v3559, %v3550
        %v3561 = vsel %vm3554, %v3557, %v3560
        %v3562 = vsel %vm3551, nan, %v3561
        %v3563 = vand.u32 2147483647, %v1162
        %vm3564 = vcmp.le.f32.partialorder %v3563, 0.7853982
        %vm3565 = vcmp.lt.s32.totalorder %v1162, 0
        %v3566 = vand.u32 %v1162, 2139095040
        %v3567 = vshrl.u32 %v3566, 23
        %v3568 = vsub.s32 %v3567, 127
        %v3569 = vand.u32 2147483647, %v1162
        %v3570 = vand.u32 %v3569, 8388607
        %v3571 = vor.u32 %v3570, 8388608
        %v3572 = vsub.s32 0, %v3571
        %v3573 = vadd.s32 %v3568, 1
        %vm3574 = vcmp.gt.s32.totalorder %v3573, 0
        %v3575 = vsel %vm3574, %v3573, 0
        %v3576 = vshrl.u32 %v3575, 5
        %v3577 = vand.u32 %v3575, 31
        %v3578 = vsub.s32 32, %v3577
        %v3579 = vshrl.u32 683565275, %v3578
        %v3580 = vshll.u32 683565275, %v3577
        %v3581 = vshrl.u32 2475754826, %v3578
        %v3582 = vor.u32 %v3580, %v3581
        %v3583 = vshll.u32 2475754826, %v3577
        %v3584 = vshrl.u32 2131351028, %v3578
        %v3585 = vor.u32 %v3583, %v3584
        %v3586 = vshll.u32 2131351028, %v3577
        %v3587 = vshrl.u32 2102212464, %v3578
        %v3588 = vor.u32 %v3586, %v3587
        %v3589 = vshll.u32 2102212464, %v3577
        %v3590 = vshrl.u32 920167782, %v3578
        %v3591 = vor.u32 %v3589, %v3590
        %v3592 = vshll.u32 920167782, %v3577
        %v3593 = vshrl.u32 1326507024, %v3578
        %v3594 = vor.u32 %v3592, %v3593
        %vm3595 = vcmp.lt.s32.totalorder %v3576, 1
        %vm3596 = vcmp.lt.s32.totalorder %v3576, 2
        %vm3597 = vcmp.lt.s32.totalorder %v3576, 3
        %vm3598 = vcmp.lt.s32.totalorder %v3576, 4
        %v3599 = vsel %vm3595, %v3579, %v3582
        %v3600 = vsel %vm3598, %v3588, 2102212464
        %v3601 = vsel %vm3597, %v3585, %v3600
        %v3602 = vsel %vm3596, %v3599, %v3601
        %v3603 = vsel %vm3595, %v3582, %v3585
        %v3604 = vsel %vm3598, %v3591, 920167782
        %v3605 = vsel %vm3597, %v3588, %v3604
        %v3606 = vsel %vm3596, %v3603, %v3605
        %v3607 = vsel %vm3595, %v3585, %v3588
        %v3608 = vsel %vm3598, %v3594, 1326507024
        %v3609 = vsel %vm3597, %v3591, %v3608
        %v3610 = vsel %vm3596, %v3607, %v3609
        %v3611 = vshll.u32 %v3571, 8
        %v3612 = vmul.u32.u64.compose %v3611, %v3610
        %v3613 = vextract.low.u32 %v3612
        %v3614 = vextract.high.u32 %v3612
        %v3615 = vmul.u32.u64.compose %v3611, %v3606
        %v3616 = vextract.low.u32 %v3615
        %v3617 = vextract.high.u32 %v3615
        %v3618 = vmul.u32 %v3611, %v3602
        %v3619 = vadd.s32 %v3614, %v3616
        %vm3620 = vc.u32 %v3614, %v3616
        %v3621 = vadd.s32 %v3617, 1
        %v3622 = vsel %vm3620, %v3621, %v3617
        %v3623 = vadd.s32 %v3618, %v3622
        %v3624 = vadd.s32 %v3623, 536870912
        %v3625 = vshrl.u32 %v3624, 30
        %v3626 = vshll.u32 %v3625, 30
        %v3627 = vsub.s32 %v3623, %v3626
        %vm3628 = vcmp.lt.s32.totalorder %v3627, 0
        %v3629 = vsub.s32 0, %v3627
        %v3630 = vsel %vm3628, %v3629, %v3627
        %v3631 = vclz %v3630
        %v3632 = vsub.s32 %v3631, 2
        %vm3633 = vcmp.gt.s32.totalorder 0, %v3632
        %v3634 = vsel %vm3633, 0, %v3632
        %v3635 = vsub.s32 32, %v3634
        %v3636 = vshll.u32 %v3627, %v3634
        %v3637 = vshrl.u32 %v3619, %v3635
        %v3638 = vor.u32 %v3636, %v3637
        %v3639 = vsub.s32 4294967266, %v3634
        %v3640 = vadd.s32 %v3639, 127
        %v3641 = vshll.u32 %v3640, 23
        %v3642 = vor.u32 4788187, %v3641
        %v3643 = vand.u32 2147483647, %v3642
        %v3645 = vcvt.s32.f32 %v3638
        %v3646 = vmul.f32 %v3645, %v3643
        %v3647 = vxor.u32 %v3646, 2147483648
        %v3648 = vsel %vm3565, %v3647, %v3646
        %v3649 = vsub.s32 4, %v3625
        %v3650 = vsel %vm3565, %v3649, %v3625
        %v3651 = vsel %vm3564, %v1162, %v3648
        %v3652 = vsel %vm3564, 0, %v3650
        %v3653 = vcosq.f32.pop %v3651
        %v3654 = vsinq.f32.pop %v3651
        %vm3655 = vweird.f32 %v1162
        %v3656 = vadd.s32 %v3652, 3
        %v3657 = vand.u32 %v3656, 3
        %vm3658 = vcmp.lt.s32.totalorder %v3657, 2
        %vm3659 = vcmp.eq.s32.totalorder %v3657, 0
        %v3660 = vxor.u32 %v3654, 2147483648
        %v3661 = vsel %vm3659, %v3653, %v3660
        %vm3662 = vcmp.eq.s32.totalorder %v3657, 2
        %v3663 = vxor.u32 %v3653, 2147483648
        %v3664 = vsel %vm3662, %v3663, %v3654
        %v3665 = vsel %vm3658, %v3661, %v3664
        %v3666 = vsel %vm3655, nan, %v3665
        %v3667 = vand.u32 2147483647, %v1163
        %vm3668 = vcmp.le.f32.partialorder %v3667, 0.7853982
        %vm3669 = vcmp.lt.s32.totalorder %v1163, 0
        %v3670 = vand.u32 %v1163, 2139095040
        %v3671 = vshrl.u32 %v3670, 23
        %v3672 = vsub.s32 %v3671, 127
        %v3673 = vand.u32 2147483647, %v1163
        %v3674 = vand.u32 %v3673, 8388607
        %v3675 = vor.u32 %v3674, 8388608
        %v3676 = vsub.s32 0, %v3675
        %v3677 = vadd.s32 %v3672, 1
        %vm3678 = vcmp.gt.s32.totalorder %v3677, 0
        %v3679 = vsel %vm3678, %v3677, 0
        %v3680 = vshrl.u32 %v3679, 5
        %v3681 = vand.u32 %v3679, 31
        %v3682 = vsub.s32 32, %v3681
        %v3683 = vshrl.u32 683565275, %v3682
        %v3684 = vshll.u32 683565275, %v3681
        %v3685 = vshrl.u32 2475754826, %v3682
        %v3686 = vor.u32 %v3684, %v3685
        %v3687 = vshll.u32 2475754826, %v3681
        %v3688 = vshrl.u32 2131351028, %v3682
        %v3689 = vor.u32 %v3687, %v3688
        %v3690 = vshll.u32 2131351028, %v3681
        %v3691 = vshrl.u32 2102212464, %v3682
        %v3692 = vor.u32 %v3690, %v3691
        %v3693 = vshll.u32 2102212464, %v3681
        %v3694 = vshrl.u32 920167782, %v3682
        %v3695 = vor.u32 %v3693, %v3694
        %v3696 = vshll.u32 920167782, %v3681
        %v3697 = vshrl.u32 1326507024, %v3682
        %v3698 = vor.u32 %v3696, %v3697
        %vm3699 = vcmp.lt.s32.totalorder %v3680, 1
        %vm3700 = vcmp.lt.s32.totalorder %v3680, 2
        %vm3701 = vcmp.lt.s32.totalorder %v3680, 3
        %vm3702 = vcmp.lt.s32.totalorder %v3680, 4
        %v3703 = vsel %vm3699, %v3683, %v3686
        %v3704 = vsel %vm3702, %v3692, 2102212464
        %v3705 = vsel %vm3701, %v3689, %v3704
        %v3706 = vsel %vm3700, %v3703, %v3705
        %v3707 = vsel %vm3699, %v3686, %v3689
        %v3708 = vsel %vm3702, %v3695, 920167782
        %v3709 = vsel %vm3701, %v3692, %v3708
        %v3710 = vsel %vm3700, %v3707, %v3709
        %v3711 = vsel %vm3699, %v3689, %v3692
        %v3712 = vsel %vm3702, %v3698, 1326507024
        %v3713 = vsel %vm3701, %v3695, %v3712
        %v3714 = vsel %vm3700, %v3711, %v3713
        %v3715 = vshll.u32 %v3675, 8
        %v3716 = vmul.u32.u64.compose %v3715, %v3714
        %v3717 = vextract.low.u32 %v3716
        %v3718 = vextract.high.u32 %v3716
        %v3719 = vmul.u32.u64.compose %v3715, %v3710
        %v3720 = vextract.low.u32 %v3719
        %v3721 = vextract.high.u32 %v3719
        %v3722 = vmul.u32 %v3715, %v3706
        %v3723 = vadd.s32 %v3718, %v3720
        %vm3724 = vc.u32 %v3718, %v3720
        %v3725 = vadd.s32 %v3721, 1
        %v3726 = vsel %vm3724, %v3725, %v3721
        %v3727 = vadd.s32 %v3722, %v3726
        %v3728 = vadd.s32 %v3727, 536870912
        %v3729 = vshrl.u32 %v3728, 30
        %v3730 = vshll.u32 %v3729, 30
        %v3731 = vsub.s32 %v3727, %v3730
        %vm3732 = vcmp.lt.s32.totalorder %v3731, 0
        %v3733 = vsub.s32 0, %v3731
        %v3734 = vsel %vm3732, %v3733, %v3731
        %v3735 = vclz %v3734
        %v3736 = vsub.s32 %v3735, 2
        %vm3737 = vcmp.gt.s32.totalorder 0, %v3736
        %v3738 = vsel %vm3737, 0, %v3736
        %v3739 = vsub.s32 32, %v3738
        %v3740 = vshll.u32 %v3731, %v3738
        %v3741 = vshrl.u32 %v3723, %v3739
        %v3742 = vor.u32 %v3740, %v3741
        %v3743 = vsub.s32 4294967266, %v3738
        %v3744 = vadd.s32 %v3743, 127
        %v3745 = vshll.u32 %v3744, 23
        %v3746 = vor.u32 4788187, %v3745
        %v3747 = vand.u32 2147483647, %v3746
        %v3749 = vcvt.s32.f32 %v3742
        %v3750 = vmul.f32 %v3749, %v3747
        %v3751 = vxor.u32 %v3750, 2147483648
        %v3752 = vsel %vm3669, %v3751, %v3750
        %v3753 = vsub.s32 4, %v3729
        %v3754 = vsel %vm3669, %v3753, %v3729
        %v3755 = vsel %vm3668, %v1163, %v3752
        %v3756 = vsel %vm3668, 0, %v3754
        %v3757 = vcosq.f32.pop %v3755
        %v3758 = vsinq.f32.pop %v3755
        %vm3759 = vweird.f32 %v1163
        %v3760 = vadd.s32 %v3756, 3
        %v3761 = vand.u32 %v3760, 3
        %vm3762 = vcmp.lt.s32.totalorder %v3761, 2
        %vm3763 = vcmp.eq.s32.totalorder %v3761, 0
        %v3764 = vxor.u32 %v3758, 2147483648
        %v3765 = vsel %vm3763, %v3757, %v3764
        %vm3766 = vcmp.eq.s32.totalorder %v3761, 2
        %v3767 = vxor.u32 %v3757, 2147483648
        %v3768 = vsel %vm3766, %v3767, %v3758
        %v3769 = vsel %vm3762, %v3765, %v3768
        %v3770 = vsel %vm3759, nan, %v3769
        %v3771 = vand.u32 2147483647, %v1164
        %vm3772 = vcmp.le.f32.partialorder %v3771, 0.7853982
        %vm3773 = vcmp.lt.s32.totalorder %v1164, 0
        %v3774 = vand.u32 %v1164, 2139095040
        %v3775 = vshrl.u32 %v3774, 23
        %v3776 = vsub.s32 %v3775, 127
        %v3777 = vand.u32 2147483647, %v1164
        %v3778 = vand.u32 %v3777, 8388607
        %v3779 = vor.u32 %v3778, 8388608
        %v3780 = vsub.s32 0, %v3779
        %v3781 = vadd.s32 %v3776, 1
        %vm3782 = vcmp.gt.s32.totalorder %v3781, 0
        %v3783 = vsel %vm3782, %v3781, 0
        %v3784 = vshrl.u32 %v3783, 5
        %v3785 = vand.u32 %v3783, 31
        %v3786 = vsub.s32 32, %v3785
        %v3787 = vshrl.u32 683565275, %v3786
        %v3788 = vshll.u32 683565275, %v3785
        %v3789 = vshrl.u32 2475754826, %v3786
        %v3790 = vor.u32 %v3788, %v3789
        %v3791 = vshll.u32 2475754826, %v3785
        %v3792 = vshrl.u32 2131351028, %v3786
        %v3793 = vor.u32 %v3791, %v3792
        %v3794 = vshll.u32 2131351028, %v3785
        %v3795 = vshrl.u32 2102212464, %v3786
        %v3796 = vor.u32 %v3794, %v3795
        %v3797 = vshll.u32 2102212464, %v3785
        %v3798 = vshrl.u32 920167782, %v3786
        %v3799 = vor.u32 %v3797, %v3798
        %v3800 = vshll.u32 920167782, %v3785
        %v3801 = vshrl.u32 1326507024, %v3786
        %v3802 = vor.u32 %v3800, %v3801
        %vm3803 = vcmp.lt.s32.totalorder %v3784, 1
        %vm3804 = vcmp.lt.s32.totalorder %v3784, 2
        %vm3805 = vcmp.lt.s32.totalorder %v3784, 3
        %vm3806 = vcmp.lt.s32.totalorder %v3784, 4
        %v3807 = vsel %vm3803, %v3787, %v3790
        %v3808 = vsel %vm3806, %v3796, 2102212464
        %v3809 = vsel %vm3805, %v3793, %v3808
        %v3810 = vsel %vm3804, %v3807, %v3809
        %v3811 = vsel %vm3803, %v3790, %v3793
        %v3812 = vsel %vm3806, %v3799, 920167782
        %v3813 = vsel %vm3805, %v3796, %v3812
        %v3814 = vsel %vm3804, %v3811, %v3813
        %v3815 = vsel %vm3803, %v3793, %v3796
        %v3816 = vsel %vm3806, %v3802, 1326507024
        %v3817 = vsel %vm3805, %v3799, %v3816
        %v3818 = vsel %vm3804, %v3815, %v3817
        %v3819 = vshll.u32 %v3779, 8
        %v3820 = vmul.u32.u64.compose %v3819, %v3818
        %v3821 = vextract.low.u32 %v3820
        %v3822 = vextract.high.u32 %v3820
        %v3823 = vmul.u32.u64.compose %v3819, %v3814
        %v3824 = vextract.low.u32 %v3823
        %v3825 = vextract.high.u32 %v3823
        %v3826 = vmul.u32 %v3819, %v3810
        %v3827 = vadd.s32 %v3822, %v3824
        %vm3828 = vc.u32 %v3822, %v3824
        %v3829 = vadd.s32 %v3825, 1
        %v3830 = vsel %vm3828, %v3829, %v3825
        %v3831 = vadd.s32 %v3826, %v3830
        %v3832 = vadd.s32 %v3831, 536870912
        %v3833 = vshrl.u32 %v3832, 30
        %v3834 = vshll.u32 %v3833, 30
        %v3835 = vsub.s32 %v3831, %v3834
        %vm3836 = vcmp.lt.s32.totalorder %v3835, 0
        %v3837 = vsub.s32 0, %v3835
        %v3838 = vsel %vm3836, %v3837, %v3835
        %v3839 = vclz %v3838
        %v3840 = vsub.s32 %v3839, 2
        %vm3841 = vcmp.gt.s32.totalorder 0, %v3840
        %v3842 = vsel %vm3841, 0, %v3840
        %v3843 = vsub.s32 32, %v3842
        %v3844 = vshll.u32 %v3835, %v3842
        %v3845 = vshrl.u32 %v3827, %v3843
        %v3846 = vor.u32 %v3844, %v3845
        %v3847 = vsub.s32 4294967266, %v3842
        %v3848 = vadd.s32 %v3847, 127
        %v3849 = vshll.u32 %v3848, 23
        %v3850 = vor.u32 4788187, %v3849
        %v3851 = vand.u32 2147483647, %v3850
        %v3853 = vcvt.s32.f32 %v3846
        %v3854 = vmul.f32 %v3853, %v3851
        %v3855 = vxor.u32 %v3854, 2147483648
        %v3856 = vsel %vm3773, %v3855, %v3854
        %v3857 = vsub.s32 4, %v3833
        %v3858 = vsel %vm3773, %v3857, %v3833
        %v3859 = vsel %vm3772, %v1164, %v3856
        %v3860 = vsel %vm3772, 0, %v3858
        %v3861 = vcosq.f32.pop %v3859
        %v3862 = vsinq.f32.pop %v3859
        %vm3863 = vweird.f32 %v1164
        %v3864 = vadd.s32 %v3860, 3
        %v3865 = vand.u32 %v3864, 3
        %vm3866 = vcmp.lt.s32.totalorder %v3865, 2
        %vm3867 = vcmp.eq.s32.totalorder %v3865, 0
        %v3868 = vxor.u32 %v3862, 2147483648
        %v3869 = vsel %vm3867, %v3861, %v3868
        %vm3870 = vcmp.eq.s32.totalorder %v3865, 2
        %v3871 = vxor.u32 %v3861, 2147483648
        %v3872 = vsel %vm3870, %v3871, %v3862
        %v3873 = vsel %vm3866, %v3869, %v3872
        %v3874 = vsel %vm3863, nan, %v3873
        %v3875 = vand.u32 2147483647, %v1165
        %vm3876 = vcmp.le.f32.partialorder %v3875, 0.7853982
        %vm3877 = vcmp.lt.s32.totalorder %v1165, 0
        %v3878 = vand.u32 %v1165, 2139095040
        %v3879 = vshrl.u32 %v3878, 23
        %v3880 = vsub.s32 %v3879, 127
        %v3881 = vand.u32 2147483647, %v1165
        %v3882 = vand.u32 %v3881, 8388607
        %v3883 = vor.u32 %v3882, 8388608
        %v3884 = vsub.s32 0, %v3883
        %v3885 = vadd.s32 %v3880, 1
        %vm3886 = vcmp.gt.s32.totalorder %v3885, 0
        %v3887 = vsel %vm3886, %v3885, 0
        %v3888 = vshrl.u32 %v3887, 5
        %v3889 = vand.u32 %v3887, 31
        %v3890 = vsub.s32 32, %v3889
        %v3891 = vshrl.u32 683565275, %v3890
        %v3892 = vshll.u32 683565275, %v3889
        %v3893 = vshrl.u32 2475754826, %v3890
        %v3894 = vor.u32 %v3892, %v3893
        %v3895 = vshll.u32 2475754826, %v3889
        %v3896 = vshrl.u32 2131351028, %v3890
        %v3897 = vor.u32 %v3895, %v3896
        %v3898 = vshll.u32 2131351028, %v3889
        %v3899 = vshrl.u32 2102212464, %v3890
        %v3900 = vor.u32 %v3898, %v3899
        %v3901 = vshll.u32 2102212464, %v3889
        %v3902 = vshrl.u32 920167782, %v3890
        %v3903 = vor.u32 %v3901, %v3902
        %v3904 = vshll.u32 920167782, %v3889
        %v3905 = vshrl.u32 1326507024, %v3890
        %v3906 = vor.u32 %v3904, %v3905
        %vm3907 = vcmp.lt.s32.totalorder %v3888, 1
        %vm3908 = vcmp.lt.s32.totalorder %v3888, 2
        %vm3909 = vcmp.lt.s32.totalorder %v3888, 3
        %vm3910 = vcmp.lt.s32.totalorder %v3888, 4
        %v3911 = vsel %vm3907, %v3891, %v3894
        %v3912 = vsel %vm3910, %v3900, 2102212464
        %v3913 = vsel %vm3909, %v3897, %v3912
        %v3914 = vsel %vm3908, %v3911, %v3913
        %v3915 = vsel %vm3907, %v3894, %v3897
        %v3916 = vsel %vm3910, %v3903, 920167782
        %v3917 = vsel %vm3909, %v3900, %v3916
        %v3918 = vsel %vm3908, %v3915, %v3917
        %v3919 = vsel %vm3907, %v3897, %v3900
        %v3920 = vsel %vm3910, %v3906, 1326507024
        %v3921 = vsel %vm3909, %v3903, %v3920
        %v3922 = vsel %vm3908, %v3919, %v3921
        %v3923 = vshll.u32 %v3883, 8
        %v3924 = vmul.u32.u64.compose %v3923, %v3922
        %v3925 = vextract.low.u32 %v3924
        %v3926 = vextract.high.u32 %v3924
        %v3927 = vmul.u32.u64.compose %v3923, %v3918
        %v3928 = vextract.low.u32 %v3927
        %v3929 = vextract.high.u32 %v3927
        %v3930 = vmul.u32 %v3923, %v3914
        %v3931 = vadd.s32 %v3926, %v3928
        %vm3932 = vc.u32 %v3926, %v3928
        %v3933 = vadd.s32 %v3929, 1
        %v3934 = vsel %vm3932, %v3933, %v3929
        %v3935 = vadd.s32 %v3930, %v3934
        %v3936 = vadd.s32 %v3935, 536870912
        %v3937 = vshrl.u32 %v3936, 30
        %v3938 = vshll.u32 %v3937, 30
        %v3939 = vsub.s32 %v3935, %v3938
        %vm3940 = vcmp.lt.s32.totalorder %v3939, 0
        %v3941 = vsub.s32 0, %v3939
        %v3942 = vsel %vm3940, %v3941, %v3939
        %v3943 = vclz %v3942
        %v3944 = vsub.s32 %v3943, 2
        %vm3945 = vcmp.gt.s32.totalorder 0, %v3944
        %v3946 = vsel %vm3945, 0, %v3944
        %v3947 = vsub.s32 32, %v3946
        %v3948 = vshll.u32 %v3939, %v3946
        %v3949 = vshrl.u32 %v3931, %v3947
        %v3950 = vor.u32 %v3948, %v3949
        %v3951 = vsub.s32 4294967266, %v3946
        %v3952 = vadd.s32 %v3951, 127
        %v3953 = vshll.u32 %v3952, 23
        %v3954 = vor.u32 4788187, %v3953
        %v3955 = vand.u32 2147483647, %v3954
        %v3957 = vcvt.s32.f32 %v3950
        %v3958 = vmul.f32 %v3957, %v3955
        %v3959 = vxor.u32 %v3958, 2147483648
        %v3960 = vsel %vm3877, %v3959, %v3958
        %v3961 = vsub.s32 4, %v3937
        %v3962 = vsel %vm3877, %v3961, %v3937
        %v3963 = vsel %vm3876, %v1165, %v3960
        %v3964 = vsel %vm3876, 0, %v3962
        %v3965 = vcosq.f32.pop %v3963
        %v3966 = vsinq.f32.pop %v3963
        %vm3967 = vweird.f32 %v1165
        %v3968 = vadd.s32 %v3964, 3
        %v3969 = vand.u32 %v3968, 3
        %vm3970 = vcmp.lt.s32.totalorder %v3969, 2
        %vm3971 = vcmp.eq.s32.totalorder %v3969, 0
        %v3972 = vxor.u32 %v3966, 2147483648
        %v3973 = vsel %vm3971, %v3965, %v3972
        %vm3974 = vcmp.eq.s32.totalorder %v3969, 2
        %v3975 = vxor.u32 %v3965, 2147483648
        %v3976 = vsel %vm3974, %v3975, %v3966
        %v3977 = vsel %vm3970, %v3973, %v3976
        %v3978 = vsel %vm3967, nan, %v3977
        %v3979 = vand.u32 2147483647, %v1166
        %vm3980 = vcmp.le.f32.partialorder %v3979, 0.7853982
        %vm3981 = vcmp.lt.s32.totalorder %v1166, 0
        %v3982 = vand.u32 %v1166, 2139095040
        %v3983 = vshrl.u32 %v3982, 23
        %v3984 = vsub.s32 %v3983, 127
        %v3985 = vand.u32 2147483647, %v1166
        %v3986 = vand.u32 %v3985, 8388607
        %v3987 = vor.u32 %v3986, 8388608
        %v3988 = vsub.s32 0, %v3987
        %v3989 = vadd.s32 %v3984, 1
        %vm3990 = vcmp.gt.s32.totalorder %v3989, 0
        %v3991 = vsel %vm3990, %v3989, 0
        %v3992 = vshrl.u32 %v3991, 5
        %v3993 = vand.u32 %v3991, 31
        %v3994 = vsub.s32 32, %v3993
        %v3995 = vshrl.u32 683565275, %v3994
        %v3996 = vshll.u32 683565275, %v3993
        %v3997 = vshrl.u32 2475754826, %v3994
        %v3998 = vor.u32 %v3996, %v3997
        %v3999 = vshll.u32 2475754826, %v3993
        %v4000 = vshrl.u32 2131351028, %v3994
        %v4001 = vor.u32 %v3999, %v4000
        %v4002 = vshll.u32 2131351028, %v3993
        %v4003 = vshrl.u32 2102212464, %v3994
        %v4004 = vor.u32 %v4002, %v4003
        %v4005 = vshll.u32 2102212464, %v3993
        %v4006 = vshrl.u32 920167782, %v3994
        %v4007 = vor.u32 %v4005, %v4006
        %v4008 = vshll.u32 920167782, %v3993
        %v4009 = vshrl.u32 1326507024, %v3994
        %v4010 = vor.u32 %v4008, %v4009
        %vm4011 = vcmp.lt.s32.totalorder %v3992, 1
        %vm4012 = vcmp.lt.s32.totalorder %v3992, 2
        %vm4013 = vcmp.lt.s32.totalorder %v3992, 3
        %vm4014 = vcmp.lt.s32.totalorder %v3992, 4
        %v4015 = vsel %vm4011, %v3995, %v3998
        %v4016 = vsel %vm4014, %v4004, 2102212464
        %v4017 = vsel %vm4013, %v4001, %v4016
        %v4018 = vsel %vm4012, %v4015, %v4017
        %v4019 = vsel %vm4011, %v3998, %v4001
        %v4020 = vsel %vm4014, %v4007, 920167782
        %v4021 = vsel %vm4013, %v4004, %v4020
        %v4022 = vsel %vm4012, %v4019, %v4021
        %v4023 = vsel %vm4011, %v4001, %v4004
        %v4024 = vsel %vm4014, %v4010, 1326507024
        %v4025 = vsel %vm4013, %v4007, %v4024
        %v4026 = vsel %vm4012, %v4023, %v4025
        %v4027 = vshll.u32 %v3987, 8
        %v4028 = vmul.u32.u64.compose %v4027, %v4026
        %v4029 = vextract.low.u32 %v4028
        %v4030 = vextract.high.u32 %v4028
        %v4031 = vmul.u32.u64.compose %v4027, %v4022
        %v4032 = vextract.low.u32 %v4031
        %v4033 = vextract.high.u32 %v4031
        %v4034 = vmul.u32 %v4027, %v4018
        %v4035 = vadd.s32 %v4030, %v4032
        %vm4036 = vc.u32 %v4030, %v4032
        %v4037 = vadd.s32 %v4033, 1
        %v4038 = vsel %vm4036, %v4037, %v4033
        %v4039 = vadd.s32 %v4034, %v4038
        %v4040 = vadd.s32 %v4039, 536870912
        %v4041 = vshrl.u32 %v4040, 30
        %v4042 = vshll.u32 %v4041, 30
        %v4043 = vsub.s32 %v4039, %v4042
        %vm4044 = vcmp.lt.s32.totalorder %v4043, 0
        %v4045 = vsub.s32 0, %v4043
        %v4046 = vsel %vm4044, %v4045, %v4043
        %v4047 = vclz %v4046
        %v4048 = vsub.s32 %v4047, 2
        %vm4049 = vcmp.gt.s32.totalorder 0, %v4048
        %v4050 = vsel %vm4049, 0, %v4048
        %v4051 = vsub.s32 32, %v4050
        %v4052 = vshll.u32 %v4043, %v4050
        %v4053 = vshrl.u32 %v4035, %v4051
        %v4054 = vor.u32 %v4052, %v4053
        %v4055 = vsub.s32 4294967266, %v4050
        %v4056 = vadd.s32 %v4055, 127
        %v4057 = vshll.u32 %v4056, 23
        %v4058 = vor.u32 4788187, %v4057
        %v4059 = vand.u32 2147483647, %v4058
        %v4061 = vcvt.s32.f32 %v4054
        %v4062 = vmul.f32 %v4061, %v4059
        %v4063 = vxor.u32 %v4062, 2147483648
        %v4064 = vsel %vm3981, %v4063, %v4062
        %v4065 = vsub.s32 4, %v4041
        %v4066 = vsel %vm3981, %v4065, %v4041
        %v4067 = vsel %vm3980, %v1166, %v4064
        %v4068 = vsel %vm3980, 0, %v4066
        %v4069 = vcosq.f32.pop %v4067
        %v4070 = vsinq.f32.pop %v4067
        %vm4071 = vweird.f32 %v1166
        %v4072 = vadd.s32 %v4068, 3
        %v4073 = vand.u32 %v4072, 3
        %vm4074 = vcmp.lt.s32.totalorder %v4073, 2
        %vm4075 = vcmp.eq.s32.totalorder %v4073, 0
        %v4076 = vxor.u32 %v4070, 2147483648
        %v4077 = vsel %vm4075, %v4069, %v4076
        %vm4078 = vcmp.eq.s32.totalorder %v4073, 2
        %v4079 = vxor.u32 %v4069, 2147483648
        %v4080 = vsel %vm4078, %v4079, %v4070
        %v4081 = vsel %vm4074, %v4077, %v4080
        %v4082 = vsel %vm4071, nan, %v4081
        %v4083 = vand.u32 2147483647, %v1167
        %vm4084 = vcmp.le.f32.partialorder %v4083, 0.7853982
        %vm4085 = vcmp.lt.s32.totalorder %v1167, 0
        %v4086 = vand.u32 %v1167, 2139095040
        %v4087 = vshrl.u32 %v4086, 23
        %v4088 = vsub.s32 %v4087, 127
        %v4089 = vand.u32 2147483647, %v1167
        %v4090 = vand.u32 %v4089, 8388607
        %v4091 = vor.u32 %v4090, 8388608
        %v4092 = vsub.s32 0, %v4091
        %v4093 = vadd.s32 %v4088, 1
        %vm4094 = vcmp.gt.s32.totalorder %v4093, 0
        %v4095 = vsel %vm4094, %v4093, 0
        %v4096 = vshrl.u32 %v4095, 5
        %v4097 = vand.u32 %v4095, 31
        %v4098 = vsub.s32 32, %v4097
        %v4099 = vshrl.u32 683565275, %v4098
        %v4100 = vshll.u32 683565275, %v4097
        %v4101 = vshrl.u32 2475754826, %v4098
        %v4102 = vor.u32 %v4100, %v4101
        %v4103 = vshll.u32 2475754826, %v4097
        %v4104 = vshrl.u32 2131351028, %v4098
        %v4105 = vor.u32 %v4103, %v4104
        %v4106 = vshll.u32 2131351028, %v4097
        %v4107 = vshrl.u32 2102212464, %v4098
        %v4108 = vor.u32 %v4106, %v4107
        %v4109 = vshll.u32 2102212464, %v4097
        %v4110 = vshrl.u32 920167782, %v4098
        %v4111 = vor.u32 %v4109, %v4110
        %v4112 = vshll.u32 920167782, %v4097
        %v4113 = vshrl.u32 1326507024, %v4098
        %v4114 = vor.u32 %v4112, %v4113
        %vm4115 = vcmp.lt.s32.totalorder %v4096, 1
        %vm4116 = vcmp.lt.s32.totalorder %v4096, 2
        %vm4117 = vcmp.lt.s32.totalorder %v4096, 3
        %vm4118 = vcmp.lt.s32.totalorder %v4096, 4
        %v4119 = vsel %vm4115, %v4099, %v4102
        %v4120 = vsel %vm4118, %v4108, 2102212464
        %v4121 = vsel %vm4117, %v4105, %v4120
        %v4122 = vsel %vm4116, %v4119, %v4121
        %v4123 = vsel %vm4115, %v4102, %v4105
        %v4124 = vsel %vm4118, %v4111, 920167782
        %v4125 = vsel %vm4117, %v4108, %v4124
        %v4126 = vsel %vm4116, %v4123, %v4125
        %v4127 = vsel %vm4115, %v4105, %v4108
        %v4128 = vsel %vm4118, %v4114, 1326507024
        %v4129 = vsel %vm4117, %v4111, %v4128
        %v4130 = vsel %vm4116, %v4127, %v4129
        %v4131 = vshll.u32 %v4091, 8
        %v4132 = vmul.u32.u64.compose %v4131, %v4130
        %v4133 = vextract.low.u32 %v4132
        %v4134 = vextract.high.u32 %v4132
        %v4135 = vmul.u32.u64.compose %v4131, %v4126
        %v4136 = vextract.low.u32 %v4135
        %v4137 = vextract.high.u32 %v4135
        %v4138 = vmul.u32 %v4131, %v4122
        %v4139 = vadd.s32 %v4134, %v4136
        %vm4140 = vc.u32 %v4134, %v4136
        %v4141 = vadd.s32 %v4137, 1
        %v4142 = vsel %vm4140, %v4141, %v4137
        %v4143 = vadd.s32 %v4138, %v4142
        %v4144 = vadd.s32 %v4143, 536870912
        %v4145 = vshrl.u32 %v4144, 30
        %v4146 = vshll.u32 %v4145, 30
        %v4147 = vsub.s32 %v4143, %v4146
        %vm4148 = vcmp.lt.s32.totalorder %v4147, 0
        %v4149 = vsub.s32 0, %v4147
        %v4150 = vsel %vm4148, %v4149, %v4147
        %v4151 = vclz %v4150
        %v4152 = vsub.s32 %v4151, 2
        %vm4153 = vcmp.gt.s32.totalorder 0, %v4152
        %v4154 = vsel %vm4153, 0, %v4152
        %v4155 = vsub.s32 32, %v4154
        %v4156 = vshll.u32 %v4147, %v4154
        %v4157 = vshrl.u32 %v4139, %v4155
        %v4158 = vor.u32 %v4156, %v4157
        %v4159 = vsub.s32 4294967266, %v4154
        %v4160 = vadd.s32 %v4159, 127
        %v4161 = vshll.u32 %v4160, 23
        %v4162 = vor.u32 4788187, %v4161
        %v4163 = vand.u32 2147483647, %v4162
        %v4165 = vcvt.s32.f32 %v4158
        %v4166 = vmul.f32 %v4165, %v4163
        %v4167 = vxor.u32 %v4166, 2147483648
        %v4168 = vsel %vm4085, %v4167, %v4166
        %v4169 = vsub.s32 4, %v4145
        %v4170 = vsel %vm4085, %v4169, %v4145
        %v4171 = vsel %vm4084, %v1167, %v4168
        %v4172 = vsel %vm4084, 0, %v4170
        %v4173 = vcosq.f32.pop %v4171
        %v4174 = vsinq.f32.pop %v4171
        %vm4175 = vweird.f32 %v1167
        %v4176 = vadd.s32 %v4172, 3
        %v4177 = vand.u32 %v4176, 3
        %vm4178 = vcmp.lt.s32.totalorder %v4177, 2
        %vm4179 = vcmp.eq.s32.totalorder %v4177, 0
        %v4180 = vxor.u32 %v4174, 2147483648
        %v4181 = vsel %vm4179, %v4173, %v4180
        %vm4182 = vcmp.eq.s32.totalorder %v4177, 2
        %v4183 = vxor.u32 %v4173, 2147483648
        %v4184 = vsel %vm4182, %v4183, %v4174
        %v4185 = vsel %vm4178, %v4181, %v4184
        %v4186 = vsel %vm4175, nan, %v4185
        %v4187 = vand.u32 2147483647, %v1168
        %vm4188 = vcmp.le.f32.partialorder %v4187, 0.7853982
        %vm4189 = vcmp.lt.s32.totalorder %v1168, 0
        %v4190 = vand.u32 %v1168, 2139095040
        %v4191 = vshrl.u32 %v4190, 23
        %v4192 = vsub.s32 %v4191, 127
        %v4193 = vand.u32 2147483647, %v1168
        %v4194 = vand.u32 %v4193, 8388607
        %v4195 = vor.u32 %v4194, 8388608
        %v4196 = vsub.s32 0, %v4195
        %v4197 = vadd.s32 %v4192, 1
        %vm4198 = vcmp.gt.s32.totalorder %v4197, 0
        %v4199 = vsel %vm4198, %v4197, 0
        %v4200 = vshrl.u32 %v4199, 5
        %v4201 = vand.u32 %v4199, 31
        %v4202 = vsub.s32 32, %v4201
        %v4203 = vshrl.u32 683565275, %v4202
        %v4204 = vshll.u32 683565275, %v4201
        %v4205 = vshrl.u32 2475754826, %v4202
        %v4206 = vor.u32 %v4204, %v4205
        %v4207 = vshll.u32 2475754826, %v4201
        %v4208 = vshrl.u32 2131351028, %v4202
        %v4209 = vor.u32 %v4207, %v4208
        %v4210 = vshll.u32 2131351028, %v4201
        %v4211 = vshrl.u32 2102212464, %v4202
        %v4212 = vor.u32 %v4210, %v4211
        %v4213 = vshll.u32 2102212464, %v4201
        %v4214 = vshrl.u32 920167782, %v4202
        %v4215 = vor.u32 %v4213, %v4214
        %v4216 = vshll.u32 920167782, %v4201
        %v4217 = vshrl.u32 1326507024, %v4202
        %v4218 = vor.u32 %v4216, %v4217
        %vm4219 = vcmp.lt.s32.totalorder %v4200, 1
        %vm4220 = vcmp.lt.s32.totalorder %v4200, 2
        %vm4221 = vcmp.lt.s32.totalorder %v4200, 3
        %vm4222 = vcmp.lt.s32.totalorder %v4200, 4
        %v4223 = vsel %vm4219, %v4203, %v4206
        %v4224 = vsel %vm4222, %v4212, 2102212464
        %v4225 = vsel %vm4221, %v4209, %v4224
        %v4226 = vsel %vm4220, %v4223, %v4225
        %v4227 = vsel %vm4219, %v4206, %v4209
        %v4228 = vsel %vm4222, %v4215, 920167782
        %v4229 = vsel %vm4221, %v4212, %v4228
        %v4230 = vsel %vm4220, %v4227, %v4229
        %v4231 = vsel %vm4219, %v4209, %v4212
        %v4232 = vsel %vm4222, %v4218, 1326507024
        %v4233 = vsel %vm4221, %v4215, %v4232
        %v4234 = vsel %vm4220, %v4231, %v4233
        %v4235 = vshll.u32 %v4195, 8
        %v4236 = vmul.u32.u64.compose %v4235, %v4234
        %v4237 = vextract.low.u32 %v4236
        %v4238 = vextract.high.u32 %v4236
        %v4239 = vmul.u32.u64.compose %v4235, %v4230
        %v4240 = vextract.low.u32 %v4239
        %v4241 = vextract.high.u32 %v4239
        %v4242 = vmul.u32 %v4235, %v4226
        %v4243 = vadd.s32 %v4238, %v4240
        %vm4244 = vc.u32 %v4238, %v4240
        %v4245 = vadd.s32 %v4241, 1
        %v4246 = vsel %vm4244, %v4245, %v4241
        %v4247 = vadd.s32 %v4242, %v4246
        %v4248 = vadd.s32 %v4247, 536870912
        %v4249 = vshrl.u32 %v4248, 30
        %v4250 = vshll.u32 %v4249, 30
        %v4251 = vsub.s32 %v4247, %v4250
        %vm4252 = vcmp.lt.s32.totalorder %v4251, 0
        %v4253 = vsub.s32 0, %v4251
        %v4254 = vsel %vm4252, %v4253, %v4251
        %v4255 = vclz %v4254
        %v4256 = vsub.s32 %v4255, 2
        %vm4257 = vcmp.gt.s32.totalorder 0, %v4256
        %v4258 = vsel %vm4257, 0, %v4256
        %v4259 = vsub.s32 32, %v4258
        %v4260 = vshll.u32 %v4251, %v4258
        %v4261 = vshrl.u32 %v4243, %v4259
        %v4262 = vor.u32 %v4260, %v4261
        %v4263 = vsub.s32 4294967266, %v4258
        %v4264 = vadd.s32 %v4263, 127
        %v4265 = vshll.u32 %v4264, 23
        %v4266 = vor.u32 4788187, %v4265
        %v4267 = vand.u32 2147483647, %v4266
        %v4269 = vcvt.s32.f32 %v4262
        %v4270 = vmul.f32 %v4269, %v4267
        %v4271 = vxor.u32 %v4270, 2147483648
        %v4272 = vsel %vm4189, %v4271, %v4270
        %v4273 = vsub.s32 4, %v4249
        %v4274 = vsel %vm4189, %v4273, %v4249
        %v4275 = vsel %vm4188, %v1168, %v4272
        %v4276 = vsel %vm4188, 0, %v4274
        %v4277 = vcosq.f32.pop %v4275
        %v4278 = vsinq.f32.pop %v4275
        %vm4279 = vweird.f32 %v1168
        %v4280 = vadd.s32 %v4276, 3
        %v4281 = vand.u32 %v4280, 3
        %vm4282 = vcmp.lt.s32.totalorder %v4281, 2
        %vm4283 = vcmp.eq.s32.totalorder %v4281, 0
        %v4284 = vxor.u32 %v4278, 2147483648
        %v4285 = vsel %vm4283, %v4277, %v4284
        %vm4286 = vcmp.eq.s32.totalorder %v4281, 2
        %v4287 = vxor.u32 %v4277, 2147483648
        %v4288 = vsel %vm4286, %v4287, %v4278
        %v4289 = vsel %vm4282, %v4285, %v4288
        %v4290 = vsel %vm4279, nan, %v4289
        %v4291 = vand.u32 2147483647, %v1169
        %vm4292 = vcmp.le.f32.partialorder %v4291, 0.7853982
        %vm4293 = vcmp.lt.s32.totalorder %v1169, 0
        %v4294 = vand.u32 %v1169, 2139095040
        %v4295 = vshrl.u32 %v4294, 23
        %v4296 = vsub.s32 %v4295, 127
        %v4297 = vand.u32 2147483647, %v1169
        %v4298 = vand.u32 %v4297, 8388607
        %v4299 = vor.u32 %v4298, 8388608
        %v4300 = vsub.s32 0, %v4299
        %v4301 = vadd.s32 %v4296, 1
        %vm4302 = vcmp.gt.s32.totalorder %v4301, 0
        %v4303 = vsel %vm4302, %v4301, 0
        %v4304 = vshrl.u32 %v4303, 5
        %v4305 = vand.u32 %v4303, 31
        %v4306 = vsub.s32 32, %v4305
        %v4307 = vshrl.u32 683565275, %v4306
        %v4308 = vshll.u32 683565275, %v4305
        %v4309 = vshrl.u32 2475754826, %v4306
        %v4310 = vor.u32 %v4308, %v4309
        %v4311 = vshll.u32 2475754826, %v4305
        %v4312 = vshrl.u32 2131351028, %v4306
        %v4313 = vor.u32 %v4311, %v4312
        %v4314 = vshll.u32 2131351028, %v4305
        %v4315 = vshrl.u32 2102212464, %v4306
        %v4316 = vor.u32 %v4314, %v4315
        %v4317 = vshll.u32 2102212464, %v4305
        %v4318 = vshrl.u32 920167782, %v4306
        %v4319 = vor.u32 %v4317, %v4318
        %v4320 = vshll.u32 920167782, %v4305
        %v4321 = vshrl.u32 1326507024, %v4306
        %v4322 = vor.u32 %v4320, %v4321
        %vm4323 = vcmp.lt.s32.totalorder %v4304, 1
        %vm4324 = vcmp.lt.s32.totalorder %v4304, 2
        %vm4325 = vcmp.lt.s32.totalorder %v4304, 3
        %vm4326 = vcmp.lt.s32.totalorder %v4304, 4
        %v4327 = vsel %vm4323, %v4307, %v4310
        %v4328 = vsel %vm4326, %v4316, 2102212464
        %v4329 = vsel %vm4325, %v4313, %v4328
        %v4330 = vsel %vm4324, %v4327, %v4329
        %v4331 = vsel %vm4323, %v4310, %v4313
        %v4332 = vsel %vm4326, %v4319, 920167782
        %v4333 = vsel %vm4325, %v4316, %v4332
        %v4334 = vsel %vm4324, %v4331, %v4333
        %v4335 = vsel %vm4323, %v4313, %v4316
        %v4336 = vsel %vm4326, %v4322, 1326507024
        %v4337 = vsel %vm4325, %v4319, %v4336
        %v4338 = vsel %vm4324, %v4335, %v4337
        %v4339 = vshll.u32 %v4299, 8
        %v4340 = vmul.u32.u64.compose %v4339, %v4338
        %v4341 = vextract.low.u32 %v4340
        %v4342 = vextract.high.u32 %v4340
        %v4343 = vmul.u32.u64.compose %v4339, %v4334
        %v4344 = vextract.low.u32 %v4343
        %v4345 = vextract.high.u32 %v4343
        %v4346 = vmul.u32 %v4339, %v4330
        %v4347 = vadd.s32 %v4342, %v4344
        %vm4348 = vc.u32 %v4342, %v4344
        %v4349 = vadd.s32 %v4345, 1
        %v4350 = vsel %vm4348, %v4349, %v4345
        %v4351 = vadd.s32 %v4346, %v4350
        %v4352 = vadd.s32 %v4351, 536870912
        %v4353 = vshrl.u32 %v4352, 30
        %v4354 = vshll.u32 %v4353, 30
        %v4355 = vsub.s32 %v4351, %v4354
        %vm4356 = vcmp.lt.s32.totalorder %v4355, 0
        %v4357 = vsub.s32 0, %v4355
        %v4358 = vsel %vm4356, %v4357, %v4355
        %v4359 = vclz %v4358
        %v4360 = vsub.s32 %v4359, 2
        %vm4361 = vcmp.gt.s32.totalorder 0, %v4360
        %v4362 = vsel %vm4361, 0, %v4360
        %v4363 = vsub.s32 32, %v4362
        %v4364 = vshll.u32 %v4355, %v4362
        %v4365 = vshrl.u32 %v4347, %v4363
        %v4366 = vor.u32 %v4364, %v4365
        %v4367 = vsub.s32 4294967266, %v4362
        %v4368 = vadd.s32 %v4367, 127
        %v4369 = vshll.u32 %v4368, 23
        %v4370 = vor.u32 4788187, %v4369
        %v4371 = vand.u32 2147483647, %v4370
        %v4373 = vcvt.s32.f32 %v4366
        %v4374 = vmul.f32 %v4373, %v4371
        %v4375 = vxor.u32 %v4374, 2147483648
        %v4376 = vsel %vm4293, %v4375, %v4374
        %v4377 = vsub.s32 4, %v4353
        %v4378 = vsel %vm4293, %v4377, %v4353
        %v4379 = vsel %vm4292, %v1169, %v4376
        %v4380 = vsel %vm4292, 0, %v4378
        %v4381 = vcosq.f32.pop %v4379
        %v4382 = vsinq.f32.pop %v4379
        %vm4383 = vweird.f32 %v1169
        %v4384 = vadd.s32 %v4380, 3
        %v4385 = vand.u32 %v4384, 3
        %vm4386 = vcmp.lt.s32.totalorder %v4385, 2
        %vm4387 = vcmp.eq.s32.totalorder %v4385, 0
        %v4388 = vxor.u32 %v4382, 2147483648
        %v4389 = vsel %vm4387, %v4381, %v4388
        %vm4390 = vcmp.eq.s32.totalorder %v4385, 2
        %v4391 = vxor.u32 %v4381, 2147483648
        %v4392 = vsel %vm4390, %v4391, %v4382
        %v4393 = vsel %vm4386, %v4389, %v4392
        %v4394 = vsel %vm4383, nan, %v4393
        %v4395 = vand.u32 2147483647, %v1170
        %vm4396 = vcmp.le.f32.partialorder %v4395, 0.7853982
        %vm4397 = vcmp.lt.s32.totalorder %v1170, 0
        %v4398 = vand.u32 %v1170, 2139095040
        %v4399 = vshrl.u32 %v4398, 23
        %v4400 = vsub.s32 %v4399, 127
        %v4401 = vand.u32 2147483647, %v1170
        %v4402 = vand.u32 %v4401, 8388607
        %v4403 = vor.u32 %v4402, 8388608
        %v4404 = vsub.s32 0, %v4403
        %v4405 = vadd.s32 %v4400, 1
        %vm4406 = vcmp.gt.s32.totalorder %v4405, 0
        %v4407 = vsel %vm4406, %v4405, 0
        %v4408 = vshrl.u32 %v4407, 5
        %v4409 = vand.u32 %v4407, 31
        %v4410 = vsub.s32 32, %v4409
        %v4411 = vshrl.u32 683565275, %v4410
        %v4412 = vshll.u32 683565275, %v4409
        %v4413 = vshrl.u32 2475754826, %v4410
        %v4414 = vor.u32 %v4412, %v4413
        %v4415 = vshll.u32 2475754826, %v4409
        %v4416 = vshrl.u32 2131351028, %v4410
        %v4417 = vor.u32 %v4415, %v4416
        %v4418 = vshll.u32 2131351028, %v4409
        %v4419 = vshrl.u32 2102212464, %v4410
        %v4420 = vor.u32 %v4418, %v4419
        %v4421 = vshll.u32 2102212464, %v4409
        %v4422 = vshrl.u32 920167782, %v4410
        %v4423 = vor.u32 %v4421, %v4422
        %v4424 = vshll.u32 920167782, %v4409
        %v4425 = vshrl.u32 1326507024, %v4410
        %v4426 = vor.u32 %v4424, %v4425
        %vm4427 = vcmp.lt.s32.totalorder %v4408, 1
        %vm4428 = vcmp.lt.s32.totalorder %v4408, 2
        %vm4429 = vcmp.lt.s32.totalorder %v4408, 3
        %vm4430 = vcmp.lt.s32.totalorder %v4408, 4
        %v4431 = vsel %vm4427, %v4411, %v4414
        %v4432 = vsel %vm4430, %v4420, 2102212464
        %v4433 = vsel %vm4429, %v4417, %v4432
        %v4434 = vsel %vm4428, %v4431, %v4433
        %v4435 = vsel %vm4427, %v4414, %v4417
        %v4436 = vsel %vm4430, %v4423, 920167782
        %v4437 = vsel %vm4429, %v4420, %v4436
        %v4438 = vsel %vm4428, %v4435, %v4437
        %v4439 = vsel %vm4427, %v4417, %v4420
        %v4440 = vsel %vm4430, %v4426, 1326507024
        %v4441 = vsel %vm4429, %v4423, %v4440
        %v4442 = vsel %vm4428, %v4439, %v4441
        %v4443 = vshll.u32 %v4403, 8
        %v4444 = vmul.u32.u64.compose %v4443, %v4442
        %v4445 = vextract.low.u32 %v4444
        %v4446 = vextract.high.u32 %v4444
        %v4447 = vmul.u32.u64.compose %v4443, %v4438
        %v4448 = vextract.low.u32 %v4447
        %v4449 = vextract.high.u32 %v4447
        %v4450 = vmul.u32 %v4443, %v4434
        %v4451 = vadd.s32 %v4446, %v4448
        %vm4452 = vc.u32 %v4446, %v4448
        %v4453 = vadd.s32 %v4449, 1
        %v4454 = vsel %vm4452, %v4453, %v4449
        %v4455 = vadd.s32 %v4450, %v4454
        %v4456 = vadd.s32 %v4455, 536870912
        %v4457 = vshrl.u32 %v4456, 30
        %v4458 = vshll.u32 %v4457, 30
        %v4459 = vsub.s32 %v4455, %v4458
        %vm4460 = vcmp.lt.s32.totalorder %v4459, 0
        %v4461 = vsub.s32 0, %v4459
        %v4462 = vsel %vm4460, %v4461, %v4459
        %v4463 = vclz %v4462
        %v4464 = vsub.s32 %v4463, 2
        %vm4465 = vcmp.gt.s32.totalorder 0, %v4464
        %v4466 = vsel %vm4465, 0, %v4464
        %v4467 = vsub.s32 32, %v4466
        %v4468 = vshll.u32 %v4459, %v4466
        %v4469 = vshrl.u32 %v4451, %v4467
        %v4470 = vor.u32 %v4468, %v4469
        %v4471 = vsub.s32 4294967266, %v4466
        %v4472 = vadd.s32 %v4471, 127
        %v4473 = vshll.u32 %v4472, 23
        %v4474 = vor.u32 4788187, %v4473
        %v4475 = vand.u32 2147483647, %v4474
        %v4477 = vcvt.s32.f32 %v4470
        %v4478 = vmul.f32 %v4477, %v4475
        %v4479 = vxor.u32 %v4478, 2147483648
        %v4480 = vsel %vm4397, %v4479, %v4478
        %v4481 = vsub.s32 4, %v4457
        %v4482 = vsel %vm4397, %v4481, %v4457
        %v4483 = vsel %vm4396, %v1170, %v4480
        %v4484 = vsel %vm4396, 0, %v4482
        %v4485 = vcosq.f32.pop %v4483
        %v4486 = vsinq.f32.pop %v4483
        %vm4487 = vweird.f32 %v1170
        %v4488 = vadd.s32 %v4484, 3
        %v4489 = vand.u32 %v4488, 3
        %vm4490 = vcmp.lt.s32.totalorder %v4489, 2
        %vm4491 = vcmp.eq.s32.totalorder %v4489, 0
        %v4492 = vxor.u32 %v4486, 2147483648
        %v4493 = vsel %vm4491, %v4485, %v4492
        %vm4494 = vcmp.eq.s32.totalorder %v4489, 2
        %v4495 = vxor.u32 %v4485, 2147483648
        %v4496 = vsel %vm4494, %v4495, %v4486
        %v4497 = vsel %vm4490, %v4493, %v4496
        %v4498 = vsel %vm4487, nan, %v4497
        %v4499 = vand.u32 2147483647, %v1139
        %vm4500 = vcmp.le.f32.partialorder %v4499, 0.7853982
        %vm4501 = vcmp.lt.s32.totalorder %v1139, 0
        %v4502 = vand.u32 %v1139, 2139095040
        %v4503 = vshrl.u32 %v4502, 23
        %v4504 = vsub.s32 %v4503, 127
        %v4505 = vand.u32 2147483647, %v1139
        %v4506 = vand.u32 %v4505, 8388607
        %v4507 = vor.u32 %v4506, 8388608
        %v4508 = vsub.s32 0, %v4507
        %v4509 = vadd.s32 %v4504, 1
        %vm4510 = vcmp.gt.s32.totalorder %v4509, 0
        %v4511 = vsel %vm4510, %v4509, 0
        %v4512 = vshrl.u32 %v4511, 5
        %v4513 = vand.u32 %v4511, 31
        %v4514 = vsub.s32 32, %v4513
        %v4515 = vshrl.u32 683565275, %v4514
        %v4516 = vshll.u32 683565275, %v4513
        %v4517 = vshrl.u32 2475754826, %v4514
        %v4518 = vor.u32 %v4516, %v4517
        %v4519 = vshll.u32 2475754826, %v4513
        %v4520 = vshrl.u32 2131351028, %v4514
        %v4521 = vor.u32 %v4519, %v4520
        %v4522 = vshll.u32 2131351028, %v4513
        %v4523 = vshrl.u32 2102212464, %v4514
        %v4524 = vor.u32 %v4522, %v4523
        %v4525 = vshll.u32 2102212464, %v4513
        %v4526 = vshrl.u32 920167782, %v4514
        %v4527 = vor.u32 %v4525, %v4526
        %v4528 = vshll.u32 920167782, %v4513
        %v4529 = vshrl.u32 1326507024, %v4514
        %v4530 = vor.u32 %v4528, %v4529
        %vm4531 = vcmp.lt.s32.totalorder %v4512, 1
        %vm4532 = vcmp.lt.s32.totalorder %v4512, 2
        %vm4533 = vcmp.lt.s32.totalorder %v4512, 3
        %vm4534 = vcmp.lt.s32.totalorder %v4512, 4
        %v4535 = vsel %vm4531, %v4515, %v4518
        %v4536 = vsel %vm4534, %v4524, 2102212464
        %v4537 = vsel %vm4533, %v4521, %v4536
        %v4538 = vsel %vm4532, %v4535, %v4537
        %v4539 = vsel %vm4531, %v4518, %v4521
        %v4540 = vsel %vm4534, %v4527, 920167782
        %v4541 = vsel %vm4533, %v4524, %v4540
        %v4542 = vsel %vm4532, %v4539, %v4541
        %v4543 = vsel %vm4531, %v4521, %v4524
        %v4544 = vsel %vm4534, %v4530, 1326507024
        %v4545 = vsel %vm4533, %v4527, %v4544
        %v4546 = vsel %vm4532, %v4543, %v4545
        %v4547 = vshll.u32 %v4507, 8
        %v4548 = vmul.u32.u64.compose %v4547, %v4546
        %v4549 = vextract.low.u32 %v4548
        %v4550 = vextract.high.u32 %v4548
        %v4551 = vmul.u32.u64.compose %v4547, %v4542
        %v4552 = vextract.low.u32 %v4551
        %v4553 = vextract.high.u32 %v4551
        %v4554 = vmul.u32 %v4547, %v4538
        %v4555 = vadd.s32 %v4550, %v4552
        %vm4556 = vc.u32 %v4550, %v4552
        %v4557 = vadd.s32 %v4553, 1
        %v4558 = vsel %vm4556, %v4557, %v4553
        %v4559 = vadd.s32 %v4554, %v4558
        %v4560 = vadd.s32 %v4559, 536870912
        %v4561 = vshrl.u32 %v4560, 30
        %v4562 = vshll.u32 %v4561, 30
        %v4563 = vsub.s32 %v4559, %v4562
        %vm4564 = vcmp.lt.s32.totalorder %v4563, 0
        %v4565 = vsub.s32 0, %v4563
        %v4566 = vsel %vm4564, %v4565, %v4563
        %v4567 = vclz %v4566
        %v4568 = vsub.s32 %v4567, 2
        %vm4569 = vcmp.gt.s32.totalorder 0, %v4568
        %v4570 = vsel %vm4569, 0, %v4568
        %v4571 = vsub.s32 32, %v4570
        %v4572 = vshll.u32 %v4563, %v4570
        %v4573 = vshrl.u32 %v4555, %v4571
        %v4574 = vor.u32 %v4572, %v4573
        %v4575 = vsub.s32 4294967266, %v4570
        %v4576 = vadd.s32 %v4575, 127
        %v4577 = vshll.u32 %v4576, 23
        %v4578 = vor.u32 4788187, %v4577
        %v4579 = vand.u32 2147483647, %v4578
        %v4581 = vcvt.s32.f32 %v4574
        %v4582 = vmul.f32 %v4581, %v4579
        %v4583 = vxor.u32 %v4582, 2147483648
        %v4584 = vsel %vm4501, %v4583, %v4582
        %v4585 = vsub.s32 4, %v4561
        %v4586 = vsel %vm4501, %v4585, %v4561
        %v4587 = vsel %vm4500, %v1139, %v4584
        %v4588 = vsel %vm4500, 0, %v4586
        %v4589 = vcosq.f32.pop %v4587
        %v4590 = vsinq.f32.pop %v4587
        %vm4591 = vweird.f32 %v1139
        %v4592 = vand.u32 %v4588, 3
        %vm4593 = vcmp.lt.s32.totalorder %v4592, 2
        %vm4594 = vcmp.eq.s32.totalorder %v4592, 0
        %v4595 = vxor.u32 %v4590, 2147483648
        %v4596 = vsel %vm4594, %v4589, %v4595
        %vm4597 = vcmp.eq.s32.totalorder %v4592, 2
        %v4598 = vxor.u32 %v4589, 2147483648
        %v4599 = vsel %vm4597, %v4598, %v4590
        %v4600 = vsel %vm4593, %v4596, %v4599
        %v4601 = vsel %vm4591, nan, %v4600
        %v4602 = vand.u32 2147483647, %v1140
        %vm4603 = vcmp.le.f32.partialorder %v4602, 0.7853982
        %vm4604 = vcmp.lt.s32.totalorder %v1140, 0
        %v4605 = vand.u32 %v1140, 2139095040
        %v4606 = vshrl.u32 %v4605, 23
        %v4607 = vsub.s32 %v4606, 127
        %v4608 = vand.u32 2147483647, %v1140
        %v4609 = vand.u32 %v4608, 8388607
        %v4610 = vor.u32 %v4609, 8388608
        %v4611 = vsub.s32 0, %v4610
        %v4612 = vadd.s32 %v4607, 1
        %vm4613 = vcmp.gt.s32.totalorder %v4612, 0
        %v4614 = vsel %vm4613, %v4612, 0
        %v4615 = vshrl.u32 %v4614, 5
        %v4616 = vand.u32 %v4614, 31
        %v4617 = vsub.s32 32, %v4616
        %v4618 = vshrl.u32 683565275, %v4617
        %v4619 = vshll.u32 683565275, %v4616
        %v4620 = vshrl.u32 2475754826, %v4617
        %v4621 = vor.u32 %v4619, %v4620
        %v4622 = vshll.u32 2475754826, %v4616
        %v4623 = vshrl.u32 2131351028, %v4617
        %v4624 = vor.u32 %v4622, %v4623
        %v4625 = vshll.u32 2131351028, %v4616
        %v4626 = vshrl.u32 2102212464, %v4617
        %v4627 = vor.u32 %v4625, %v4626
        %v4628 = vshll.u32 2102212464, %v4616
        %v4629 = vshrl.u32 920167782, %v4617
        %v4630 = vor.u32 %v4628, %v4629
        %v4631 = vshll.u32 920167782, %v4616
        %v4632 = vshrl.u32 1326507024, %v4617
        %v4633 = vor.u32 %v4631, %v4632
        %vm4634 = vcmp.lt.s32.totalorder %v4615, 1
        %vm4635 = vcmp.lt.s32.totalorder %v4615, 2
        %vm4636 = vcmp.lt.s32.totalorder %v4615, 3
        %vm4637 = vcmp.lt.s32.totalorder %v4615, 4
        %v4638 = vsel %vm4634, %v4618, %v4621
        %v4639 = vsel %vm4637, %v4627, 2102212464
        %v4640 = vsel %vm4636, %v4624, %v4639
        %v4641 = vsel %vm4635, %v4638, %v4640
        %v4642 = vsel %vm4634, %v4621, %v4624
        %v4643 = vsel %vm4637, %v4630, 920167782
        %v4644 = vsel %vm4636, %v4627, %v4643
        %v4645 = vsel %vm4635, %v4642, %v4644
        %v4646 = vsel %vm4634, %v4624, %v4627
        %v4647 = vsel %vm4637, %v4633, 1326507024
        %v4648 = vsel %vm4636, %v4630, %v4647
        %v4649 = vsel %vm4635, %v4646, %v4648
        %v4650 = vshll.u32 %v4610, 8
        %v4651 = vmul.u32.u64.compose %v4650, %v4649
        %v4652 = vextract.low.u32 %v4651
        %v4653 = vextract.high.u32 %v4651
        %v4654 = vmul.u32.u64.compose %v4650, %v4645
        %v4655 = vextract.low.u32 %v4654
        %v4656 = vextract.high.u32 %v4654
        %v4657 = vmul.u32 %v4650, %v4641
        %v4658 = vadd.s32 %v4653, %v4655
        %vm4659 = vc.u32 %v4653, %v4655
        %v4660 = vadd.s32 %v4656, 1
        %v4661 = vsel %vm4659, %v4660, %v4656
        %v4662 = vadd.s32 %v4657, %v4661
        %v4663 = vadd.s32 %v4662, 536870912
        %v4664 = vshrl.u32 %v4663, 30
        %v4665 = vshll.u32 %v4664, 30
        %v4666 = vsub.s32 %v4662, %v4665
        %vm4667 = vcmp.lt.s32.totalorder %v4666, 0
        %v4668 = vsub.s32 0, %v4666
        %v4669 = vsel %vm4667, %v4668, %v4666
        %v4670 = vclz %v4669
        %v4671 = vsub.s32 %v4670, 2
        %vm4672 = vcmp.gt.s32.totalorder 0, %v4671
        %v4673 = vsel %vm4672, 0, %v4671
        %v4674 = vsub.s32 32, %v4673
        %v4675 = vshll.u32 %v4666, %v4673
        %v4676 = vshrl.u32 %v4658, %v4674
        %v4677 = vor.u32 %v4675, %v4676
        %v4678 = vsub.s32 4294967266, %v4673
        %v4679 = vadd.s32 %v4678, 127
        %v4680 = vshll.u32 %v4679, 23
        %v4681 = vor.u32 4788187, %v4680
        %v4682 = vand.u32 2147483647, %v4681
        %v4684 = vcvt.s32.f32 %v4677
        %v4685 = vmul.f32 %v4684, %v4682
        %v4686 = vxor.u32 %v4685, 2147483648
        %v4687 = vsel %vm4604, %v4686, %v4685
        %v4688 = vsub.s32 4, %v4664
        %v4689 = vsel %vm4604, %v4688, %v4664
        %v4690 = vsel %vm4603, %v1140, %v4687
        %v4691 = vsel %vm4603, 0, %v4689
        %v4692 = vcosq.f32.pop %v4690
        %v4693 = vsinq.f32.pop %v4690
        %vm4694 = vweird.f32 %v1140
        %v4695 = vand.u32 %v4691, 3
        %vm4696 = vcmp.lt.s32.totalorder %v4695, 2
        %vm4697 = vcmp.eq.s32.totalorder %v4695, 0
        %v4698 = vxor.u32 %v4693, 2147483648
        %v4699 = vsel %vm4697, %v4692, %v4698
        %vm4700 = vcmp.eq.s32.totalorder %v4695, 2
        %v4701 = vxor.u32 %v4692, 2147483648
        %v4702 = vsel %vm4700, %v4701, %v4693
        %v4703 = vsel %vm4696, %v4699, %v4702
        %v4704 = vsel %vm4694, nan, %v4703
        %v4705 = vand.u32 2147483647, %v1141
        %vm4706 = vcmp.le.f32.partialorder %v4705, 0.7853982
        %vm4707 = vcmp.lt.s32.totalorder %v1141, 0
        %v4708 = vand.u32 %v1141, 2139095040
        %v4709 = vshrl.u32 %v4708, 23
        %v4710 = vsub.s32 %v4709, 127
        %v4711 = vand.u32 2147483647, %v1141
        %v4712 = vand.u32 %v4711, 8388607
        %v4713 = vor.u32 %v4712, 8388608
        %v4714 = vsub.s32 0, %v4713
        %v4715 = vadd.s32 %v4710, 1
        %vm4716 = vcmp.gt.s32.totalorder %v4715, 0
        %v4717 = vsel %vm4716, %v4715, 0
        %v4718 = vshrl.u32 %v4717, 5
        %v4719 = vand.u32 %v4717, 31
        %v4720 = vsub.s32 32, %v4719
        %v4721 = vshrl.u32 683565275, %v4720
        %v4722 = vshll.u32 683565275, %v4719
        %v4723 = vshrl.u32 2475754826, %v4720
        %v4724 = vor.u32 %v4722, %v4723
        %v4725 = vshll.u32 2475754826, %v4719
        %v4726 = vshrl.u32 2131351028, %v4720
        %v4727 = vor.u32 %v4725, %v4726
        %v4728 = vshll.u32 2131351028, %v4719
        %v4729 = vshrl.u32 2102212464, %v4720
        %v4730 = vor.u32 %v4728, %v4729
        %v4731 = vshll.u32 2102212464, %v4719
        %v4732 = vshrl.u32 920167782, %v4720
        %v4733 = vor.u32 %v4731, %v4732
        %v4734 = vshll.u32 920167782, %v4719
        %v4735 = vshrl.u32 1326507024, %v4720
        %v4736 = vor.u32 %v4734, %v4735
        %vm4737 = vcmp.lt.s32.totalorder %v4718, 1
        %vm4738 = vcmp.lt.s32.totalorder %v4718, 2
        %vm4739 = vcmp.lt.s32.totalorder %v4718, 3
        %vm4740 = vcmp.lt.s32.totalorder %v4718, 4
        %v4741 = vsel %vm4737, %v4721, %v4724
        %v4742 = vsel %vm4740, %v4730, 2102212464
        %v4743 = vsel %vm4739, %v4727, %v4742
        %v4744 = vsel %vm4738, %v4741, %v4743
        %v4745 = vsel %vm4737, %v4724, %v4727
        %v4746 = vsel %vm4740, %v4733, 920167782
        %v4747 = vsel %vm4739, %v4730, %v4746
        %v4748 = vsel %vm4738, %v4745, %v4747
        %v4749 = vsel %vm4737, %v4727, %v4730
        %v4750 = vsel %vm4740, %v4736, 1326507024
        %v4751 = vsel %vm4739, %v4733, %v4750
        %v4752 = vsel %vm4738, %v4749, %v4751
        %v4753 = vshll.u32 %v4713, 8
        %v4754 = vmul.u32.u64.compose %v4753, %v4752
        %v4755 = vextract.low.u32 %v4754
        %v4756 = vextract.high.u32 %v4754
        %v4757 = vmul.u32.u64.compose %v4753, %v4748
        %v4758 = vextract.low.u32 %v4757
        %v4759 = vextract.high.u32 %v4757
        %v4760 = vmul.u32 %v4753, %v4744
        %v4761 = vadd.s32 %v4756, %v4758
        %vm4762 = vc.u32 %v4756, %v4758
        %v4763 = vadd.s32 %v4759, 1
        %v4764 = vsel %vm4762, %v4763, %v4759
        %v4765 = vadd.s32 %v4760, %v4764
        %v4766 = vadd.s32 %v4765, 536870912
        %v4767 = vshrl.u32 %v4766, 30
        %v4768 = vshll.u32 %v4767, 30
        %v4769 = vsub.s32 %v4765, %v4768
        %vm4770 = vcmp.lt.s32.totalorder %v4769, 0
        %v4771 = vsub.s32 0, %v4769
        %v4772 = vsel %vm4770, %v4771, %v4769
        %v4773 = vclz %v4772
        %v4774 = vsub.s32 %v4773, 2
        %vm4775 = vcmp.gt.s32.totalorder 0, %v4774
        %v4776 = vsel %vm4775, 0, %v4774
        %v4777 = vsub.s32 32, %v4776
        %v4778 = vshll.u32 %v4769, %v4776
        %v4779 = vshrl.u32 %v4761, %v4777
        %v4780 = vor.u32 %v4778, %v4779
        %v4781 = vsub.s32 4294967266, %v4776
        %v4782 = vadd.s32 %v4781, 127
        %v4783 = vshll.u32 %v4782, 23
        %v4784 = vor.u32 4788187, %v4783
        %v4785 = vand.u32 2147483647, %v4784
        %v4787 = vcvt.s32.f32 %v4780
        %v4788 = vmul.f32 %v4787, %v4785
        %v4789 = vxor.u32 %v4788, 2147483648
        %v4790 = vsel %vm4707, %v4789, %v4788
        %v4791 = vsub.s32 4, %v4767
        %v4792 = vsel %vm4707, %v4791, %v4767
        %v4793 = vsel %vm4706, %v1141, %v4790
        %v4794 = vsel %vm4706, 0, %v4792
        %v4795 = vcosq.f32.pop %v4793
        %v4796 = vsinq.f32.pop %v4793
        %vm4797 = vweird.f32 %v1141
        %v4798 = vand.u32 %v4794, 3
        %vm4799 = vcmp.lt.s32.totalorder %v4798, 2
        %vm4800 = vcmp.eq.s32.totalorder %v4798, 0
        %v4801 = vxor.u32 %v4796, 2147483648
        %v4802 = vsel %vm4800, %v4795, %v4801
        %vm4803 = vcmp.eq.s32.totalorder %v4798, 2
        %v4804 = vxor.u32 %v4795, 2147483648
        %v4805 = vsel %vm4803, %v4804, %v4796
        %v4806 = vsel %vm4799, %v4802, %v4805
        %v4807 = vsel %vm4797, nan, %v4806
        %v4808 = vand.u32 2147483647, %v1142
        %vm4809 = vcmp.le.f32.partialorder %v4808, 0.7853982
        %vm4810 = vcmp.lt.s32.totalorder %v1142, 0
        %v4811 = vand.u32 %v1142, 2139095040
        %v4812 = vshrl.u32 %v4811, 23
        %v4813 = vsub.s32 %v4812, 127
        %v4814 = vand.u32 2147483647, %v1142
        %v4815 = vand.u32 %v4814, 8388607
        %v4816 = vor.u32 %v4815, 8388608
        %v4817 = vsub.s32 0, %v4816
        %v4818 = vadd.s32 %v4813, 1
        %vm4819 = vcmp.gt.s32.totalorder %v4818, 0
        %v4820 = vsel %vm4819, %v4818, 0
        %v4821 = vshrl.u32 %v4820, 5
        %v4822 = vand.u32 %v4820, 31
        %v4823 = vsub.s32 32, %v4822
        %v4824 = vshrl.u32 683565275, %v4823
        %v4825 = vshll.u32 683565275, %v4822
        %v4826 = vshrl.u32 2475754826, %v4823
        %v4827 = vor.u32 %v4825, %v4826
        %v4828 = vshll.u32 2475754826, %v4822
        %v4829 = vshrl.u32 2131351028, %v4823
        %v4830 = vor.u32 %v4828, %v4829
        %v4831 = vshll.u32 2131351028, %v4822
        %v4832 = vshrl.u32 2102212464, %v4823
        %v4833 = vor.u32 %v4831, %v4832
        %v4834 = vshll.u32 2102212464, %v4822
        %v4835 = vshrl.u32 920167782, %v4823
        %v4836 = vor.u32 %v4834, %v4835
        %v4837 = vshll.u32 920167782, %v4822
        %v4838 = vshrl.u32 1326507024, %v4823
        %v4839 = vor.u32 %v4837, %v4838
        %vm4840 = vcmp.lt.s32.totalorder %v4821, 1
        %vm4841 = vcmp.lt.s32.totalorder %v4821, 2
        %vm4842 = vcmp.lt.s32.totalorder %v4821, 3
        %vm4843 = vcmp.lt.s32.totalorder %v4821, 4
        %v4844 = vsel %vm4840, %v4824, %v4827
        %v4845 = vsel %vm4843, %v4833, 2102212464
        %v4846 = vsel %vm4842, %v4830, %v4845
        %v4847 = vsel %vm4841, %v4844, %v4846
        %v4848 = vsel %vm4840, %v4827, %v4830
        %v4849 = vsel %vm4843, %v4836, 920167782
        %v4850 = vsel %vm4842, %v4833, %v4849
        %v4851 = vsel %vm4841, %v4848, %v4850
        %v4852 = vsel %vm4840, %v4830, %v4833
        %v4853 = vsel %vm4843, %v4839, 1326507024
        %v4854 = vsel %vm4842, %v4836, %v4853
        %v4855 = vsel %vm4841, %v4852, %v4854
        %v4856 = vshll.u32 %v4816, 8
        %v4857 = vmul.u32.u64.compose %v4856, %v4855
        %v4858 = vextract.low.u32 %v4857
        %v4859 = vextract.high.u32 %v4857
        %v4860 = vmul.u32.u64.compose %v4856, %v4851
        %v4861 = vextract.low.u32 %v4860
        %v4862 = vextract.high.u32 %v4860
        %v4863 = vmul.u32 %v4856, %v4847
        %v4864 = vadd.s32 %v4859, %v4861
        %vm4865 = vc.u32 %v4859, %v4861
        %v4866 = vadd.s32 %v4862, 1
        %v4867 = vsel %vm4865, %v4866, %v4862
        %v4868 = vadd.s32 %v4863, %v4867
        %v4869 = vadd.s32 %v4868, 536870912
        %v4870 = vshrl.u32 %v4869, 30
        %v4871 = vshll.u32 %v4870, 30
        %v4872 = vsub.s32 %v4868, %v4871
        %vm4873 = vcmp.lt.s32.totalorder %v4872, 0
        %v4874 = vsub.s32 0, %v4872
        %v4875 = vsel %vm4873, %v4874, %v4872
        %v4876 = vclz %v4875
        %v4877 = vsub.s32 %v4876, 2
        %vm4878 = vcmp.gt.s32.totalorder 0, %v4877
        %v4879 = vsel %vm4878, 0, %v4877
        %v4880 = vsub.s32 32, %v4879
        %v4881 = vshll.u32 %v4872, %v4879
        %v4882 = vshrl.u32 %v4864, %v4880
        %v4883 = vor.u32 %v4881, %v4882
        %v4884 = vsub.s32 4294967266, %v4879
        %v4885 = vadd.s32 %v4884, 127
        %v4886 = vshll.u32 %v4885, 23
        %v4887 = vor.u32 4788187, %v4886
        %v4888 = vand.u32 2147483647, %v4887
        %v4890 = vcvt.s32.f32 %v4883
        %v4891 = vmul.f32 %v4890, %v4888
        %v4892 = vxor.u32 %v4891, 2147483648
        %v4893 = vsel %vm4810, %v4892, %v4891
        %v4894 = vsub.s32 4, %v4870
        %v4895 = vsel %vm4810, %v4894, %v4870
        %v4896 = vsel %vm4809, %v1142, %v4893
        %v4897 = vsel %vm4809, 0, %v4895
        %v4898 = vcosq.f32.pop %v4896
        %v4899 = vsinq.f32.pop %v4896
        %vm4900 = vweird.f32 %v1142
        %v4901 = vand.u32 %v4897, 3
        %vm4902 = vcmp.lt.s32.totalorder %v4901, 2
        %vm4903 = vcmp.eq.s32.totalorder %v4901, 0
        %v4904 = vxor.u32 %v4899, 2147483648
        %v4905 = vsel %vm4903, %v4898, %v4904
        %vm4906 = vcmp.eq.s32.totalorder %v4901, 2
        %v4907 = vxor.u32 %v4898, 2147483648
        %v4908 = vsel %vm4906, %v4907, %v4899
        %v4909 = vsel %vm4902, %v4905, %v4908
        %v4910 = vsel %vm4900, nan, %v4909
        %v4911 = vand.u32 2147483647, %v1143
        %vm4912 = vcmp.le.f32.partialorder %v4911, 0.7853982
        %vm4913 = vcmp.lt.s32.totalorder %v1143, 0
        %v4914 = vand.u32 %v1143, 2139095040
        %v4915 = vshrl.u32 %v4914, 23
        %v4916 = vsub.s32 %v4915, 127
        %v4917 = vand.u32 2147483647, %v1143
        %v4918 = vand.u32 %v4917, 8388607
        %v4919 = vor.u32 %v4918, 8388608
        %v4920 = vsub.s32 0, %v4919
        %v4921 = vadd.s32 %v4916, 1
        %vm4922 = vcmp.gt.s32.totalorder %v4921, 0
        %v4923 = vsel %vm4922, %v4921, 0
        %v4924 = vshrl.u32 %v4923, 5
        %v4925 = vand.u32 %v4923, 31
        %v4926 = vsub.s32 32, %v4925
        %v4927 = vshrl.u32 683565275, %v4926
        %v4928 = vshll.u32 683565275, %v4925
        %v4929 = vshrl.u32 2475754826, %v4926
        %v4930 = vor.u32 %v4928, %v4929
        %v4931 = vshll.u32 2475754826, %v4925
        %v4932 = vshrl.u32 2131351028, %v4926
        %v4933 = vor.u32 %v4931, %v4932
        %v4934 = vshll.u32 2131351028, %v4925
        %v4935 = vshrl.u32 2102212464, %v4926
        %v4936 = vor.u32 %v4934, %v4935
        %v4937 = vshll.u32 2102212464, %v4925
        %v4938 = vshrl.u32 920167782, %v4926
        %v4939 = vor.u32 %v4937, %v4938
        %v4940 = vshll.u32 920167782, %v4925
        %v4941 = vshrl.u32 1326507024, %v4926
        %v4942 = vor.u32 %v4940, %v4941
        %vm4943 = vcmp.lt.s32.totalorder %v4924, 1
        %vm4944 = vcmp.lt.s32.totalorder %v4924, 2
        %vm4945 = vcmp.lt.s32.totalorder %v4924, 3
        %vm4946 = vcmp.lt.s32.totalorder %v4924, 4
        %v4947 = vsel %vm4943, %v4927, %v4930
        %v4948 = vsel %vm4946, %v4936, 2102212464
        %v4949 = vsel %vm4945, %v4933, %v4948
        %v4950 = vsel %vm4944, %v4947, %v4949
        %v4951 = vsel %vm4943, %v4930, %v4933
        %v4952 = vsel %vm4946, %v4939, 920167782
        %v4953 = vsel %vm4945, %v4936, %v4952
        %v4954 = vsel %vm4944, %v4951, %v4953
        %v4955 = vsel %vm4943, %v4933, %v4936
        %v4956 = vsel %vm4946, %v4942, 1326507024
        %v4957 = vsel %vm4945, %v4939, %v4956
        %v4958 = vsel %vm4944, %v4955, %v4957
        %v4959 = vshll.u32 %v4919, 8
        %v4960 = vmul.u32.u64.compose %v4959, %v4958
        %v4961 = vextract.low.u32 %v4960
        %v4962 = vextract.high.u32 %v4960
        %v4963 = vmul.u32.u64.compose %v4959, %v4954
        %v4964 = vextract.low.u32 %v4963
        %v4965 = vextract.high.u32 %v4963
        %v4966 = vmul.u32 %v4959, %v4950
        %v4967 = vadd.s32 %v4962, %v4964
        %vm4968 = vc.u32 %v4962, %v4964
        %v4969 = vadd.s32 %v4965, 1
        %v4970 = vsel %vm4968, %v4969, %v4965
        %v4971 = vadd.s32 %v4966, %v4970
        %v4972 = vadd.s32 %v4971, 536870912
        %v4973 = vshrl.u32 %v4972, 30
        %v4974 = vshll.u32 %v4973, 30
        %v4975 = vsub.s32 %v4971, %v4974
        %vm4976 = vcmp.lt.s32.totalorder %v4975, 0
        %v4977 = vsub.s32 0, %v4975
        %v4978 = vsel %vm4976, %v4977, %v4975
        %v4979 = vclz %v4978
        %v4980 = vsub.s32 %v4979, 2
        %vm4981 = vcmp.gt.s32.totalorder 0, %v4980
        %v4982 = vsel %vm4981, 0, %v4980
        %v4983 = vsub.s32 32, %v4982
        %v4984 = vshll.u32 %v4975, %v4982
        %v4985 = vshrl.u32 %v4967, %v4983
        %v4986 = vor.u32 %v4984, %v4985
        %v4987 = vsub.s32 4294967266, %v4982
        %v4988 = vadd.s32 %v4987, 127
        %v4989 = vshll.u32 %v4988, 23
        %v4990 = vor.u32 4788187, %v4989
        %v4991 = vand.u32 2147483647, %v4990
        %v4993 = vcvt.s32.f32 %v4986
        %v4994 = vmul.f32 %v4993, %v4991
        %v4995 = vxor.u32 %v4994, 2147483648
        %v4996 = vsel %vm4913, %v4995, %v4994
        %v4997 = vsub.s32 4, %v4973
        %v4998 = vsel %vm4913, %v4997, %v4973
        %v4999 = vsel %vm4912, %v1143, %v4996
        %v5000 = vsel %vm4912, 0, %v4998
        %v5001 = vcosq.f32.pop %v4999
        %v5002 = vsinq.f32.pop %v4999
        %vm5003 = vweird.f32 %v1143
        %v5004 = vand.u32 %v5000, 3
        %vm5005 = vcmp.lt.s32.totalorder %v5004, 2
        %vm5006 = vcmp.eq.s32.totalorder %v5004, 0
        %v5007 = vxor.u32 %v5002, 2147483648
        %v5008 = vsel %vm5006, %v5001, %v5007
        %vm5009 = vcmp.eq.s32.totalorder %v5004, 2
        %v5010 = vxor.u32 %v5001, 2147483648
        %v5011 = vsel %vm5009, %v5010, %v5002
        %v5012 = vsel %vm5005, %v5008, %v5011
        %v5013 = vsel %vm5003, nan, %v5012
        %v5014 = vand.u32 2147483647, %v1144
        %vm5015 = vcmp.le.f32.partialorder %v5014, 0.7853982
        %vm5016 = vcmp.lt.s32.totalorder %v1144, 0
        %v5017 = vand.u32 %v1144, 2139095040
        %v5018 = vshrl.u32 %v5017, 23
        %v5019 = vsub.s32 %v5018, 127
        %v5020 = vand.u32 2147483647, %v1144
        %v5021 = vand.u32 %v5020, 8388607
        %v5022 = vor.u32 %v5021, 8388608
        %v5023 = vsub.s32 0, %v5022
        %v5024 = vadd.s32 %v5019, 1
        %vm5025 = vcmp.gt.s32.totalorder %v5024, 0
        %v5026 = vsel %vm5025, %v5024, 0
        %v5027 = vshrl.u32 %v5026, 5
        %v5028 = vand.u32 %v5026, 31
        %v5029 = vsub.s32 32, %v5028
        %v5030 = vshrl.u32 683565275, %v5029
        %v5031 = vshll.u32 683565275, %v5028
        %v5032 = vshrl.u32 2475754826, %v5029
        %v5033 = vor.u32 %v5031, %v5032
        %v5034 = vshll.u32 2475754826, %v5028
        %v5035 = vshrl.u32 2131351028, %v5029
        %v5036 = vor.u32 %v5034, %v5035
        %v5037 = vshll.u32 2131351028, %v5028
        %v5038 = vshrl.u32 2102212464, %v5029
        %v5039 = vor.u32 %v5037, %v5038
        %v5040 = vshll.u32 2102212464, %v5028
        %v5041 = vshrl.u32 920167782, %v5029
        %v5042 = vor.u32 %v5040, %v5041
        %v5043 = vshll.u32 920167782, %v5028
        %v5044 = vshrl.u32 1326507024, %v5029
        %v5045 = vor.u32 %v5043, %v5044
        %vm5046 = vcmp.lt.s32.totalorder %v5027, 1
        %vm5047 = vcmp.lt.s32.totalorder %v5027, 2
        %vm5048 = vcmp.lt.s32.totalorder %v5027, 3
        %vm5049 = vcmp.lt.s32.totalorder %v5027, 4
        %v5050 = vsel %vm5046, %v5030, %v5033
        %v5051 = vsel %vm5049, %v5039, 2102212464
        %v5052 = vsel %vm5048, %v5036, %v5051
        %v5053 = vsel %vm5047, %v5050, %v5052
        %v5054 = vsel %vm5046, %v5033, %v5036
        %v5055 = vsel %vm5049, %v5042, 920167782
        %v5056 = vsel %vm5048, %v5039, %v5055
        %v5057 = vsel %vm5047, %v5054, %v5056
        %v5058 = vsel %vm5046, %v5036, %v5039
        %v5059 = vsel %vm5049, %v5045, 1326507024
        %v5060 = vsel %vm5048, %v5042, %v5059
        %v5061 = vsel %vm5047, %v5058, %v5060
        %v5062 = vshll.u32 %v5022, 8
        %v5063 = vmul.u32.u64.compose %v5062, %v5061
        %v5064 = vextract.low.u32 %v5063
        %v5065 = vextract.high.u32 %v5063
        %v5066 = vmul.u32.u64.compose %v5062, %v5057
        %v5067 = vextract.low.u32 %v5066
        %v5068 = vextract.high.u32 %v5066
        %v5069 = vmul.u32 %v5062, %v5053
        %v5070 = vadd.s32 %v5065, %v5067
        %vm5071 = vc.u32 %v5065, %v5067
        %v5072 = vadd.s32 %v5068, 1
        %v5073 = vsel %vm5071, %v5072, %v5068
        %v5074 = vadd.s32 %v5069, %v5073
        %v5075 = vadd.s32 %v5074, 536870912
        %v5076 = vshrl.u32 %v5075, 30
        %v5077 = vshll.u32 %v5076, 30
        %v5078 = vsub.s32 %v5074, %v5077
        %vm5079 = vcmp.lt.s32.totalorder %v5078, 0
        %v5080 = vsub.s32 0, %v5078
        %v5081 = vsel %vm5079, %v5080, %v5078
        %v5082 = vclz %v5081
        %v5083 = vsub.s32 %v5082, 2
        %vm5084 = vcmp.gt.s32.totalorder 0, %v5083
        %v5085 = vsel %vm5084, 0, %v5083
        %v5086 = vsub.s32 32, %v5085
        %v5087 = vshll.u32 %v5078, %v5085
        %v5088 = vshrl.u32 %v5070, %v5086
        %v5089 = vor.u32 %v5087, %v5088
        %v5090 = vsub.s32 4294967266, %v5085
        %v5091 = vadd.s32 %v5090, 127
        %v5092 = vshll.u32 %v5091, 23
        %v5093 = vor.u32 4788187, %v5092
        %v5094 = vand.u32 2147483647, %v5093
        %v5096 = vcvt.s32.f32 %v5089
        %v5097 = vmul.f32 %v5096, %v5094
        %v5098 = vxor.u32 %v5097, 2147483648
        %v5099 = vsel %vm5016, %v5098, %v5097
        %v5100 = vsub.s32 4, %v5076
        %v5101 = vsel %vm5016, %v5100, %v5076
        %v5102 = vsel %vm5015, %v1144, %v5099
        %v5103 = vsel %vm5015, 0, %v5101
        %v5104 = vcosq.f32.pop %v5102
        %v5105 = vsinq.f32.pop %v5102
        %vm5106 = vweird.f32 %v1144
        %v5107 = vand.u32 %v5103, 3
        %vm5108 = vcmp.lt.s32.totalorder %v5107, 2
        %vm5109 = vcmp.eq.s32.totalorder %v5107, 0
        %v5110 = vxor.u32 %v5105, 2147483648
        %v5111 = vsel %vm5109, %v5104, %v5110
        %vm5112 = vcmp.eq.s32.totalorder %v5107, 2
        %v5113 = vxor.u32 %v5104, 2147483648
        %v5114 = vsel %vm5112, %v5113, %v5105
        %v5115 = vsel %vm5108, %v5111, %v5114
        %v5116 = vsel %vm5106, nan, %v5115
        %v5117 = vand.u32 2147483647, %v1145
        %vm5118 = vcmp.le.f32.partialorder %v5117, 0.7853982
        %vm5119 = vcmp.lt.s32.totalorder %v1145, 0
        %v5120 = vand.u32 %v1145, 2139095040
        %v5121 = vshrl.u32 %v5120, 23
        %v5122 = vsub.s32 %v5121, 127
        %v5123 = vand.u32 2147483647, %v1145
        %v5124 = vand.u32 %v5123, 8388607
        %v5125 = vor.u32 %v5124, 8388608
        %v5126 = vsub.s32 0, %v5125
        %v5127 = vadd.s32 %v5122, 1
        %vm5128 = vcmp.gt.s32.totalorder %v5127, 0
        %v5129 = vsel %vm5128, %v5127, 0
        %v5130 = vshrl.u32 %v5129, 5
        %v5131 = vand.u32 %v5129, 31
        %v5132 = vsub.s32 32, %v5131
        %v5133 = vshrl.u32 683565275, %v5132
        %v5134 = vshll.u32 683565275, %v5131
        %v5135 = vshrl.u32 2475754826, %v5132
        %v5136 = vor.u32 %v5134, %v5135
        %v5137 = vshll.u32 2475754826, %v5131
        %v5138 = vshrl.u32 2131351028, %v5132
        %v5139 = vor.u32 %v5137, %v5138
        %v5140 = vshll.u32 2131351028, %v5131
        %v5141 = vshrl.u32 2102212464, %v5132
        %v5142 = vor.u32 %v5140, %v5141
        %v5143 = vshll.u32 2102212464, %v5131
        %v5144 = vshrl.u32 920167782, %v5132
        %v5145 = vor.u32 %v5143, %v5144
        %v5146 = vshll.u32 920167782, %v5131
        %v5147 = vshrl.u32 1326507024, %v5132
        %v5148 = vor.u32 %v5146, %v5147
        %vm5149 = vcmp.lt.s32.totalorder %v5130, 1
        %vm5150 = vcmp.lt.s32.totalorder %v5130, 2
        %vm5151 = vcmp.lt.s32.totalorder %v5130, 3
        %vm5152 = vcmp.lt.s32.totalorder %v5130, 4
        %v5153 = vsel %vm5149, %v5133, %v5136
        %v5154 = vsel %vm5152, %v5142, 2102212464
        %v5155 = vsel %vm5151, %v5139, %v5154
        %v5156 = vsel %vm5150, %v5153, %v5155
        %v5157 = vsel %vm5149, %v5136, %v5139
        %v5158 = vsel %vm5152, %v5145, 920167782
        %v5159 = vsel %vm5151, %v5142, %v5158
        %v5160 = vsel %vm5150, %v5157, %v5159
        %v5161 = vsel %vm5149, %v5139, %v5142
        %v5162 = vsel %vm5152, %v5148, 1326507024
        %v5163 = vsel %vm5151, %v5145, %v5162
        %v5164 = vsel %vm5150, %v5161, %v5163
        %v5165 = vshll.u32 %v5125, 8
        %v5166 = vmul.u32.u64.compose %v5165, %v5164
        %v5167 = vextract.low.u32 %v5166
        %v5168 = vextract.high.u32 %v5166
        %v5169 = vmul.u32.u64.compose %v5165, %v5160
        %v5170 = vextract.low.u32 %v5169
        %v5171 = vextract.high.u32 %v5169
        %v5172 = vmul.u32 %v5165, %v5156
        %v5173 = vadd.s32 %v5168, %v5170
        %vm5174 = vc.u32 %v5168, %v5170
        %v5175 = vadd.s32 %v5171, 1
        %v5176 = vsel %vm5174, %v5175, %v5171
        %v5177 = vadd.s32 %v5172, %v5176
        %v5178 = vadd.s32 %v5177, 536870912
        %v5179 = vshrl.u32 %v5178, 30
        %v5180 = vshll.u32 %v5179, 30
        %v5181 = vsub.s32 %v5177, %v5180
        %vm5182 = vcmp.lt.s32.totalorder %v5181, 0
        %v5183 = vsub.s32 0, %v5181
        %v5184 = vsel %vm5182, %v5183, %v5181
        %v5185 = vclz %v5184
        %v5186 = vsub.s32 %v5185, 2
        %vm5187 = vcmp.gt.s32.totalorder 0, %v5186
        %v5188 = vsel %vm5187, 0, %v5186
        %v5189 = vsub.s32 32, %v5188
        %v5190 = vshll.u32 %v5181, %v5188
        %v5191 = vshrl.u32 %v5173, %v5189
        %v5192 = vor.u32 %v5190, %v5191
        %v5193 = vsub.s32 4294967266, %v5188
        %v5194 = vadd.s32 %v5193, 127
        %v5195 = vshll.u32 %v5194, 23
        %v5196 = vor.u32 4788187, %v5195
        %v5197 = vand.u32 2147483647, %v5196
        %v5199 = vcvt.s32.f32 %v5192
        %v5200 = vmul.f32 %v5199, %v5197
        %v5201 = vxor.u32 %v5200, 2147483648
        %v5202 = vsel %vm5119, %v5201, %v5200
        %v5203 = vsub.s32 4, %v5179
        %v5204 = vsel %vm5119, %v5203, %v5179
        %v5205 = vsel %vm5118, %v1145, %v5202
        %v5206 = vsel %vm5118, 0, %v5204
        %v5207 = vcosq.f32.pop %v5205
        %v5208 = vsinq.f32.pop %v5205
        %vm5209 = vweird.f32 %v1145
        %v5210 = vand.u32 %v5206, 3
        %vm5211 = vcmp.lt.s32.totalorder %v5210, 2
        %vm5212 = vcmp.eq.s32.totalorder %v5210, 0
        %v5213 = vxor.u32 %v5208, 2147483648
        %v5214 = vsel %vm5212, %v5207, %v5213
        %vm5215 = vcmp.eq.s32.totalorder %v5210, 2
        %v5216 = vxor.u32 %v5207, 2147483648
        %v5217 = vsel %vm5215, %v5216, %v5208
        %v5218 = vsel %vm5211, %v5214, %v5217
        %v5219 = vsel %vm5209, nan, %v5218
        %v5220 = vand.u32 2147483647, %v1146
        %vm5221 = vcmp.le.f32.partialorder %v5220, 0.7853982
        %vm5222 = vcmp.lt.s32.totalorder %v1146, 0
        %v5223 = vand.u32 %v1146, 2139095040
        %v5224 = vshrl.u32 %v5223, 23
        %v5225 = vsub.s32 %v5224, 127
        %v5226 = vand.u32 2147483647, %v1146
        %v5227 = vand.u32 %v5226, 8388607
        %v5228 = vor.u32 %v5227, 8388608
        %v5229 = vsub.s32 0, %v5228
        %v5230 = vadd.s32 %v5225, 1
        %vm5231 = vcmp.gt.s32.totalorder %v5230, 0
        %v5232 = vsel %vm5231, %v5230, 0
        %v5233 = vshrl.u32 %v5232, 5
        %v5234 = vand.u32 %v5232, 31
        %v5235 = vsub.s32 32, %v5234
        %v5236 = vshrl.u32 683565275, %v5235
        %v5237 = vshll.u32 683565275, %v5234
        %v5238 = vshrl.u32 2475754826, %v5235
        %v5239 = vor.u32 %v5237, %v5238
        %v5240 = vshll.u32 2475754826, %v5234
        %v5241 = vshrl.u32 2131351028, %v5235
        %v5242 = vor.u32 %v5240, %v5241
        %v5243 = vshll.u32 2131351028, %v5234
        %v5244 = vshrl.u32 2102212464, %v5235
        %v5245 = vor.u32 %v5243, %v5244
        %v5246 = vshll.u32 2102212464, %v5234
        %v5247 = vshrl.u32 920167782, %v5235
        %v5248 = vor.u32 %v5246, %v5247
        %v5249 = vshll.u32 920167782, %v5234
        %v5250 = vshrl.u32 1326507024, %v5235
        %v5251 = vor.u32 %v5249, %v5250
        %vm5252 = vcmp.lt.s32.totalorder %v5233, 1
        %vm5253 = vcmp.lt.s32.totalorder %v5233, 2
        %vm5254 = vcmp.lt.s32.totalorder %v5233, 3
        %vm5255 = vcmp.lt.s32.totalorder %v5233, 4
        %v5256 = vsel %vm5252, %v5236, %v5239
        %v5257 = vsel %vm5255, %v5245, 2102212464
        %v5258 = vsel %vm5254, %v5242, %v5257
        %v5259 = vsel %vm5253, %v5256, %v5258
        %v5260 = vsel %vm5252, %v5239, %v5242
        %v5261 = vsel %vm5255, %v5248, 920167782
        %v5262 = vsel %vm5254, %v5245, %v5261
        %v5263 = vsel %vm5253, %v5260, %v5262
        %v5264 = vsel %vm5252, %v5242, %v5245
        %v5265 = vsel %vm5255, %v5251, 1326507024
        %v5266 = vsel %vm5254, %v5248, %v5265
        %v5267 = vsel %vm5253, %v5264, %v5266
        %v5268 = vshll.u32 %v5228, 8
        %v5269 = vmul.u32.u64.compose %v5268, %v5267
        %v5270 = vextract.low.u32 %v5269
        %v5271 = vextract.high.u32 %v5269
        %v5272 = vmul.u32.u64.compose %v5268, %v5263
        %v5273 = vextract.low.u32 %v5272
        %v5274 = vextract.high.u32 %v5272
        %v5275 = vmul.u32 %v5268, %v5259
        %v5276 = vadd.s32 %v5271, %v5273
        %vm5277 = vc.u32 %v5271, %v5273
        %v5278 = vadd.s32 %v5274, 1
        %v5279 = vsel %vm5277, %v5278, %v5274
        %v5280 = vadd.s32 %v5275, %v5279
        %v5281 = vadd.s32 %v5280, 536870912
        %v5282 = vshrl.u32 %v5281, 30
        %v5283 = vshll.u32 %v5282, 30
        %v5284 = vsub.s32 %v5280, %v5283
        %vm5285 = vcmp.lt.s32.totalorder %v5284, 0
        %v5286 = vsub.s32 0, %v5284
        %v5287 = vsel %vm5285, %v5286, %v5284
        %v5288 = vclz %v5287
        %v5289 = vsub.s32 %v5288, 2
        %vm5290 = vcmp.gt.s32.totalorder 0, %v5289
        %v5291 = vsel %vm5290, 0, %v5289
        %v5292 = vsub.s32 32, %v5291
        %v5293 = vshll.u32 %v5284, %v5291
        %v5294 = vshrl.u32 %v5276, %v5292
        %v5295 = vor.u32 %v5293, %v5294
        %v5296 = vsub.s32 4294967266, %v5291
        %v5297 = vadd.s32 %v5296, 127
        %v5298 = vshll.u32 %v5297, 23
        %v5299 = vor.u32 4788187, %v5298
        %v5300 = vand.u32 2147483647, %v5299
        %v5302 = vcvt.s32.f32 %v5295
        %v5303 = vmul.f32 %v5302, %v5300
        %v5304 = vxor.u32 %v5303, 2147483648
        %v5305 = vsel %vm5222, %v5304, %v5303
        %v5306 = vsub.s32 4, %v5282
        %v5307 = vsel %vm5222, %v5306, %v5282
        %v5308 = vsel %vm5221, %v1146, %v5305
        %v5309 = vsel %vm5221, 0, %v5307
        %v5310 = vcosq.f32.pop %v5308
        %v5311 = vsinq.f32.pop %v5308
        %vm5312 = vweird.f32 %v1146
        %v5313 = vand.u32 %v5309, 3
        %vm5314 = vcmp.lt.s32.totalorder %v5313, 2
        %vm5315 = vcmp.eq.s32.totalorder %v5313, 0
        %v5316 = vxor.u32 %v5311, 2147483648
        %v5317 = vsel %vm5315, %v5310, %v5316
        %vm5318 = vcmp.eq.s32.totalorder %v5313, 2
        %v5319 = vxor.u32 %v5310, 2147483648
        %v5320 = vsel %vm5318, %v5319, %v5311
        %v5321 = vsel %vm5314, %v5317, %v5320
        %v5322 = vsel %vm5312, nan, %v5321
        %v5323 = vand.u32 2147483647, %v1147
        %vm5324 = vcmp.le.f32.partialorder %v5323, 0.7853982
        %vm5325 = vcmp.lt.s32.totalorder %v1147, 0
        %v5326 = vand.u32 %v1147, 2139095040
        %v5327 = vshrl.u32 %v5326, 23
        %v5328 = vsub.s32 %v5327, 127
        %v5329 = vand.u32 2147483647, %v1147
        %v5330 = vand.u32 %v5329, 8388607
        %v5331 = vor.u32 %v5330, 8388608
        %v5332 = vsub.s32 0, %v5331
        %v5333 = vadd.s32 %v5328, 1
        %vm5334 = vcmp.gt.s32.totalorder %v5333, 0
        %v5335 = vsel %vm5334, %v5333, 0
        %v5336 = vshrl.u32 %v5335, 5
        %v5337 = vand.u32 %v5335, 31
        %v5338 = vsub.s32 32, %v5337
        %v5339 = vshrl.u32 683565275, %v5338
        %v5340 = vshll.u32 683565275, %v5337
        %v5341 = vshrl.u32 2475754826, %v5338
        %v5342 = vor.u32 %v5340, %v5341
        %v5343 = vshll.u32 2475754826, %v5337
        %v5344 = vshrl.u32 2131351028, %v5338
        %v5345 = vor.u32 %v5343, %v5344
        %v5346 = vshll.u32 2131351028, %v5337
        %v5347 = vshrl.u32 2102212464, %v5338
        %v5348 = vor.u32 %v5346, %v5347
        %v5349 = vshll.u32 2102212464, %v5337
        %v5350 = vshrl.u32 920167782, %v5338
        %v5351 = vor.u32 %v5349, %v5350
        %v5352 = vshll.u32 920167782, %v5337
        %v5353 = vshrl.u32 1326507024, %v5338
        %v5354 = vor.u32 %v5352, %v5353
        %vm5355 = vcmp.lt.s32.totalorder %v5336, 1
        %vm5356 = vcmp.lt.s32.totalorder %v5336, 2
        %vm5357 = vcmp.lt.s32.totalorder %v5336, 3
        %vm5358 = vcmp.lt.s32.totalorder %v5336, 4
        %v5359 = vsel %vm5355, %v5339, %v5342
        %v5360 = vsel %vm5358, %v5348, 2102212464
        %v5361 = vsel %vm5357, %v5345, %v5360
        %v5362 = vsel %vm5356, %v5359, %v5361
        %v5363 = vsel %vm5355, %v5342, %v5345
        %v5364 = vsel %vm5358, %v5351, 920167782
        %v5365 = vsel %vm5357, %v5348, %v5364
        %v5366 = vsel %vm5356, %v5363, %v5365
        %v5367 = vsel %vm5355, %v5345, %v5348
        %v5368 = vsel %vm5358, %v5354, 1326507024
        %v5369 = vsel %vm5357, %v5351, %v5368
        %v5370 = vsel %vm5356, %v5367, %v5369
        %v5371 = vshll.u32 %v5331, 8
        %v5372 = vmul.u32.u64.compose %v5371, %v5370
        %v5373 = vextract.low.u32 %v5372
        %v5374 = vextract.high.u32 %v5372
        %v5375 = vmul.u32.u64.compose %v5371, %v5366
        %v5376 = vextract.low.u32 %v5375
        %v5377 = vextract.high.u32 %v5375
        %v5378 = vmul.u32 %v5371, %v5362
        %v5379 = vadd.s32 %v5374, %v5376
        %vm5380 = vc.u32 %v5374, %v5376
        %v5381 = vadd.s32 %v5377, 1
        %v5382 = vsel %vm5380, %v5381, %v5377
        %v5383 = vadd.s32 %v5378, %v5382
        %v5384 = vadd.s32 %v5383, 536870912
        %v5385 = vshrl.u32 %v5384, 30
        %v5386 = vshll.u32 %v5385, 30
        %v5387 = vsub.s32 %v5383, %v5386
        %vm5388 = vcmp.lt.s32.totalorder %v5387, 0
        %v5389 = vsub.s32 0, %v5387
        %v5390 = vsel %vm5388, %v5389, %v5387
        %v5391 = vclz %v5390
        %v5392 = vsub.s32 %v5391, 2
        %vm5393 = vcmp.gt.s32.totalorder 0, %v5392
        %v5394 = vsel %vm5393, 0, %v5392
        %v5395 = vsub.s32 32, %v5394
        %v5396 = vshll.u32 %v5387, %v5394
        %v5397 = vshrl.u32 %v5379, %v5395
        %v5398 = vor.u32 %v5396, %v5397
        %v5399 = vsub.s32 4294967266, %v5394
        %v5400 = vadd.s32 %v5399, 127
        %v5401 = vshll.u32 %v5400, 23
        %v5402 = vor.u32 4788187, %v5401
        %v5403 = vand.u32 2147483647, %v5402
        %v5405 = vcvt.s32.f32 %v5398
        %v5406 = vmul.f32 %v5405, %v5403
        %v5407 = vxor.u32 %v5406, 2147483648
        %v5408 = vsel %vm5325, %v5407, %v5406
        %v5409 = vsub.s32 4, %v5385
        %v5410 = vsel %vm5325, %v5409, %v5385
        %v5411 = vsel %vm5324, %v1147, %v5408
        %v5412 = vsel %vm5324, 0, %v5410
        %v5413 = vcosq.f32.pop %v5411
        %v5414 = vsinq.f32.pop %v5411
        %vm5415 = vweird.f32 %v1147
        %v5416 = vand.u32 %v5412, 3
        %vm5417 = vcmp.lt.s32.totalorder %v5416, 2
        %vm5418 = vcmp.eq.s32.totalorder %v5416, 0
        %v5419 = vxor.u32 %v5414, 2147483648
        %v5420 = vsel %vm5418, %v5413, %v5419
        %vm5421 = vcmp.eq.s32.totalorder %v5416, 2
        %v5422 = vxor.u32 %v5413, 2147483648
        %v5423 = vsel %vm5421, %v5422, %v5414
        %v5424 = vsel %vm5417, %v5420, %v5423
        %v5425 = vsel %vm5415, nan, %v5424
        %v5426 = vand.u32 2147483647, %v1148
        %vm5427 = vcmp.le.f32.partialorder %v5426, 0.7853982
        %vm5428 = vcmp.lt.s32.totalorder %v1148, 0
        %v5429 = vand.u32 %v1148, 2139095040
        %v5430 = vshrl.u32 %v5429, 23
        %v5431 = vsub.s32 %v5430, 127
        %v5432 = vand.u32 2147483647, %v1148
        %v5433 = vand.u32 %v5432, 8388607
        %v5434 = vor.u32 %v5433, 8388608
        %v5435 = vsub.s32 0, %v5434
        %v5436 = vadd.s32 %v5431, 1
        %vm5437 = vcmp.gt.s32.totalorder %v5436, 0
        %v5438 = vsel %vm5437, %v5436, 0
        %v5439 = vshrl.u32 %v5438, 5
        %v5440 = vand.u32 %v5438, 31
        %v5441 = vsub.s32 32, %v5440
        %v5442 = vshrl.u32 683565275, %v5441
        %v5443 = vshll.u32 683565275, %v5440
        %v5444 = vshrl.u32 2475754826, %v5441
        %v5445 = vor.u32 %v5443, %v5444
        %v5446 = vshll.u32 2475754826, %v5440
        %v5447 = vshrl.u32 2131351028, %v5441
        %v5448 = vor.u32 %v5446, %v5447
        %v5449 = vshll.u32 2131351028, %v5440
        %v5450 = vshrl.u32 2102212464, %v5441
        %v5451 = vor.u32 %v5449, %v5450
        %v5452 = vshll.u32 2102212464, %v5440
        %v5453 = vshrl.u32 920167782, %v5441
        %v5454 = vor.u32 %v5452, %v5453
        %v5455 = vshll.u32 920167782, %v5440
        %v5456 = vshrl.u32 1326507024, %v5441
        %v5457 = vor.u32 %v5455, %v5456
        %vm5458 = vcmp.lt.s32.totalorder %v5439, 1
        %vm5459 = vcmp.lt.s32.totalorder %v5439, 2
        %vm5460 = vcmp.lt.s32.totalorder %v5439, 3
        %vm5461 = vcmp.lt.s32.totalorder %v5439, 4
        %v5462 = vsel %vm5458, %v5442, %v5445
        %v5463 = vsel %vm5461, %v5451, 2102212464
        %v5464 = vsel %vm5460, %v5448, %v5463
        %v5465 = vsel %vm5459, %v5462, %v5464
        %v5466 = vsel %vm5458, %v5445, %v5448
        %v5467 = vsel %vm5461, %v5454, 920167782
        %v5468 = vsel %vm5460, %v5451, %v5467
        %v5469 = vsel %vm5459, %v5466, %v5468
        %v5470 = vsel %vm5458, %v5448, %v5451
        %v5471 = vsel %vm5461, %v5457, 1326507024
        %v5472 = vsel %vm5460, %v5454, %v5471
        %v5473 = vsel %vm5459, %v5470, %v5472
        %v5474 = vshll.u32 %v5434, 8
        %v5475 = vmul.u32.u64.compose %v5474, %v5473
        %v5476 = vextract.low.u32 %v5475
        %v5477 = vextract.high.u32 %v5475
        %v5478 = vmul.u32.u64.compose %v5474, %v5469
        %v5479 = vextract.low.u32 %v5478
        %v5480 = vextract.high.u32 %v5478
        %v5481 = vmul.u32 %v5474, %v5465
        %v5482 = vadd.s32 %v5477, %v5479
        %vm5483 = vc.u32 %v5477, %v5479
        %v5484 = vadd.s32 %v5480, 1
        %v5485 = vsel %vm5483, %v5484, %v5480
        %v5486 = vadd.s32 %v5481, %v5485
        %v5487 = vadd.s32 %v5486, 536870912
        %v5488 = vshrl.u32 %v5487, 30
        %v5489 = vshll.u32 %v5488, 30
        %v5490 = vsub.s32 %v5486, %v5489
        %vm5491 = vcmp.lt.s32.totalorder %v5490, 0
        %v5492 = vsub.s32 0, %v5490
        %v5493 = vsel %vm5491, %v5492, %v5490
        %v5494 = vclz %v5493
        %v5495 = vsub.s32 %v5494, 2
        %vm5496 = vcmp.gt.s32.totalorder 0, %v5495
        %v5497 = vsel %vm5496, 0, %v5495
        %v5498 = vsub.s32 32, %v5497
        %v5499 = vshll.u32 %v5490, %v5497
        %v5500 = vshrl.u32 %v5482, %v5498
        %v5501 = vor.u32 %v5499, %v5500
        %v5502 = vsub.s32 4294967266, %v5497
        %v5503 = vadd.s32 %v5502, 127
        %v5504 = vshll.u32 %v5503, 23
        %v5505 = vor.u32 4788187, %v5504
        %v5506 = vand.u32 2147483647, %v5505
        %v5508 = vcvt.s32.f32 %v5501
        %v5509 = vmul.f32 %v5508, %v5506
        %v5510 = vxor.u32 %v5509, 2147483648
        %v5511 = vsel %vm5428, %v5510, %v5509
        %v5512 = vsub.s32 4, %v5488
        %v5513 = vsel %vm5428, %v5512, %v5488
        %v5514 = vsel %vm5427, %v1148, %v5511
        %v5515 = vsel %vm5427, 0, %v5513
        %v5516 = vcosq.f32.pop %v5514
        %v5517 = vsinq.f32.pop %v5514
        %vm5518 = vweird.f32 %v1148
        %v5519 = vand.u32 %v5515, 3
        %vm5520 = vcmp.lt.s32.totalorder %v5519, 2
        %vm5521 = vcmp.eq.s32.totalorder %v5519, 0
        %v5522 = vxor.u32 %v5517, 2147483648
        %v5523 = vsel %vm5521, %v5516, %v5522
        %vm5524 = vcmp.eq.s32.totalorder %v5519, 2
        %v5525 = vxor.u32 %v5516, 2147483648
        %v5526 = vsel %vm5524, %v5525, %v5517
        %v5527 = vsel %vm5520, %v5523, %v5526
        %v5528 = vsel %vm5518, nan, %v5527
        %v5529 = vand.u32 2147483647, %v1149
        %vm5530 = vcmp.le.f32.partialorder %v5529, 0.7853982
        %vm5531 = vcmp.lt.s32.totalorder %v1149, 0
        %v5532 = vand.u32 %v1149, 2139095040
        %v5533 = vshrl.u32 %v5532, 23
        %v5534 = vsub.s32 %v5533, 127
        %v5535 = vand.u32 2147483647, %v1149
        %v5536 = vand.u32 %v5535, 8388607
        %v5537 = vor.u32 %v5536, 8388608
        %v5538 = vsub.s32 0, %v5537
        %v5539 = vadd.s32 %v5534, 1
        %vm5540 = vcmp.gt.s32.totalorder %v5539, 0
        %v5541 = vsel %vm5540, %v5539, 0
        %v5542 = vshrl.u32 %v5541, 5
        %v5543 = vand.u32 %v5541, 31
        %v5544 = vsub.s32 32, %v5543
        %v5545 = vshrl.u32 683565275, %v5544
        %v5546 = vshll.u32 683565275, %v5543
        %v5547 = vshrl.u32 2475754826, %v5544
        %v5548 = vor.u32 %v5546, %v5547
        %v5549 = vshll.u32 2475754826, %v5543
        %v5550 = vshrl.u32 2131351028, %v5544
        %v5551 = vor.u32 %v5549, %v5550
        %v5552 = vshll.u32 2131351028, %v5543
        %v5553 = vshrl.u32 2102212464, %v5544
        %v5554 = vor.u32 %v5552, %v5553
        %v5555 = vshll.u32 2102212464, %v5543
        %v5556 = vshrl.u32 920167782, %v5544
        %v5557 = vor.u32 %v5555, %v5556
        %v5558 = vshll.u32 920167782, %v5543
        %v5559 = vshrl.u32 1326507024, %v5544
        %v5560 = vor.u32 %v5558, %v5559
        %vm5561 = vcmp.lt.s32.totalorder %v5542, 1
        %vm5562 = vcmp.lt.s32.totalorder %v5542, 2
        %vm5563 = vcmp.lt.s32.totalorder %v5542, 3
        %vm5564 = vcmp.lt.s32.totalorder %v5542, 4
        %v5565 = vsel %vm5561, %v5545, %v5548
        %v5566 = vsel %vm5564, %v5554, 2102212464
        %v5567 = vsel %vm5563, %v5551, %v5566
        %v5568 = vsel %vm5562, %v5565, %v5567
        %v5569 = vsel %vm5561, %v5548, %v5551
        %v5570 = vsel %vm5564, %v5557, 920167782
        %v5571 = vsel %vm5563, %v5554, %v5570
        %v5572 = vsel %vm5562, %v5569, %v5571
        %v5573 = vsel %vm5561, %v5551, %v5554
        %v5574 = vsel %vm5564, %v5560, 1326507024
        %v5575 = vsel %vm5563, %v5557, %v5574
        %v5576 = vsel %vm5562, %v5573, %v5575
        %v5577 = vshll.u32 %v5537, 8
        %v5578 = vmul.u32.u64.compose %v5577, %v5576
        %v5579 = vextract.low.u32 %v5578
        %v5580 = vextract.high.u32 %v5578
        %v5581 = vmul.u32.u64.compose %v5577, %v5572
        %v5582 = vextract.low.u32 %v5581
        %v5583 = vextract.high.u32 %v5581
        %v5584 = vmul.u32 %v5577, %v5568
        %v5585 = vadd.s32 %v5580, %v5582
        %vm5586 = vc.u32 %v5580, %v5582
        %v5587 = vadd.s32 %v5583, 1
        %v5588 = vsel %vm5586, %v5587, %v5583
        %v5589 = vadd.s32 %v5584, %v5588
        %v5590 = vadd.s32 %v5589, 536870912
        %v5591 = vshrl.u32 %v5590, 30
        %v5592 = vshll.u32 %v5591, 30
        %v5593 = vsub.s32 %v5589, %v5592
        %vm5594 = vcmp.lt.s32.totalorder %v5593, 0
        %v5595 = vsub.s32 0, %v5593
        %v5596 = vsel %vm5594, %v5595, %v5593
        %v5597 = vclz %v5596
        %v5598 = vsub.s32 %v5597, 2
        %vm5599 = vcmp.gt.s32.totalorder 0, %v5598
        %v5600 = vsel %vm5599, 0, %v5598
        %v5601 = vsub.s32 32, %v5600
        %v5602 = vshll.u32 %v5593, %v5600
        %v5603 = vshrl.u32 %v5585, %v5601
        %v5604 = vor.u32 %v5602, %v5603
        %v5605 = vsub.s32 4294967266, %v5600
        %v5606 = vadd.s32 %v5605, 127
        %v5607 = vshll.u32 %v5606, 23
        %v5608 = vor.u32 4788187, %v5607
        %v5609 = vand.u32 2147483647, %v5608
        %v5611 = vcvt.s32.f32 %v5604
        %v5612 = vmul.f32 %v5611, %v5609
        %v5613 = vxor.u32 %v5612, 2147483648
        %v5614 = vsel %vm5531, %v5613, %v5612
        %v5615 = vsub.s32 4, %v5591
        %v5616 = vsel %vm5531, %v5615, %v5591
        %v5617 = vsel %vm5530, %v1149, %v5614
        %v5618 = vsel %vm5530, 0, %v5616
        %v5619 = vcosq.f32.pop %v5617
        %v5620 = vsinq.f32.pop %v5617
        %vm5621 = vweird.f32 %v1149
        %v5622 = vand.u32 %v5618, 3
        %vm5623 = vcmp.lt.s32.totalorder %v5622, 2
        %vm5624 = vcmp.eq.s32.totalorder %v5622, 0
        %v5625 = vxor.u32 %v5620, 2147483648
        %v5626 = vsel %vm5624, %v5619, %v5625
        %vm5627 = vcmp.eq.s32.totalorder %v5622, 2
        %v5628 = vxor.u32 %v5619, 2147483648
        %v5629 = vsel %vm5627, %v5628, %v5620
        %v5630 = vsel %vm5623, %v5626, %v5629
        %v5631 = vsel %vm5621, nan, %v5630
        %v5632 = vand.u32 2147483647, %v1150
        %vm5633 = vcmp.le.f32.partialorder %v5632, 0.7853982
        %vm5634 = vcmp.lt.s32.totalorder %v1150, 0
        %v5635 = vand.u32 %v1150, 2139095040
        %v5636 = vshrl.u32 %v5635, 23
        %v5637 = vsub.s32 %v5636, 127
        %v5638 = vand.u32 2147483647, %v1150
        %v5639 = vand.u32 %v5638, 8388607
        %v5640 = vor.u32 %v5639, 8388608
        %v5641 = vsub.s32 0, %v5640
        %v5642 = vadd.s32 %v5637, 1
        %vm5643 = vcmp.gt.s32.totalorder %v5642, 0
        %v5644 = vsel %vm5643, %v5642, 0
        %v5645 = vshrl.u32 %v5644, 5
        %v5646 = vand.u32 %v5644, 31
        %v5647 = vsub.s32 32, %v5646
        %v5648 = vshrl.u32 683565275, %v5647
        %v5649 = vshll.u32 683565275, %v5646
        %v5650 = vshrl.u32 2475754826, %v5647
        %v5651 = vor.u32 %v5649, %v5650
        %v5652 = vshll.u32 2475754826, %v5646
        %v5653 = vshrl.u32 2131351028, %v5647
        %v5654 = vor.u32 %v5652, %v5653
        %v5655 = vshll.u32 2131351028, %v5646
        %v5656 = vshrl.u32 2102212464, %v5647
        %v5657 = vor.u32 %v5655, %v5656
        %v5658 = vshll.u32 2102212464, %v5646
        %v5659 = vshrl.u32 920167782, %v5647
        %v5660 = vor.u32 %v5658, %v5659
        %v5661 = vshll.u32 920167782, %v5646
        %v5662 = vshrl.u32 1326507024, %v5647
        %v5663 = vor.u32 %v5661, %v5662
        %vm5664 = vcmp.lt.s32.totalorder %v5645, 1
        %vm5665 = vcmp.lt.s32.totalorder %v5645, 2
        %vm5666 = vcmp.lt.s32.totalorder %v5645, 3
        %vm5667 = vcmp.lt.s32.totalorder %v5645, 4
        %v5668 = vsel %vm5664, %v5648, %v5651
        %v5669 = vsel %vm5667, %v5657, 2102212464
        %v5670 = vsel %vm5666, %v5654, %v5669
        %v5671 = vsel %vm5665, %v5668, %v5670
        %v5672 = vsel %vm5664, %v5651, %v5654
        %v5673 = vsel %vm5667, %v5660, 920167782
        %v5674 = vsel %vm5666, %v5657, %v5673
        %v5675 = vsel %vm5665, %v5672, %v5674
        %v5676 = vsel %vm5664, %v5654, %v5657
        %v5677 = vsel %vm5667, %v5663, 1326507024
        %v5678 = vsel %vm5666, %v5660, %v5677
        %v5679 = vsel %vm5665, %v5676, %v5678
        %v5680 = vshll.u32 %v5640, 8
        %v5681 = vmul.u32.u64.compose %v5680, %v5679
        %v5682 = vextract.low.u32 %v5681
        %v5683 = vextract.high.u32 %v5681
        %v5684 = vmul.u32.u64.compose %v5680, %v5675
        %v5685 = vextract.low.u32 %v5684
        %v5686 = vextract.high.u32 %v5684
        %v5687 = vmul.u32 %v5680, %v5671
        %v5688 = vadd.s32 %v5683, %v5685
        %vm5689 = vc.u32 %v5683, %v5685
        %v5690 = vadd.s32 %v5686, 1
        %v5691 = vsel %vm5689, %v5690, %v5686
        %v5692 = vadd.s32 %v5687, %v5691
        %v5693 = vadd.s32 %v5692, 536870912
        %v5694 = vshrl.u32 %v5693, 30
        %v5695 = vshll.u32 %v5694, 30
        %v5696 = vsub.s32 %v5692, %v5695
        %vm5697 = vcmp.lt.s32.totalorder %v5696, 0
        %v5698 = vsub.s32 0, %v5696
        %v5699 = vsel %vm5697, %v5698, %v5696
        %v5700 = vclz %v5699
        %v5701 = vsub.s32 %v5700, 2
        %vm5702 = vcmp.gt.s32.totalorder 0, %v5701
        %v5703 = vsel %vm5702, 0, %v5701
        %v5704 = vsub.s32 32, %v5703
        %v5705 = vshll.u32 %v5696, %v5703
        %v5706 = vshrl.u32 %v5688, %v5704
        %v5707 = vor.u32 %v5705, %v5706
        %v5708 = vsub.s32 4294967266, %v5703
        %v5709 = vadd.s32 %v5708, 127
        %v5710 = vshll.u32 %v5709, 23
        %v5711 = vor.u32 4788187, %v5710
        %v5712 = vand.u32 2147483647, %v5711
        %v5714 = vcvt.s32.f32 %v5707
        %v5715 = vmul.f32 %v5714, %v5712
        %v5716 = vxor.u32 %v5715, 2147483648
        %v5717 = vsel %vm5634, %v5716, %v5715
        %v5718 = vsub.s32 4, %v5694
        %v5719 = vsel %vm5634, %v5718, %v5694
        %v5720 = vsel %vm5633, %v1150, %v5717
        %v5721 = vsel %vm5633, 0, %v5719
        %v5722 = vcosq.f32.pop %v5720
        %v5723 = vsinq.f32.pop %v5720
        %vm5724 = vweird.f32 %v1150
        %v5725 = vand.u32 %v5721, 3
        %vm5726 = vcmp.lt.s32.totalorder %v5725, 2
        %vm5727 = vcmp.eq.s32.totalorder %v5725, 0
        %v5728 = vxor.u32 %v5723, 2147483648
        %v5729 = vsel %vm5727, %v5722, %v5728
        %vm5730 = vcmp.eq.s32.totalorder %v5725, 2
        %v5731 = vxor.u32 %v5722, 2147483648
        %v5732 = vsel %vm5730, %v5731, %v5723
        %v5733 = vsel %vm5726, %v5729, %v5732
        %v5734 = vsel %vm5724, nan, %v5733
        %v5735 = vand.u32 2147483647, %v1151
        %vm5736 = vcmp.le.f32.partialorder %v5735, 0.7853982
        %vm5737 = vcmp.lt.s32.totalorder %v1151, 0
        %v5738 = vand.u32 %v1151, 2139095040
        %v5739 = vshrl.u32 %v5738, 23
        %v5740 = vsub.s32 %v5739, 127
        %v5741 = vand.u32 2147483647, %v1151
        %v5742 = vand.u32 %v5741, 8388607
        %v5743 = vor.u32 %v5742, 8388608
        %v5744 = vsub.s32 0, %v5743
        %v5745 = vadd.s32 %v5740, 1
        %vm5746 = vcmp.gt.s32.totalorder %v5745, 0
        %v5747 = vsel %vm5746, %v5745, 0
        %v5748 = vshrl.u32 %v5747, 5
        %v5749 = vand.u32 %v5747, 31
        %v5750 = vsub.s32 32, %v5749
        %v5751 = vshrl.u32 683565275, %v5750
        %v5752 = vshll.u32 683565275, %v5749
        %v5753 = vshrl.u32 2475754826, %v5750
        %v5754 = vor.u32 %v5752, %v5753
        %v5755 = vshll.u32 2475754826, %v5749
        %v5756 = vshrl.u32 2131351028, %v5750
        %v5757 = vor.u32 %v5755, %v5756
        %v5758 = vshll.u32 2131351028, %v5749
        %v5759 = vshrl.u32 2102212464, %v5750
        %v5760 = vor.u32 %v5758, %v5759
        %v5761 = vshll.u32 2102212464, %v5749
        %v5762 = vshrl.u32 920167782, %v5750
        %v5763 = vor.u32 %v5761, %v5762
        %v5764 = vshll.u32 920167782, %v5749
        %v5765 = vshrl.u32 1326507024, %v5750
        %v5766 = vor.u32 %v5764, %v5765
        %vm5767 = vcmp.lt.s32.totalorder %v5748, 1
        %vm5768 = vcmp.lt.s32.totalorder %v5748, 2
        %vm5769 = vcmp.lt.s32.totalorder %v5748, 3
        %vm5770 = vcmp.lt.s32.totalorder %v5748, 4
        %v5771 = vsel %vm5767, %v5751, %v5754
        %v5772 = vsel %vm5770, %v5760, 2102212464
        %v5773 = vsel %vm5769, %v5757, %v5772
        %v5774 = vsel %vm5768, %v5771, %v5773
        %v5775 = vsel %vm5767, %v5754, %v5757
        %v5776 = vsel %vm5770, %v5763, 920167782
        %v5777 = vsel %vm5769, %v5760, %v5776
        %v5778 = vsel %vm5768, %v5775, %v5777
        %v5779 = vsel %vm5767, %v5757, %v5760
        %v5780 = vsel %vm5770, %v5766, 1326507024
        %v5781 = vsel %vm5769, %v5763, %v5780
        %v5782 = vsel %vm5768, %v5779, %v5781
        %v5783 = vshll.u32 %v5743, 8
        %v5784 = vmul.u32.u64.compose %v5783, %v5782
        %v5785 = vextract.low.u32 %v5784
        %v5786 = vextract.high.u32 %v5784
        %v5787 = vmul.u32.u64.compose %v5783, %v5778
        %v5788 = vextract.low.u32 %v5787
        %v5789 = vextract.high.u32 %v5787
        %v5790 = vmul.u32 %v5783, %v5774
        %v5791 = vadd.s32 %v5786, %v5788
        %vm5792 = vc.u32 %v5786, %v5788
        %v5793 = vadd.s32 %v5789, 1
        %v5794 = vsel %vm5792, %v5793, %v5789
        %v5795 = vadd.s32 %v5790, %v5794
        %v5796 = vadd.s32 %v5795, 536870912
        %v5797 = vshrl.u32 %v5796, 30
        %v5798 = vshll.u32 %v5797, 30
        %v5799 = vsub.s32 %v5795, %v5798
        %vm5800 = vcmp.lt.s32.totalorder %v5799, 0
        %v5801 = vsub.s32 0, %v5799
        %v5802 = vsel %vm5800, %v5801, %v5799
        %v5803 = vclz %v5802
        %v5804 = vsub.s32 %v5803, 2
        %vm5805 = vcmp.gt.s32.totalorder 0, %v5804
        %v5806 = vsel %vm5805, 0, %v5804
        %v5807 = vsub.s32 32, %v5806
        %v5808 = vshll.u32 %v5799, %v5806
        %v5809 = vshrl.u32 %v5791, %v5807
        %v5810 = vor.u32 %v5808, %v5809
        %v5811 = vsub.s32 4294967266, %v5806
        %v5812 = vadd.s32 %v5811, 127
        %v5813 = vshll.u32 %v5812, 23
        %v5814 = vor.u32 4788187, %v5813
        %v5815 = vand.u32 2147483647, %v5814
        %v5817 = vcvt.s32.f32 %v5810
        %v5818 = vmul.f32 %v5817, %v5815
        %v5819 = vxor.u32 %v5818, 2147483648
        %v5820 = vsel %vm5737, %v5819, %v5818
        %v5821 = vsub.s32 4, %v5797
        %v5822 = vsel %vm5737, %v5821, %v5797
        %v5823 = vsel %vm5736, %v1151, %v5820
        %v5824 = vsel %vm5736, 0, %v5822
        %v5825 = vcosq.f32.pop %v5823
        %v5826 = vsinq.f32.pop %v5823
        %vm5827 = vweird.f32 %v1151
        %v5828 = vand.u32 %v5824, 3
        %vm5829 = vcmp.lt.s32.totalorder %v5828, 2
        %vm5830 = vcmp.eq.s32.totalorder %v5828, 0
        %v5831 = vxor.u32 %v5826, 2147483648
        %v5832 = vsel %vm5830, %v5825, %v5831
        %vm5833 = vcmp.eq.s32.totalorder %v5828, 2
        %v5834 = vxor.u32 %v5825, 2147483648
        %v5835 = vsel %vm5833, %v5834, %v5826
        %v5836 = vsel %vm5829, %v5832, %v5835
        %v5837 = vsel %vm5827, nan, %v5836
        %v5838 = vand.u32 2147483647, %v1152
        %vm5839 = vcmp.le.f32.partialorder %v5838, 0.7853982
        %vm5840 = vcmp.lt.s32.totalorder %v1152, 0
        %v5841 = vand.u32 %v1152, 2139095040
        %v5842 = vshrl.u32 %v5841, 23
        %v5843 = vsub.s32 %v5842, 127
        %v5844 = vand.u32 2147483647, %v1152
        %v5845 = vand.u32 %v5844, 8388607
        %v5846 = vor.u32 %v5845, 8388608
        %v5847 = vsub.s32 0, %v5846
        %v5848 = vadd.s32 %v5843, 1
        %vm5849 = vcmp.gt.s32.totalorder %v5848, 0
        %v5850 = vsel %vm5849, %v5848, 0
        %v5851 = vshrl.u32 %v5850, 5
        %v5852 = vand.u32 %v5850, 31
        %v5853 = vsub.s32 32, %v5852
        %v5854 = vshrl.u32 683565275, %v5853
        %v5855 = vshll.u32 683565275, %v5852
        %v5856 = vshrl.u32 2475754826, %v5853
        %v5857 = vor.u32 %v5855, %v5856
        %v5858 = vshll.u32 2475754826, %v5852
        %v5859 = vshrl.u32 2131351028, %v5853
        %v5860 = vor.u32 %v5858, %v5859
        %v5861 = vshll.u32 2131351028, %v5852
        %v5862 = vshrl.u32 2102212464, %v5853
        %v5863 = vor.u32 %v5861, %v5862
        %v5864 = vshll.u32 2102212464, %v5852
        %v5865 = vshrl.u32 920167782, %v5853
        %v5866 = vor.u32 %v5864, %v5865
        %v5867 = vshll.u32 920167782, %v5852
        %v5868 = vshrl.u32 1326507024, %v5853
        %v5869 = vor.u32 %v5867, %v5868
        %vm5870 = vcmp.lt.s32.totalorder %v5851, 1
        %vm5871 = vcmp.lt.s32.totalorder %v5851, 2
        %vm5872 = vcmp.lt.s32.totalorder %v5851, 3
        %vm5873 = vcmp.lt.s32.totalorder %v5851, 4
        %v5874 = vsel %vm5870, %v5854, %v5857
        %v5875 = vsel %vm5873, %v5863, 2102212464
        %v5876 = vsel %vm5872, %v5860, %v5875
        %v5877 = vsel %vm5871, %v5874, %v5876
        %v5878 = vsel %vm5870, %v5857, %v5860
        %v5879 = vsel %vm5873, %v5866, 920167782
        %v5880 = vsel %vm5872, %v5863, %v5879
        %v5881 = vsel %vm5871, %v5878, %v5880
        %v5882 = vsel %vm5870, %v5860, %v5863
        %v5883 = vsel %vm5873, %v5869, 1326507024
        %v5884 = vsel %vm5872, %v5866, %v5883
        %v5885 = vsel %vm5871, %v5882, %v5884
        %v5886 = vshll.u32 %v5846, 8
        %v5887 = vmul.u32.u64.compose %v5886, %v5885
        %v5888 = vextract.low.u32 %v5887
        %v5889 = vextract.high.u32 %v5887
        %v5890 = vmul.u32.u64.compose %v5886, %v5881
        %v5891 = vextract.low.u32 %v5890
        %v5892 = vextract.high.u32 %v5890
        %v5893 = vmul.u32 %v5886, %v5877
        %v5894 = vadd.s32 %v5889, %v5891
        %vm5895 = vc.u32 %v5889, %v5891
        %v5896 = vadd.s32 %v5892, 1
        %v5897 = vsel %vm5895, %v5896, %v5892
        %v5898 = vadd.s32 %v5893, %v5897
        %v5899 = vadd.s32 %v5898, 536870912
        %v5900 = vshrl.u32 %v5899, 30
        %v5901 = vshll.u32 %v5900, 30
        %v5902 = vsub.s32 %v5898, %v5901
        %vm5903 = vcmp.lt.s32.totalorder %v5902, 0
        %v5904 = vsub.s32 0, %v5902
        %v5905 = vsel %vm5903, %v5904, %v5902
        %v5906 = vclz %v5905
        %v5907 = vsub.s32 %v5906, 2
        %vm5908 = vcmp.gt.s32.totalorder 0, %v5907
        %v5909 = vsel %vm5908, 0, %v5907
        %v5910 = vsub.s32 32, %v5909
        %v5911 = vshll.u32 %v5902, %v5909
        %v5912 = vshrl.u32 %v5894, %v5910
        %v5913 = vor.u32 %v5911, %v5912
        %v5914 = vsub.s32 4294967266, %v5909
        %v5915 = vadd.s32 %v5914, 127
        %v5916 = vshll.u32 %v5915, 23
        %v5917 = vor.u32 4788187, %v5916
        %v5918 = vand.u32 2147483647, %v5917
        %v5920 = vcvt.s32.f32 %v5913
        %v5921 = vmul.f32 %v5920, %v5918
        %v5922 = vxor.u32 %v5921, 2147483648
        %v5923 = vsel %vm5840, %v5922, %v5921
        %v5924 = vsub.s32 4, %v5900
        %v5925 = vsel %vm5840, %v5924, %v5900
        %v5926 = vsel %vm5839, %v1152, %v5923
        %v5927 = vsel %vm5839, 0, %v5925
        %v5928 = vcosq.f32.pop %v5926
        %v5929 = vsinq.f32.pop %v5926
        %vm5930 = vweird.f32 %v1152
        %v5931 = vand.u32 %v5927, 3
        %vm5932 = vcmp.lt.s32.totalorder %v5931, 2
        %vm5933 = vcmp.eq.s32.totalorder %v5931, 0
        %v5934 = vxor.u32 %v5929, 2147483648
        %v5935 = vsel %vm5933, %v5928, %v5934
        %vm5936 = vcmp.eq.s32.totalorder %v5931, 2
        %v5937 = vxor.u32 %v5928, 2147483648
        %v5938 = vsel %vm5936, %v5937, %v5929
        %v5939 = vsel %vm5932, %v5935, %v5938
        %v5940 = vsel %vm5930, nan, %v5939
        %v5941 = vand.u32 2147483647, %v1153
        %vm5942 = vcmp.le.f32.partialorder %v5941, 0.7853982
        %vm5943 = vcmp.lt.s32.totalorder %v1153, 0
        %v5944 = vand.u32 %v1153, 2139095040
        %v5945 = vshrl.u32 %v5944, 23
        %v5946 = vsub.s32 %v5945, 127
        %v5947 = vand.u32 2147483647, %v1153
        %v5948 = vand.u32 %v5947, 8388607
        %v5949 = vor.u32 %v5948, 8388608
        %v5950 = vsub.s32 0, %v5949
        %v5951 = vadd.s32 %v5946, 1
        %vm5952 = vcmp.gt.s32.totalorder %v5951, 0
        %v5953 = vsel %vm5952, %v5951, 0
        %v5954 = vshrl.u32 %v5953, 5
        %v5955 = vand.u32 %v5953, 31
        %v5956 = vsub.s32 32, %v5955
        %v5957 = vshrl.u32 683565275, %v5956
        %v5958 = vshll.u32 683565275, %v5955
        %v5959 = vshrl.u32 2475754826, %v5956
        %v5960 = vor.u32 %v5958, %v5959
        %v5961 = vshll.u32 2475754826, %v5955
        %v5962 = vshrl.u32 2131351028, %v5956
        %v5963 = vor.u32 %v5961, %v5962
        %v5964 = vshll.u32 2131351028, %v5955
        %v5965 = vshrl.u32 2102212464, %v5956
        %v5966 = vor.u32 %v5964, %v5965
        %v5967 = vshll.u32 2102212464, %v5955
        %v5968 = vshrl.u32 920167782, %v5956
        %v5969 = vor.u32 %v5967, %v5968
        %v5970 = vshll.u32 920167782, %v5955
        %v5971 = vshrl.u32 1326507024, %v5956
        %v5972 = vor.u32 %v5970, %v5971
        %vm5973 = vcmp.lt.s32.totalorder %v5954, 1
        %vm5974 = vcmp.lt.s32.totalorder %v5954, 2
        %vm5975 = vcmp.lt.s32.totalorder %v5954, 3
        %vm5976 = vcmp.lt.s32.totalorder %v5954, 4
        %v5977 = vsel %vm5973, %v5957, %v5960
        %v5978 = vsel %vm5976, %v5966, 2102212464
        %v5979 = vsel %vm5975, %v5963, %v5978
        %v5980 = vsel %vm5974, %v5977, %v5979
        %v5981 = vsel %vm5973, %v5960, %v5963
        %v5982 = vsel %vm5976, %v5969, 920167782
        %v5983 = vsel %vm5975, %v5966, %v5982
        %v5984 = vsel %vm5974, %v5981, %v5983
        %v5985 = vsel %vm5973, %v5963, %v5966
        %v5986 = vsel %vm5976, %v5972, 1326507024
        %v5987 = vsel %vm5975, %v5969, %v5986
        %v5988 = vsel %vm5974, %v5985, %v5987
        %v5989 = vshll.u32 %v5949, 8
        %v5990 = vmul.u32.u64.compose %v5989, %v5988
        %v5991 = vextract.low.u32 %v5990
        %v5992 = vextract.high.u32 %v5990
        %v5993 = vmul.u32.u64.compose %v5989, %v5984
        %v5994 = vextract.low.u32 %v5993
        %v5995 = vextract.high.u32 %v5993
        %v5996 = vmul.u32 %v5989, %v5980
        %v5997 = vadd.s32 %v5992, %v5994
        %vm5998 = vc.u32 %v5992, %v5994
        %v5999 = vadd.s32 %v5995, 1
        %v6000 = vsel %vm5998, %v5999, %v5995
        %v6001 = vadd.s32 %v5996, %v6000
        %v6002 = vadd.s32 %v6001, 536870912
        %v6003 = vshrl.u32 %v6002, 30
        %v6004 = vshll.u32 %v6003, 30
        %v6005 = vsub.s32 %v6001, %v6004
        %vm6006 = vcmp.lt.s32.totalorder %v6005, 0
        %v6007 = vsub.s32 0, %v6005
        %v6008 = vsel %vm6006, %v6007, %v6005
        %v6009 = vclz %v6008
        %v6010 = vsub.s32 %v6009, 2
        %vm6011 = vcmp.gt.s32.totalorder 0, %v6010
        %v6012 = vsel %vm6011, 0, %v6010
        %v6013 = vsub.s32 32, %v6012
        %v6014 = vshll.u32 %v6005, %v6012
        %v6015 = vshrl.u32 %v5997, %v6013
        %v6016 = vor.u32 %v6014, %v6015
        %v6017 = vsub.s32 4294967266, %v6012
        %v6018 = vadd.s32 %v6017, 127
        %v6019 = vshll.u32 %v6018, 23
        %v6020 = vor.u32 4788187, %v6019
        %v6021 = vand.u32 2147483647, %v6020
        %v6023 = vcvt.s32.f32 %v6016
        %v6024 = vmul.f32 %v6023, %v6021
        %v6025 = vxor.u32 %v6024, 2147483648
        %v6026 = vsel %vm5943, %v6025, %v6024
        %v6027 = vsub.s32 4, %v6003
        %v6028 = vsel %vm5943, %v6027, %v6003
        %v6029 = vsel %vm5942, %v1153, %v6026
        %v6030 = vsel %vm5942, 0, %v6028
        %v6031 = vcosq.f32.pop %v6029
        %v6032 = vsinq.f32.pop %v6029
        %vm6033 = vweird.f32 %v1153
        %v6034 = vand.u32 %v6030, 3
        %vm6035 = vcmp.lt.s32.totalorder %v6034, 2
        %vm6036 = vcmp.eq.s32.totalorder %v6034, 0
        %v6037 = vxor.u32 %v6032, 2147483648
        %v6038 = vsel %vm6036, %v6031, %v6037
        %vm6039 = vcmp.eq.s32.totalorder %v6034, 2
        %v6040 = vxor.u32 %v6031, 2147483648
        %v6041 = vsel %vm6039, %v6040, %v6032
        %v6042 = vsel %vm6035, %v6038, %v6041
        %v6043 = vsel %vm6033, nan, %v6042
        %v6044 = vand.u32 2147483647, %v1154
        %vm6045 = vcmp.le.f32.partialorder %v6044, 0.7853982
        %vm6046 = vcmp.lt.s32.totalorder %v1154, 0
        %v6047 = vand.u32 %v1154, 2139095040
        %v6048 = vshrl.u32 %v6047, 23
        %v6049 = vsub.s32 %v6048, 127
        %v6050 = vand.u32 2147483647, %v1154
        %v6051 = vand.u32 %v6050, 8388607
        %v6052 = vor.u32 %v6051, 8388608
        %v6053 = vsub.s32 0, %v6052
        %v6054 = vadd.s32 %v6049, 1
        %vm6055 = vcmp.gt.s32.totalorder %v6054, 0
        %v6056 = vsel %vm6055, %v6054, 0
        %v6057 = vshrl.u32 %v6056, 5
        %v6058 = vand.u32 %v6056, 31
        %v6059 = vsub.s32 32, %v6058
        %v6060 = vshrl.u32 683565275, %v6059
        %v6061 = vshll.u32 683565275, %v6058
        %v6062 = vshrl.u32 2475754826, %v6059
        %v6063 = vor.u32 %v6061, %v6062
        %v6064 = vshll.u32 2475754826, %v6058
        %v6065 = vshrl.u32 2131351028, %v6059
        %v6066 = vor.u32 %v6064, %v6065
        %v6067 = vshll.u32 2131351028, %v6058
        %v6068 = vshrl.u32 2102212464, %v6059
        %v6069 = vor.u32 %v6067, %v6068
        %v6070 = vshll.u32 2102212464, %v6058
        %v6071 = vshrl.u32 920167782, %v6059
        %v6072 = vor.u32 %v6070, %v6071
        %v6073 = vshll.u32 920167782, %v6058
        %v6074 = vshrl.u32 1326507024, %v6059
        %v6075 = vor.u32 %v6073, %v6074
        %vm6076 = vcmp.lt.s32.totalorder %v6057, 1
        %vm6077 = vcmp.lt.s32.totalorder %v6057, 2
        %vm6078 = vcmp.lt.s32.totalorder %v6057, 3
        %vm6079 = vcmp.lt.s32.totalorder %v6057, 4
        %v6080 = vsel %vm6076, %v6060, %v6063
        %v6081 = vsel %vm6079, %v6069, 2102212464
        %v6082 = vsel %vm6078, %v6066, %v6081
        %v6083 = vsel %vm6077, %v6080, %v6082
        %v6084 = vsel %vm6076, %v6063, %v6066
        %v6085 = vsel %vm6079, %v6072, 920167782
        %v6086 = vsel %vm6078, %v6069, %v6085
        %v6087 = vsel %vm6077, %v6084, %v6086
        %v6088 = vsel %vm6076, %v6066, %v6069
        %v6089 = vsel %vm6079, %v6075, 1326507024
        %v6090 = vsel %vm6078, %v6072, %v6089
        %v6091 = vsel %vm6077, %v6088, %v6090
        %v6092 = vshll.u32 %v6052, 8
        %v6093 = vmul.u32.u64.compose %v6092, %v6091
        %v6094 = vextract.low.u32 %v6093
        %v6095 = vextract.high.u32 %v6093
        %v6096 = vmul.u32.u64.compose %v6092, %v6087
        %v6097 = vextract.low.u32 %v6096
        %v6098 = vextract.high.u32 %v6096
        %v6099 = vmul.u32 %v6092, %v6083
        %v6100 = vadd.s32 %v6095, %v6097
        %vm6101 = vc.u32 %v6095, %v6097
        %v6102 = vadd.s32 %v6098, 1
        %v6103 = vsel %vm6101, %v6102, %v6098
        %v6104 = vadd.s32 %v6099, %v6103
        %v6105 = vadd.s32 %v6104, 536870912
        %v6106 = vshrl.u32 %v6105, 30
        %v6107 = vshll.u32 %v6106, 30
        %v6108 = vsub.s32 %v6104, %v6107
        %vm6109 = vcmp.lt.s32.totalorder %v6108, 0
        %v6110 = vsub.s32 0, %v6108
        %v6111 = vsel %vm6109, %v6110, %v6108
        %v6112 = vclz %v6111
        %v6113 = vsub.s32 %v6112, 2
        %vm6114 = vcmp.gt.s32.totalorder 0, %v6113
        %v6115 = vsel %vm6114, 0, %v6113
        %v6116 = vsub.s32 32, %v6115
        %v6117 = vshll.u32 %v6108, %v6115
        %v6118 = vshrl.u32 %v6100, %v6116
        %v6119 = vor.u32 %v6117, %v6118
        %v6120 = vsub.s32 4294967266, %v6115
        %v6121 = vadd.s32 %v6120, 127
        %v6122 = vshll.u32 %v6121, 23
        %v6123 = vor.u32 4788187, %v6122
        %v6124 = vand.u32 2147483647, %v6123
        %v6126 = vcvt.s32.f32 %v6119
        %v6127 = vmul.f32 %v6126, %v6124
        %v6128 = vxor.u32 %v6127, 2147483648
        %v6129 = vsel %vm6046, %v6128, %v6127
        %v6130 = vsub.s32 4, %v6106
        %v6131 = vsel %vm6046, %v6130, %v6106
        %v6132 = vsel %vm6045, %v1154, %v6129
        %v6133 = vsel %vm6045, 0, %v6131
        %v6134 = vcosq.f32.pop %v6132
        %v6135 = vsinq.f32.pop %v6132
        %vm6136 = vweird.f32 %v1154
        %v6137 = vand.u32 %v6133, 3
        %vm6138 = vcmp.lt.s32.totalorder %v6137, 2
        %vm6139 = vcmp.eq.s32.totalorder %v6137, 0
        %v6140 = vxor.u32 %v6135, 2147483648
        %v6141 = vsel %vm6139, %v6134, %v6140
        %vm6142 = vcmp.eq.s32.totalorder %v6137, 2
        %v6143 = vxor.u32 %v6134, 2147483648
        %v6144 = vsel %vm6142, %v6143, %v6135
        %v6145 = vsel %vm6138, %v6141, %v6144
        %v6146 = vsel %vm6136, nan, %v6145
        %v6147 = vand.u32 2147483647, %v1155
        %vm6148 = vcmp.le.f32.partialorder %v6147, 0.7853982
        %vm6149 = vcmp.lt.s32.totalorder %v1155, 0
        %v6150 = vand.u32 %v1155, 2139095040
        %v6151 = vshrl.u32 %v6150, 23
        %v6152 = vsub.s32 %v6151, 127
        %v6153 = vand.u32 2147483647, %v1155
        %v6154 = vand.u32 %v6153, 8388607
        %v6155 = vor.u32 %v6154, 8388608
        %v6156 = vsub.s32 0, %v6155
        %v6157 = vadd.s32 %v6152, 1
        %vm6158 = vcmp.gt.s32.totalorder %v6157, 0
        %v6159 = vsel %vm6158, %v6157, 0
        %v6160 = vshrl.u32 %v6159, 5
        %v6161 = vand.u32 %v6159, 31
        %v6162 = vsub.s32 32, %v6161
        %v6163 = vshrl.u32 683565275, %v6162
        %v6164 = vshll.u32 683565275, %v6161
        %v6165 = vshrl.u32 2475754826, %v6162
        %v6166 = vor.u32 %v6164, %v6165
        %v6167 = vshll.u32 2475754826, %v6161
        %v6168 = vshrl.u32 2131351028, %v6162
        %v6169 = vor.u32 %v6167, %v6168
        %v6170 = vshll.u32 2131351028, %v6161
        %v6171 = vshrl.u32 2102212464, %v6162
        %v6172 = vor.u32 %v6170, %v6171
        %v6173 = vshll.u32 2102212464, %v6161
        %v6174 = vshrl.u32 920167782, %v6162
        %v6175 = vor.u32 %v6173, %v6174
        %v6176 = vshll.u32 920167782, %v6161
        %v6177 = vshrl.u32 1326507024, %v6162
        %v6178 = vor.u32 %v6176, %v6177
        %vm6179 = vcmp.lt.s32.totalorder %v6160, 1
        %vm6180 = vcmp.lt.s32.totalorder %v6160, 2
        %vm6181 = vcmp.lt.s32.totalorder %v6160, 3
        %vm6182 = vcmp.lt.s32.totalorder %v6160, 4
        %v6183 = vsel %vm6179, %v6163, %v6166
        %v6184 = vsel %vm6182, %v6172, 2102212464
        %v6185 = vsel %vm6181, %v6169, %v6184
        %v6186 = vsel %vm6180, %v6183, %v6185
        %v6187 = vsel %vm6179, %v6166, %v6169
        %v6188 = vsel %vm6182, %v6175, 920167782
        %v6189 = vsel %vm6181, %v6172, %v6188
        %v6190 = vsel %vm6180, %v6187, %v6189
        %v6191 = vsel %vm6179, %v6169, %v6172
        %v6192 = vsel %vm6182, %v6178, 1326507024
        %v6193 = vsel %vm6181, %v6175, %v6192
        %v6194 = vsel %vm6180, %v6191, %v6193
        %v6195 = vshll.u32 %v6155, 8
        %v6196 = vmul.u32.u64.compose %v6195, %v6194
        %v6197 = vextract.low.u32 %v6196
        %v6198 = vextract.high.u32 %v6196
        %v6199 = vmul.u32.u64.compose %v6195, %v6190
        %v6200 = vextract.low.u32 %v6199
        %v6201 = vextract.high.u32 %v6199
        %v6202 = vmul.u32 %v6195, %v6186
        %v6203 = vadd.s32 %v6198, %v6200
        %vm6204 = vc.u32 %v6198, %v6200
        %v6205 = vadd.s32 %v6201, 1
        %v6206 = vsel %vm6204, %v6205, %v6201
        %v6207 = vadd.s32 %v6202, %v6206
        %v6208 = vadd.s32 %v6207, 536870912
        %v6209 = vshrl.u32 %v6208, 30
        %v6210 = vshll.u32 %v6209, 30
        %v6211 = vsub.s32 %v6207, %v6210
        %vm6212 = vcmp.lt.s32.totalorder %v6211, 0
        %v6213 = vsub.s32 0, %v6211
        %v6214 = vsel %vm6212, %v6213, %v6211
        %v6215 = vclz %v6214
        %v6216 = vsub.s32 %v6215, 2
        %vm6217 = vcmp.gt.s32.totalorder 0, %v6216
        %v6218 = vsel %vm6217, 0, %v6216
        %v6219 = vsub.s32 32, %v6218
        %v6220 = vshll.u32 %v6211, %v6218
        %v6221 = vshrl.u32 %v6203, %v6219
        %v6222 = vor.u32 %v6220, %v6221
        %v6223 = vsub.s32 4294967266, %v6218
        %v6224 = vadd.s32 %v6223, 127
        %v6225 = vshll.u32 %v6224, 23
        %v6226 = vor.u32 4788187, %v6225
        %v6227 = vand.u32 2147483647, %v6226
        %v6229 = vcvt.s32.f32 %v6222
        %v6230 = vmul.f32 %v6229, %v6227
        %v6231 = vxor.u32 %v6230, 2147483648
        %v6232 = vsel %vm6149, %v6231, %v6230
        %v6233 = vsub.s32 4, %v6209
        %v6234 = vsel %vm6149, %v6233, %v6209
        %v6235 = vsel %vm6148, %v1155, %v6232
        %v6236 = vsel %vm6148, 0, %v6234
        %v6237 = vcosq.f32.pop %v6235
        %v6238 = vsinq.f32.pop %v6235
        %vm6239 = vweird.f32 %v1155
        %v6240 = vand.u32 %v6236, 3
        %vm6241 = vcmp.lt.s32.totalorder %v6240, 2
        %vm6242 = vcmp.eq.s32.totalorder %v6240, 0
        %v6243 = vxor.u32 %v6238, 2147483648
        %v6244 = vsel %vm6242, %v6237, %v6243
        %vm6245 = vcmp.eq.s32.totalorder %v6240, 2
        %v6246 = vxor.u32 %v6237, 2147483648
        %v6247 = vsel %vm6245, %v6246, %v6238
        %v6248 = vsel %vm6241, %v6244, %v6247
        %v6249 = vsel %vm6239, nan, %v6248
        %v6250 = vand.u32 2147483647, %v1156
        %vm6251 = vcmp.le.f32.partialorder %v6250, 0.7853982
        %vm6252 = vcmp.lt.s32.totalorder %v1156, 0
        %v6253 = vand.u32 %v1156, 2139095040
        %v6254 = vshrl.u32 %v6253, 23
        %v6255 = vsub.s32 %v6254, 127
        %v6256 = vand.u32 2147483647, %v1156
        %v6257 = vand.u32 %v6256, 8388607
        %v6258 = vor.u32 %v6257, 8388608
        %v6259 = vsub.s32 0, %v6258
        %v6260 = vadd.s32 %v6255, 1
        %vm6261 = vcmp.gt.s32.totalorder %v6260, 0
        %v6262 = vsel %vm6261, %v6260, 0
        %v6263 = vshrl.u32 %v6262, 5
        %v6264 = vand.u32 %v6262, 31
        %v6265 = vsub.s32 32, %v6264
        %v6266 = vshrl.u32 683565275, %v6265
        %v6267 = vshll.u32 683565275, %v6264
        %v6268 = vshrl.u32 2475754826, %v6265
        %v6269 = vor.u32 %v6267, %v6268
        %v6270 = vshll.u32 2475754826, %v6264
        %v6271 = vshrl.u32 2131351028, %v6265
        %v6272 = vor.u32 %v6270, %v6271
        %v6273 = vshll.u32 2131351028, %v6264
        %v6274 = vshrl.u32 2102212464, %v6265
        %v6275 = vor.u32 %v6273, %v6274
        %v6276 = vshll.u32 2102212464, %v6264
        %v6277 = vshrl.u32 920167782, %v6265
        %v6278 = vor.u32 %v6276, %v6277
        %v6279 = vshll.u32 920167782, %v6264
        %v6280 = vshrl.u32 1326507024, %v6265
        %v6281 = vor.u32 %v6279, %v6280
        %vm6282 = vcmp.lt.s32.totalorder %v6263, 1
        %vm6283 = vcmp.lt.s32.totalorder %v6263, 2
        %vm6284 = vcmp.lt.s32.totalorder %v6263, 3
        %vm6285 = vcmp.lt.s32.totalorder %v6263, 4
        %v6286 = vsel %vm6282, %v6266, %v6269
        %v6287 = vsel %vm6285, %v6275, 2102212464
        %v6288 = vsel %vm6284, %v6272, %v6287
        %v6289 = vsel %vm6283, %v6286, %v6288
        %v6290 = vsel %vm6282, %v6269, %v6272
        %v6291 = vsel %vm6285, %v6278, 920167782
        %v6292 = vsel %vm6284, %v6275, %v6291
        %v6293 = vsel %vm6283, %v6290, %v6292
        %v6294 = vsel %vm6282, %v6272, %v6275
        %v6295 = vsel %vm6285, %v6281, 1326507024
        %v6296 = vsel %vm6284, %v6278, %v6295
        %v6297 = vsel %vm6283, %v6294, %v6296
        %v6298 = vshll.u32 %v6258, 8
        %v6299 = vmul.u32.u64.compose %v6298, %v6297
        %v6300 = vextract.low.u32 %v6299
        %v6301 = vextract.high.u32 %v6299
        %v6302 = vmul.u32.u64.compose %v6298, %v6293
        %v6303 = vextract.low.u32 %v6302
        %v6304 = vextract.high.u32 %v6302
        %v6305 = vmul.u32 %v6298, %v6289
        %v6306 = vadd.s32 %v6301, %v6303
        %vm6307 = vc.u32 %v6301, %v6303
        %v6308 = vadd.s32 %v6304, 1
        %v6309 = vsel %vm6307, %v6308, %v6304
        %v6310 = vadd.s32 %v6305, %v6309
        %v6311 = vadd.s32 %v6310, 536870912
        %v6312 = vshrl.u32 %v6311, 30
        %v6313 = vshll.u32 %v6312, 30
        %v6314 = vsub.s32 %v6310, %v6313
        %vm6315 = vcmp.lt.s32.totalorder %v6314, 0
        %v6316 = vsub.s32 0, %v6314
        %v6317 = vsel %vm6315, %v6316, %v6314
        %v6318 = vclz %v6317
        %v6319 = vsub.s32 %v6318, 2
        %vm6320 = vcmp.gt.s32.totalorder 0, %v6319
        %v6321 = vsel %vm6320, 0, %v6319
        %v6322 = vsub.s32 32, %v6321
        %v6323 = vshll.u32 %v6314, %v6321
        %v6324 = vshrl.u32 %v6306, %v6322
        %v6325 = vor.u32 %v6323, %v6324
        %v6326 = vsub.s32 4294967266, %v6321
        %v6327 = vadd.s32 %v6326, 127
        %v6328 = vshll.u32 %v6327, 23
        %v6329 = vor.u32 4788187, %v6328
        %v6330 = vand.u32 2147483647, %v6329
        %v6332 = vcvt.s32.f32 %v6325
        %v6333 = vmul.f32 %v6332, %v6330
        %v6334 = vxor.u32 %v6333, 2147483648
        %v6335 = vsel %vm6252, %v6334, %v6333
        %v6336 = vsub.s32 4, %v6312
        %v6337 = vsel %vm6252, %v6336, %v6312
        %v6338 = vsel %vm6251, %v1156, %v6335
        %v6339 = vsel %vm6251, 0, %v6337
        %v6340 = vcosq.f32.pop %v6338
        %v6341 = vsinq.f32.pop %v6338
        %vm6342 = vweird.f32 %v1156
        %v6343 = vand.u32 %v6339, 3
        %vm6344 = vcmp.lt.s32.totalorder %v6343, 2
        %vm6345 = vcmp.eq.s32.totalorder %v6343, 0
        %v6346 = vxor.u32 %v6341, 2147483648
        %v6347 = vsel %vm6345, %v6340, %v6346
        %vm6348 = vcmp.eq.s32.totalorder %v6343, 2
        %v6349 = vxor.u32 %v6340, 2147483648
        %v6350 = vsel %vm6348, %v6349, %v6341
        %v6351 = vsel %vm6344, %v6347, %v6350
        %v6352 = vsel %vm6342, nan, %v6351
        %v6353 = vand.u32 2147483647, %v1157
        %vm6354 = vcmp.le.f32.partialorder %v6353, 0.7853982
        %vm6355 = vcmp.lt.s32.totalorder %v1157, 0
        %v6356 = vand.u32 %v1157, 2139095040
        %v6357 = vshrl.u32 %v6356, 23
        %v6358 = vsub.s32 %v6357, 127
        %v6359 = vand.u32 2147483647, %v1157
        %v6360 = vand.u32 %v6359, 8388607
        %v6361 = vor.u32 %v6360, 8388608
        %v6362 = vsub.s32 0, %v6361
        %v6363 = vadd.s32 %v6358, 1
        %vm6364 = vcmp.gt.s32.totalorder %v6363, 0
        %v6365 = vsel %vm6364, %v6363, 0
        %v6366 = vshrl.u32 %v6365, 5
        %v6367 = vand.u32 %v6365, 31
        %v6368 = vsub.s32 32, %v6367
        %v6369 = vshrl.u32 683565275, %v6368
        %v6370 = vshll.u32 683565275, %v6367
        %v6371 = vshrl.u32 2475754826, %v6368
        %v6372 = vor.u32 %v6370, %v6371
        %v6373 = vshll.u32 2475754826, %v6367
        %v6374 = vshrl.u32 2131351028, %v6368
        %v6375 = vor.u32 %v6373, %v6374
        %v6376 = vshll.u32 2131351028, %v6367
        %v6377 = vshrl.u32 2102212464, %v6368
        %v6378 = vor.u32 %v6376, %v6377
        %v6379 = vshll.u32 2102212464, %v6367
        %v6380 = vshrl.u32 920167782, %v6368
        %v6381 = vor.u32 %v6379, %v6380
        %v6382 = vshll.u32 920167782, %v6367
        %v6383 = vshrl.u32 1326507024, %v6368
        %v6384 = vor.u32 %v6382, %v6383
        %vm6385 = vcmp.lt.s32.totalorder %v6366, 1
        %vm6386 = vcmp.lt.s32.totalorder %v6366, 2
        %vm6387 = vcmp.lt.s32.totalorder %v6366, 3
        %vm6388 = vcmp.lt.s32.totalorder %v6366, 4
        %v6389 = vsel %vm6385, %v6369, %v6372
        %v6390 = vsel %vm6388, %v6378, 2102212464
        %v6391 = vsel %vm6387, %v6375, %v6390
        %v6392 = vsel %vm6386, %v6389, %v6391
        %v6393 = vsel %vm6385, %v6372, %v6375
        %v6394 = vsel %vm6388, %v6381, 920167782
        %v6395 = vsel %vm6387, %v6378, %v6394
        %v6396 = vsel %vm6386, %v6393, %v6395
        %v6397 = vsel %vm6385, %v6375, %v6378
        %v6398 = vsel %vm6388, %v6384, 1326507024
        %v6399 = vsel %vm6387, %v6381, %v6398
        %v6400 = vsel %vm6386, %v6397, %v6399
        %v6401 = vshll.u32 %v6361, 8
        %v6402 = vmul.u32.u64.compose %v6401, %v6400
        %v6403 = vextract.low.u32 %v6402
        %v6404 = vextract.high.u32 %v6402
        %v6405 = vmul.u32.u64.compose %v6401, %v6396
        %v6406 = vextract.low.u32 %v6405
        %v6407 = vextract.high.u32 %v6405
        %v6408 = vmul.u32 %v6401, %v6392
        %v6409 = vadd.s32 %v6404, %v6406
        %vm6410 = vc.u32 %v6404, %v6406
        %v6411 = vadd.s32 %v6407, 1
        %v6412 = vsel %vm6410, %v6411, %v6407
        %v6413 = vadd.s32 %v6408, %v6412
        %v6414 = vadd.s32 %v6413, 536870912
        %v6415 = vshrl.u32 %v6414, 30
        %v6416 = vshll.u32 %v6415, 30
        %v6417 = vsub.s32 %v6413, %v6416
        %vm6418 = vcmp.lt.s32.totalorder %v6417, 0
        %v6419 = vsub.s32 0, %v6417
        %v6420 = vsel %vm6418, %v6419, %v6417
        %v6421 = vclz %v6420
        %v6422 = vsub.s32 %v6421, 2
        %vm6423 = vcmp.gt.s32.totalorder 0, %v6422
        %v6424 = vsel %vm6423, 0, %v6422
        %v6425 = vsub.s32 32, %v6424
        %v6426 = vshll.u32 %v6417, %v6424
        %v6427 = vshrl.u32 %v6409, %v6425
        %v6428 = vor.u32 %v6426, %v6427
        %v6429 = vsub.s32 4294967266, %v6424
        %v6430 = vadd.s32 %v6429, 127
        %v6431 = vshll.u32 %v6430, 23
        %v6432 = vor.u32 4788187, %v6431
        %v6433 = vand.u32 2147483647, %v6432
        %v6435 = vcvt.s32.f32 %v6428
        %v6436 = vmul.f32 %v6435, %v6433
        %v6437 = vxor.u32 %v6436, 2147483648
        %v6438 = vsel %vm6355, %v6437, %v6436
        %v6439 = vsub.s32 4, %v6415
        %v6440 = vsel %vm6355, %v6439, %v6415
        %v6441 = vsel %vm6354, %v1157, %v6438
        %v6442 = vsel %vm6354, 0, %v6440
        %v6443 = vcosq.f32.pop %v6441
        %v6444 = vsinq.f32.pop %v6441
        %vm6445 = vweird.f32 %v1157
        %v6446 = vand.u32 %v6442, 3
        %vm6447 = vcmp.lt.s32.totalorder %v6446, 2
        %vm6448 = vcmp.eq.s32.totalorder %v6446, 0
        %v6449 = vxor.u32 %v6444, 2147483648
        %v6450 = vsel %vm6448, %v6443, %v6449
        %vm6451 = vcmp.eq.s32.totalorder %v6446, 2
        %v6452 = vxor.u32 %v6443, 2147483648
        %v6453 = vsel %vm6451, %v6452, %v6444
        %v6454 = vsel %vm6447, %v6450, %v6453
        %v6455 = vsel %vm6445, nan, %v6454
        %v6456 = vand.u32 2147483647, %v1158
        %vm6457 = vcmp.le.f32.partialorder %v6456, 0.7853982
        %vm6458 = vcmp.lt.s32.totalorder %v1158, 0
        %v6459 = vand.u32 %v1158, 2139095040
        %v6460 = vshrl.u32 %v6459, 23
        %v6461 = vsub.s32 %v6460, 127
        %v6462 = vand.u32 2147483647, %v1158
        %v6463 = vand.u32 %v6462, 8388607
        %v6464 = vor.u32 %v6463, 8388608
        %v6465 = vsub.s32 0, %v6464
        %v6466 = vadd.s32 %v6461, 1
        %vm6467 = vcmp.gt.s32.totalorder %v6466, 0
        %v6468 = vsel %vm6467, %v6466, 0
        %v6469 = vshrl.u32 %v6468, 5
        %v6470 = vand.u32 %v6468, 31
        %v6471 = vsub.s32 32, %v6470
        %v6472 = vshrl.u32 683565275, %v6471
        %v6473 = vshll.u32 683565275, %v6470
        %v6474 = vshrl.u32 2475754826, %v6471
        %v6475 = vor.u32 %v6473, %v6474
        %v6476 = vshll.u32 2475754826, %v6470
        %v6477 = vshrl.u32 2131351028, %v6471
        %v6478 = vor.u32 %v6476, %v6477
        %v6479 = vshll.u32 2131351028, %v6470
        %v6480 = vshrl.u32 2102212464, %v6471
        %v6481 = vor.u32 %v6479, %v6480
        %v6482 = vshll.u32 2102212464, %v6470
        %v6483 = vshrl.u32 920167782, %v6471
        %v6484 = vor.u32 %v6482, %v6483
        %v6485 = vshll.u32 920167782, %v6470
        %v6486 = vshrl.u32 1326507024, %v6471
        %v6487 = vor.u32 %v6485, %v6486
        %vm6488 = vcmp.lt.s32.totalorder %v6469, 1
        %vm6489 = vcmp.lt.s32.totalorder %v6469, 2
        %vm6490 = vcmp.lt.s32.totalorder %v6469, 3
        %vm6491 = vcmp.lt.s32.totalorder %v6469, 4
        %v6492 = vsel %vm6488, %v6472, %v6475
        %v6493 = vsel %vm6491, %v6481, 2102212464
        %v6494 = vsel %vm6490, %v6478, %v6493
        %v6495 = vsel %vm6489, %v6492, %v6494
        %v6496 = vsel %vm6488, %v6475, %v6478
        %v6497 = vsel %vm6491, %v6484, 920167782
        %v6498 = vsel %vm6490, %v6481, %v6497
        %v6499 = vsel %vm6489, %v6496, %v6498
        %v6500 = vsel %vm6488, %v6478, %v6481
        %v6501 = vsel %vm6491, %v6487, 1326507024
        %v6502 = vsel %vm6490, %v6484, %v6501
        %v6503 = vsel %vm6489, %v6500, %v6502
        %v6504 = vshll.u32 %v6464, 8
        %v6505 = vmul.u32.u64.compose %v6504, %v6503
        %v6506 = vextract.low.u32 %v6505
        %v6507 = vextract.high.u32 %v6505
        %v6508 = vmul.u32.u64.compose %v6504, %v6499
        %v6509 = vextract.low.u32 %v6508
        %v6510 = vextract.high.u32 %v6508
        %v6511 = vmul.u32 %v6504, %v6495
        %v6512 = vadd.s32 %v6507, %v6509
        %vm6513 = vc.u32 %v6507, %v6509
        %v6514 = vadd.s32 %v6510, 1
        %v6515 = vsel %vm6513, %v6514, %v6510
        %v6516 = vadd.s32 %v6511, %v6515
        %v6517 = vadd.s32 %v6516, 536870912
        %v6518 = vshrl.u32 %v6517, 30
        %v6519 = vshll.u32 %v6518, 30
        %v6520 = vsub.s32 %v6516, %v6519
        %vm6521 = vcmp.lt.s32.totalorder %v6520, 0
        %v6522 = vsub.s32 0, %v6520
        %v6523 = vsel %vm6521, %v6522, %v6520
        %v6524 = vclz %v6523
        %v6525 = vsub.s32 %v6524, 2
        %vm6526 = vcmp.gt.s32.totalorder 0, %v6525
        %v6527 = vsel %vm6526, 0, %v6525
        %v6528 = vsub.s32 32, %v6527
        %v6529 = vshll.u32 %v6520, %v6527
        %v6530 = vshrl.u32 %v6512, %v6528
        %v6531 = vor.u32 %v6529, %v6530
        %v6532 = vsub.s32 4294967266, %v6527
        %v6533 = vadd.s32 %v6532, 127
        %v6534 = vshll.u32 %v6533, 23
        %v6535 = vor.u32 4788187, %v6534
        %v6536 = vand.u32 2147483647, %v6535
        %v6538 = vcvt.s32.f32 %v6531
        %v6539 = vmul.f32 %v6538, %v6536
        %v6540 = vxor.u32 %v6539, 2147483648
        %v6541 = vsel %vm6458, %v6540, %v6539
        %v6542 = vsub.s32 4, %v6518
        %v6543 = vsel %vm6458, %v6542, %v6518
        %v6544 = vsel %vm6457, %v1158, %v6541
        %v6545 = vsel %vm6457, 0, %v6543
        %v6546 = vcosq.f32.pop %v6544
        %v6547 = vsinq.f32.pop %v6544
        %vm6548 = vweird.f32 %v1158
        %v6549 = vand.u32 %v6545, 3
        %vm6550 = vcmp.lt.s32.totalorder %v6549, 2
        %vm6551 = vcmp.eq.s32.totalorder %v6549, 0
        %v6552 = vxor.u32 %v6547, 2147483648
        %v6553 = vsel %vm6551, %v6546, %v6552
        %vm6554 = vcmp.eq.s32.totalorder %v6549, 2
        %v6555 = vxor.u32 %v6546, 2147483648
        %v6556 = vsel %vm6554, %v6555, %v6547
        %v6557 = vsel %vm6550, %v6553, %v6556
        %v6558 = vsel %vm6548, nan, %v6557
        %v6559 = vand.u32 2147483647, %v1159
        %vm6560 = vcmp.le.f32.partialorder %v6559, 0.7853982
        %vm6561 = vcmp.lt.s32.totalorder %v1159, 0
        %v6562 = vand.u32 %v1159, 2139095040
        %v6563 = vshrl.u32 %v6562, 23
        %v6564 = vsub.s32 %v6563, 127
        %v6565 = vand.u32 2147483647, %v1159
        %v6566 = vand.u32 %v6565, 8388607
        %v6567 = vor.u32 %v6566, 8388608
        %v6568 = vsub.s32 0, %v6567
        %v6569 = vadd.s32 %v6564, 1
        %vm6570 = vcmp.gt.s32.totalorder %v6569, 0
        %v6571 = vsel %vm6570, %v6569, 0
        %v6572 = vshrl.u32 %v6571, 5
        %v6573 = vand.u32 %v6571, 31
        %v6574 = vsub.s32 32, %v6573
        %v6575 = vshrl.u32 683565275, %v6574
        %v6576 = vshll.u32 683565275, %v6573
        %v6577 = vshrl.u32 2475754826, %v6574
        %v6578 = vor.u32 %v6576, %v6577
        %v6579 = vshll.u32 2475754826, %v6573
        %v6580 = vshrl.u32 2131351028, %v6574
        %v6581 = vor.u32 %v6579, %v6580
        %v6582 = vshll.u32 2131351028, %v6573
        %v6583 = vshrl.u32 2102212464, %v6574
        %v6584 = vor.u32 %v6582, %v6583
        %v6585 = vshll.u32 2102212464, %v6573
        %v6586 = vshrl.u32 920167782, %v6574
        %v6587 = vor.u32 %v6585, %v6586
        %v6588 = vshll.u32 920167782, %v6573
        %v6589 = vshrl.u32 1326507024, %v6574
        %v6590 = vor.u32 %v6588, %v6589
        %vm6591 = vcmp.lt.s32.totalorder %v6572, 1
        %vm6592 = vcmp.lt.s32.totalorder %v6572, 2
        %vm6593 = vcmp.lt.s32.totalorder %v6572, 3
        %vm6594 = vcmp.lt.s32.totalorder %v6572, 4
        %v6595 = vsel %vm6591, %v6575, %v6578
        %v6596 = vsel %vm6594, %v6584, 2102212464
        %v6597 = vsel %vm6593, %v6581, %v6596
        %v6598 = vsel %vm6592, %v6595, %v6597
        %v6599 = vsel %vm6591, %v6578, %v6581
        %v6600 = vsel %vm6594, %v6587, 920167782
        %v6601 = vsel %vm6593, %v6584, %v6600
        %v6602 = vsel %vm6592, %v6599, %v6601
        %v6603 = vsel %vm6591, %v6581, %v6584
        %v6604 = vsel %vm6594, %v6590, 1326507024
        %v6605 = vsel %vm6593, %v6587, %v6604
        %v6606 = vsel %vm6592, %v6603, %v6605
        %v6607 = vshll.u32 %v6567, 8
        %v6608 = vmul.u32.u64.compose %v6607, %v6606
        %v6609 = vextract.low.u32 %v6608
        %v6610 = vextract.high.u32 %v6608
        %v6611 = vmul.u32.u64.compose %v6607, %v6602
        %v6612 = vextract.low.u32 %v6611
        %v6613 = vextract.high.u32 %v6611
        %v6614 = vmul.u32 %v6607, %v6598
        %v6615 = vadd.s32 %v6610, %v6612
        %vm6616 = vc.u32 %v6610, %v6612
        %v6617 = vadd.s32 %v6613, 1
        %v6618 = vsel %vm6616, %v6617, %v6613
        %v6619 = vadd.s32 %v6614, %v6618
        %v6620 = vadd.s32 %v6619, 536870912
        %v6621 = vshrl.u32 %v6620, 30
        %v6622 = vshll.u32 %v6621, 30
        %v6623 = vsub.s32 %v6619, %v6622
        %vm6624 = vcmp.lt.s32.totalorder %v6623, 0
        %v6625 = vsub.s32 0, %v6623
        %v6626 = vsel %vm6624, %v6625, %v6623
        %v6627 = vclz %v6626
        %v6628 = vsub.s32 %v6627, 2
        %vm6629 = vcmp.gt.s32.totalorder 0, %v6628
        %v6630 = vsel %vm6629, 0, %v6628
        %v6631 = vsub.s32 32, %v6630
        %v6632 = vshll.u32 %v6623, %v6630
        %v6633 = vshrl.u32 %v6615, %v6631
        %v6634 = vor.u32 %v6632, %v6633
        %v6635 = vsub.s32 4294967266, %v6630
        %v6636 = vadd.s32 %v6635, 127
        %v6637 = vshll.u32 %v6636, 23
        %v6638 = vor.u32 4788187, %v6637
        %v6639 = vand.u32 2147483647, %v6638
        %v6641 = vcvt.s32.f32 %v6634
        %v6642 = vmul.f32 %v6641, %v6639
        %v6643 = vxor.u32 %v6642, 2147483648
        %v6644 = vsel %vm6561, %v6643, %v6642
        %v6645 = vsub.s32 4, %v6621
        %v6646 = vsel %vm6561, %v6645, %v6621
        %v6647 = vsel %vm6560, %v1159, %v6644
        %v6648 = vsel %vm6560, 0, %v6646
        %v6649 = vcosq.f32.pop %v6647
        %v6650 = vsinq.f32.pop %v6647
        %vm6651 = vweird.f32 %v1159
        %v6652 = vand.u32 %v6648, 3
        %vm6653 = vcmp.lt.s32.totalorder %v6652, 2
        %vm6654 = vcmp.eq.s32.totalorder %v6652, 0
        %v6655 = vxor.u32 %v6650, 2147483648
        %v6656 = vsel %vm6654, %v6649, %v6655
        %vm6657 = vcmp.eq.s32.totalorder %v6652, 2
        %v6658 = vxor.u32 %v6649, 2147483648
        %v6659 = vsel %vm6657, %v6658, %v6650
        %v6660 = vsel %vm6653, %v6656, %v6659
        %v6661 = vsel %vm6651, nan, %v6660
        %v6662 = vand.u32 2147483647, %v1160
        %vm6663 = vcmp.le.f32.partialorder %v6662, 0.7853982
        %vm6664 = vcmp.lt.s32.totalorder %v1160, 0
        %v6665 = vand.u32 %v1160, 2139095040
        %v6666 = vshrl.u32 %v6665, 23
        %v6667 = vsub.s32 %v6666, 127
        %v6668 = vand.u32 2147483647, %v1160
        %v6669 = vand.u32 %v6668, 8388607
        %v6670 = vor.u32 %v6669, 8388608
        %v6671 = vsub.s32 0, %v6670
        %v6672 = vadd.s32 %v6667, 1
        %vm6673 = vcmp.gt.s32.totalorder %v6672, 0
        %v6674 = vsel %vm6673, %v6672, 0
        %v6675 = vshrl.u32 %v6674, 5
        %v6676 = vand.u32 %v6674, 31
        %v6677 = vsub.s32 32, %v6676
        %v6678 = vshrl.u32 683565275, %v6677
        %v6679 = vshll.u32 683565275, %v6676
        %v6680 = vshrl.u32 2475754826, %v6677
        %v6681 = vor.u32 %v6679, %v6680
        %v6682 = vshll.u32 2475754826, %v6676
        %v6683 = vshrl.u32 2131351028, %v6677
        %v6684 = vor.u32 %v6682, %v6683
        %v6685 = vshll.u32 2131351028, %v6676
        %v6686 = vshrl.u32 2102212464, %v6677
        %v6687 = vor.u32 %v6685, %v6686
        %v6688 = vshll.u32 2102212464, %v6676
        %v6689 = vshrl.u32 920167782, %v6677
        %v6690 = vor.u32 %v6688, %v6689
        %v6691 = vshll.u32 920167782, %v6676
        %v6692 = vshrl.u32 1326507024, %v6677
        %v6693 = vor.u32 %v6691, %v6692
        %vm6694 = vcmp.lt.s32.totalorder %v6675, 1
        %vm6695 = vcmp.lt.s32.totalorder %v6675, 2
        %vm6696 = vcmp.lt.s32.totalorder %v6675, 3
        %vm6697 = vcmp.lt.s32.totalorder %v6675, 4
        %v6698 = vsel %vm6694, %v6678, %v6681
        %v6699 = vsel %vm6697, %v6687, 2102212464
        %v6700 = vsel %vm6696, %v6684, %v6699
        %v6701 = vsel %vm6695, %v6698, %v6700
        %v6702 = vsel %vm6694, %v6681, %v6684
        %v6703 = vsel %vm6697, %v6690, 920167782
        %v6704 = vsel %vm6696, %v6687, %v6703
        %v6705 = vsel %vm6695, %v6702, %v6704
        %v6706 = vsel %vm6694, %v6684, %v6687
        %v6707 = vsel %vm6697, %v6693, 1326507024
        %v6708 = vsel %vm6696, %v6690, %v6707
        %v6709 = vsel %vm6695, %v6706, %v6708
        %v6710 = vshll.u32 %v6670, 8
        %v6711 = vmul.u32.u64.compose %v6710, %v6709
        %v6712 = vextract.low.u32 %v6711
        %v6713 = vextract.high.u32 %v6711
        %v6714 = vmul.u32.u64.compose %v6710, %v6705
        %v6715 = vextract.low.u32 %v6714
        %v6716 = vextract.high.u32 %v6714
        %v6717 = vmul.u32 %v6710, %v6701
        %v6718 = vadd.s32 %v6713, %v6715
        %vm6719 = vc.u32 %v6713, %v6715
        %v6720 = vadd.s32 %v6716, 1
        %v6721 = vsel %vm6719, %v6720, %v6716
        %v6722 = vadd.s32 %v6717, %v6721
        %v6723 = vadd.s32 %v6722, 536870912
        %v6724 = vshrl.u32 %v6723, 30
        %v6725 = vshll.u32 %v6724, 30
        %v6726 = vsub.s32 %v6722, %v6725
        %vm6727 = vcmp.lt.s32.totalorder %v6726, 0
        %v6728 = vsub.s32 0, %v6726
        %v6729 = vsel %vm6727, %v6728, %v6726
        %v6730 = vclz %v6729
        %v6731 = vsub.s32 %v6730, 2
        %vm6732 = vcmp.gt.s32.totalorder 0, %v6731
        %v6733 = vsel %vm6732, 0, %v6731
        %v6734 = vsub.s32 32, %v6733
        %v6735 = vshll.u32 %v6726, %v6733
        %v6736 = vshrl.u32 %v6718, %v6734
        %v6737 = vor.u32 %v6735, %v6736
        %v6738 = vsub.s32 4294967266, %v6733
        %v6739 = vadd.s32 %v6738, 127
        %v6740 = vshll.u32 %v6739, 23
        %v6741 = vor.u32 4788187, %v6740
        %v6742 = vand.u32 2147483647, %v6741
        %v6744 = vcvt.s32.f32 %v6737
        %v6745 = vmul.f32 %v6744, %v6742
        %v6746 = vxor.u32 %v6745, 2147483648
        %v6747 = vsel %vm6664, %v6746, %v6745
        %v6748 = vsub.s32 4, %v6724
        %v6749 = vsel %vm6664, %v6748, %v6724
        %v6750 = vsel %vm6663, %v1160, %v6747
        %v6751 = vsel %vm6663, 0, %v6749
        %v6752 = vcosq.f32.pop %v6750
        %v6753 = vsinq.f32.pop %v6750
        %vm6754 = vweird.f32 %v1160
        %v6755 = vand.u32 %v6751, 3
        %vm6756 = vcmp.lt.s32.totalorder %v6755, 2
        %vm6757 = vcmp.eq.s32.totalorder %v6755, 0
        %v6758 = vxor.u32 %v6753, 2147483648
        %v6759 = vsel %vm6757, %v6752, %v6758
        %vm6760 = vcmp.eq.s32.totalorder %v6755, 2
        %v6761 = vxor.u32 %v6752, 2147483648
        %v6762 = vsel %vm6760, %v6761, %v6753
        %v6763 = vsel %vm6756, %v6759, %v6762
        %v6764 = vsel %vm6754, nan, %v6763
        %v6765 = vand.u32 2147483647, %v1161
        %vm6766 = vcmp.le.f32.partialorder %v6765, 0.7853982
        %vm6767 = vcmp.lt.s32.totalorder %v1161, 0
        %v6768 = vand.u32 %v1161, 2139095040
        %v6769 = vshrl.u32 %v6768, 23
        %v6770 = vsub.s32 %v6769, 127
        %v6771 = vand.u32 2147483647, %v1161
        %v6772 = vand.u32 %v6771, 8388607
        %v6773 = vor.u32 %v6772, 8388608
        %v6774 = vsub.s32 0, %v6773
        %v6775 = vadd.s32 %v6770, 1
        %vm6776 = vcmp.gt.s32.totalorder %v6775, 0
        %v6777 = vsel %vm6776, %v6775, 0
        %v6778 = vshrl.u32 %v6777, 5
        %v6779 = vand.u32 %v6777, 31
        %v6780 = vsub.s32 32, %v6779
        %v6781 = vshrl.u32 683565275, %v6780
        %v6782 = vshll.u32 683565275, %v6779
        %v6783 = vshrl.u32 2475754826, %v6780
        %v6784 = vor.u32 %v6782, %v6783
        %v6785 = vshll.u32 2475754826, %v6779
        %v6786 = vshrl.u32 2131351028, %v6780
        %v6787 = vor.u32 %v6785, %v6786
        %v6788 = vshll.u32 2131351028, %v6779
        %v6789 = vshrl.u32 2102212464, %v6780
        %v6790 = vor.u32 %v6788, %v6789
        %v6791 = vshll.u32 2102212464, %v6779
        %v6792 = vshrl.u32 920167782, %v6780
        %v6793 = vor.u32 %v6791, %v6792
        %v6794 = vshll.u32 920167782, %v6779
        %v6795 = vshrl.u32 1326507024, %v6780
        %v6796 = vor.u32 %v6794, %v6795
        %vm6797 = vcmp.lt.s32.totalorder %v6778, 1
        %vm6798 = vcmp.lt.s32.totalorder %v6778, 2
        %vm6799 = vcmp.lt.s32.totalorder %v6778, 3
        %vm6800 = vcmp.lt.s32.totalorder %v6778, 4
        %v6801 = vsel %vm6797, %v6781, %v6784
        %v6802 = vsel %vm6800, %v6790, 2102212464
        %v6803 = vsel %vm6799, %v6787, %v6802
        %v6804 = vsel %vm6798, %v6801, %v6803
        %v6805 = vsel %vm6797, %v6784, %v6787
        %v6806 = vsel %vm6800, %v6793, 920167782
        %v6807 = vsel %vm6799, %v6790, %v6806
        %v6808 = vsel %vm6798, %v6805, %v6807
        %v6809 = vsel %vm6797, %v6787, %v6790
        %v6810 = vsel %vm6800, %v6796, 1326507024
        %v6811 = vsel %vm6799, %v6793, %v6810
        %v6812 = vsel %vm6798, %v6809, %v6811
        %v6813 = vshll.u32 %v6773, 8
        %v6814 = vmul.u32.u64.compose %v6813, %v6812
        %v6815 = vextract.low.u32 %v6814
        %v6816 = vextract.high.u32 %v6814
        %v6817 = vmul.u32.u64.compose %v6813, %v6808
        %v6818 = vextract.low.u32 %v6817
        %v6819 = vextract.high.u32 %v6817
        %v6820 = vmul.u32 %v6813, %v6804
        %v6821 = vadd.s32 %v6816, %v6818
        %vm6822 = vc.u32 %v6816, %v6818
        %v6823 = vadd.s32 %v6819, 1
        %v6824 = vsel %vm6822, %v6823, %v6819
        %v6825 = vadd.s32 %v6820, %v6824
        %v6826 = vadd.s32 %v6825, 536870912
        %v6827 = vshrl.u32 %v6826, 30
        %v6828 = vshll.u32 %v6827, 30
        %v6829 = vsub.s32 %v6825, %v6828
        %vm6830 = vcmp.lt.s32.totalorder %v6829, 0
        %v6831 = vsub.s32 0, %v6829
        %v6832 = vsel %vm6830, %v6831, %v6829
        %v6833 = vclz %v6832
        %v6834 = vsub.s32 %v6833, 2
        %vm6835 = vcmp.gt.s32.totalorder 0, %v6834
        %v6836 = vsel %vm6835, 0, %v6834
        %v6837 = vsub.s32 32, %v6836
        %v6838 = vshll.u32 %v6829, %v6836
        %v6839 = vshrl.u32 %v6821, %v6837
        %v6840 = vor.u32 %v6838, %v6839
        %v6841 = vsub.s32 4294967266, %v6836
        %v6842 = vadd.s32 %v6841, 127
        %v6843 = vshll.u32 %v6842, 23
        %v6844 = vor.u32 4788187, %v6843
        %v6845 = vand.u32 2147483647, %v6844
        %v6847 = vcvt.s32.f32 %v6840
        %v6848 = vmul.f32 %v6847, %v6845
        %v6849 = vxor.u32 %v6848, 2147483648
        %v6850 = vsel %vm6767, %v6849, %v6848
        %v6851 = vsub.s32 4, %v6827
        %v6852 = vsel %vm6767, %v6851, %v6827
        %v6853 = vsel %vm6766, %v1161, %v6850
        %v6854 = vsel %vm6766, 0, %v6852
        %v6855 = vcosq.f32.pop %v6853
        %v6856 = vsinq.f32.pop %v6853
        %vm6857 = vweird.f32 %v1161
        %v6858 = vand.u32 %v6854, 3
        %vm6859 = vcmp.lt.s32.totalorder %v6858, 2
        %vm6860 = vcmp.eq.s32.totalorder %v6858, 0
        %v6861 = vxor.u32 %v6856, 2147483648
        %v6862 = vsel %vm6860, %v6855, %v6861
        %vm6863 = vcmp.eq.s32.totalorder %v6858, 2
        %v6864 = vxor.u32 %v6855, 2147483648
        %v6865 = vsel %vm6863, %v6864, %v6856
        %v6866 = vsel %vm6859, %v6862, %v6865
        %v6867 = vsel %vm6857, nan, %v6866
        %v6868 = vand.u32 2147483647, %v1162
        %vm6869 = vcmp.le.f32.partialorder %v6868, 0.7853982
        %vm6870 = vcmp.lt.s32.totalorder %v1162, 0
        %v6871 = vand.u32 %v1162, 2139095040
        %v6872 = vshrl.u32 %v6871, 23
        %v6873 = vsub.s32 %v6872, 127
        %v6874 = vand.u32 2147483647, %v1162
        %v6875 = vand.u32 %v6874, 8388607
        %v6876 = vor.u32 %v6875, 8388608
        %v6877 = vsub.s32 0, %v6876
        %v6878 = vadd.s32 %v6873, 1
        %vm6879 = vcmp.gt.s32.totalorder %v6878, 0
        %v6880 = vsel %vm6879, %v6878, 0
        %v6881 = vshrl.u32 %v6880, 5
        %v6882 = vand.u32 %v6880, 31
        %v6883 = vsub.s32 32, %v6882
        %v6884 = vshrl.u32 683565275, %v6883
        %v6885 = vshll.u32 683565275, %v6882
        %v6886 = vshrl.u32 2475754826, %v6883
        %v6887 = vor.u32 %v6885, %v6886
        %v6888 = vshll.u32 2475754826, %v6882
        %v6889 = vshrl.u32 2131351028, %v6883
        %v6890 = vor.u32 %v6888, %v6889
        %v6891 = vshll.u32 2131351028, %v6882
        %v6892 = vshrl.u32 2102212464, %v6883
        %v6893 = vor.u32 %v6891, %v6892
        %v6894 = vshll.u32 2102212464, %v6882
        %v6895 = vshrl.u32 920167782, %v6883
        %v6896 = vor.u32 %v6894, %v6895
        %v6897 = vshll.u32 920167782, %v6882
        %v6898 = vshrl.u32 1326507024, %v6883
        %v6899 = vor.u32 %v6897, %v6898
        %vm6900 = vcmp.lt.s32.totalorder %v6881, 1
        %vm6901 = vcmp.lt.s32.totalorder %v6881, 2
        %vm6902 = vcmp.lt.s32.totalorder %v6881, 3
        %vm6903 = vcmp.lt.s32.totalorder %v6881, 4
        %v6904 = vsel %vm6900, %v6884, %v6887
        %v6905 = vsel %vm6903, %v6893, 2102212464
        %v6906 = vsel %vm6902, %v6890, %v6905
        %v6907 = vsel %vm6901, %v6904, %v6906
        %v6908 = vsel %vm6900, %v6887, %v6890
        %v6909 = vsel %vm6903, %v6896, 920167782
        %v6910 = vsel %vm6902, %v6893, %v6909
        %v6911 = vsel %vm6901, %v6908, %v6910
        %v6912 = vsel %vm6900, %v6890, %v6893
        %v6913 = vsel %vm6903, %v6899, 1326507024
        %v6914 = vsel %vm6902, %v6896, %v6913
        %v6915 = vsel %vm6901, %v6912, %v6914
        %v6916 = vshll.u32 %v6876, 8
        %v6917 = vmul.u32.u64.compose %v6916, %v6915
        %v6918 = vextract.low.u32 %v6917
        %v6919 = vextract.high.u32 %v6917
        %v6920 = vmul.u32.u64.compose %v6916, %v6911
        %v6921 = vextract.low.u32 %v6920
        %v6922 = vextract.high.u32 %v6920
        %v6923 = vmul.u32 %v6916, %v6907
        %v6924 = vadd.s32 %v6919, %v6921
        %vm6925 = vc.u32 %v6919, %v6921
        %v6926 = vadd.s32 %v6922, 1
        %v6927 = vsel %vm6925, %v6926, %v6922
        %v6928 = vadd.s32 %v6923, %v6927
        %v6929 = vadd.s32 %v6928, 536870912
        %v6930 = vshrl.u32 %v6929, 30
        %v6931 = vshll.u32 %v6930, 30
        %v6932 = vsub.s32 %v6928, %v6931
        %vm6933 = vcmp.lt.s32.totalorder %v6932, 0
        %v6934 = vsub.s32 0, %v6932
        %v6935 = vsel %vm6933, %v6934, %v6932
        %v6936 = vclz %v6935
        %v6937 = vsub.s32 %v6936, 2
        %vm6938 = vcmp.gt.s32.totalorder 0, %v6937
        %v6939 = vsel %vm6938, 0, %v6937
        %v6940 = vsub.s32 32, %v6939
        %v6941 = vshll.u32 %v6932, %v6939
        %v6942 = vshrl.u32 %v6924, %v6940
        %v6943 = vor.u32 %v6941, %v6942
        %v6944 = vsub.s32 4294967266, %v6939
        %v6945 = vadd.s32 %v6944, 127
        %v6946 = vshll.u32 %v6945, 23
        %v6947 = vor.u32 4788187, %v6946
        %v6948 = vand.u32 2147483647, %v6947
        %v6950 = vcvt.s32.f32 %v6943
        %v6951 = vmul.f32 %v6950, %v6948
        %v6952 = vxor.u32 %v6951, 2147483648
        %v6953 = vsel %vm6870, %v6952, %v6951
        %v6954 = vsub.s32 4, %v6930
        %v6955 = vsel %vm6870, %v6954, %v6930
        %v6956 = vsel %vm6869, %v1162, %v6953
        %v6957 = vsel %vm6869, 0, %v6955
        %v6958 = vcosq.f32.pop %v6956
        %v6959 = vsinq.f32.pop %v6956
        %vm6960 = vweird.f32 %v1162
        %v6961 = vand.u32 %v6957, 3
        %vm6962 = vcmp.lt.s32.totalorder %v6961, 2
        %vm6963 = vcmp.eq.s32.totalorder %v6961, 0
        %v6964 = vxor.u32 %v6959, 2147483648
        %v6965 = vsel %vm6963, %v6958, %v6964
        %vm6966 = vcmp.eq.s32.totalorder %v6961, 2
        %v6967 = vxor.u32 %v6958, 2147483648
        %v6968 = vsel %vm6966, %v6967, %v6959
        %v6969 = vsel %vm6962, %v6965, %v6968
        %v6970 = vsel %vm6960, nan, %v6969
        %v6971 = vand.u32 2147483647, %v1163
        %vm6972 = vcmp.le.f32.partialorder %v6971, 0.7853982
        %vm6973 = vcmp.lt.s32.totalorder %v1163, 0
        %v6974 = vand.u32 %v1163, 2139095040
        %v6975 = vshrl.u32 %v6974, 23
        %v6976 = vsub.s32 %v6975, 127
        %v6977 = vand.u32 2147483647, %v1163
        %v6978 = vand.u32 %v6977, 8388607
        %v6979 = vor.u32 %v6978, 8388608
        %v6980 = vsub.s32 0, %v6979
        %v6981 = vadd.s32 %v6976, 1
        %vm6982 = vcmp.gt.s32.totalorder %v6981, 0
        %v6983 = vsel %vm6982, %v6981, 0
        %v6984 = vshrl.u32 %v6983, 5
        %v6985 = vand.u32 %v6983, 31
        %v6986 = vsub.s32 32, %v6985
        %v6987 = vshrl.u32 683565275, %v6986
        %v6988 = vshll.u32 683565275, %v6985
        %v6989 = vshrl.u32 2475754826, %v6986
        %v6990 = vor.u32 %v6988, %v6989
        %v6991 = vshll.u32 2475754826, %v6985
        %v6992 = vshrl.u32 2131351028, %v6986
        %v6993 = vor.u32 %v6991, %v6992
        %v6994 = vshll.u32 2131351028, %v6985
        %v6995 = vshrl.u32 2102212464, %v6986
        %v6996 = vor.u32 %v6994, %v6995
        %v6997 = vshll.u32 2102212464, %v6985
        %v6998 = vshrl.u32 920167782, %v6986
        %v6999 = vor.u32 %v6997, %v6998
        %v7000 = vshll.u32 920167782, %v6985
        %v7001 = vshrl.u32 1326507024, %v6986
        %v7002 = vor.u32 %v7000, %v7001
        %vm7003 = vcmp.lt.s32.totalorder %v6984, 1
        %vm7004 = vcmp.lt.s32.totalorder %v6984, 2
        %vm7005 = vcmp.lt.s32.totalorder %v6984, 3
        %vm7006 = vcmp.lt.s32.totalorder %v6984, 4
        %v7007 = vsel %vm7003, %v6987, %v6990
        %v7008 = vsel %vm7006, %v6996, 2102212464
        %v7009 = vsel %vm7005, %v6993, %v7008
        %v7010 = vsel %vm7004, %v7007, %v7009
        %v7011 = vsel %vm7003, %v6990, %v6993
        %v7012 = vsel %vm7006, %v6999, 920167782
        %v7013 = vsel %vm7005, %v6996, %v7012
        %v7014 = vsel %vm7004, %v7011, %v7013
        %v7015 = vsel %vm7003, %v6993, %v6996
        %v7016 = vsel %vm7006, %v7002, 1326507024
        %v7017 = vsel %vm7005, %v6999, %v7016
        %v7018 = vsel %vm7004, %v7015, %v7017
        %v7019 = vshll.u32 %v6979, 8
        %v7020 = vmul.u32.u64.compose %v7019, %v7018
        %v7021 = vextract.low.u32 %v7020
        %v7022 = vextract.high.u32 %v7020
        %v7023 = vmul.u32.u64.compose %v7019, %v7014
        %v7024 = vextract.low.u32 %v7023
        %v7025 = vextract.high.u32 %v7023
        %v7026 = vmul.u32 %v7019, %v7010
        %v7027 = vadd.s32 %v7022, %v7024
        %vm7028 = vc.u32 %v7022, %v7024
        %v7029 = vadd.s32 %v7025, 1
        %v7030 = vsel %vm7028, %v7029, %v7025
        %v7031 = vadd.s32 %v7026, %v7030
        %v7032 = vadd.s32 %v7031, 536870912
        %v7033 = vshrl.u32 %v7032, 30
        %v7034 = vshll.u32 %v7033, 30
        %v7035 = vsub.s32 %v7031, %v7034
        %vm7036 = vcmp.lt.s32.totalorder %v7035, 0
        %v7037 = vsub.s32 0, %v7035
        %v7038 = vsel %vm7036, %v7037, %v7035
        %v7039 = vclz %v7038
        %v7040 = vsub.s32 %v7039, 2
        %vm7041 = vcmp.gt.s32.totalorder 0, %v7040
        %v7042 = vsel %vm7041, 0, %v7040
        %v7043 = vsub.s32 32, %v7042
        %v7044 = vshll.u32 %v7035, %v7042
        %v7045 = vshrl.u32 %v7027, %v7043
        %v7046 = vor.u32 %v7044, %v7045
        %v7047 = vsub.s32 4294967266, %v7042
        %v7048 = vadd.s32 %v7047, 127
        %v7049 = vshll.u32 %v7048, 23
        %v7050 = vor.u32 4788187, %v7049
        %v7051 = vand.u32 2147483647, %v7050
        %v7053 = vcvt.s32.f32 %v7046
        %v7054 = vmul.f32 %v7053, %v7051
        %v7055 = vxor.u32 %v7054, 2147483648
        %v7056 = vsel %vm6973, %v7055, %v7054
        %v7057 = vsub.s32 4, %v7033
        %v7058 = vsel %vm6973, %v7057, %v7033
        %v7059 = vsel %vm6972, %v1163, %v7056
        %v7060 = vsel %vm6972, 0, %v7058
        %v7061 = vcosq.f32.pop %v7059
        %v7062 = vsinq.f32.pop %v7059
        %vm7063 = vweird.f32 %v1163
        %v7064 = vand.u32 %v7060, 3
        %vm7065 = vcmp.lt.s32.totalorder %v7064, 2
        %vm7066 = vcmp.eq.s32.totalorder %v7064, 0
        %v7067 = vxor.u32 %v7062, 2147483648
        %v7068 = vsel %vm7066, %v7061, %v7067
        %vm7069 = vcmp.eq.s32.totalorder %v7064, 2
        %v7070 = vxor.u32 %v7061, 2147483648
        %v7071 = vsel %vm7069, %v7070, %v7062
        %v7072 = vsel %vm7065, %v7068, %v7071
        %v7073 = vsel %vm7063, nan, %v7072
        %v7074 = vand.u32 2147483647, %v1164
        %vm7075 = vcmp.le.f32.partialorder %v7074, 0.7853982
        %vm7076 = vcmp.lt.s32.totalorder %v1164, 0
        %v7077 = vand.u32 %v1164, 2139095040
        %v7078 = vshrl.u32 %v7077, 23
        %v7079 = vsub.s32 %v7078, 127
        %v7080 = vand.u32 2147483647, %v1164
        %v7081 = vand.u32 %v7080, 8388607
        %v7082 = vor.u32 %v7081, 8388608
        %v7083 = vsub.s32 0, %v7082
        %v7084 = vadd.s32 %v7079, 1
        %vm7085 = vcmp.gt.s32.totalorder %v7084, 0
        %v7086 = vsel %vm7085, %v7084, 0
        %v7087 = vshrl.u32 %v7086, 5
        %v7088 = vand.u32 %v7086, 31
        %v7089 = vsub.s32 32, %v7088
        %v7090 = vshrl.u32 683565275, %v7089
        %v7091 = vshll.u32 683565275, %v7088
        %v7092 = vshrl.u32 2475754826, %v7089
        %v7093 = vor.u32 %v7091, %v7092
        %v7094 = vshll.u32 2475754826, %v7088
        %v7095 = vshrl.u32 2131351028, %v7089
        %v7096 = vor.u32 %v7094, %v7095
        %v7097 = vshll.u32 2131351028, %v7088
        %v7098 = vshrl.u32 2102212464, %v7089
        %v7099 = vor.u32 %v7097, %v7098
        %v7100 = vshll.u32 2102212464, %v7088
        %v7101 = vshrl.u32 920167782, %v7089
        %v7102 = vor.u32 %v7100, %v7101
        %v7103 = vshll.u32 920167782, %v7088
        %v7104 = vshrl.u32 1326507024, %v7089
        %v7105 = vor.u32 %v7103, %v7104
        %vm7106 = vcmp.lt.s32.totalorder %v7087, 1
        %vm7107 = vcmp.lt.s32.totalorder %v7087, 2
        %vm7108 = vcmp.lt.s32.totalorder %v7087, 3
        %vm7109 = vcmp.lt.s32.totalorder %v7087, 4
        %v7110 = vsel %vm7106, %v7090, %v7093
        %v7111 = vsel %vm7109, %v7099, 2102212464
        %v7112 = vsel %vm7108, %v7096, %v7111
        %v7113 = vsel %vm7107, %v7110, %v7112
        %v7114 = vsel %vm7106, %v7093, %v7096
        %v7115 = vsel %vm7109, %v7102, 920167782
        %v7116 = vsel %vm7108, %v7099, %v7115
        %v7117 = vsel %vm7107, %v7114, %v7116
        %v7118 = vsel %vm7106, %v7096, %v7099
        %v7119 = vsel %vm7109, %v7105, 1326507024
        %v7120 = vsel %vm7108, %v7102, %v7119
        %v7121 = vsel %vm7107, %v7118, %v7120
        %v7122 = vshll.u32 %v7082, 8
        %v7123 = vmul.u32.u64.compose %v7122, %v7121
        %v7124 = vextract.low.u32 %v7123
        %v7125 = vextract.high.u32 %v7123
        %v7126 = vmul.u32.u64.compose %v7122, %v7117
        %v7127 = vextract.low.u32 %v7126
        %v7128 = vextract.high.u32 %v7126
        %v7129 = vmul.u32 %v7122, %v7113
        %v7130 = vadd.s32 %v7125, %v7127
        %vm7131 = vc.u32 %v7125, %v7127
        %v7132 = vadd.s32 %v7128, 1
        %v7133 = vsel %vm7131, %v7132, %v7128
        %v7134 = vadd.s32 %v7129, %v7133
        %v7135 = vadd.s32 %v7134, 536870912
        %v7136 = vshrl.u32 %v7135, 30
        %v7137 = vshll.u32 %v7136, 30
        %v7138 = vsub.s32 %v7134, %v7137
        %vm7139 = vcmp.lt.s32.totalorder %v7138, 0
        %v7140 = vsub.s32 0, %v7138
        %v7141 = vsel %vm7139, %v7140, %v7138
        %v7142 = vclz %v7141
        %v7143 = vsub.s32 %v7142, 2
        %vm7144 = vcmp.gt.s32.totalorder 0, %v7143
        %v7145 = vsel %vm7144, 0, %v7143
        %v7146 = vsub.s32 32, %v7145
        %v7147 = vshll.u32 %v7138, %v7145
        %v7148 = vshrl.u32 %v7130, %v7146
        %v7149 = vor.u32 %v7147, %v7148
        %v7150 = vsub.s32 4294967266, %v7145
        %v7151 = vadd.s32 %v7150, 127
        %v7152 = vshll.u32 %v7151, 23
        %v7153 = vor.u32 4788187, %v7152
        %v7154 = vand.u32 2147483647, %v7153
        %v7156 = vcvt.s32.f32 %v7149
        %v7157 = vmul.f32 %v7156, %v7154
        %v7158 = vxor.u32 %v7157, 2147483648
        %v7159 = vsel %vm7076, %v7158, %v7157
        %v7160 = vsub.s32 4, %v7136
        %v7161 = vsel %vm7076, %v7160, %v7136
        %v7162 = vsel %vm7075, %v1164, %v7159
        %v7163 = vsel %vm7075, 0, %v7161
        %v7164 = vcosq.f32.pop %v7162
        %v7165 = vsinq.f32.pop %v7162
        %vm7166 = vweird.f32 %v1164
        %v7167 = vand.u32 %v7163, 3
        %vm7168 = vcmp.lt.s32.totalorder %v7167, 2
        %vm7169 = vcmp.eq.s32.totalorder %v7167, 0
        %v7170 = vxor.u32 %v7165, 2147483648
        %v7171 = vsel %vm7169, %v7164, %v7170
        %vm7172 = vcmp.eq.s32.totalorder %v7167, 2
        %v7173 = vxor.u32 %v7164, 2147483648
        %v7174 = vsel %vm7172, %v7173, %v7165
        %v7175 = vsel %vm7168, %v7171, %v7174
        %v7176 = vsel %vm7166, nan, %v7175
        %v7177 = vand.u32 2147483647, %v1165
        %vm7178 = vcmp.le.f32.partialorder %v7177, 0.7853982
        %vm7179 = vcmp.lt.s32.totalorder %v1165, 0
        %v7180 = vand.u32 %v1165, 2139095040
        %v7181 = vshrl.u32 %v7180, 23
        %v7182 = vsub.s32 %v7181, 127
        %v7183 = vand.u32 2147483647, %v1165
        %v7184 = vand.u32 %v7183, 8388607
        %v7185 = vor.u32 %v7184, 8388608
        %v7186 = vsub.s32 0, %v7185
        %v7187 = vadd.s32 %v7182, 1
        %vm7188 = vcmp.gt.s32.totalorder %v7187, 0
        %v7189 = vsel %vm7188, %v7187, 0
        %v7190 = vshrl.u32 %v7189, 5
        %v7191 = vand.u32 %v7189, 31
        %v7192 = vsub.s32 32, %v7191
        %v7193 = vshrl.u32 683565275, %v7192
        %v7194 = vshll.u32 683565275, %v7191
        %v7195 = vshrl.u32 2475754826, %v7192
        %v7196 = vor.u32 %v7194, %v7195
        %v7197 = vshll.u32 2475754826, %v7191
        %v7198 = vshrl.u32 2131351028, %v7192
        %v7199 = vor.u32 %v7197, %v7198
        %v7200 = vshll.u32 2131351028, %v7191
        %v7201 = vshrl.u32 2102212464, %v7192
        %v7202 = vor.u32 %v7200, %v7201
        %v7203 = vshll.u32 2102212464, %v7191
        %v7204 = vshrl.u32 920167782, %v7192
        %v7205 = vor.u32 %v7203, %v7204
        %v7206 = vshll.u32 920167782, %v7191
        %v7207 = vshrl.u32 1326507024, %v7192
        %v7208 = vor.u32 %v7206, %v7207
        %vm7209 = vcmp.lt.s32.totalorder %v7190, 1
        %vm7210 = vcmp.lt.s32.totalorder %v7190, 2
        %vm7211 = vcmp.lt.s32.totalorder %v7190, 3
        %vm7212 = vcmp.lt.s32.totalorder %v7190, 4
        %v7213 = vsel %vm7209, %v7193, %v7196
        %v7214 = vsel %vm7212, %v7202, 2102212464
        %v7215 = vsel %vm7211, %v7199, %v7214
        %v7216 = vsel %vm7210, %v7213, %v7215
        %v7217 = vsel %vm7209, %v7196, %v7199
        %v7218 = vsel %vm7212, %v7205, 920167782
        %v7219 = vsel %vm7211, %v7202, %v7218
        %v7220 = vsel %vm7210, %v7217, %v7219
        %v7221 = vsel %vm7209, %v7199, %v7202
        %v7222 = vsel %vm7212, %v7208, 1326507024
        %v7223 = vsel %vm7211, %v7205, %v7222
        %v7224 = vsel %vm7210, %v7221, %v7223
        %v7225 = vshll.u32 %v7185, 8
        %v7226 = vmul.u32.u64.compose %v7225, %v7224
        %v7227 = vextract.low.u32 %v7226
        %v7228 = vextract.high.u32 %v7226
        %v7229 = vmul.u32.u64.compose %v7225, %v7220
        %v7230 = vextract.low.u32 %v7229
        %v7231 = vextract.high.u32 %v7229
        %v7232 = vmul.u32 %v7225, %v7216
        %v7233 = vadd.s32 %v7228, %v7230
        %vm7234 = vc.u32 %v7228, %v7230
        %v7235 = vadd.s32 %v7231, 1
        %v7236 = vsel %vm7234, %v7235, %v7231
        %v7237 = vadd.s32 %v7232, %v7236
        %v7238 = vadd.s32 %v7237, 536870912
        %v7239 = vshrl.u32 %v7238, 30
        %v7240 = vshll.u32 %v7239, 30
        %v7241 = vsub.s32 %v7237, %v7240
        %vm7242 = vcmp.lt.s32.totalorder %v7241, 0
        %v7243 = vsub.s32 0, %v7241
        %v7244 = vsel %vm7242, %v7243, %v7241
        %v7245 = vclz %v7244
        %v7246 = vsub.s32 %v7245, 2
        %vm7247 = vcmp.gt.s32.totalorder 0, %v7246
        %v7248 = vsel %vm7247, 0, %v7246
        %v7249 = vsub.s32 32, %v7248
        %v7250 = vshll.u32 %v7241, %v7248
        %v7251 = vshrl.u32 %v7233, %v7249
        %v7252 = vor.u32 %v7250, %v7251
        %v7253 = vsub.s32 4294967266, %v7248
        %v7254 = vadd.s32 %v7253, 127
        %v7255 = vshll.u32 %v7254, 23
        %v7256 = vor.u32 4788187, %v7255
        %v7257 = vand.u32 2147483647, %v7256
        %v7259 = vcvt.s32.f32 %v7252
        %v7260 = vmul.f32 %v7259, %v7257
        %v7261 = vxor.u32 %v7260, 2147483648
        %v7262 = vsel %vm7179, %v7261, %v7260
        %v7263 = vsub.s32 4, %v7239
        %v7264 = vsel %vm7179, %v7263, %v7239
        %v7265 = vsel %vm7178, %v1165, %v7262
        %v7266 = vsel %vm7178, 0, %v7264
        %v7267 = vcosq.f32.pop %v7265
        %v7268 = vsinq.f32.pop %v7265
        %vm7269 = vweird.f32 %v1165
        %v7270 = vand.u32 %v7266, 3
        %vm7271 = vcmp.lt.s32.totalorder %v7270, 2
        %vm7272 = vcmp.eq.s32.totalorder %v7270, 0
        %v7273 = vxor.u32 %v7268, 2147483648
        %v7274 = vsel %vm7272, %v7267, %v7273
        %vm7275 = vcmp.eq.s32.totalorder %v7270, 2
        %v7276 = vxor.u32 %v7267, 2147483648
        %v7277 = vsel %vm7275, %v7276, %v7268
        %v7278 = vsel %vm7271, %v7274, %v7277
        %v7279 = vsel %vm7269, nan, %v7278
        %v7280 = vand.u32 2147483647, %v1166
        %vm7281 = vcmp.le.f32.partialorder %v7280, 0.7853982
        %vm7282 = vcmp.lt.s32.totalorder %v1166, 0
        %v7283 = vand.u32 %v1166, 2139095040
        %v7284 = vshrl.u32 %v7283, 23
        %v7285 = vsub.s32 %v7284, 127
        %v7286 = vand.u32 2147483647, %v1166
        %v7287 = vand.u32 %v7286, 8388607
        %v7288 = vor.u32 %v7287, 8388608
        %v7289 = vsub.s32 0, %v7288
        %v7290 = vadd.s32 %v7285, 1
        %vm7291 = vcmp.gt.s32.totalorder %v7290, 0
        %v7292 = vsel %vm7291, %v7290, 0
        %v7293 = vshrl.u32 %v7292, 5
        %v7294 = vand.u32 %v7292, 31
        %v7295 = vsub.s32 32, %v7294
        %v7296 = vshrl.u32 683565275, %v7295
        %v7297 = vshll.u32 683565275, %v7294
        %v7298 = vshrl.u32 2475754826, %v7295
        %v7299 = vor.u32 %v7297, %v7298
        %v7300 = vshll.u32 2475754826, %v7294
        %v7301 = vshrl.u32 2131351028, %v7295
        %v7302 = vor.u32 %v7300, %v7301
        %v7303 = vshll.u32 2131351028, %v7294
        %v7304 = vshrl.u32 2102212464, %v7295
        %v7305 = vor.u32 %v7303, %v7304
        %v7306 = vshll.u32 2102212464, %v7294
        %v7307 = vshrl.u32 920167782, %v7295
        %v7308 = vor.u32 %v7306, %v7307
        %v7309 = vshll.u32 920167782, %v7294
        %v7310 = vshrl.u32 1326507024, %v7295
        %v7311 = vor.u32 %v7309, %v7310
        %vm7312 = vcmp.lt.s32.totalorder %v7293, 1
        %vm7313 = vcmp.lt.s32.totalorder %v7293, 2
        %vm7314 = vcmp.lt.s32.totalorder %v7293, 3
        %vm7315 = vcmp.lt.s32.totalorder %v7293, 4
        %v7316 = vsel %vm7312, %v7296, %v7299
        %v7317 = vsel %vm7315, %v7305, 2102212464
        %v7318 = vsel %vm7314, %v7302, %v7317
        %v7319 = vsel %vm7313, %v7316, %v7318
        %v7320 = vsel %vm7312, %v7299, %v7302
        %v7321 = vsel %vm7315, %v7308, 920167782
        %v7322 = vsel %vm7314, %v7305, %v7321
        %v7323 = vsel %vm7313, %v7320, %v7322
        %v7324 = vsel %vm7312, %v7302, %v7305
        %v7325 = vsel %vm7315, %v7311, 1326507024
        %v7326 = vsel %vm7314, %v7308, %v7325
        %v7327 = vsel %vm7313, %v7324, %v7326
        %v7328 = vshll.u32 %v7288, 8
        %v7329 = vmul.u32.u64.compose %v7328, %v7327
        %v7330 = vextract.low.u32 %v7329
        %v7331 = vextract.high.u32 %v7329
        %v7332 = vmul.u32.u64.compose %v7328, %v7323
        %v7333 = vextract.low.u32 %v7332
        %v7334 = vextract.high.u32 %v7332
        %v7335 = vmul.u32 %v7328, %v7319
        %v7336 = vadd.s32 %v7331, %v7333
        %vm7337 = vc.u32 %v7331, %v7333
        %v7338 = vadd.s32 %v7334, 1
        %v7339 = vsel %vm7337, %v7338, %v7334
        %v7340 = vadd.s32 %v7335, %v7339
        %v7341 = vadd.s32 %v7340, 536870912
        %v7342 = vshrl.u32 %v7341, 30
        %v7343 = vshll.u32 %v7342, 30
        %v7344 = vsub.s32 %v7340, %v7343
        %vm7345 = vcmp.lt.s32.totalorder %v7344, 0
        %v7346 = vsub.s32 0, %v7344
        %v7347 = vsel %vm7345, %v7346, %v7344
        %v7348 = vclz %v7347
        %v7349 = vsub.s32 %v7348, 2
        %vm7350 = vcmp.gt.s32.totalorder 0, %v7349
        %v7351 = vsel %vm7350, 0, %v7349
        %v7352 = vsub.s32 32, %v7351
        %v7353 = vshll.u32 %v7344, %v7351
        %v7354 = vshrl.u32 %v7336, %v7352
        %v7355 = vor.u32 %v7353, %v7354
        %v7356 = vsub.s32 4294967266, %v7351
        %v7357 = vadd.s32 %v7356, 127
        %v7358 = vshll.u32 %v7357, 23
        %v7359 = vor.u32 4788187, %v7358
        %v7360 = vand.u32 2147483647, %v7359
        %v7362 = vcvt.s32.f32 %v7355
        %v7363 = vmul.f32 %v7362, %v7360
        %v7364 = vxor.u32 %v7363, 2147483648
        %v7365 = vsel %vm7282, %v7364, %v7363
        %v7366 = vsub.s32 4, %v7342
        %v7367 = vsel %vm7282, %v7366, %v7342
        %v7368 = vsel %vm7281, %v1166, %v7365
        %v7369 = vsel %vm7281, 0, %v7367
        %v7370 = vcosq.f32.pop %v7368
        %v7371 = vsinq.f32.pop %v7368
        %vm7372 = vweird.f32 %v1166
        %v7373 = vand.u32 %v7369, 3
        %vm7374 = vcmp.lt.s32.totalorder %v7373, 2
        %vm7375 = vcmp.eq.s32.totalorder %v7373, 0
        %v7376 = vxor.u32 %v7371, 2147483648
        %v7377 = vsel %vm7375, %v7370, %v7376
        %vm7378 = vcmp.eq.s32.totalorder %v7373, 2
        %v7379 = vxor.u32 %v7370, 2147483648
        %v7380 = vsel %vm7378, %v7379, %v7371
        %v7381 = vsel %vm7374, %v7377, %v7380
        %v7382 = vsel %vm7372, nan, %v7381
        %v7383 = vand.u32 2147483647, %v1167
        %vm7384 = vcmp.le.f32.partialorder %v7383, 0.7853982
        %vm7385 = vcmp.lt.s32.totalorder %v1167, 0
        %v7386 = vand.u32 %v1167, 2139095040
        %v7387 = vshrl.u32 %v7386, 23
        %v7388 = vsub.s32 %v7387, 127
        %v7389 = vand.u32 2147483647, %v1167
        %v7390 = vand.u32 %v7389, 8388607
        %v7391 = vor.u32 %v7390, 8388608
        %v7392 = vsub.s32 0, %v7391
        %v7393 = vadd.s32 %v7388, 1
        %vm7394 = vcmp.gt.s32.totalorder %v7393, 0
        %v7395 = vsel %vm7394, %v7393, 0
        %v7396 = vshrl.u32 %v7395, 5
        %v7397 = vand.u32 %v7395, 31
        %v7398 = vsub.s32 32, %v7397
        %v7399 = vshrl.u32 683565275, %v7398
        %v7400 = vshll.u32 683565275, %v7397
        %v7401 = vshrl.u32 2475754826, %v7398
        %v7402 = vor.u32 %v7400, %v7401
        %v7403 = vshll.u32 2475754826, %v7397
        %v7404 = vshrl.u32 2131351028, %v7398
        %v7405 = vor.u32 %v7403, %v7404
        %v7406 = vshll.u32 2131351028, %v7397
        %v7407 = vshrl.u32 2102212464, %v7398
        %v7408 = vor.u32 %v7406, %v7407
        %v7409 = vshll.u32 2102212464, %v7397
        %v7410 = vshrl.u32 920167782, %v7398
        %v7411 = vor.u32 %v7409, %v7410
        %v7412 = vshll.u32 920167782, %v7397
        %v7413 = vshrl.u32 1326507024, %v7398
        %v7414 = vor.u32 %v7412, %v7413
        %vm7415 = vcmp.lt.s32.totalorder %v7396, 1
        %vm7416 = vcmp.lt.s32.totalorder %v7396, 2
        %vm7417 = vcmp.lt.s32.totalorder %v7396, 3
        %vm7418 = vcmp.lt.s32.totalorder %v7396, 4
        %v7419 = vsel %vm7415, %v7399, %v7402
        %v7420 = vsel %vm7418, %v7408, 2102212464
        %v7421 = vsel %vm7417, %v7405, %v7420
        %v7422 = vsel %vm7416, %v7419, %v7421
        %v7423 = vsel %vm7415, %v7402, %v7405
        %v7424 = vsel %vm7418, %v7411, 920167782
        %v7425 = vsel %vm7417, %v7408, %v7424
        %v7426 = vsel %vm7416, %v7423, %v7425
        %v7427 = vsel %vm7415, %v7405, %v7408
        %v7428 = vsel %vm7418, %v7414, 1326507024
        %v7429 = vsel %vm7417, %v7411, %v7428
        %v7430 = vsel %vm7416, %v7427, %v7429
        %v7431 = vshll.u32 %v7391, 8
        %v7432 = vmul.u32.u64.compose %v7431, %v7430
        %v7433 = vextract.low.u32 %v7432
        %v7434 = vextract.high.u32 %v7432
        %v7435 = vmul.u32.u64.compose %v7431, %v7426
        %v7436 = vextract.low.u32 %v7435
        %v7437 = vextract.high.u32 %v7435
        %v7438 = vmul.u32 %v7431, %v7422
        %v7439 = vadd.s32 %v7434, %v7436
        %vm7440 = vc.u32 %v7434, %v7436
        %v7441 = vadd.s32 %v7437, 1
        %v7442 = vsel %vm7440, %v7441, %v7437
        %v7443 = vadd.s32 %v7438, %v7442
        %v7444 = vadd.s32 %v7443, 536870912
        %v7445 = vshrl.u32 %v7444, 30
        %v7446 = vshll.u32 %v7445, 30
        %v7447 = vsub.s32 %v7443, %v7446
        %vm7448 = vcmp.lt.s32.totalorder %v7447, 0
        %v7449 = vsub.s32 0, %v7447
        %v7450 = vsel %vm7448, %v7449, %v7447
        %v7451 = vclz %v7450
        %v7452 = vsub.s32 %v7451, 2
        %vm7453 = vcmp.gt.s32.totalorder 0, %v7452
        %v7454 = vsel %vm7453, 0, %v7452
        %v7455 = vsub.s32 32, %v7454
        %v7456 = vshll.u32 %v7447, %v7454
        %v7457 = vshrl.u32 %v7439, %v7455
        %v7458 = vor.u32 %v7456, %v7457
        %v7459 = vsub.s32 4294967266, %v7454
        %v7460 = vadd.s32 %v7459, 127
        %v7461 = vshll.u32 %v7460, 23
        %v7462 = vor.u32 4788187, %v7461
        %v7463 = vand.u32 2147483647, %v7462
        %v7465 = vcvt.s32.f32 %v7458
        %v7466 = vmul.f32 %v7465, %v7463
        %v7467 = vxor.u32 %v7466, 2147483648
        %v7468 = vsel %vm7385, %v7467, %v7466
        %v7469 = vsub.s32 4, %v7445
        %v7470 = vsel %vm7385, %v7469, %v7445
        %v7471 = vsel %vm7384, %v1167, %v7468
        %v7472 = vsel %vm7384, 0, %v7470
        %v7473 = vcosq.f32.pop %v7471
        %v7474 = vsinq.f32.pop %v7471
        %vm7475 = vweird.f32 %v1167
        %v7476 = vand.u32 %v7472, 3
        %vm7477 = vcmp.lt.s32.totalorder %v7476, 2
        %vm7478 = vcmp.eq.s32.totalorder %v7476, 0
        %v7479 = vxor.u32 %v7474, 2147483648
        %v7480 = vsel %vm7478, %v7473, %v7479
        %vm7481 = vcmp.eq.s32.totalorder %v7476, 2
        %v7482 = vxor.u32 %v7473, 2147483648
        %v7483 = vsel %vm7481, %v7482, %v7474
        %v7484 = vsel %vm7477, %v7480, %v7483
        %v7485 = vsel %vm7475, nan, %v7484
        %v7486 = vand.u32 2147483647, %v1168
        %vm7487 = vcmp.le.f32.partialorder %v7486, 0.7853982
        %vm7488 = vcmp.lt.s32.totalorder %v1168, 0
        %v7489 = vand.u32 %v1168, 2139095040
        %v7490 = vshrl.u32 %v7489, 23
        %v7491 = vsub.s32 %v7490, 127
        %v7492 = vand.u32 2147483647, %v1168
        %v7493 = vand.u32 %v7492, 8388607
        %v7494 = vor.u32 %v7493, 8388608
        %v7495 = vsub.s32 0, %v7494
        %v7496 = vadd.s32 %v7491, 1
        %vm7497 = vcmp.gt.s32.totalorder %v7496, 0
        %v7498 = vsel %vm7497, %v7496, 0
        %v7499 = vshrl.u32 %v7498, 5
        %v7500 = vand.u32 %v7498, 31
        %v7501 = vsub.s32 32, %v7500
        %v7502 = vshrl.u32 683565275, %v7501
        %v7503 = vshll.u32 683565275, %v7500
        %v7504 = vshrl.u32 2475754826, %v7501
        %v7505 = vor.u32 %v7503, %v7504
        %v7506 = vshll.u32 2475754826, %v7500
        %v7507 = vshrl.u32 2131351028, %v7501
        %v7508 = vor.u32 %v7506, %v7507
        %v7509 = vshll.u32 2131351028, %v7500
        %v7510 = vshrl.u32 2102212464, %v7501
        %v7511 = vor.u32 %v7509, %v7510
        %v7512 = vshll.u32 2102212464, %v7500
        %v7513 = vshrl.u32 920167782, %v7501
        %v7514 = vor.u32 %v7512, %v7513
        %v7515 = vshll.u32 920167782, %v7500
        %v7516 = vshrl.u32 1326507024, %v7501
        %v7517 = vor.u32 %v7515, %v7516
        %vm7518 = vcmp.lt.s32.totalorder %v7499, 1
        %vm7519 = vcmp.lt.s32.totalorder %v7499, 2
        %vm7520 = vcmp.lt.s32.totalorder %v7499, 3
        %vm7521 = vcmp.lt.s32.totalorder %v7499, 4
        %v7522 = vsel %vm7518, %v7502, %v7505
        %v7523 = vsel %vm7521, %v7511, 2102212464
        %v7524 = vsel %vm7520, %v7508, %v7523
        %v7525 = vsel %vm7519, %v7522, %v7524
        %v7526 = vsel %vm7518, %v7505, %v7508
        %v7527 = vsel %vm7521, %v7514, 920167782
        %v7528 = vsel %vm7520, %v7511, %v7527
        %v7529 = vsel %vm7519, %v7526, %v7528
        %v7530 = vsel %vm7518, %v7508, %v7511
        %v7531 = vsel %vm7521, %v7517, 1326507024
        %v7532 = vsel %vm7520, %v7514, %v7531
        %v7533 = vsel %vm7519, %v7530, %v7532
        %v7534 = vshll.u32 %v7494, 8
        %v7535 = vmul.u32.u64.compose %v7534, %v7533
        %v7536 = vextract.low.u32 %v7535
        %v7537 = vextract.high.u32 %v7535
        %v7538 = vmul.u32.u64.compose %v7534, %v7529
        %v7539 = vextract.low.u32 %v7538
        %v7540 = vextract.high.u32 %v7538
        %v7541 = vmul.u32 %v7534, %v7525
        %v7542 = vadd.s32 %v7537, %v7539
        %vm7543 = vc.u32 %v7537, %v7539
        %v7544 = vadd.s32 %v7540, 1
        %v7545 = vsel %vm7543, %v7544, %v7540
        %v7546 = vadd.s32 %v7541, %v7545
        %v7547 = vadd.s32 %v7546, 536870912
        %v7548 = vshrl.u32 %v7547, 30
        %v7549 = vshll.u32 %v7548, 30
        %v7550 = vsub.s32 %v7546, %v7549
        %vm7551 = vcmp.lt.s32.totalorder %v7550, 0
        %v7552 = vsub.s32 0, %v7550
        %v7553 = vsel %vm7551, %v7552, %v7550
        %v7554 = vclz %v7553
        %v7555 = vsub.s32 %v7554, 2
        %vm7556 = vcmp.gt.s32.totalorder 0, %v7555
        %v7557 = vsel %vm7556, 0, %v7555
        %v7558 = vsub.s32 32, %v7557
        %v7559 = vshll.u32 %v7550, %v7557
        %v7560 = vshrl.u32 %v7542, %v7558
        %v7561 = vor.u32 %v7559, %v7560
        %v7562 = vsub.s32 4294967266, %v7557
        %v7563 = vadd.s32 %v7562, 127
        %v7564 = vshll.u32 %v7563, 23
        %v7565 = vor.u32 4788187, %v7564
        %v7566 = vand.u32 2147483647, %v7565
        %v7568 = vcvt.s32.f32 %v7561
        %v7569 = vmul.f32 %v7568, %v7566
        %v7570 = vxor.u32 %v7569, 2147483648
        %v7571 = vsel %vm7488, %v7570, %v7569
        %v7572 = vsub.s32 4, %v7548
        %v7573 = vsel %vm7488, %v7572, %v7548
        %v7574 = vsel %vm7487, %v1168, %v7571
        %v7575 = vsel %vm7487, 0, %v7573
        %v7576 = vcosq.f32.pop %v7574
        %v7577 = vsinq.f32.pop %v7574
        %vm7578 = vweird.f32 %v1168
        %v7579 = vand.u32 %v7575, 3
        %vm7580 = vcmp.lt.s32.totalorder %v7579, 2
        %vm7581 = vcmp.eq.s32.totalorder %v7579, 0
        %v7582 = vxor.u32 %v7577, 2147483648
        %v7583 = vsel %vm7581, %v7576, %v7582
        %vm7584 = vcmp.eq.s32.totalorder %v7579, 2
        %v7585 = vxor.u32 %v7576, 2147483648
        %v7586 = vsel %vm7584, %v7585, %v7577
        %v7587 = vsel %vm7580, %v7583, %v7586
        %v7588 = vsel %vm7578, nan, %v7587
        %v7589 = vand.u32 2147483647, %v1169
        %vm7590 = vcmp.le.f32.partialorder %v7589, 0.7853982
        %vm7591 = vcmp.lt.s32.totalorder %v1169, 0
        %v7592 = vand.u32 %v1169, 2139095040
        %v7593 = vshrl.u32 %v7592, 23
        %v7594 = vsub.s32 %v7593, 127
        %v7595 = vand.u32 2147483647, %v1169
        %v7596 = vand.u32 %v7595, 8388607
        %v7597 = vor.u32 %v7596, 8388608
        %v7598 = vsub.s32 0, %v7597
        %v7599 = vadd.s32 %v7594, 1
        %vm7600 = vcmp.gt.s32.totalorder %v7599, 0
        %v7601 = vsel %vm7600, %v7599, 0
        %v7602 = vshrl.u32 %v7601, 5
        %v7603 = vand.u32 %v7601, 31
        %v7604 = vsub.s32 32, %v7603
        %v7605 = vshrl.u32 683565275, %v7604
        %v7606 = vshll.u32 683565275, %v7603
        %v7607 = vshrl.u32 2475754826, %v7604
        %v7608 = vor.u32 %v7606, %v7607
        %v7609 = vshll.u32 2475754826, %v7603
        %v7610 = vshrl.u32 2131351028, %v7604
        %v7611 = vor.u32 %v7609, %v7610
        %v7612 = vshll.u32 2131351028, %v7603
        %v7613 = vshrl.u32 2102212464, %v7604
        %v7614 = vor.u32 %v7612, %v7613
        %v7615 = vshll.u32 2102212464, %v7603
        %v7616 = vshrl.u32 920167782, %v7604
        %v7617 = vor.u32 %v7615, %v7616
        %v7618 = vshll.u32 920167782, %v7603
        %v7619 = vshrl.u32 1326507024, %v7604
        %v7620 = vor.u32 %v7618, %v7619
        %vm7621 = vcmp.lt.s32.totalorder %v7602, 1
        %vm7622 = vcmp.lt.s32.totalorder %v7602, 2
        %vm7623 = vcmp.lt.s32.totalorder %v7602, 3
        %vm7624 = vcmp.lt.s32.totalorder %v7602, 4
        %v7625 = vsel %vm7621, %v7605, %v7608
        %v7626 = vsel %vm7624, %v7614, 2102212464
        %v7627 = vsel %vm7623, %v7611, %v7626
        %v7628 = vsel %vm7622, %v7625, %v7627
        %v7629 = vsel %vm7621, %v7608, %v7611
        %v7630 = vsel %vm7624, %v7617, 920167782
        %v7631 = vsel %vm7623, %v7614, %v7630
        %v7632 = vsel %vm7622, %v7629, %v7631
        %v7633 = vsel %vm7621, %v7611, %v7614
        %v7634 = vsel %vm7624, %v7620, 1326507024
        %v7635 = vsel %vm7623, %v7617, %v7634
        %v7636 = vsel %vm7622, %v7633, %v7635
        %v7637 = vshll.u32 %v7597, 8
        %v7638 = vmul.u32.u64.compose %v7637, %v7636
        %v7639 = vextract.low.u32 %v7638
        %v7640 = vextract.high.u32 %v7638
        %v7641 = vmul.u32.u64.compose %v7637, %v7632
        %v7642 = vextract.low.u32 %v7641
        %v7643 = vextract.high.u32 %v7641
        %v7644 = vmul.u32 %v7637, %v7628
        %v7645 = vadd.s32 %v7640, %v7642
        %vm7646 = vc.u32 %v7640, %v7642
        %v7647 = vadd.s32 %v7643, 1
        %v7648 = vsel %vm7646, %v7647, %v7643
        %v7649 = vadd.s32 %v7644, %v7648
        %v7650 = vadd.s32 %v7649, 536870912
        %v7651 = vshrl.u32 %v7650, 30
        %v7652 = vshll.u32 %v7651, 30
        %v7653 = vsub.s32 %v7649, %v7652
        %vm7654 = vcmp.lt.s32.totalorder %v7653, 0
        %v7655 = vsub.s32 0, %v7653
        %v7656 = vsel %vm7654, %v7655, %v7653
        %v7657 = vclz %v7656
        %v7658 = vsub.s32 %v7657, 2
        %vm7659 = vcmp.gt.s32.totalorder 0, %v7658
        %v7660 = vsel %vm7659, 0, %v7658
        %v7661 = vsub.s32 32, %v7660
        %v7662 = vshll.u32 %v7653, %v7660
        %v7663 = vshrl.u32 %v7645, %v7661
        %v7664 = vor.u32 %v7662, %v7663
        %v7665 = vsub.s32 4294967266, %v7660
        %v7666 = vadd.s32 %v7665, 127
        %v7667 = vshll.u32 %v7666, 23
        %v7668 = vor.u32 4788187, %v7667
        %v7669 = vand.u32 2147483647, %v7668
        %v7671 = vcvt.s32.f32 %v7664
        %v7672 = vmul.f32 %v7671, %v7669
        %v7673 = vxor.u32 %v7672, 2147483648
        %v7674 = vsel %vm7591, %v7673, %v7672
        %v7675 = vsub.s32 4, %v7651
        %v7676 = vsel %vm7591, %v7675, %v7651
        %v7677 = vsel %vm7590, %v1169, %v7674
        %v7678 = vsel %vm7590, 0, %v7676
        %v7679 = vcosq.f32.pop %v7677
        %v7680 = vsinq.f32.pop %v7677
        %vm7681 = vweird.f32 %v1169
        %v7682 = vand.u32 %v7678, 3
        %vm7683 = vcmp.lt.s32.totalorder %v7682, 2
        %vm7684 = vcmp.eq.s32.totalorder %v7682, 0
        %v7685 = vxor.u32 %v7680, 2147483648
        %v7686 = vsel %vm7684, %v7679, %v7685
        %vm7687 = vcmp.eq.s32.totalorder %v7682, 2
        %v7688 = vxor.u32 %v7679, 2147483648
        %v7689 = vsel %vm7687, %v7688, %v7680
        %v7690 = vsel %vm7683, %v7686, %v7689
        %v7691 = vsel %vm7681, nan, %v7690
        %v7692 = vand.u32 2147483647, %v1170
        %vm7693 = vcmp.le.f32.partialorder %v7692, 0.7853982
        %vm7694 = vcmp.lt.s32.totalorder %v1170, 0
        %v7695 = vand.u32 %v1170, 2139095040
        %v7696 = vshrl.u32 %v7695, 23
        %v7697 = vsub.s32 %v7696, 127
        %v7698 = vand.u32 2147483647, %v1170
        %v7699 = vand.u32 %v7698, 8388607
        %v7700 = vor.u32 %v7699, 8388608
        %v7701 = vsub.s32 0, %v7700
        %v7702 = vadd.s32 %v7697, 1
        %vm7703 = vcmp.gt.s32.totalorder %v7702, 0
        %v7704 = vsel %vm7703, %v7702, 0
        %v7705 = vshrl.u32 %v7704, 5
        %v7706 = vand.u32 %v7704, 31
        %v7707 = vsub.s32 32, %v7706
        %v7708 = vshrl.u32 683565275, %v7707
        %v7709 = vshll.u32 683565275, %v7706
        %v7710 = vshrl.u32 2475754826, %v7707
        %v7711 = vor.u32 %v7709, %v7710
        %v7712 = vshll.u32 2475754826, %v7706
        %v7713 = vshrl.u32 2131351028, %v7707
        %v7714 = vor.u32 %v7712, %v7713
        %v7715 = vshll.u32 2131351028, %v7706
        %v7716 = vshrl.u32 2102212464, %v7707
        %v7717 = vor.u32 %v7715, %v7716
        %v7718 = vshll.u32 2102212464, %v7706
        %v7719 = vshrl.u32 920167782, %v7707
        %v7720 = vor.u32 %v7718, %v7719
        %v7721 = vshll.u32 920167782, %v7706
        %v7722 = vshrl.u32 1326507024, %v7707
        %v7723 = vor.u32 %v7721, %v7722
        %vm7724 = vcmp.lt.s32.totalorder %v7705, 1
        %vm7725 = vcmp.lt.s32.totalorder %v7705, 2
        %vm7726 = vcmp.lt.s32.totalorder %v7705, 3
        %vm7727 = vcmp.lt.s32.totalorder %v7705, 4
        %v7728 = vsel %vm7724, %v7708, %v7711
        %v7729 = vsel %vm7727, %v7717, 2102212464
        %v7730 = vsel %vm7726, %v7714, %v7729
        %v7731 = vsel %vm7725, %v7728, %v7730
        %v7732 = vsel %vm7724, %v7711, %v7714
        %v7733 = vsel %vm7727, %v7720, 920167782
        %v7734 = vsel %vm7726, %v7717, %v7733
        %v7735 = vsel %vm7725, %v7732, %v7734
        %v7736 = vsel %vm7724, %v7714, %v7717
        %v7737 = vsel %vm7727, %v7723, 1326507024
        %v7738 = vsel %vm7726, %v7720, %v7737
        %v7739 = vsel %vm7725, %v7736, %v7738
        %v7740 = vshll.u32 %v7700, 8
        %v7741 = vmul.u32.u64.compose %v7740, %v7739
        %v7742 = vextract.low.u32 %v7741
        %v7743 = vextract.high.u32 %v7741
        %v7744 = vmul.u32.u64.compose %v7740, %v7735
        %v7745 = vextract.low.u32 %v7744
        %v7746 = vextract.high.u32 %v7744
        %v7747 = vmul.u32 %v7740, %v7731
        %v7748 = vadd.s32 %v7743, %v7745
        %vm7749 = vc.u32 %v7743, %v7745
        %v7750 = vadd.s32 %v7746, 1
        %v7751 = vsel %vm7749, %v7750, %v7746
        %v7752 = vadd.s32 %v7747, %v7751
        %v7753 = vadd.s32 %v7752, 536870912
        %v7754 = vshrl.u32 %v7753, 30
        %v7755 = vshll.u32 %v7754, 30
        %v7756 = vsub.s32 %v7752, %v7755
        %vm7757 = vcmp.lt.s32.totalorder %v7756, 0
        %v7758 = vsub.s32 0, %v7756
        %v7759 = vsel %vm7757, %v7758, %v7756
        %v7760 = vclz %v7759
        %v7761 = vsub.s32 %v7760, 2
        %vm7762 = vcmp.gt.s32.totalorder 0, %v7761
        %v7763 = vsel %vm7762, 0, %v7761
        %v7764 = vsub.s32 32, %v7763
        %v7765 = vshll.u32 %v7756, %v7763
        %v7766 = vshrl.u32 %v7748, %v7764
        %v7767 = vor.u32 %v7765, %v7766
        %v7768 = vsub.s32 4294967266, %v7763
        %v7769 = vadd.s32 %v7768, 127
        %v7770 = vshll.u32 %v7769, 23
        %v7771 = vor.u32 4788187, %v7770
        %v7772 = vand.u32 2147483647, %v7771
        %v7774 = vcvt.s32.f32 %v7767
        %v7775 = vmul.f32 %v7774, %v7772
        %v7776 = vxor.u32 %v7775, 2147483648
        %v7777 = vsel %vm7694, %v7776, %v7775
        %v7778 = vsub.s32 4, %v7754
        %v7779 = vsel %vm7694, %v7778, %v7754
        %v7780 = vsel %vm7693, %v1170, %v7777
        %v7781 = vsel %vm7693, 0, %v7779
        %v7782 = vcosq.f32.pop %v7780
        %v7783 = vsinq.f32.pop %v7780
        %vm7784 = vweird.f32 %v1170
        %v7785 = vand.u32 %v7781, 3
        %vm7786 = vcmp.lt.s32.totalorder %v7785, 2
        %vm7787 = vcmp.eq.s32.totalorder %v7785, 0
        %v7788 = vxor.u32 %v7783, 2147483648
        %v7789 = vsel %vm7787, %v7782, %v7788
        %vm7790 = vcmp.eq.s32.totalorder %v7785, 2
        %v7791 = vxor.u32 %v7782, 2147483648
        %v7792 = vsel %vm7790, %v7791, %v7783
        %v7793 = vsel %vm7786, %v7789, %v7792
        %v7794 = vsel %vm7784, nan, %v7793
        %v7795 = vpack.c.bf16 %v1378, %v1274
        %v7796 = vpack.c.bf16 %v4704, %v4601
        %v7797 = vpack.c.bf16 %v1586, %v1482
        %v7798 = vpack.c.bf16 %v4910, %v4807
        %v7799 = vpack.c.bf16 %v1794, %v1690
        %v7800 = vpack.c.bf16 %v5116, %v5013
        %v7801 = vpack.c.bf16 %v2002, %v1898
        %v7802 = vpack.c.bf16 %v5322, %v5219
        %v7803 = vpack.c.bf16 %v2210, %v2106
        %v7804 = vpack.c.bf16 %v5528, %v5425
        %v7805 = vpack.c.bf16 %v2418, %v2314
        %v7806 = vpack.c.bf16 %v5734, %v5631
        %v7807 = vpack.c.bf16 %v2626, %v2522
        %v7808 = vpack.c.bf16 %v5940, %v5837
        %v7809 = vpack.c.bf16 %v2834, %v2730
        %v7810 = vpack.c.bf16 %v6146, %v6043
        %v7811 = vpack.c.bf16 %v3042, %v2938
        %v7812 = vpack.c.bf16 %v6352, %v6249
        %v7813 = vpack.c.bf16 %v3250, %v3146
        %v7814 = vpack.c.bf16 %v6558, %v6455
        %v7815 = vpack.c.bf16 %v3458, %v3354
        %v7816 = vpack.c.bf16 %v6764, %v6661
        %v7817 = vpack.c.bf16 %v3666, %v3562
        %v7818 = vpack.c.bf16 %v6970, %v6867
        %v7819 = vpack.c.bf16 %v3874, %v3770
        %v7820 = vpack.c.bf16 %v7176, %v7073
        %v7821 = vpack.c.bf16 %v4082, %v3978
        %v7822 = vpack.c.bf16 %v7382, %v7279
        %v7823 = vpack.c.bf16 %v4290, %v4186
        %v7824 = vpack.c.bf16 %v7588, %v7485
        %v7825 = vpack.c.bf16 %v4498, %v4394
        %v7826 = vpack.c.bf16 %v7794, %v7691
        %v7859 = vunpack.c.l.b16 %v7795
        %v7860 = vunpack.c.l.b16 %v7796
        %v7861 = vunpack.c.h.b16 %v7795
        %v7862 = vunpack.c.h.b16 %v7796
        %v7863 = vunpack.c.l.b16 %v7797
        %v7864 = vunpack.c.l.b16 %v7798
        %v7865 = vunpack.c.h.b16 %v7797
        %v7866 = vunpack.c.h.b16 %v7798
        %v7867 = vunpack.c.l.b16 %v7799
        %v7868 = vunpack.c.l.b16 %v7800
        %v7869 = vunpack.c.h.b16 %v7799
        %v7870 = vunpack.c.h.b16 %v7800
        %v7871 = vunpack.c.l.b16 %v7801
        %v7872 = vunpack.c.l.b16 %v7802
        %v7873 = vunpack.c.h.b16 %v7801
        %v7874 = vunpack.c.h.b16 %v7802
        %v7875 = vunpack.c.l.b16 %v7803
        %v7876 = vunpack.c.l.b16 %v7804
        %v7877 = vunpack.c.h.b16 %v7803
        %v7878 = vunpack.c.h.b16 %v7804
        %v7879 = vunpack.c.l.b16 %v7805
        %v7880 = vunpack.c.l.b16 %v7806
        %v7881 = vunpack.c.h.b16 %v7805
        %v7882 = vunpack.c.h.b16 %v7806
        %v7883 = vunpack.c.l.b16 %v7807
        %v7884 = vunpack.c.l.b16 %v7808
        %v7885 = vunpack.c.h.b16 %v7807
        %v7886 = vunpack.c.h.b16 %v7808
        %v7887 = vunpack.c.l.b16 %v7809
        %v7888 = vunpack.c.l.b16 %v7810
        %v7889 = vunpack.c.h.b16 %v7809
        %v7890 = vunpack.c.h.b16 %v7810
        %v7891 = vunpack.c.l.b16 %v7811
        %v7892 = vunpack.c.l.b16 %v7812
        %v7893 = vunpack.c.h.b16 %v7811
        %v7894 = vunpack.c.h.b16 %v7812
        %v7895 = vunpack.c.l.b16 %v7813
        %v7896 = vunpack.c.l.b16 %v7814
        %v7897 = vunpack.c.h.b16 %v7813
        %v7898 = vunpack.c.h.b16 %v7814
        %v7899 = vunpack.c.l.b16 %v7815
        %v7900 = vunpack.c.l.b16 %v7816
        %v7901 = vunpack.c.h.b16 %v7815
        %v7902 = vunpack.c.h.b16 %v7816
        %v7903 = vunpack.c.l.b16 %v7817
        %v7904 = vunpack.c.l.b16 %v7818
        %v7905 = vunpack.c.h.b16 %v7817
        %v7906 = vunpack.c.h.b16 %v7818
        %v7907 = vunpack.c.l.b16 %v7819
        %v7908 = vunpack.c.l.b16 %v7820
        %v7909 = vunpack.c.h.b16 %v7819
        %v7910 = vunpack.c.h.b16 %v7820
        %v7911 = vunpack.c.l.b16 %v7821
        %v7912 = vunpack.c.l.b16 %v7822
        %v7913 = vunpack.c.h.b16 %v7821
        %v7914 = vunpack.c.h.b16 %v7822
        %v7915 = vunpack.c.l.b16 %v7823
        %v7916 = vunpack.c.l.b16 %v7824
        %v7917 = vunpack.c.h.b16 %v7823
        %v7918 = vunpack.c.h.b16 %v7824
        %v7919 = vunpack.c.l.b16 %v7825
        %v7920 = vunpack.c.l.b16 %v7826
        %v7921 = vunpack.c.h.b16 %v7825
        %v7922 = vunpack.c.h.b16 %v7826
        %v7923 = vpack.c.b16 %v7860, %v7859
        %v7924 = vpack.c.b16 %v7862, %v7861
        %v7925 = vpack.c.b16 %v7864, %v7863
        %v7926 = vpack.c.b16 %v7866, %v7865
        %v7927 = vpack.c.b16 %v7868, %v7867
        %v7928 = vpack.c.b16 %v7870, %v7869
        %v7929 = vpack.c.b16 %v7872, %v7871
        %v7930 = vpack.c.b16 %v7874, %v7873
        %v7931 = vpack.c.b16 %v7876, %v7875
        %v7932 = vpack.c.b16 %v7878, %v7877
        %v7933 = vpack.c.b16 %v7880, %v7879
        %v7934 = vpack.c.b16 %v7882, %v7881
        %v7935 = vpack.c.b16 %v7884, %v7883
        %v7936 = vpack.c.b16 %v7886, %v7885
        %v7937 = vpack.c.b16 %v7888, %v7887
        %v7938 = vpack.c.b16 %v7890, %v7889
        %v7939 = vpack.c.b16 %v7892, %v7891
        %v7940 = vpack.c.b16 %v7894, %v7893
        %v7941 = vpack.c.b16 %v7896, %v7895
        %v7942 = vpack.c.b16 %v7898, %v7897
        %v7943 = vpack.c.b16 %v7900, %v7899
        %v7944 = vpack.c.b16 %v7902, %v7901
        %v7945 = vpack.c.b16 %v7904, %v7903
        %v7946 = vpack.c.b16 %v7906, %v7905
        %v7947 = vpack.c.b16 %v7908, %v7907
        %v7948 = vpack.c.b16 %v7910, %v7909
        %v7949 = vpack.c.b16 %v7912, %v7911
        %v7950 = vpack.c.b16 %v7914, %v7913
        %v7951 = vpack.c.b16 %v7916, %v7915
        %v7952 = vpack.c.b16 %v7918, %v7917
        %v7953 = vpack.c.b16 %v7920, %v7919
        %v7954 = vpack.c.b16 %v7922, %v7921
        %7987 = vst [vmem:[%s502] sm:$0xff] %v7923
        %7988 = vst [vmem:[%s502 + $0x8] sm:$0xff] %v7924
        %7989 = vst [vmem:[%s502 + $0x10] sm:$0xff] %v7925
        %7990 = vst [vmem:[%s502 + $0x18] sm:$0xff] %v7926
        %7991 = vst [vmem:[%s502 + $0x20] sm:$0xff] %v7927
        %7992 = vst [vmem:[%s502 + $0x28] sm:$0xff] %v7928
        %7993 = vst [vmem:[%s502 + $0x30] sm:$0xff] %v7929
        %7994 = vst [vmem:[%s502 + $0x38] sm:$0xff] %v7930
        %7995 = vst [vmem:[%s502 + $0x40] sm:$0xff] %v7931
        %7996 = vst [vmem:[%s502 + $0x48] sm:$0xff] %v7932
        %7997 = vst [vmem:[%s502 + $0x50] sm:$0xff] %v7933
        %7998 = vst [vmem:[%s502 + $0x58] sm:$0xff] %v7934
        %7999 = vst [vmem:[%s502 + $0x60] sm:$0xff] %v7935
        %8000 = vst [vmem:[%s502 + $0x68] sm:$0xff] %v7936
        %8001 = vst [vmem:[%s502 + $0x70] sm:$0xff] %v7937
        %8002 = vst [vmem:[%s502 + $0x78] sm:$0xff] %v7938
        %8003 = vst [vmem:[%s502 + $0x80] sm:$0xff] %v7939
        %8004 = vst [vmem:[%s502 + $0x88] sm:$0xff] %v7940
        %8005 = vst [vmem:[%s502 + $0x90] sm:$0xff] %v7941
        %8006 = vst [vmem:[%s502 + $0x98] sm:$0xff] %v7942
        %8007 = vst [vmem:[%s502 + $0xa0] sm:$0xff] %v7943
        %8008 = vst [vmem:[%s502 + $0xa8] sm:$0xff] %v7944
        %8009 = vst [vmem:[%s502 + $0xb0] sm:$0xff] %v7945
        %8010 = vst [vmem:[%s502 + $0xb8] sm:$0xff] %v7946
        %8011 = vst [vmem:[%s502 + $0xc0] sm:$0xff] %v7947
        %8012 = vst [vmem:[%s502 + $0xc8] sm:$0xff] %v7948
        %8013 = vst [vmem:[%s502 + $0xd0] sm:$0xff] %v7949
        %8014 = vst [vmem:[%s502 + $0xd8] sm:$0xff] %v7950
        %8015 = vst [vmem:[%s502 + $0xe0] sm:$0xff] %v7951
        %8016 = vst [vmem:[%s502 + $0xe8] sm:$0xff] %v7952
        %8017 = vst [vmem:[%s502 + $0xf0] sm:$0xff] %v7953
        %8018 = vst [vmem:[%s502 + $0xf8] sm:$0xff] %v7954
        // Predicated region
        $region53: #{tpu_custom_call.1} parent=43 // pred_check
          %p8019 = pneg %p575
        $region54: #{tpu_custom_call.1} parent=43 // pred_check_branch
          %8021 = sbr.rel (%p8019) target = $region56
        $region55: #{tpu_custom_call.1} parent=43 // pred_region
          %8022 = vst [vmem:[#allocation2] sm:$0xff] %v1274
          %8023 = vst [vmem:[#allocation2 + $0x10] sm:$0xff] %v1378
          %8024 = vst [vmem:[#allocation2 + $0x20] sm:$0xff] %v1482
          %8025 = vst [vmem:[#allocation2 + $0x30] sm:$0xff] %v1586
          %8026 = vst [vmem:[#allocation2 + $0x40] sm:$0xff] %v1690
          %8027 = vst [vmem:[#allocation2 + $0x50] sm:$0xff] %v1794
          %8028 = vst [vmem:[#allocation2 + $0x60] sm:$0xff] %v1898
          %8029 = vst [vmem:[#allocation2 + $0x70] sm:$0xff] %v2002
          %8030 = vst [vmem:[#allocation2 + $0x80] sm:$0xff] %v2106
          %8031 = vst [vmem:[#allocation2 + $0x90] sm:$0xff] %v2210
          %8032 = vst [vmem:[#allocation2 + $0xa0] sm:$0xff] %v2314
          %8033 = vst [vmem:[#allocation2 + $0xb0] sm:$0xff] %v2418
          %8034 = vst [vmem:[#allocation2 + $0xc0] sm:$0xff] %v2522
          %8035 = vst [vmem:[#allocation2 + $0xd0] sm:$0xff] %v2626
          %8036 = vst [vmem:[#allocation2 + $0xe0] sm:$0xff] %v2730
          %8037 = vst [vmem:[#allocation2 + $0xf0] sm:$0xff] %v2834
          %8038 = vst [vmem:[#allocation2 + $0x100] sm:$0xff] %v2938
          %8039 = vst [vmem:[#allocation2 + $0x110] sm:$0xff] %v3042
          %8040 = vst [vmem:[#allocation2 + $0x120] sm:$0xff] %v3146
          %8041 = vst [vmem:[#allocation2 + $0x130] sm:$0xff] %v3250
          %8042 = vst [vmem:[#allocation2 + $0x140] sm:$0xff] %v3354
          %8043 = vst [vmem:[#allocation2 + $0x150] sm:$0xff] %v3458
          %8044 = vst [vmem:[#allocation2 + $0x160] sm:$0xff] %v3562
          %8045 = vst [vmem:[#allocation2 + $0x170] sm:$0xff] %v3666
          %8046 = vst [vmem:[#allocation2 + $0x180] sm:$0xff] %v3770
          %8047 = vst [vmem:[#allocation2 + $0x190] sm:$0xff] %v3874
          %8048 = vst [vmem:[#allocation2 + $0x1a0] sm:$0xff] %v3978
          %8049 = vst [vmem:[#allocation2 + $0x1b0] sm:$0xff] %v4082
          %8050 = vst [vmem:[#allocation2 + $0x1c0] sm:$0xff] %v4186
          %8051 = vst [vmem:[#allocation2 + $0x1d0] sm:$0xff] %v4290
          %8052 = vst [vmem:[#allocation2 + $0x1e0] sm:$0xff] %v4394
          %8053 = vst [vmem:[#allocation2 + $0x1f0] sm:$0xff] %v4498
          %8054 = vst [vmem:[#allocation2 + $0x8] sm:$0xff] %v4601
          %8055 = vst [vmem:[#allocation2 + $0x18] sm:$0xff] %v4704
          %8056 = vst [vmem:[#allocation2 + $0x28] sm:$0xff] %v4807
          %8057 = vst [vmem:[#allocation2 + $0x38] sm:$0xff] %v4910
          %8058 = vst [vmem:[#allocation2 + $0x48] sm:$0xff] %v5013
          %8059 = vst [vmem:[#allocation2 + $0x58] sm:$0xff] %v5116
          %8060 = vst [vmem:[#allocation2 + $0x68] sm:$0xff] %v5219
          %8061 = vst [vmem:[#allocation2 + $0x78] sm:$0xff] %v5322
          %8062 = vst [vmem:[#allocation2 + $0x88] sm:$0xff] %v5425
          %8063 = vst [vmem:[#allocation2 + $0x98] sm:$0xff] %v5528
          %8064 = vst [vmem:[#allocation2 + $0xa8] sm:$0xff] %v5631
          %8065 = vst [vmem:[#allocation2 + $0xb8] sm:$0xff] %v5734
          %8066 = vst [vmem:[#allocation2 + $0xc8] sm:$0xff] %v5837
          %8067 = vst [vmem:[#allocation2 + $0xd8] sm:$0xff] %v5940
          %8068 = vst [vmem:[#allocation2 + $0xe8] sm:$0xff] %v6043
          %8069 = vst [vmem:[#allocation2 + $0xf8] sm:$0xff] %v6146
          %8070 = vst [vmem:[#allocation2 + $0x108] sm:$0xff] %v6249
          %8071 = vst [vmem:[#allocation2 + $0x118] sm:$0xff] %v6352
          %8072 = vst [vmem:[#allocation2 + $0x128] sm:$0xff] %v6455
          %8073 = vst [vmem:[#allocation2 + $0x138] sm:$0xff] %v6558
          %8074 = vst [vmem:[#allocation2 + $0x148] sm:$0xff] %v6661
          %8075 = vst [vmem:[#allocation2 + $0x158] sm:$0xff] %v6764
          %8076 = vst [vmem:[#allocation2 + $0x168] sm:$0xff] %v6867
          %8077 = vst [vmem:[#allocation2 + $0x178] sm:$0xff] %v6970
          %8078 = vst [vmem:[#allocation2 + $0x188] sm:$0xff] %v7073
          %8079 = vst [vmem:[#allocation2 + $0x198] sm:$0xff] %v7176
          %8080 = vst [vmem:[#allocation2 + $0x1a8] sm:$0xff] %v7279
          %8081 = vst [vmem:[#allocation2 + $0x1b8] sm:$0xff] %v7382
          %8082 = vst [vmem:[#allocation2 + $0x1c8] sm:$0xff] %v7485
          %8083 = vst [vmem:[#allocation2 + $0x1d8] sm:$0xff] %v7588
          %8084 = vst [vmem:[#allocation2 + $0x1e8] sm:$0xff] %v7691
          %8085 = vst [vmem:[#allocation2 + $0x1f8] sm:$0xff] %v7794
          %8086 = vst [vmem:[#allocation3] sm:$0xff] 0.0
          %8087 = vst [vmem:[#allocation3 + $0x8] sm:$0xff] 0.0
          %8088 = vst [vmem:[%s509] sm:$0xff] 0
          %8089 = vst [vmem:[%s509 + $0x8] sm:$0xff] 0
          %8090 = vst [vmem:[%s509 + $0x10] sm:$0xff] 0
          %8091 = vst [vmem:[%s509 + $0x18] sm:$0xff] 0
          %8092 = vst [vmem:[%s509 + $0x20] sm:$0xff] 0
          %8093 = vst [vmem:[%s509 + $0x28] sm:$0xff] 0
          %8094 = vst [vmem:[%s509 + $0x30] sm:$0xff] 0
          %8095 = vst [vmem:[%s509 + $0x38] sm:$0xff] 0
          %8096 = vst [vmem:[%s509 + $0x40] sm:$0xff] 0
          %8097 = vst [vmem:[%s509 + $0x48] sm:$0xff] 0
          %8098 = vst [vmem:[%s509 + $0x50] sm:$0xff] 0
          %8099 = vst [vmem:[%s509 + $0x58] sm:$0xff] 0
          %8100 = vst [vmem:[%s509 + $0x60] sm:$0xff] 0
          %8101 = vst [vmem:[%s509 + $0x68] sm:$0xff] 0
          %8102 = vst [vmem:[%s509 + $0x70] sm:$0xff] 0
          %8103 = vst [vmem:[%s509 + $0x78] sm:$0xff] 0
          %8104 = vst [vmem:[%s509 + $0x80] sm:$0xff] 0
          %8105 = vst [vmem:[%s509 + $0x88] sm:$0xff] 0
          %8106 = vst [vmem:[%s509 + $0x90] sm:$0xff] 0
          %8107 = vst [vmem:[%s509 + $0x98] sm:$0xff] 0
          %8108 = vst [vmem:[%s509 + $0xa0] sm:$0xff] 0
          %8109 = vst [vmem:[%s509 + $0xa8] sm:$0xff] 0
          %8110 = vst [vmem:[%s509 + $0xb0] sm:$0xff] 0
          %8111 = vst [vmem:[%s509 + $0xb8] sm:$0xff] 0
          %8112 = vst [vmem:[%s509 + $0xc0] sm:$0xff] 0
          %8113 = vst [vmem:[%s509 + $0xc8] sm:$0xff] 0
          %8114 = vst [vmem:[%s509 + $0xd0] sm:$0xff] 0
          %8115 = vst [vmem:[%s509 + $0xd8] sm:$0xff] 0
          %8116 = vst [vmem:[%s509 + $0xe0] sm:$0xff] 0
          %8117 = vst [vmem:[%s509 + $0xe8] sm:$0xff] 0
          %8118 = vst [vmem:[%s509 + $0xf0] sm:$0xff] 0
          %8119 = vst [vmem:[%s509 + $0xf8] sm:$0xff] 0
          %8120 = vst [vmem:[%s516] sm:$0xff] 0.0
          %8121 = vst [vmem:[%s516 + $0x8] sm:$0xff] 0.0
          %8122 = vst [vmem:[%s523] sm:$0xff] 0.0
          %8123 = vst [vmem:[%s523 + $0x8] sm:$0xff] 0.0
        $region56: #{tpu_custom_call.1} parent=43 // pred_fallthru
          _
        %p8124 = scmp.gt.s32.totalorder %s38, 0
        // Predicated region
        $region57: #{tpu_custom_call.1} parent=43 // pred_check
          %p8125 = pneg %p8124
        $region58: #{tpu_custom_call.1} parent=43 // pred_check_branch
          %8127 = sbr.rel (%p8125) target = $region60
        $region59: #{tpu_custom_call.1} parent=43 // pred_region
          %v8128 = vld [vmem:[#allocation2] sm:$0xff]
          %v8129 = vld [vmem:[#allocation2 + $0x8] sm:$0xff]
          %v8130 = vld [vmem:[#allocation2 + $0x10] sm:$0xff]
          %v8131 = vld [vmem:[#allocation2 + $0x18] sm:$0xff]
          %v8132 = vld [vmem:[#allocation2 + $0x20] sm:$0xff]
          %v8133 = vld [vmem:[#allocation2 + $0x28] sm:$0xff]
          %v8134 = vld [vmem:[#allocation2 + $0x30] sm:$0xff]
          %v8135 = vld [vmem:[#allocation2 + $0x38] sm:$0xff]
          %v8136 = vld [vmem:[#allocation2 + $0x40] sm:$0xff]
          %v8137 = vld [vmem:[#allocation2 + $0x48] sm:$0xff]
          %v8138 = vld [vmem:[#allocation2 + $0x50] sm:$0xff]
          %v8139 = vld [vmem:[#allocation2 + $0x58] sm:$0xff]
          %v8140 = vld [vmem:[#allocation2 + $0x60] sm:$0xff]
          %v8141 = vld [vmem:[#allocation2 + $0x68] sm:$0xff]
          %v8142 = vld [vmem:[#allocation2 + $0x70] sm:$0xff]
          %v8143 = vld [vmem:[#allocation2 + $0x78] sm:$0xff]
          %v8144 = vld [vmem:[#allocation2 + $0x80] sm:$0xff]
          %v8145 = vld [vmem:[#allocation2 + $0x88] sm:$0xff]
          %v8146 = vld [vmem:[#allocation2 + $0x90] sm:$0xff]
          %v8147 = vld [vmem:[#allocation2 + $0x98] sm:$0xff]
          %v8148 = vld [vmem:[#allocation2 + $0xa0] sm:$0xff]
          %v8149 = vld [vmem:[#allocation2 + $0xa8] sm:$0xff]
          %v8150 = vld [vmem:[#allocation2 + $0xb0] sm:$0xff]
          %v8151 = vld [vmem:[#allocation2 + $0xb8] sm:$0xff]
          %v8152 = vld [vmem:[#allocation2 + $0xc0] sm:$0xff]
          %v8153 = vld [vmem:[#allocation2 + $0xc8] sm:$0xff]
          %v8154 = vld [vmem:[#allocation2 + $0xd0] sm:$0xff]
          %v8155 = vld [vmem:[#allocation2 + $0xd8] sm:$0xff]
          %v8156 = vld [vmem:[#allocation2 + $0xe0] sm:$0xff]
          %v8157 = vld [vmem:[#allocation2 + $0xe8] sm:$0xff]
          %v8158 = vld [vmem:[#allocation2 + $0xf0] sm:$0xff]
          %v8159 = vld [vmem:[#allocation2 + $0xf8] sm:$0xff]
          %v8160 = vld [vmem:[#allocation2 + $0x100] sm:$0xff]
          %v8161 = vld [vmem:[#allocation2 + $0x108] sm:$0xff]
          %v8162 = vld [vmem:[#allocation2 + $0x110] sm:$0xff]
          %v8163 = vld [vmem:[#allocation2 + $0x118] sm:$0xff]
          %v8164 = vld [vmem:[#allocation2 + $0x120] sm:$0xff]
          %v8165 = vld [vmem:[#allocation2 + $0x128] sm:$0xff]
          %v8166 = vld [vmem:[#allocation2 + $0x130] sm:$0xff]
          %v8167 = vld [vmem:[#allocation2 + $0x138] sm:$0xff]
          %v8168 = vld [vmem:[#allocation2 + $0x140] sm:$0xff]
          %v8169 = vld [vmem:[#allocation2 + $0x148] sm:$0xff]
          %v8170 = vld [vmem:[#allocation2 + $0x150] sm:$0xff]
          %v8171 = vld [vmem:[#allocation2 + $0x158] sm:$0xff]
          %v8172 = vld [vmem:[#allocation2 + $0x160] sm:$0xff]
          %v8173 = vld [vmem:[#allocation2 + $0x168] sm:$0xff]
          %v8174 = vld [vmem:[#allocation2 + $0x170] sm:$0xff]
          %v8175 = vld [vmem:[#allocation2 + $0x178] sm:$0xff]
          %v8176 = vld [vmem:[#allocation2 + $0x180] sm:$0xff]
          %v8177 = vld [vmem:[#allocation2 + $0x188] sm:$0xff]
          %v8178 = vld [vmem:[#allocation2 + $0x190] sm:$0xff]
          %v8179 = vld [vmem:[#allocation2 + $0x198] sm:$0xff]
          %v8180 = vld [vmem:[#allocation2 + $0x1a0] sm:$0xff]
          %v8181 = vld [vmem:[#allocation2 + $0x1a8] sm:$0xff]
          %v8182 = vld [vmem:[#allocation2 + $0x1b0] sm:$0xff]
          %v8183 = vld [vmem:[#allocation2 + $0x1b8] sm:$0xff]
          %v8184 = vld [vmem:[#allocation2 + $0x1c0] sm:$0xff]
          %v8185 = vld [vmem:[#allocation2 + $0x1c8] sm:$0xff]
          %v8186 = vld [vmem:[#allocation2 + $0x1d0] sm:$0xff]
          %v8187 = vld [vmem:[#allocation2 + $0x1d8] sm:$0xff]
          %v8188 = vld [vmem:[#allocation2 + $0x1e0] sm:$0xff]
          %v8189 = vld [vmem:[#allocation2 + $0x1e8] sm:$0xff]
          %v8190 = vld [vmem:[#allocation2 + $0x1f0] sm:$0xff]
          %v8191 = vld [vmem:[#allocation2 + $0x1f8] sm:$0xff]
          %v8192 = vld [vmem:[%s447] sm:$0xff]
          %v8193 = vld [vmem:[%s447 + $0x8] sm:$0xff]
          %v8194 = vld [vmem:[%s447 + $0x10] sm:$0xff]
          %v8195 = vld [vmem:[%s447 + $0x18] sm:$0xff]
          %v8196 = vld [vmem:[%s447 + $0x20] sm:$0xff]
          %v8197 = vld [vmem:[%s447 + $0x28] sm:$0xff]
          %v8198 = vld [vmem:[%s447 + $0x30] sm:$0xff]
          %v8199 = vld [vmem:[%s447 + $0x38] sm:$0xff]
          %v8200 = vld [vmem:[%s447 + $0x40] sm:$0xff]
          %v8201 = vld [vmem:[%s447 + $0x48] sm:$0xff]
          %v8202 = vld [vmem:[%s447 + $0x50] sm:$0xff]
          %v8203 = vld [vmem:[%s447 + $0x58] sm:$0xff]
          %v8204 = vld [vmem:[%s447 + $0x60] sm:$0xff]
          %v8205 = vld [vmem:[%s447 + $0x68] sm:$0xff]
          %v8206 = vld [vmem:[%s447 + $0x70] sm:$0xff]
          %v8207 = vld [vmem:[%s447 + $0x78] sm:$0xff]
          %v8208 = vld [vmem:[%s447 + $0x80] sm:$0xff]
          %v8209 = vld [vmem:[%s447 + $0x88] sm:$0xff]
          %v8210 = vld [vmem:[%s447 + $0x90] sm:$0xff]
          %v8211 = vld [vmem:[%s447 + $0x98] sm:$0xff]
          %v8212 = vld [vmem:[%s447 + $0xa0] sm:$0xff]
          %v8213 = vld [vmem:[%s447 + $0xa8] sm:$0xff]
          %v8214 = vld [vmem:[%s447 + $0xb0] sm:$0xff]
          %v8215 = vld [vmem:[%s447 + $0xb8] sm:$0xff]
          %v8216 = vld [vmem:[%s447 + $0xc0] sm:$0xff]
          %v8217 = vld [vmem:[%s447 + $0xc8] sm:$0xff]
          %v8218 = vld [vmem:[%s447 + $0xd0] sm:$0xff]
          %v8219 = vld [vmem:[%s447 + $0xd8] sm:$0xff]
          %v8220 = vld [vmem:[%s447 + $0xe0] sm:$0xff]
          %v8221 = vld [vmem:[%s447 + $0xe8] sm:$0xff]
          %v8222 = vld [vmem:[%s447 + $0xf0] sm:$0xff]
          %v8223 = vld [vmem:[%s447 + $0xf8] sm:$0xff]
          %v8224 = vld [vmem:[%s447 + $0x100] sm:$0xff]
          %v8225 = vld [vmem:[%s447 + $0x108] sm:$0xff]
          %v8226 = vld [vmem:[%s447 + $0x110] sm:$0xff]
          %v8227 = vld [vmem:[%s447 + $0x118] sm:$0xff]
          %v8228 = vld [vmem:[%s447 + $0x120] sm:$0xff]
          %v8229 = vld [vmem:[%s447 + $0x128] sm:$0xff]
          %v8230 = vld [vmem:[%s447 + $0x130] sm:$0xff]
          %v8231 = vld [vmem:[%s447 + $0x138] sm:$0xff]
          %v8232 = vld [vmem:[%s447 + $0x140] sm:$0xff]
          %v8233 = vld [vmem:[%s447 + $0x148] sm:$0xff]
          %v8234 = vld [vmem:[%s447 + $0x150] sm:$0xff]
          %v8235 = vld [vmem:[%s447 + $0x158] sm:$0xff]
          %v8236 = vld [vmem:[%s447 + $0x160] sm:$0xff]
          %v8237 = vld [vmem:[%s447 + $0x168] sm:$0xff]
          %v8238 = vld [vmem:[%s447 + $0x170] sm:$0xff]
          %v8239 = vld [vmem:[%s447 + $0x178] sm:$0xff]
          %v8240 = vld [vmem:[%s447 + $0x180] sm:$0xff]
          %v8241 = vld [vmem:[%s447 + $0x188] sm:$0xff]
          %v8242 = vld [vmem:[%s447 + $0x190] sm:$0xff]
          %v8243 = vld [vmem:[%s447 + $0x198] sm:$0xff]
          %v8244 = vld [vmem:[%s447 + $0x1a0] sm:$0xff]
          %v8245 = vld [vmem:[%s447 + $0x1a8] sm:$0xff]
          %v8246 = vld [vmem:[%s447 + $0x1b0] sm:$0xff]
          %v8247 = vld [vmem:[%s447 + $0x1b8] sm:$0xff]
          %v8248 = vld [vmem:[%s447 + $0x1c0] sm:$0xff]
          %v8249 = vld [vmem:[%s447 + $0x1c8] sm:$0xff]
          %v8250 = vld [vmem:[%s447 + $0x1d0] sm:$0xff]
          %v8251 = vld [vmem:[%s447 + $0x1d8] sm:$0xff]
          %v8252 = vld [vmem:[%s447 + $0x1e0] sm:$0xff]
          %v8253 = vld [vmem:[%s447 + $0x1e8] sm:$0xff]
          %v8254 = vld [vmem:[%s447 + $0x1f0] sm:$0xff]
          %v8255 = vld [vmem:[%s447 + $0x1f8] sm:$0xff]
          %8256 = vmatprep.subr.mxu0 %v8223
          %8257 = vmatpush1.msra.mxu0 %v8222
          %8258 = vmatprep.subr.mxu0 %v8221
          %8259 = vmatpush1.msra.mxu0 %v8220
          %8260 = vmatprep.subr.mxu0 %v8219
          %8261 = vmatpush1.msra.mxu0 %v8218
          %8262 = vmatprep.subr.mxu0 %v8217
          %8263 = vmatpush1.msra.mxu0 %v8216
          %8264 = vmatprep.subr.mxu0 %v8215
          %8265 = vmatpush1.msra.mxu0 %v8214
          %8266 = vmatprep.subr.mxu0 %v8213
          %8267 = vmatpush1.msra.mxu0 %v8212
          %8268 = vmatprep.subr.mxu0 %v8211
          %8269 = vmatpush1.msra.mxu0 %v8210
          %8270 = vmatprep.subr.mxu0 %v8209
          %8271 = vmatpush1.msra.mxu0 %v8208
          %8272 = vmatprep.subr.mxu0 %v8207
          %8273 = vmatpush1.msra.mxu0 %v8206
          %8274 = vmatprep.subr.mxu0 %v8205
          %8275 = vmatpush1.msra.mxu0 %v8204
          %8276 = vmatprep.subr.mxu0 %v8203
          %8277 = vmatpush1.msra.mxu0 %v8202
          %8278 = vmatprep.subr.mxu0 %v8201
          %8279 = vmatpush1.msra.mxu0 %v8200
          %8280 = vmatprep.subr.mxu0 %v8199
          %8281 = vmatpush1.msra.mxu0 %v8198
          %8282 = vmatprep.subr.mxu0 %v8197
          %8283 = vmatpush1.msra.mxu0 %v8196
          %8284 = vmatprep.subr.mxu0 %v8195
          %8285 = vmatpush1.msra.mxu0 %v8194
          %8286 = vmatprep.subr.mxu0 %v8193
          %8287 = vmatpush1.msra.mxu0 %v8192
          %8288 = vmatprep.subr.mxu0 %v8255
          %8289 = vmatpush2.msra.mxu0 %v8254
          %8290 = vmatprep.subr.mxu0 %v8253
          %8291 = vmatpush2.msra.mxu0 %v8252
          %8292 = vmatprep.subr.mxu0 %v8251
          %8293 = vmatpush2.msra.mxu0 %v8250
          %8294 = vmatprep.subr.mxu0 %v8249
          %8295 = vmatpush2.msra.mxu0 %v8248
          %8296 = vmatprep.subr.mxu0 %v8247
          %8297 = vmatpush2.msra.mxu0 %v8246
          %8298 = vmatprep.subr.mxu0 %v8245
          %8299 = vmatpush2.msra.mxu0 %v8244
          %8300 = vmatprep.subr.mxu0 %v8243
          %8301 = vmatpush2.msra.mxu0 %v8242
          %8302 = vmatprep.subr.mxu0 %v8241
          %8303 = vmatpush2.msra.mxu0 %v8240
          %8304 = vmatprep.subr.mxu0 %v8239
          %8305 = vmatpush2.msra.mxu0 %v8238
          %8306 = vmatprep.subr.mxu0 %v8237
          %8307 = vmatpush2.msra.mxu0 %v8236
          %8308 = vmatprep.subr.mxu0 %v8235
          %8309 = vmatpush2.msra.mxu0 %v8234
          %8310 = vmatprep.subr.mxu0 %v8233
          %8311 = vmatpush2.msra.mxu0 %v8232
          %8312 = vmatprep.subr.mxu0 %v8231
          %8313 = vmatpush2.msra.mxu0 %v8230
          %8314 = vmatprep.subr.mxu0 %v8229
          %8315 = vmatpush2.msra.mxu0 %v8228
          %8316 = vmatprep.subr.mxu0 %v8227
          %8317 = vmatpush2.msra.mxu0 %v8226
          %8318 = vmatprep.subr.mxu0 %v8225
          %8319 = vmatpush2.msra.mxu0 %v8224
          %8320 = vmatprep.mubr.f32.mxu0 %v8129
          %8321 = vmatmul.mubr.f32.gmra.mxu0 %v8128
          %v8322 = vpop.f32.mrf.mxu0
          %v8323 = vadd.f32 0.0, %v8322
          %v8324 = vpop.f32.mrf.mxu0
          %v8325 = vadd.f32 0.0, %v8324
          %8326 = vmatprep.mubr.f32.mxu0 %v8131
          %8327 = vmatmul.mubr.f32.gmra.mxu0 %v8130
          %v8328 = vpop.f32.mrf.mxu0
          %v8329 = vadd.f32 0.0, %v8328
          %v8330 = vpop.f32.mrf.mxu0
          %v8331 = vadd.f32 0.0, %v8330
          %8332 = vmatprep.mubr.f32.mxu0 %v8133
          %8333 = vmatmul.mubr.f32.gmra.mxu0 %v8132
          %v8334 = vpop.f32.mrf.mxu0
          %v8335 = vadd.f32 0.0, %v8334
          %v8336 = vpop.f32.mrf.mxu0
          %v8337 = vadd.f32 0.0, %v8336
          %8338 = vmatprep.mubr.f32.mxu0 %v8135
          %8339 = vmatmul.mubr.f32.gmra.mxu0 %v8134
          %v8340 = vpop.f32.mrf.mxu0
          %v8341 = vadd.f32 0.0, %v8340
          %v8342 = vpop.f32.mrf.mxu0
          %v8343 = vadd.f32 0.0, %v8342
          %8344 = vmatprep.mubr.f32.mxu0 %v8137
          %8345 = vmatmul.mubr.f32.gmra.mxu0 %v8136
          %v8346 = vpop.f32.mrf.mxu0
          %v8347 = vadd.f32 0.0, %v8346
          %v8348 = vpop.f32.mrf.mxu0
          %v8349 = vadd.f32 0.0, %v8348
          %8350 = vmatprep.mubr.f32.mxu0 %v8139
          %8351 = vmatmul.mubr.f32.gmra.mxu0 %v8138
          %v8352 = vpop.f32.mrf.mxu0
          %v8353 = vadd.f32 0.0, %v8352
          %v8354 = vpop.f32.mrf.mxu0
          %v8355 = vadd.f32 0.0, %v8354
          %8356 = vmatprep.mubr.f32.mxu0 %v8141
          %8357 = vmatmul.mubr.f32.gmra.mxu0 %v8140
          %v8358 = vpop.f32.mrf.mxu0
          %v8359 = vadd.f32 0.0, %v8358
          %v8360 = vpop.f32.mrf.mxu0
          %v8361 = vadd.f32 0.0, %v8360
          %8362 = vmatprep.mubr.f32.mxu0 %v8143
          %8363 = vmatmul.mubr.f32.gmra.mxu0 %v8142
          %v8364 = vpop.f32.mrf.mxu0
          %v8365 = vadd.f32 0.0, %v8364
          %v8366 = vpop.f32.mrf.mxu0
          %v8367 = vadd.f32 0.0, %v8366
          %8368 = vmatprep.mubr.f32.mxu0 %v8145
          %8369 = vmatmul.mubr.f32.gmra.mxu0 %v8144
          %v8370 = vpop.f32.mrf.mxu0
          %v8371 = vadd.f32 0.0, %v8370
          %v8372 = vpop.f32.mrf.mxu0
          %v8373 = vadd.f32 0.0, %v8372
          %8374 = vmatprep.mubr.f32.mxu0 %v8147
          %8375 = vmatmul.mubr.f32.gmra.mxu0 %v8146
          %v8376 = vpop.f32.mrf.mxu0
          %v8377 = vadd.f32 0.0, %v8376
          %v8378 = vpop.f32.mrf.mxu0
          %v8379 = vadd.f32 0.0, %v8378
          %8380 = vmatprep.mubr.f32.mxu0 %v8149
          %8381 = vmatmul.mubr.f32.gmra.mxu0 %v8148
          %v8382 = vpop.f32.mrf.mxu0
          %v8383 = vadd.f32 0.0, %v8382
          %v8384 = vpop.f32.mrf.mxu0
          %v8385 = vadd.f32 0.0, %v8384
          %8386 = vmatprep.mubr.f32.mxu0 %v8151
          %8387 = vmatmul.mubr.f32.gmra.mxu0 %v8150
          %v8388 = vpop.f32.mrf.mxu0
          %v8389 = vadd.f32 0.0, %v8388
          %v8390 = vpop.f32.mrf.mxu0
          %v8391 = vadd.f32 0.0, %v8390
          %8392 = vmatprep.mubr.f32.mxu0 %v8153
          %8393 = vmatmul.mubr.f32.gmra.mxu0 %v8152
          %v8394 = vpop.f32.mrf.mxu0
          %v8395 = vadd.f32 0.0, %v8394
          %v8396 = vpop.f32.mrf.mxu0
          %v8397 = vadd.f32 0.0, %v8396
          %8398 = vmatprep.mubr.f32.mxu0 %v8155
          %8399 = vmatmul.mubr.f32.gmra.mxu0 %v8154
          %v8400 = vpop.f32.mrf.mxu0
          %v8401 = vadd.f32 0.0, %v8400
          %v8402 = vpop.f32.mrf.mxu0
          %v8403 = vadd.f32 0.0, %v8402
          %8404 = vmatprep.mubr.f32.mxu0 %v8157
          %8405 = vmatmul.mubr.f32.gmra.mxu0 %v8156
          %v8406 = vpop.f32.mrf.mxu0
          %v8407 = vadd.f32 0.0, %v8406
          %v8408 = vpop.f32.mrf.mxu0
          %v8409 = vadd.f32 0.0, %v8408
          %8410 = vmatprep.mubr.f32.mxu0 %v8159
          %8411 = vmatmul.mubr.f32.gmra.mxu0 %v8158
          %v8412 = vpop.f32.mrf.mxu0
          %v8413 = vadd.f32 0.0, %v8412
          %v8414 = vpop.f32.mrf.mxu0
          %v8415 = vadd.f32 0.0, %v8414
          %8416 = vmatprep.mubr.f32.mxu0 %v8161
          %8417 = vmatmul.mubr.f32.gmra.mxu0 %v8160
          %v8418 = vpop.f32.mrf.mxu0
          %v8419 = vadd.f32 0.0, %v8418
          %v8420 = vpop.f32.mrf.mxu0
          %v8421 = vadd.f32 0.0, %v8420
          %8422 = vmatprep.mubr.f32.mxu0 %v8163
          %8423 = vmatmul.mubr.f32.gmra.mxu0 %v8162
          %v8424 = vpop.f32.mrf.mxu0
          %v8425 = vadd.f32 0.0, %v8424
          %v8426 = vpop.f32.mrf.mxu0
          %v8427 = vadd.f32 0.0, %v8426
          %8428 = vmatprep.mubr.f32.mxu0 %v8165
          %8429 = vmatmul.mubr.f32.gmra.mxu0 %v8164
          %v8430 = vpop.f32.mrf.mxu0
          %v8431 = vadd.f32 0.0, %v8430
          %v8432 = vpop.f32.mrf.mxu0
          %v8433 = vadd.f32 0.0, %v8432
          %8434 = vmatprep.mubr.f32.mxu0 %v8167
          %8435 = vmatmul.mubr.f32.gmra.mxu0 %v8166
          %v8436 = vpop.f32.mrf.mxu0
          %v8437 = vadd.f32 0.0, %v8436
          %v8438 = vpop.f32.mrf.mxu0
          %v8439 = vadd.f32 0.0, %v8438
          %8440 = vmatprep.mubr.f32.mxu0 %v8169
          %8441 = vmatmul.mubr.f32.gmra.mxu0 %v8168
          %v8442 = vpop.f32.mrf.mxu0
          %v8443 = vadd.f32 0.0, %v8442
          %v8444 = vpop.f32.mrf.mxu0
          %v8445 = vadd.f32 0.0, %v8444
          %8446 = vmatprep.mubr.f32.mxu0 %v8171
          %8447 = vmatmul.mubr.f32.gmra.mxu0 %v8170
          %v8448 = vpop.f32.mrf.mxu0
          %v8449 = vadd.f32 0.0, %v8448
          %v8450 = vpop.f32.mrf.mxu0
          %v8451 = vadd.f32 0.0, %v8450
          %8452 = vmatprep.mubr.f32.mxu0 %v8173
          %8453 = vmatmul.mubr.f32.gmra.mxu0 %v8172
          %v8454 = vpop.f32.mrf.mxu0
          %v8455 = vadd.f32 0.0, %v8454
          %v8456 = vpop.f32.mrf.mxu0
          %v8457 = vadd.f32 0.0, %v8456
          %8458 = vmatprep.mubr.f32.mxu0 %v8175
          %8459 = vmatmul.mubr.f32.gmra.mxu0 %v8174
          %v8460 = vpop.f32.mrf.mxu0
          %v8461 = vadd.f32 0.0, %v8460
          %v8462 = vpop.f32.mrf.mxu0
          %v8463 = vadd.f32 0.0, %v8462
          %8464 = vmatprep.mubr.f32.mxu0 %v8177
          %8465 = vmatmul.mubr.f32.gmra.mxu0 %v8176
          %v8466 = vpop.f32.mrf.mxu0
          %v8467 = vadd.f32 0.0, %v8466
          %v8468 = vpop.f32.mrf.mxu0
          %v8469 = vadd.f32 0.0, %v8468
          %8470 = vmatprep.mubr.f32.mxu0 %v8179
          %8471 = vmatmul.mubr.f32.gmra.mxu0 %v8178
          %v8472 = vpop.f32.mrf.mxu0
          %v8473 = vadd.f32 0.0, %v8472
          %v8474 = vpop.f32.mrf.mxu0
          %v8475 = vadd.f32 0.0, %v8474
          %8476 = vmatprep.mubr.f32.mxu0 %v8181
          %8477 = vmatmul.mubr.f32.gmra.mxu0 %v8180
          %v8478 = vpop.f32.mrf.mxu0
          %v8479 = vadd.f32 0.0, %v8478
          %v8480 = vpop.f32.mrf.mxu0
          %v8481 = vadd.f32 0.0, %v8480
          %8482 = vmatprep.mubr.f32.mxu0 %v8183
          %8483 = vmatmul.mubr.f32.gmra.mxu0 %v8182
          %v8484 = vpop.f32.mrf.mxu0
          %v8485 = vadd.f32 0.0, %v8484
          %v8486 = vpop.f32.mrf.mxu0
          %v8487 = vadd.f32 0.0, %v8486
          %8488 = vmatprep.mubr.f32.mxu0 %v8185
          %8489 = vmatmul.mubr.f32.gmra.mxu0 %v8184
          %v8490 = vpop.f32.mrf.mxu0
          %v8491 = vadd.f32 0.0, %v8490
          %v8492 = vpop.f32.mrf.mxu0
          %v8493 = vadd.f32 0.0, %v8492
          %8494 = vmatprep.mubr.f32.mxu0 %v8187
          %8495 = vmatmul.mubr.f32.gmra.mxu0 %v8186
          %v8496 = vpop.f32.mrf.mxu0
          %v8497 = vadd.f32 0.0, %v8496
          %v8498 = vpop.f32.mrf.mxu0
          %v8499 = vadd.f32 0.0, %v8498
          %8500 = vmatprep.mubr.f32.mxu0 %v8189
          %8501 = vmatmul.mubr.f32.gmra.mxu0 %v8188
          %v8502 = vpop.f32.mrf.mxu0
          %v8503 = vadd.f32 0.0, %v8502
          %v8504 = vpop.f32.mrf.mxu0
          %v8505 = vadd.f32 0.0, %v8504
          %8506 = vmatprep.mubr.f32.mxu0 %v8191
          %8507 = vmatmul.mubr.f32.gmra.mxu0 %v8190
          %v8508 = vpop.f32.mrf.mxu0
          %v8509 = vadd.f32 0.0, %v8508
          %v8510 = vpop.f32.mrf.mxu0
          %v8511 = vadd.f32 0.0, %v8510
          %8512 = vdwg.mxu0
          %v8513 = vmul.f32 %v8323, %v4601
          %v8514 = vmul.f32 %v8329, %v4704
          %v8515 = vmul.f32 %v8335, %v4807
          %v8516 = vmul.f32 %v8341, %v4910
          %v8517 = vmul.f32 %v8347, %v5013
          %v8518 = vmul.f32 %v8353, %v5116
          %v8519 = vmul.f32 %v8359, %v5219
          %v8520 = vmul.f32 %v8365, %v5322
          %v8521 = vmul.f32 %v8371, %v5425
          %v8522 = vmul.f32 %v8377, %v5528
          %v8523 = vmul.f32 %v8383, %v5631
          %v8524 = vmul.f32 %v8389, %v5734
          %v8525 = vmul.f32 %v8395, %v5837
          %v8526 = vmul.f32 %v8401, %v5940
          %v8527 = vmul.f32 %v8407, %v6043
          %v8528 = vmul.f32 %v8413, %v6146
          %v8529 = vmul.f32 %v8419, %v6249
          %v8530 = vmul.f32 %v8425, %v6352
          %v8531 = vmul.f32 %v8431, %v6455
          %v8532 = vmul.f32 %v8437, %v6558
          %v8533 = vmul.f32 %v8443, %v6661
          %v8534 = vmul.f32 %v8449, %v6764
          %v8535 = vmul.f32 %v8455, %v6867
          %v8536 = vmul.f32 %v8461, %v6970
          %v8537 = vmul.f32 %v8467, %v7073
          %v8538 = vmul.f32 %v8473, %v7176
          %v8539 = vmul.f32 %v8479, %v7279
          %v8540 = vmul.f32 %v8485, %v7382
          %v8541 = vmul.f32 %v8491, %v7485
          %v8542 = vmul.f32 %v8497, %v7588
          %v8543 = vmul.f32 %v8503, %v7691
          %v8544 = vmul.f32 %v8509, %v7794
          %v8545 = vmul.f32 %v8325, %v1274
          %v8546 = vmul.f32 %v8331, %v1378
          %v8547 = vmul.f32 %v8337, %v1482
          %v8548 = vmul.f32 %v8343, %v1586
          %v8549 = vmul.f32 %v8349, %v1690
          %v8550 = vmul.f32 %v8355, %v1794
          %v8551 = vmul.f32 %v8361, %v1898
          %v8552 = vmul.f32 %v8367, %v2002
          %v8553 = vmul.f32 %v8373, %v2106
          %v8554 = vmul.f32 %v8379, %v2210
          %v8555 = vmul.f32 %v8385, %v2314
          %v8556 = vmul.f32 %v8391, %v2418
          %v8557 = vmul.f32 %v8397, %v2522
          %v8558 = vmul.f32 %v8403, %v2626
          %v8559 = vmul.f32 %v8409, %v2730
          %v8560 = vmul.f32 %v8415, %v2834
          %v8561 = vmul.f32 %v8421, %v2938
          %v8562 = vmul.f32 %v8427, %v3042
          %v8563 = vmul.f32 %v8433, %v3146
          %v8564 = vmul.f32 %v8439, %v3250
          %v8565 = vmul.f32 %v8445, %v3354
          %v8566 = vmul.f32 %v8451, %v3458
          %v8567 = vmul.f32 %v8457, %v3562
          %v8568 = vmul.f32 %v8463, %v3666
          %v8569 = vmul.f32 %v8469, %v3770
          %v8570 = vmul.f32 %v8475, %v3874
          %v8571 = vmul.f32 %v8481, %v3978
          %v8572 = vmul.f32 %v8487, %v4082
          %v8573 = vmul.f32 %v8493, %v4186
          %v8574 = vmul.f32 %v8499, %v4290
          %v8575 = vmul.f32 %v8505, %v4394
          %v8576 = vmul.f32 %v8511, %v4498
          %v8577 = vadd.f32 %v8513, %v8545
          %v8578 = vadd.f32 %v8514, %v8546
          %v8579 = vadd.f32 %v8515, %v8547
          %v8580 = vadd.f32 %v8516, %v8548
          %v8581 = vadd.f32 %v8517, %v8549
          %v8582 = vadd.f32 %v8518, %v8550
          %v8583 = vadd.f32 %v8519, %v8551
          %v8584 = vadd.f32 %v8520, %v8552
          %v8585 = vadd.f32 %v8521, %v8553
          %v8586 = vadd.f32 %v8522, %v8554
          %v8587 = vadd.f32 %v8523, %v8555
          %v8588 = vadd.f32 %v8524, %v8556
          %v8589 = vadd.f32 %v8525, %v8557
          %v8590 = vadd.f32 %v8526, %v8558
          %v8591 = vadd.f32 %v8527, %v8559
          %v8592 = vadd.f32 %v8528, %v8560
          %v8593 = vadd.f32 %v8529, %v8561
          %v8594 = vadd.f32 %v8530, %v8562
          %v8595 = vadd.f32 %v8531, %v8563
          %v8596 = vadd.f32 %v8532, %v8564
          %v8597 = vadd.f32 %v8533, %v8565
          %v8598 = vadd.f32 %v8534, %v8566
          %v8599 = vadd.f32 %v8535, %v8567
          %v8600 = vadd.f32 %v8536, %v8568
          %v8601 = vadd.f32 %v8537, %v8569
          %v8602 = vadd.f32 %v8538, %v8570
          %v8603 = vadd.f32 %v8539, %v8571
          %v8604 = vadd.f32 %v8540, %v8572
          %v8605 = vadd.f32 %v8541, %v8573
          %v8606 = vadd.f32 %v8542, %v8574
          %v8607 = vadd.f32 %v8543, %v8575
          %v8608 = vadd.f32 %v8544, %v8576
          %v8609 = vmul.f32 %v8325, %v4601
          %v8610 = vmul.f32 %v8331, %v4704
          %v8611 = vmul.f32 %v8337, %v4807
          %v8612 = vmul.f32 %v8343, %v4910
          %v8613 = vmul.f32 %v8349, %v5013
          %v8614 = vmul.f32 %v8355, %v5116
          %v8615 = vmul.f32 %v8361, %v5219
          %v8616 = vmul.f32 %v8367, %v5322
          %v8617 = vmul.f32 %v8373, %v5425
          %v8618 = vmul.f32 %v8379, %v5528
          %v8619 = vmul.f32 %v8385, %v5631
          %v8620 = vmul.f32 %v8391, %v5734
          %v8621 = vmul.f32 %v8397, %v5837
          %v8622 = vmul.f32 %v8403, %v5940
          %v8623 = vmul.f32 %v8409, %v6043
          %v8624 = vmul.f32 %v8415, %v6146
          %v8625 = vmul.f32 %v8421, %v6249
          %v8626 = vmul.f32 %v8427, %v6352
          %v8627 = vmul.f32 %v8433, %v6455
          %v8628 = vmul.f32 %v8439, %v6558
          %v8629 = vmul.f32 %v8445, %v6661
          %v8630 = vmul.f32 %v8451, %v6764
          %v8631 = vmul.f32 %v8457, %v6867
          %v8632 = vmul.f32 %v8463, %v6970
          %v8633 = vmul.f32 %v8469, %v7073
          %v8634 = vmul.f32 %v8475, %v7176
          %v8635 = vmul.f32 %v8481, %v7279
          %v8636 = vmul.f32 %v8487, %v7382
          %v8637 = vmul.f32 %v8493, %v7485
          %v8638 = vmul.f32 %v8499, %v7588
          %v8639 = vmul.f32 %v8505, %v7691
          %v8640 = vmul.f32 %v8511, %v7794
          %v8641 = vmul.f32 %v8323, %v1274
          %v8642 = vmul.f32 %v8329, %v1378
          %v8643 = vmul.f32 %v8335, %v1482
          %v8644 = vmul.f32 %v8341, %v1586
          %v8645 = vmul.f32 %v8347, %v1690
          %v8646 = vmul.f32 %v8353, %v1794
          %v8647 = vmul.f32 %v8359, %v1898
          %v8648 = vmul.f32 %v8365, %v2002
          %v8649 = vmul.f32 %v8371, %v2106
          %v8650 = vmul.f32 %v8377, %v2210
          %v8651 = vmul.f32 %v8383, %v2314
          %v8652 = vmul.f32 %v8389, %v2418
          %v8653 = vmul.f32 %v8395, %v2522
          %v8654 = vmul.f32 %v8401, %v2626
          %v8655 = vmul.f32 %v8407, %v2730
          %v8656 = vmul.f32 %v8413, %v2834
          %v8657 = vmul.f32 %v8419, %v2938
          %v8658 = vmul.f32 %v8425, %v3042
          %v8659 = vmul.f32 %v8431, %v3146
          %v8660 = vmul.f32 %v8437, %v3250
          %v8661 = vmul.f32 %v8443, %v3354
          %v8662 = vmul.f32 %v8449, %v3458
          %v8663 = vmul.f32 %v8455, %v3562
          %v8664 = vmul.f32 %v8461, %v3666
          %v8665 = vmul.f32 %v8467, %v3770
          %v8666 = vmul.f32 %v8473, %v3874
          %v8667 = vmul.f32 %v8479, %v3978
          %v8668 = vmul.f32 %v8485, %v4082
          %v8669 = vmul.f32 %v8491, %v4186
          %v8670 = vmul.f32 %v8497, %v4290
          %v8671 = vmul.f32 %v8503, %v4394
          %v8672 = vmul.f32 %v8509, %v4498
          %v8673 = vsub.f32 %v8609, %v8641
          %v8674 = vsub.f32 %v8610, %v8642
          %v8675 = vsub.f32 %v8611, %v8643
          %v8676 = vsub.f32 %v8612, %v8644
          %v8677 = vsub.f32 %v8613, %v8645
          %v8678 = vsub.f32 %v8614, %v8646
          %v8679 = vsub.f32 %v8615, %v8647
          %v8680 = vsub.f32 %v8616, %v8648
          %v8681 = vsub.f32 %v8617, %v8649
          %v8682 = vsub.f32 %v8618, %v8650
          %v8683 = vsub.f32 %v8619, %v8651
          %v8684 = vsub.f32 %v8620, %v8652
          %v8685 = vsub.f32 %v8621, %v8653
          %v8686 = vsub.f32 %v8622, %v8654
          %v8687 = vsub.f32 %v8623, %v8655
          %v8688 = vsub.f32 %v8624, %v8656
          %v8689 = vsub.f32 %v8625, %v8657
          %v8690 = vsub.f32 %v8626, %v8658
          %v8691 = vsub.f32 %v8627, %v8659
          %v8692 = vsub.f32 %v8628, %v8660
          %v8693 = vsub.f32 %v8629, %v8661
          %v8694 = vsub.f32 %v8630, %v8662
          %v8695 = vsub.f32 %v8631, %v8663
          %v8696 = vsub.f32 %v8632, %v8664
          %v8697 = vsub.f32 %v8633, %v8665
          %v8698 = vsub.f32 %v8634, %v8666
          %v8699 = vsub.f32 %v8635, %v8667
          %v8700 = vsub.f32 %v8636, %v8668
          %v8701 = vsub.f32 %v8637, %v8669
          %v8702 = vsub.f32 %v8638, %v8670
          %v8703 = vsub.f32 %v8639, %v8671
          %v8704 = vsub.f32 %v8640, %v8672
          %8705 = vst [vmem:[#allocation2] sm:$0xff] %v8577
          %8706 = vst [vmem:[#allocation2 + $0x8] sm:$0xff] %v8673
          %8707 = vst [vmem:[#allocation2 + $0x10] sm:$0xff] %v8578
          %8708 = vst [vmem:[#allocation2 + $0x18] sm:$0xff] %v8674
          %8709 = vst [vmem:[#allocation2 + $0x20] sm:$0xff] %v8579
          %8710 = vst [vmem:[#allocation2 + $0x28] sm:$0xff] %v8675
          %8711 = vst [vmem:[#allocation2 + $0x30] sm:$0xff] %v8580
          %8712 = vst [vmem:[#allocation2 + $0x38] sm:$0xff] %v8676
          %8713 = vst [vmem:[#allocation2 + $0x40] sm:$0xff] %v8581
          %8714 = vst [vmem:[#allocation2 + $0x48] sm:$0xff] %v8677
          %8715 = vst [vmem:[#allocation2 + $0x50] sm:$0xff] %v8582
          %8716 = vst [vmem:[#allocation2 + $0x58] sm:$0xff] %v8678
          %8717 = vst [vmem:[#allocation2 + $0x60] sm:$0xff] %v8583
          %8718 = vst [vmem:[#allocation2 + $0x68] sm:$0xff] %v8679
          %8719 = vst [vmem:[#allocation2 + $0x70] sm:$0xff] %v8584
          %8720 = vst [vmem:[#allocation2 + $0x78] sm:$0xff] %v8680
          %8721 = vst [vmem:[#allocation2 + $0x80] sm:$0xff] %v8585
          %8722 = vst [vmem:[#allocation2 + $0x88] sm:$0xff] %v8681
          %8723 = vst [vmem:[#allocation2 + $0x90] sm:$0xff] %v8586
          %8724 = vst [vmem:[#allocation2 + $0x98] sm:$0xff] %v8682
          %8725 = vst [vmem:[#allocation2 + $0xa0] sm:$0xff] %v8587
          %8726 = vst [vmem:[#allocation2 + $0xa8] sm:$0xff] %v8683
          %8727 = vst [vmem:[#allocation2 + $0xb0] sm:$0xff] %v8588
          %8728 = vst [vmem:[#allocation2 + $0xb8] sm:$0xff] %v8684
          %8729 = vst [vmem:[#allocation2 + $0xc0] sm:$0xff] %v8589
          %8730 = vst [vmem:[#allocation2 + $0xc8] sm:$0xff] %v8685
          %8731 = vst [vmem:[#allocation2 + $0xd0] sm:$0xff] %v8590
          %8732 = vst [vmem:[#allocation2 + $0xd8] sm:$0xff] %v8686
          %8733 = vst [vmem:[#allocation2 + $0xe0] sm:$0xff] %v8591
          %8734 = vst [vmem:[#allocation2 + $0xe8] sm:$0xff] %v8687
          %8735 = vst [vmem:[#allocation2 + $0xf0] sm:$0xff] %v8592
          %8736 = vst [vmem:[#allocation2 + $0xf8] sm:$0xff] %v8688
          %8737 = vst [vmem:[#allocation2 + $0x100] sm:$0xff] %v8593
          %8738 = vst [vmem:[#allocation2 + $0x108] sm:$0xff] %v8689
          %8739 = vst [vmem:[#allocation2 + $0x110] sm:$0xff] %v8594
          %8740 = vst [vmem:[#allocation2 + $0x118] sm:$0xff] %v8690
          %8741 = vst [vmem:[#allocation2 + $0x120] sm:$0xff] %v8595
          %8742 = vst [vmem:[#allocation2 + $0x128] sm:$0xff] %v8691
          %8743 = vst [vmem:[#allocation2 + $0x130] sm:$0xff] %v8596
          %8744 = vst [vmem:[#allocation2 + $0x138] sm:$0xff] %v8692
          %8745 = vst [vmem:[#allocation2 + $0x140] sm:$0xff] %v8597
          %8746 = vst [vmem:[#allocation2 + $0x148] sm:$0xff] %v8693
          %8747 = vst [vmem:[#allocation2 + $0x150] sm:$0xff] %v8598
          %8748 = vst [vmem:[#allocation2 + $0x158] sm:$0xff] %v8694
          %8749 = vst [vmem:[#allocation2 + $0x160] sm:$0xff] %v8599
          %8750 = vst [vmem:[#allocation2 + $0x168] sm:$0xff] %v8695
          %8751 = vst [vmem:[#allocation2 + $0x170] sm:$0xff] %v8600
          %8752 = vst [vmem:[#allocation2 + $0x178] sm:$0xff] %v8696
          %8753 = vst [vmem:[#allocation2 + $0x180] sm:$0xff] %v8601
          %8754 = vst [vmem:[#allocation2 + $0x188] sm:$0xff] %v8697
          %8755 = vst [vmem:[#allocation2 + $0x190] sm:$0xff] %v8602
          %8756 = vst [vmem:[#allocation2 + $0x198] sm:$0xff] %v8698
          %8757 = vst [vmem:[#allocation2 + $0x1a0] sm:$0xff] %v8603
          %8758 = vst [vmem:[#allocation2 + $0x1a8] sm:$0xff] %v8699
          %8759 = vst [vmem:[#allocation2 + $0x1b0] sm:$0xff] %v8604
          %8760 = vst [vmem:[#allocation2 + $0x1b8] sm:$0xff] %v8700
          %8761 = vst [vmem:[#allocation2 + $0x1c0] sm:$0xff] %v8605
          %8762 = vst [vmem:[#allocation2 + $0x1c8] sm:$0xff] %v8701
          %8763 = vst [vmem:[#allocation2 + $0x1d0] sm:$0xff] %v8606
          %8764 = vst [vmem:[#allocation2 + $0x1d8] sm:$0xff] %v8702
          %8765 = vst [vmem:[#allocation2 + $0x1e0] sm:$0xff] %v8607
          %8766 = vst [vmem:[#allocation2 + $0x1e8] sm:$0xff] %v8703
          %8767 = vst [vmem:[#allocation2 + $0x1f0] sm:$0xff] %v8608
          %8768 = vst [vmem:[#allocation2 + $0x1f8] sm:$0xff] %v8704
          %v8769 = vpack.c.bf16 %v8578, %v8577
          %v8770 = vpack.c.bf16 %v8674, %v8673
          %v8771 = vpack.c.bf16 %v8580, %v8579
          %v8772 = vpack.c.bf16 %v8676, %v8675
          %v8773 = vpack.c.bf16 %v8582, %v8581
          %v8774 = vpack.c.bf16 %v8678, %v8677
          %v8775 = vpack.c.bf16 %v8584, %v8583
          %v8776 = vpack.c.bf16 %v8680, %v8679
          %v8777 = vpack.c.bf16 %v8586, %v8585
          %v8778 = vpack.c.bf16 %v8682, %v8681
          %v8779 = vpack.c.bf16 %v8588, %v8587
          %v8780 = vpack.c.bf16 %v8684, %v8683
          %v8781 = vpack.c.bf16 %v8590, %v8589
          %v8782 = vpack.c.bf16 %v8686, %v8685
          %v8783 = vpack.c.bf16 %v8592, %v8591
          %v8784 = vpack.c.bf16 %v8688, %v8687
          %v8785 = vpack.c.bf16 %v8594, %v8593
          %v8786 = vpack.c.bf16 %v8690, %v8689
          %v8787 = vpack.c.bf16 %v8596, %v8595
          %v8788 = vpack.c.bf16 %v8692, %v8691
          %v8789 = vpack.c.bf16 %v8598, %v8597
          %v8790 = vpack.c.bf16 %v8694, %v8693
          %v8791 = vpack.c.bf16 %v8600, %v8599
          %v8792 = vpack.c.bf16 %v8696, %v8695
          %v8793 = vpack.c.bf16 %v8602, %v8601
          %v8794 = vpack.c.bf16 %v8698, %v8697
          %v8795 = vpack.c.bf16 %v8604, %v8603
          %v8796 = vpack.c.bf16 %v8700, %v8699
          %v8797 = vpack.c.bf16 %v8606, %v8605
          %v8798 = vpack.c.bf16 %v8702, %v8701
          %v8799 = vpack.c.bf16 %v8608, %v8607
          %v8800 = vpack.c.bf16 %v8704, %v8703
          %v8833 = vunpack.c.l.b16 %v8769
          %v8834 = vunpack.c.l.b16 %v8770
          %v8835 = vunpack.c.h.b16 %v8769
          %v8836 = vunpack.c.h.b16 %v8770
          %v8837 = vunpack.c.l.b16 %v8771
          %v8838 = vunpack.c.l.b16 %v8772
          %v8839 = vunpack.c.h.b16 %v8771
          %v8840 = vunpack.c.h.b16 %v8772
          %v8841 = vunpack.c.l.b16 %v8773
          %v8842 = vunpack.c.l.b16 %v8774
          %v8843 = vunpack.c.h.b16 %v8773
          %v8844 = vunpack.c.h.b16 %v8774
          %v8845 = vunpack.c.l.b16 %v8775
          %v8846 = vunpack.c.l.b16 %v8776
          %v8847 = vunpack.c.h.b16 %v8775
          %v8848 = vunpack.c.h.b16 %v8776
          %v8849 = vunpack.c.l.b16 %v8777
          %v8850 = vunpack.c.l.b16 %v8778
          %v8851 = vunpack.c.h.b16 %v8777
          %v8852 = vunpack.c.h.b16 %v8778
          %v8853 = vunpack.c.l.b16 %v8779
          %v8854 = vunpack.c.l.b16 %v8780
          %v8855 = vunpack.c.h.b16 %v8779
          %v8856 = vunpack.c.h.b16 %v8780
          %v8857 = vunpack.c.l.b16 %v8781
          %v8858 = vunpack.c.l.b16 %v8782
          %v8859 = vunpack.c.h.b16 %v8781
          %v8860 = vunpack.c.h.b16 %v8782
          %v8861 = vunpack.c.l.b16 %v8783
          %v8862 = vunpack.c.l.b16 %v8784
          %v8863 = vunpack.c.h.b16 %v8783
          %v8864 = vunpack.c.h.b16 %v8784
          %v8865 = vunpack.c.l.b16 %v8785
          %v8866 = vunpack.c.l.b16 %v8786
          %v8867 = vunpack.c.h.b16 %v8785
          %v8868 = vunpack.c.h.b16 %v8786
          %v8869 = vunpack.c.l.b16 %v8787
          %v8870 = vunpack.c.l.b16 %v8788
          %v8871 = vunpack.c.h.b16 %v8787
          %v8872 = vunpack.c.h.b16 %v8788
          %v8873 = vunpack.c.l.b16 %v8789
          %v8874 = vunpack.c.l.b16 %v8790
          %v8875 = vunpack.c.h.b16 %v8789
          %v8876 = vunpack.c.h.b16 %v8790
          %v8877 = vunpack.c.l.b16 %v8791
          %v8878 = vunpack.c.l.b16 %v8792
          %v8879 = vunpack.c.h.b16 %v8791
          %v8880 = vunpack.c.h.b16 %v8792
          %v8881 = vunpack.c.l.b16 %v8793
          %v8882 = vunpack.c.l.b16 %v8794
          %v8883 = vunpack.c.h.b16 %v8793
          %v8884 = vunpack.c.h.b16 %v8794
          %v8885 = vunpack.c.l.b16 %v8795
          %v8886 = vunpack.c.l.b16 %v8796
          %v8887 = vunpack.c.h.b16 %v8795
          %v8888 = vunpack.c.h.b16 %v8796
          %v8889 = vunpack.c.l.b16 %v8797
          %v8890 = vunpack.c.l.b16 %v8798
          %v8891 = vunpack.c.h.b16 %v8797
          %v8892 = vunpack.c.h.b16 %v8798
          %v8893 = vunpack.c.l.b16 %v8799
          %v8894 = vunpack.c.l.b16 %v8800
          %v8895 = vunpack.c.h.b16 %v8799
          %v8896 = vunpack.c.h.b16 %v8800
          %v8897 = vpack.c.b16 %v8834, %v8833
          %v8898 = vpack.c.b16 %v8836, %v8835
          %v8899 = vpack.c.b16 %v8838, %v8837
          %v8900 = vpack.c.b16 %v8840, %v8839
          %v8901 = vpack.c.b16 %v8842, %v8841
          %v8902 = vpack.c.b16 %v8844, %v8843
          %v8903 = vpack.c.b16 %v8846, %v8845
          %v8904 = vpack.c.b16 %v8848, %v8847
          %v8905 = vpack.c.b16 %v8850, %v8849
          %v8906 = vpack.c.b16 %v8852, %v8851
          %v8907 = vpack.c.b16 %v8854, %v8853
          %v8908 = vpack.c.b16 %v8856, %v8855
          %v8909 = vpack.c.b16 %v8858, %v8857
          %v8910 = vpack.c.b16 %v8860, %v8859
          %v8911 = vpack.c.b16 %v8862, %v8861
          %v8912 = vpack.c.b16 %v8864, %v8863
          %v8913 = vpack.c.b16 %v8866, %v8865
          %v8914 = vpack.c.b16 %v8868, %v8867
          %v8915 = vpack.c.b16 %v8870, %v8869
          %v8916 = vpack.c.b16 %v8872, %v8871
          %v8917 = vpack.c.b16 %v8874, %v8873
          %v8918 = vpack.c.b16 %v8876, %v8875
          %v8919 = vpack.c.b16 %v8878, %v8877
          %v8920 = vpack.c.b16 %v8880, %v8879
          %v8921 = vpack.c.b16 %v8882, %v8881
          %v8922 = vpack.c.b16 %v8884, %v8883
          %v8923 = vpack.c.b16 %v8886, %v8885
          %v8924 = vpack.c.b16 %v8888, %v8887
          %v8925 = vpack.c.b16 %v8890, %v8889
          %v8926 = vpack.c.b16 %v8892, %v8891
          %v8927 = vpack.c.b16 %v8894, %v8893
          %v8928 = vpack.c.b16 %v8896, %v8895
          %8961 = vst [vmem:[%s509] sm:$0xff] %v8897
          %8962 = vst [vmem:[%s509 + $0x8] sm:$0xff] %v8898
          %8963 = vst [vmem:[%s509 + $0x10] sm:$0xff] %v8899
          %8964 = vst [vmem:[%s509 + $0x18] sm:$0xff] %v8900
          %8965 = vst [vmem:[%s509 + $0x20] sm:$0xff] %v8901
          %8966 = vst [vmem:[%s509 + $0x28] sm:$0xff] %v8902
          %8967 = vst [vmem:[%s509 + $0x30] sm:$0xff] %v8903
          %8968 = vst [vmem:[%s509 + $0x38] sm:$0xff] %v8904
          %8969 = vst [vmem:[%s509 + $0x40] sm:$0xff] %v8905
          %8970 = vst [vmem:[%s509 + $0x48] sm:$0xff] %v8906
          %8971 = vst [vmem:[%s509 + $0x50] sm:$0xff] %v8907
          %8972 = vst [vmem:[%s509 + $0x58] sm:$0xff] %v8908
          %8973 = vst [vmem:[%s509 + $0x60] sm:$0xff] %v8909
          %8974 = vst [vmem:[%s509 + $0x68] sm:$0xff] %v8910
          %8975 = vst [vmem:[%s509 + $0x70] sm:$0xff] %v8911
          %8976 = vst [vmem:[%s509 + $0x78] sm:$0xff] %v8912
          %8977 = vst [vmem:[%s509 + $0x80] sm:$0xff] %v8913
          %8978 = vst [vmem:[%s509 + $0x88] sm:$0xff] %v8914
          %8979 = vst [vmem:[%s509 + $0x90] sm:$0xff] %v8915
          %8980 = vst [vmem:[%s509 + $0x98] sm:$0xff] %v8916
          %8981 = vst [vmem:[%s509 + $0xa0] sm:$0xff] %v8917
          %8982 = vst [vmem:[%s509 + $0xa8] sm:$0xff] %v8918
          %8983 = vst [vmem:[%s509 + $0xb0] sm:$0xff] %v8919
          %8984 = vst [vmem:[%s509 + $0xb8] sm:$0xff] %v8920
          %8985 = vst [vmem:[%s509 + $0xc0] sm:$0xff] %v8921
          %8986 = vst [vmem:[%s509 + $0xc8] sm:$0xff] %v8922
          %8987 = vst [vmem:[%s509 + $0xd0] sm:$0xff] %v8923
          %8988 = vst [vmem:[%s509 + $0xd8] sm:$0xff] %v8924
          %8989 = vst [vmem:[%s509 + $0xe0] sm:$0xff] %v8925
          %8990 = vst [vmem:[%s509 + $0xe8] sm:$0xff] %v8926
          %8991 = vst [vmem:[%s509 + $0xf0] sm:$0xff] %v8927
          %8992 = vst [vmem:[%s509 + $0xf8] sm:$0xff] %v8928
          %v8993 = vld [vmem:[%s547] sm:$0xff]
          %v8994 = vld [vmem:[%s547 + $0x8] sm:$0xff]
          %v8995 = vld [vmem:[%s557] sm:$0xff]
          %8997 = vset.pattern.permute.xlu0 0
          %8998 = vperm.xlu0 %8997, %v8995
          %v8999 = vpop.permute.xlu0 %8998
          %9001 = vmatprep.subr.mxu0 %v8688
          %9002 = vmatpush1.xpose.msra.mxu0 %v8592
          %9003 = vmatprep.subr.mxu0 %v8687
          %9004 = vmatpush1.xpose.msra.mxu0 %v8591
          %9005 = vmatprep.subr.mxu0 %v8686
          %9006 = vmatpush1.xpose.msra.mxu0 %v8590
          %9007 = vmatprep.subr.mxu0 %v8685
          %9008 = vmatpush1.xpose.msra.mxu0 %v8589
          %9009 = vmatprep.subr.mxu0 %v8684
          %9010 = vmatpush1.xpose.msra.mxu0 %v8588
          %9011 = vmatprep.subr.mxu0 %v8683
          %9012 = vmatpush1.xpose.msra.mxu0 %v8587
          %9013 = vmatprep.subr.mxu0 %v8682
          %9014 = vmatpush1.xpose.msra.mxu0 %v8586
          %9015 = vmatprep.subr.mxu0 %v8681
          %9016 = vmatpush1.xpose.msra.mxu0 %v8585
          %9017 = vmatprep.subr.mxu0 %v8680
          %9018 = vmatpush1.xpose.msra.mxu0 %v8584
          %9019 = vmatprep.subr.mxu0 %v8679
          %9020 = vmatpush1.xpose.msra.mxu0 %v8583
          %9021 = vmatprep.subr.mxu0 %v8678
          %9022 = vmatpush1.xpose.msra.mxu0 %v8582
          %9023 = vmatprep.subr.mxu0 %v8677
          %9024 = vmatpush1.xpose.msra.mxu0 %v8581
          %9025 = vmatprep.subr.mxu0 %v8676
          %9026 = vmatpush1.xpose.msra.mxu0 %v8580
          %9027 = vmatprep.subr.mxu0 %v8675
          %9028 = vmatpush1.xpose.msra.mxu0 %v8579
          %9029 = vmatprep.subr.mxu0 %v8674
          %9030 = vmatpush1.xpose.msra.mxu0 %v8578
          %9031 = vmatprep.subr.mxu0 %v8673
          %9032 = vmatpush1.xpose.msra.mxu0 %v8577
          %9033 = vmatprep.subr.mxu0 %v8704
          %9034 = vmatpush2.xpose.msra.mxu0 %v8608
          %9035 = vmatprep.subr.mxu0 %v8703
          %9036 = vmatpush2.xpose.msra.mxu0 %v8607
          %9037 = vmatprep.subr.mxu0 %v8702
          %9038 = vmatpush2.xpose.msra.mxu0 %v8606
          %9039 = vmatprep.subr.mxu0 %v8701
          %9040 = vmatpush2.xpose.msra.mxu0 %v8605
          %9041 = vmatprep.subr.mxu0 %v8700
          %9042 = vmatpush2.xpose.msra.mxu0 %v8604
          %9043 = vmatprep.subr.mxu0 %v8699
          %9044 = vmatpush2.xpose.msra.mxu0 %v8603
          %9045 = vmatprep.subr.mxu0 %v8698
          %9046 = vmatpush2.xpose.msra.mxu0 %v8602
          %9047 = vmatprep.subr.mxu0 %v8697
          %9048 = vmatpush2.xpose.msra.mxu0 %v8601
          %9049 = vmatprep.subr.mxu0 %v8696
          %9050 = vmatpush2.xpose.msra.mxu0 %v8600
          %9051 = vmatprep.subr.mxu0 %v8695
          %9052 = vmatpush2.xpose.msra.mxu0 %v8599
          %9053 = vmatprep.subr.mxu0 %v8694
          %9054 = vmatpush2.xpose.msra.mxu0 %v8598
          %9055 = vmatprep.subr.mxu0 %v8693
          %9056 = vmatpush2.xpose.msra.mxu0 %v8597
          %9057 = vmatprep.subr.mxu0 %v8692
          %9058 = vmatpush2.xpose.msra.mxu0 %v8596
          %9059 = vmatprep.subr.mxu0 %v8691
          %9060 = vmatpush2.xpose.msra.mxu0 %v8595
          %9061 = vmatprep.subr.mxu0 %v8690
          %9062 = vmatpush2.xpose.msra.mxu0 %v8594
          %9063 = vmatprep.subr.mxu0 %v8689
          %9064 = vmatpush2.xpose.msra.mxu0 %v8593
          %9065 = vmatprep.mubr.f32.mxu0 %v8994
          %9066 = vmatmul.mubr.f32.gmra.mxu0 %v8993
          %v9067 = vpop.f32.mrf.mxu0
          %v9068 = vadd.f32 %v8999, %v9067
          %v9069 = vpop.f32.mrf.mxu0
          %v9070 = vadd.f32 %v8999, %v9069
          %9071 = vdwg.mxu0
          %v9072 = vld [vmem:[#allocation3] sm:$0xff]
          %v9073 = vld [vmem:[#allocation3 + $0x8] sm:$0xff]
          %v9074 = vadd.f32 %v9072, %v9068
          %v9075 = vadd.f32 %v9073, %v9070
          %9076 = vst [vmem:[#allocation3] sm:$0xff] %v9074
          %9077 = vst [vmem:[#allocation3 + $0x8] sm:$0xff] %v9075
          %9078 = vst [vmem:[%s516] sm:$0xff] %v9068
          %9079 = vst [vmem:[%s516 + $0x8] sm:$0xff] %v9070
          %9080 = vst [vmem:[%s523] sm:$0xff] %v9074
          %9081 = vst [vmem:[%s523 + $0x8] sm:$0xff] %v9075
        $region60: #{tpu_custom_call.1} parent=43 // pred_fallthru
          _
        %s9082 = sand.u32 %s229, 1
        %s9083 = scalar_lea.sflag [#allocation7], %s9082
        %s9084 = sand.u32 %s229, 1
        %s9085 = smul.addr %s9084, 256
        %s9086 = scalar_lea.vmem [#allocation8], %s9085
        %s9087 = sand.u32 %s33, 1
        %s9088 = scalar_lea.sflag [#allocation10], %s9087
        %s9089 = sand.u32 %s263, 1
        %s9090 = smul.addr %s9089, 256
        %s9091 = scalar_lea.vmem [#allocation9], %s9090
        %s9092 = sand.u32 %s33, 1
        %s9093 = scalar_lea.sflag [#allocation10], %s9092
        %s9094 = sand.u32 %s297, 1
        %s9095 = smul.addr %s9094, 16
        %s9096 = scalar_lea.vmem [#allocation11], %s9095
        %s9097 = sand.u32 %s331, 1
        %s9098 = scalar_lea.sflag [#allocation13], %s9097
        %s9099 = sand.u32 %s331, 1
        %s9100 = smul.addr %s9099, 16
        %s9101 = scalar_lea.vmem [#allocation12], %s9100
        // Predicated region
        $region61: #{tpu_custom_call.1} parent=43 // pred_check
          %p9102 = pneg %p239
        $region62: #{tpu_custom_call.1} parent=43 // pred_check_branch
          %9104 = sbr.rel (%p9102) target = $region64
        $region63: #{tpu_custom_call.1} parent=43 // pred_region
          %s9105 = smul.u32 32, %s37
          %s9107 = ssub.s32 4096, 4096
          %9108 = vsyncadd %s9083, %s9107
          %s9109 = smul.addr %s9105, 2
          %s9110 = smul.addr %s38, 64
          %s9111 = sadd.s32 %s9109, %s9110
          %s9112 = smul.addr %s9111, 64
          %s9113 = scalar_lea.hbm %s6, %s9112
          %s9114 = sshll.u32 %s9086, 4
          %s9115 = int_to_ptr.vmem [resolvable:$true] %s9114
          %9120 = dma.vmem_to_hbm [thread:$0]  %s9115, 4096, %s9113, %s9083, 128, 128, 8
        $region64: #{tpu_custom_call.1} parent=43 // pred_fallthru
          _
        // Predicated region
        $region65: #{tpu_custom_call.1} parent=43 // pred_check
          %p9121 = pneg %p273
        $region66: #{tpu_custom_call.1} parent=43 // pred_check_branch
          %9123 = sbr.rel (%p9121) target = $region68
        $region67: #{tpu_custom_call.1} parent=43 // pred_region
          %s9124 = ssub.s32 %s38, 1
          %p9125 = scmp.gt.s32.totalorder %s9124, 0
          %s9126 = scalar_select %p9125, %s9124, 0
          %s9127 = smul.u32 32, %s37
          %s9129 = ssub.s32 4096, 4096
          %9130 = vsyncadd %s9088, %s9129
          %s9131 = smul.addr %s9127, 2
          %s9132 = smul.addr %s9126, 64
          %s9133 = sadd.s32 %s9131, %s9132
          %s9134 = smul.addr %s9133, 64
          %s9135 = scalar_lea.hbm %s7, %s9134
          %s9136 = sshll.u32 %s9091, 4
          %s9137 = int_to_ptr.vmem [resolvable:$true] %s9136
          %9142 = dma.vmem_to_hbm [thread:$0]  %s9137, 4096, %s9135, %s9088, 128, 128, 8
        $region68: #{tpu_custom_call.1} parent=43 // pred_fallthru
          _
        // Predicated region
        $region69: #{tpu_custom_call.1} parent=43 // pred_check
          %p9143 = pneg %p307
        $region70: #{tpu_custom_call.1} parent=43 // pred_check_branch
          %9145 = sbr.rel (%p9143) target = $region72
        $region71: #{tpu_custom_call.1} parent=43 // pred_region
          %s9146 = ssub.s32 %s38, 1
          %p9147 = scmp.gt.s32.totalorder %s9146, 0
          %s9148 = scalar_select %p9147, %s9146, 0
          %s9149 = smul.u32 2, %s37
          %s9151 = ssub.s32 256, 256
          %9152 = vsyncadd %s9093, %s9151
          %s9153 = smul.addr %s9148, 2
          %s9154 = sadd.s32 %s9149, %s9153
          %s9155 = smul.addr %s9154, 128
          %s9156 = scalar_lea.hbm %s8, %s9155
          %s9158 = sshll.u32 %s9096, 4
          %s9159 = int_to_ptr.vmem [resolvable:$true] %s9158
          %9161 = dma.vmem_to_hbm [thread:$0]  %s9159, 256, %s9156, %s9093
        $region72: #{tpu_custom_call.1} parent=43 // pred_fallthru
          _
        // Predicated region
        $region73: #{tpu_custom_call.1} parent=43 // pred_check
          %p9162 = pneg %p341
        $region74: #{tpu_custom_call.1} parent=43 // pred_check_branch
          %9164 = sbr.rel (%p9162) target = $region76
        $region75: #{tpu_custom_call.1} parent=43 // pred_region
          %s9165 = ssub.s32 %s38, 1
          %p9166 = scmp.gt.s32.totalorder %s9165, 0
          %s9167 = scalar_select %p9166, %s9165, 0
          %s9168 = smul.u32 2, %s37
          %s9170 = ssub.s32 256, 256
          %9171 = vsyncadd %s9098, %s9170
          %s9172 = smul.addr %s9167, 2
          %s9173 = sadd.s32 %s9168, %s9172
          %s9174 = smul.addr %s9173, 128
          %s9175 = scalar_lea.hbm %s9, %s9174
          %s9177 = sshll.u32 %s9101, 4
          %s9178 = int_to_ptr.vmem [resolvable:$true] %s9177
          %9180 = dma.vmem_to_hbm [thread:$0]  %s9178, 256, %s9175, %s9098
        $region76: #{tpu_custom_call.1} parent=43 // pred_fallthru
          _
      $region44: #{tpu_custom_call.1} parent=5 // pred_fallthru
        _
      %p9181 = scmp.le.s32.totalorder 2, %s28
      // Predicated region
      $region77: #{tpu_custom_call.1} parent=5 // pred_check
        %p9182 = pneg %p9181
      $region78: #{tpu_custom_call.1} parent=5 // pred_check_branch
        %9184 = sbr.rel (%p9182) target = $region80
      $region79: #{tpu_custom_call.1} parent=5 // pred_region
        %s9185 = ssub.s32 %s28, 2
        // Predicated region
        $region81: #{tpu_custom_call.1} parent=79 // pred_check
          %p9186 = pneg %p245
        $region82: #{tpu_custom_call.1} parent=79 // pred_check_branch
          %9188 = sbr.rel (%p9186) target = $region84
        $region83: #{tpu_custom_call.1} parent=79 // pred_region
          %s9189 = sand.u32 %s230, 1
          %s9190 = scalar_lea.sflag [#allocation7], %s9189
          %s9191 = sand.u32 %s230, 1
          %s9192 = smul.addr %s9191, 256
          %s9193 = scalar_lea.vmem [#allocation8], %s9192
          %9194 = dma.done %s9190, 4096
        $region84: #{tpu_custom_call.1} parent=79 // pred_fallthru
          _
        // Predicated region
        $region85: #{tpu_custom_call.1} parent=79 // pred_check
          %p9195 = pneg %p279
        $region86: #{tpu_custom_call.1} parent=79 // pred_check_branch
          %9197 = sbr.rel (%p9195) target = $region88
        $region87: #{tpu_custom_call.1} parent=79 // pred_region
          %s9198 = sand.u32 %s34, 1
          %s9199 = scalar_lea.sflag [#allocation10], %s9198
          %s9200 = sand.u32 %s264, 1
          %s9201 = smul.addr %s9200, 256
          %s9202 = scalar_lea.vmem [#allocation9], %s9201
          %9203 = dma.done %s9199, 4096
        $region88: #{tpu_custom_call.1} parent=79 // pred_fallthru
          _
        // Predicated region
        $region89: #{tpu_custom_call.1} parent=79 // pred_check
          %p9204 = pneg %p313
        $region90: #{tpu_custom_call.1} parent=79 // pred_check_branch
          %9206 = sbr.rel (%p9204) target = $region92
        $region91: #{tpu_custom_call.1} parent=79 // pred_region
          %s9207 = sand.u32 %s34, 1
          %s9208 = scalar_lea.sflag [#allocation10], %s9207
          %s9209 = sand.u32 %s298, 1
          %s9210 = smul.addr %s9209, 16
          %s9211 = scalar_lea.vmem [#allocation11], %s9210
          %9212 = dma.done %s9208, 256
        $region92: #{tpu_custom_call.1} parent=79 // pred_fallthru
          _
        // Predicated region
        $region93: #{tpu_custom_call.1} parent=79 // pred_check
          %p9213 = pneg %p347
        $region94: #{tpu_custom_call.1} parent=79 // pred_check_branch
          %9215 = sbr.rel (%p9213) target = $region96
        $region95: #{tpu_custom_call.1} parent=79 // pred_region
          %s9216 = sand.u32 %s332, 1
          %s9217 = scalar_lea.sflag [#allocation13], %s9216
          %s9218 = sand.u32 %s332, 1
          %s9219 = smul.addr %s9218, 16
          %s9220 = scalar_lea.vmem [#allocation12], %s9219
          %9221 = dma.done %s9217, 256
        $region96: #{tpu_custom_call.1} parent=79 // pred_fallthru
          _
      $region80: #{tpu_custom_call.1} parent=5 // pred_fallthru
        _
    $region6: #{tpu_custom_call.1} parent=1 // loop_footer
      %s32 = sadd.s32 1, %s28
    $region7: #{tpu_custom_call.1} parent=1 // loop_footer_branch
      %27 = sbr.rel target = $region3
    $region8: #{tpu_custom_call.1} parent=1 // loop_exit
      _
    %9222 = vsyncpa [#allocation6], 1
    %s9223 = scalar_lea.sflag [#allocation6], 1
    %9224 = vsyncpa %s9223, 1
    %9225 = vsyncpa [#allocation7], 1
    %s9226 = scalar_lea.sflag [#allocation7], 1
    %9227 = vsyncpa %s9226, 1
    %9228 = vsyncpa [#allocation10], 1
    %s9229 = scalar_lea.sflag [#allocation10], 1
    %9230 = vsyncpa %s9229, 1
    %9231 = vsyncpa [#allocation13], 1
    %s9232 = scalar_lea.sflag [#allocation13], 1
    %9233 = vsyncpa %s9232, 1

</llo_original>
